<compile_context>
chip_gen: v7x
topology: tpu7x:2x2x1
jax: 0.10.0
libtpu: 0.0.40
codegen_flags: <defaults>
</compile_context>

<pallas_src>
import math

import jax
import jax.numpy as jnp
from jax.experimental import pallas as pl
from jax.experimental.pallas import tpu as pltpu


TIME_DIM = 32
NUM_LAYERS = 3
NUM_HEADS = 4


# ----------------------------------------------------------------------------
# small helpers usable inside Pallas kernels
# ----------------------------------------------------------------------------
def _erf(x):
    # Abramowitz & Stegun 7.1.26 rational approximation (max abs err ~1.5e-7).
    a1, a2, a3, a4, a5 = 0.254829592, -0.284496736, 1.421413741, -1.453152027, 1.061405429
    p = 0.3275911
    sgn = jnp.where(x >= 0.0, 1.0, -1.0)
    ax = jnp.abs(x)
    t = 1.0 / (1.0 + p * ax)
    poly = ((((a5 * t + a4) * t + a3) * t + a2) * t + a1) * t
    return sgn * (1.0 - poly * jnp.exp(-ax * ax))


def _gelu(x):
    # exact (erf-based) GELU, matching torch.nn.GELU default
    return 0.5 * x * (1.0 + _erf(x * 0.7071067811865476))


def _layernorm(x, eps=1e-5):
    mu = jnp.mean(x, axis=-1, keepdims=True)
    var = jnp.mean((x - mu) ** 2, axis=-1, keepdims=True)
    return (x - mu) * jax.lax.rsqrt(var + eps)


# ----------------------------------------------------------------------------
# The single fused kernel: tri-conv + BN + ReLU + AdaLN, 3 StyleTransformer
# blocks (time-emb, AdaLN, batch-axis MHA, LayerNorm, FFN), k=1 conv head and
# per-batch temporal mean.
# ----------------------------------------------------------------------------
def make_fused_kernel(B, T, Cin, H, nh, num_layers):
    hd = H // nh
    scale = 1.0 / math.sqrt(hd)
    BT = B * T

    def rows_from_batch(v):      # (B, H) per-batch value -> (B*T, H) rows (row = b*T + t)
        return jnp.broadcast_to(v[:, None, :], (B, T, H)).reshape(BT, H)

    def tile_over_batch(v):      # (T, H) per-time value  -> (B*T, H) rows
        return jnp.broadcast_to(v[None, :, :], (B, T, H)).reshape(BT, H)

    def kernel(xcol_ref, emo_ref, ff_ref, hsum_ref, hexp_ref, avg_ref,
               wconv_ref, bconv_ref, bng_ref, bnb_ref, wada0_ref, bada0_ref,
               wt_ref, bt_ref, wada_ref, bada_ref,
               win_ref, bin_ref, wout_ref, bout_ref,
               g2_ref, b2_ref, w1_ref, b1_ref, w2_ref, b2f_ref,
               whead_ref, bhead_ref,
               frame_ref, glob_ref):
        f32 = jnp.float32
        emo = emo_ref[...]                                                  # (B, H)
        hsum = hsum_ref[...]                                                # (H, nh)
        hexp = hexp_ref[...]                                                # (nh, H)

        def ada_ln(xrows, h):                                               # h: (B, 2H)
            ge = rows_from_batch(h[:, :H])
            be = rows_from_batch(h[:, H:])
            return (1.0 + ge) * _layernorm(xrows) + be

        # ---- tri-conv: ONE im2col matmul, joint BatchNorm(train)+ReLU, branch sum
        y3 = jnp.dot(xcol_ref[...], wconv_ref[...],
                     preferred_element_type=f32) + bconv_ref[...]           # (B*T, 3H)
        mu = jnp.mean(y3, axis=0, keepdims=True)
        var = jnp.mean((y3 - mu) ** 2, axis=0, keepdims=True)
        y3 = jnp.maximum((y3 - mu) * jax.lax.rsqrt(var + 1e-5) * bng_ref[...] + bnb_ref[...], 0.0)
        x = y3[:, :H] + y3[:, H:2 * H] + y3[:, 2 * H:]                      # (B*T, H)

        # ---- AdaLayerNorm conditioned on the emotion embedding
        x = ada_ln(x, jnp.dot(emo, wada0_ref[...], preferred_element_type=f32) + bada0_ref[...])

        mapping = rows_from_batch(emo)                                      # hoisted broadcast

        # ---- style transformer blocks (statically unrolled; per-layer weights indexed by l)
        for l in range(num_layers):
            # time positional embedding: Linear(time_dim+1 -> H) + GELU (same for all batches)
            temb = _gelu(jnp.dot(ff_ref[l], wt_ref[l], preferred_element_type=f32) + bt_ref[l])
            xb = x + mapping + tile_over_batch(temb)

            # AdaLayerNorm(style = emotion embedding)
            xb = ada_ln(xb, jnp.dot(emo, wada_ref[l], preferred_element_type=f32) + bada_ref[l])

            # Multi-head attention. batch_first=False quirk: attention sequence = batch
            # axis (length B), attention "batch" = (time, head). Vectorized over all
            # B*T query rows; per-head reduce/expand done with MXU matmuls.
            qkv = jnp.dot(xb, win_ref[l], preferred_element_type=f32) + bin_ref[l]
            q, k, v = qkv[:, :H], qkv[:, H:2 * H], qkv[:, 2 * H:]
            logits = []
            for j in range(B):
                kj = tile_over_batch(k[j * T:(j + 1) * T, :])
                logits.append(scale * jnp.dot(q * kj, hsum,
                                              preferred_element_type=f32))  # (B*T, nh)
            m = logits[0]
            for j in range(1, B):
                m = jnp.maximum(m, logits[j])
            exps = [jnp.exp(lg - m) for lg in logits]
            denom = exps[0]
            for j in range(1, B):
                denom = denom + exps[j]
            inv = pl.reciprocal(denom, approx=True)
            attn = jnp.dot(exps[0] * inv, hexp, preferred_element_type=f32) \
                * tile_over_batch(v[0:T, :])
            for j in range(1, B):
                attn = attn + jnp.dot(exps[j] * inv, hexp, preferred_element_type=f32) \
                    * tile_over_batch(v[j * T:(j + 1) * T, :])
            attn = jnp.dot(attn, wout_ref[l], preferred_element_type=f32) + bout_ref[l]
            xb = xb + attn

            # norm2 (LayerNorm with affine) + feed-forward
            xb = _layernorm(xb) * g2_ref[l] + b2_ref[l]
            hid = _gelu(jnp.dot(xb, w1_ref[l], preferred_element_type=f32) + b1_ref[l])
            x = xb + jnp.dot(hid, w2_ref[l], preferred_element_type=f32) + b2f_ref[l]

        # ---- output head (Conv1d k=1 == Linear) + per-batch mean over time (MXU matmul)
        y = jnp.dot(x, whead_ref[...], preferred_element_type=f32) + bhead_ref[...]
        frame_ref[...] = y
        glob_ref[...] = jnp.dot(avg_ref[...], y, preferred_element_type=f32)

    return kernel


# ----------------------------------------------------------------------------
# Parameter init (deterministic, synthetic, PyTorch layout) and one-time prep
# ----------------------------------------------------------------------------
def init_params(key, Cin, H, time_dim=TIME_DIM, num_layers=NUM_LAYERS):
    ks = iter(jax.random.split(key, 96))

    def nrm(shape, s=0.1):
        return s * jax.random.normal(next(ks), shape, dtype=jnp.float32)

    p = {}
    p['conv1_w'], p['conv1_b'] = nrm((H, Cin, 3)), nrm((H,))
    p['conv2_w'], p['conv2_b'] = nrm((H, Cin, 5)), nrm((H,))
    p['conv3_w'], p['conv3_b'] = nrm((H, Cin, 7)), nrm((H,))
    for i in (1, 2, 3):
        p[f'bn{i}_g'] = 1.0 + nrm((H,))
        p[f'bn{i}_b'] = nrm((H,))
    p['ada0_w'], p['ada0_b'] = nrm((2 * H, H)), nrm((2 * H,))
    p['emb'] = nrm((5, H), 0.5)
    for l in range(num_layers):
        p[f'blk{l}_pos'] = jax.random.normal(next(ks), (time_dim // 2,), dtype=jnp.float32)
        p[f'blk{l}_time_w'], p[f'blk{l}_time_b'] = nrm((H, time_dim + 1)), nrm((H,))
        p[f'blk{l}_ada_w'], p[f'blk{l}_ada_b'] = nrm((2 * H, H)), nrm((2 * H,))
        p[f'blk{l}_inproj_w'], p[f'blk{l}_inproj_b'] = nrm((3 * H, H)), nrm((3 * H,))
        p[f'blk{l}_outproj_w'], p[f'blk{l}_outproj_b'] = nrm((H, H)), nrm((H,))
        p[f'blk{l}_ln2_g'] = 1.0 + nrm((H,))
        p[f'blk{l}_ln2_b'] = nrm((H,))
        p[f'blk{l}_ff1_w'], p[f'blk{l}_ff1_b'] = nrm((2 * H, H)), nrm((2 * H,))
        p[f'blk{l}_ff2_w'], p[f'blk{l}_ff2_b'] = nrm((H, 2 * H)), nrm((H,))
    p['out_w'], p['out_b'] = nrm((H, H, 1)), nrm((H,))
    return p


def prepare_params(params, *, B, T, time_dim=TIME_DIM, num_layers=NUM_LAYERS,
                   num_heads=NUM_HEADS):
    """One-time re-layout of PyTorch-layout params into kernel-friendly tensors,
    plus the constant 0/1 MXU matrices (head-sum/expand, time averaging)."""
    H, Cin, _ = params['conv1_w'].shape
    hd = H // num_heads
    f32 = jnp.float32

    # pack the three conv kernels (k=3/5/7), center-aligned in a 7-tap window,
    # into a single (7*Cin, 3H) matmul weight for the im2col formulation.
    wpk = jnp.zeros((7, Cin, 3 * H), f32)
    for bi, (name, K, pad) in enumerate((('conv1', 3, 1), ('conv2', 5, 2), ('conv3', 7, 3))):
        wt = jnp.transpose(params[f'{name}_w'], (2, 1, 0))        # (K, Cin, H)
        wpk = wpk.at[3 - pad:3 - pad + K, :, bi * H:(bi + 1) * H].set(wt)

    # constant 0/1 matrices keeping per-head reduce/expand and the per-batch
    # time mean on the MXU (hoisted out of the kernel body).
    hsum = (jnp.arange(H)[:, None] // hd == jnp.arange(num_heads)[None, :]).astype(f32)
    avg = (jnp.arange(B * T)[None, :] // T == jnp.arange(B)[:, None]).astype(f32) / T

    prep = {
        'wconv': wpk.reshape(7 * Cin, 3 * H),
        'bconv': jnp.concatenate([params['conv1_b'], params['conv2_b'], params['conv3_b']])[None, :],
        'bng': jnp.concatenate([params['bn1_g'], params['bn2_g'], params['bn3_g']])[None, :],
        'bnb': jnp.concatenate([params['bn1_b'], params['bn2_b'], params['bn3_b']])[None, :],
        'wada0': params['ada0_w'].T,
        'bada0': params['ada0_b'][None, :],
        'emb': params['emb'],
        'whead': params['out_w'][:, :, 0].T,
        'bhead': params['out_b'][None, :],
        'hsum': hsum,                                             # (H, nh)
        'hexp': hsum.T,                                           # (nh, H)
        'avg': avg,                                               # (B, B*T)
    }

    # TODO(synk): fourier-feature tables (sin/cos of learned freqs) are precomputed
    # here as glue (they depend only on T and the learned pos weights); the
    # Linear(time_dim+1 -> H) + GELU stays inside the kernel.
    t = jnp.linspace(0.0, 1.0, T)[:, None]                        # (T, 1)
    ffs = []
    for l in range(num_layers):
        freqs = t * params[f'blk{l}_pos'][None, :] * (2.0 * math.pi)
        ffs.append(jnp.concatenate([t, jnp.sin(freqs), jnp.cos(freqs)], axis=-1))
    prep['ff_all'] = jnp.stack(ffs)                               # (L, T, time_dim+1)

    def stackw(name):
        return jnp.stack([params[f'blk{l}_{name}'].T for l in range(num_layers)])

    def stackb(name):
        return jnp.stack([params[f'blk{l}_{name}'][None, :] for l in range(num_layers)])

    prep.update(
        wt_all=stackw('time_w'), bt_all=stackb('time_b'),
        wada_all=stackw('ada_w'), bada_all=stackb('ada_b'),
        win_all=stackw('inproj_w'), bin_all=stackb('inproj_b'),
        wout_all=stackw('outproj_w'), bout_all=stackb('outproj_b'),
        g2_all=stackb('ln2_g'), b2_all=stackb('ln2_b'),
        wff1_all=stackw('ff1_w'), bff1_all=stackb('ff1_b'),
        wff2_all=stackw('ff2_w'), bff2_all=stackb('ff2_b'),
    )
    return prep


# ----------------------------------------------------------------------------
# Forward wrapper: thin glue (pad, im2col slab, embedding gather) + ONE pallas_call
# ----------------------------------------------------------------------------
def intensity_extractor_forward(x, emotion_class, prep, *, H,
                                num_layers=NUM_LAYERS, num_heads=NUM_HEADS):
    B, T, Cin = x.shape
    x = x.astype(jnp.float32)

    # glue: zero-pad by the max padding (3) and build the (B*T, 7*Cin) im2col slab
    xpad = jnp.pad(x, ((0, 0), (3, 3), (0, 0)))                   # (B, T+6, Cin)
    xcol = jnp.concatenate([xpad[:, s:s + T, :] for s in range(7)],
                           axis=-1).reshape(B * T, 7 * Cin)
    emo = jnp.take(prep['emb'], emotion_class[:, 0], axis=0)      # (B, H)

    vmem = lambda: pl.BlockSpec(memory_space=pltpu.MemorySpace.VMEM)
    args = (xcol, emo, prep['ff_all'], prep['hsum'], prep['hexp'], prep['avg'],
            prep['wconv'], prep['bconv'], prep['bng'], prep['bnb'], prep['wada0'], prep['bada0'],
            prep['wt_all'], prep['bt_all'], prep['wada_all'], prep['bada_all'],
            prep['win_all'], prep['bin_all'], prep['wout_all'], prep['bout_all'],
            prep['g2_all'], prep['b2_all'], prep['wff1_all'], prep['bff1_all'],
            prep['wff2_all'], prep['bff2_all'], prep['whead'], prep['bhead'])

    frame, glob = pl.pallas_call(
        make_fused_kernel(B, T, Cin, H, num_heads, num_layers),
        out_shape=(jax.ShapeDtypeStruct((B * T, H), jnp.float32),
                   jax.ShapeDtypeStruct((B, H), jnp.float32)),
        in_specs=[vmem() for _ in range(len(args))],
        out_specs=(vmem(), vmem()),
    )(*args)

    return glob, frame.reshape(B, T, H)


# ----------------------------------------------------------------------------
# Pure-JAX reference (mirrors the PyTorch forward) for the correctness check
# ----------------------------------------------------------------------------
def reference_forward(x, emotion_class, params, *, H,
                      time_dim=TIME_DIM, num_layers=NUM_LAYERS, num_heads=NUM_HEADS):
    B, T, Cin = x.shape
    hd = H // num_heads
    gelu = lambda v: jax.nn.gelu(v, approximate=False)
    ln = lambda v: (v - v.mean(-1, keepdims=True)) / jnp.sqrt(
        ((v - v.mean(-1, keepdims=True)) ** 2).mean(-1, keepdims=True) + 1e-5)

    time = jnp.broadcast_to(jnp.linspace(0.0, 1.0, T)[None, :], (B, T))
    xt = jnp.transpose(x, (0, 2, 1))                              # (B, Cin, T)

    def conv1d(w, b, pad):
        y = jax.lax.conv_general_dilated(xt, w, window_strides=(1,), padding=[(pad, pad)],
                                         dimension_numbers=('NCW', 'OIW', 'NCW'))
        return y + b[None, :, None]

    def bn(y, g, be):
        mu = jnp.mean(y, axis=(0, 2), keepdims=True)
        var = jnp.mean((y - mu) ** 2, axis=(0, 2), keepdims=True)
        return (y - mu) / jnp.sqrt(var + 1e-5) * g[None, :, None] + be[None, :, None]

    co = (jax.nn.relu(bn(conv1d(params['conv1_w'], params['conv1_b'], 1), params['bn1_g'], params['bn1_b']))
          + jax.nn.relu(bn(conv1d(params['conv2_w'], params['conv2_b'], 2), params['bn2_g'], params['bn2_b']))
          + jax.nn.relu(bn(conv1d(params['conv3_w'], params['conv3_b'], 3), params['bn3_g'], params['bn3_b'])))
    co = jnp.transpose(co, (0, 2, 1))                             # (B, T, H)

    emo = params['emb'][emotion_class[:, 0]]                      # (B, H)

    def ada(xx, W, b):
        h = emo @ W.T + b
        gamma, beta = h[:, :H], h[:, H:]
        return (1.0 + gamma[:, None, :]) * ln(xx) + beta[:, None, :]

    xc = ada(co, params['ada0_w'], params['ada0_b'])
    mapping = jnp.broadcast_to(emo[:, None, :], (B, T, H))
    for l in range(num_layers):
        xx = xc + mapping
        freqs = time[:, :, None] * params[f'blk{l}_pos'] * 2.0 * math.pi
        ffe = jnp.concatenate([time[:, :, None], jnp.sin(freqs), jnp.cos(freqs)], axis=-1)
        xx = xx + gelu(ffe @ params[f'blk{l}_time_w'].T + params[f'blk{l}_time_b'])
        xx = ada(xx, params[f'blk{l}_ada_w'], params[f'blk{l}_ada_b'])
        qkv = xx @ params[f'blk{l}_inproj_w'].T + params[f'blk{l}_inproj_b']
        q, k, v = qkv[..., :H], qkv[..., H:2 * H], qkv[..., 2 * H:]
        q4 = q.reshape(B, T, num_heads, hd)
        k4 = k.reshape(B, T, num_heads, hd)
        v4 = v.reshape(B, T, num_heads, hd)
        scores = jnp.einsum('ithd,jthd->thij', q4, k4) / math.sqrt(hd)
        probs = jax.nn.softmax(scores, axis=-1)
        o = jnp.einsum('thij,jthd->ithd', probs, v4).reshape(B, T, H)
        xx = xx + (o @ params[f'blk{l}_outproj_w'].T + params[f'blk{l}_outproj_b'])
        xx = ln(xx) * params[f'blk{l}_ln2_g'] + params[f'blk{l}_ln2_b']
        ffn = gelu(xx @ params[f'blk{l}_ff1_w'].T + params[f'blk{l}_ff1_b']) \
            @ params[f'blk{l}_ff2_w'].T + params[f'blk{l}_ff2_b']
        xc = xx + ffn
    y = xc @ params['out_w'][:, :, 0].T + params['out_b']
    return y.mean(axis=1), y


if __name__ == "__main__":
    B, T, Cin, H = 2, 16, 8, 32
    key = jax.random.PRNGKey(0)
    kx, ke, kp = jax.random.split(key, 3)
    x = jax.random.normal(kx, (B, T, Cin), dtype=jnp.float32)
    emotion_class = jax.random.randint(ke, (B, 1), 0, 5)          # (B, 1) emotion ids
    params = init_params(kp, Cin, H)
    prep = prepare_params(params, B=B, T=T)                       # one-time param re-layout

    fwd = jax.jit(lambda xx, ee: intensity_extractor_forward(xx, ee, prep, H=H))
    glob, frame = fwd(x, emotion_class)
    glob = jax.block_until_ready(glob)
    frame = jax.block_until_ready(frame)

    assert glob.shape == (B, H) and frame.shape == (B, T, H)

    g_ref, f_ref = reference_forward(x, emotion_class, params, H=H)
    assert jnp.allclose(glob, g_ref, atol=3e-2, rtol=3e-2), float(jnp.max(jnp.abs(glob - g_ref)))
    assert jnp.allclose(frame, f_ref, atol=3e-2, rtol=3e-2), float(jnp.max(jnp.abs(frame - f_ref)))

    print("KERNEL_OK")
</pallas_src>

<mosaic_0001>
module attributes {stable_mosaic.version = 11 : i64} {
  func.func @kernel(%arg0: memref<32x56xf32, #tpu.memory_space<vmem>>, %arg1: memref<2x32xf32, #tpu.memory_space<vmem>>, %arg2: memref<3x16x33xf32, #tpu.memory_space<vmem>>, %arg3: memref<32x4xf32, #tpu.memory_space<vmem>>, %arg4: memref<4x32xf32, #tpu.memory_space<vmem>>, %arg5: memref<2x32xf32, #tpu.memory_space<vmem>>, %arg6: memref<56x96xf32, #tpu.memory_space<vmem>>, %arg7: memref<1x96xf32, #tpu.memory_space<vmem>>, %arg8: memref<1x96xf32, #tpu.memory_space<vmem>>, %arg9: memref<1x96xf32, #tpu.memory_space<vmem>>, %arg10: memref<32x64xf32, #tpu.memory_space<vmem>>, %arg11: memref<1x64xf32, #tpu.memory_space<vmem>>, %arg12: memref<3x33x32xf32, #tpu.memory_space<vmem>>, %arg13: memref<3x1x32xf32, #tpu.memory_space<vmem>>, %arg14: memref<3x32x64xf32, #tpu.memory_space<vmem>>, %arg15: memref<3x1x64xf32, #tpu.memory_space<vmem>>, %arg16: memref<3x32x96xf32, #tpu.memory_space<vmem>>, %arg17: memref<3x1x96xf32, #tpu.memory_space<vmem>>, %arg18: memref<3x32x32xf32, #tpu.memory_space<vmem>>, %arg19: memref<3x1x32xf32, #tpu.memory_space<vmem>>, %arg20: memref<3x1x32xf32, #tpu.memory_space<vmem>>, %arg21: memref<3x1x32xf32, #tpu.memory_space<vmem>>, %arg22: memref<3x32x64xf32, #tpu.memory_space<vmem>>, %arg23: memref<3x1x64xf32, #tpu.memory_space<vmem>>, %arg24: memref<3x64x32xf32, #tpu.memory_space<vmem>>, %arg25: memref<3x1x32xf32, #tpu.memory_space<vmem>>, %arg26: memref<32x32xf32, #tpu.memory_space<vmem>>, %arg27: memref<1x32xf32, #tpu.memory_space<vmem>>, %arg28: memref<32x32xf32, #tpu.memory_space<vmem>>, %arg29: memref<2x32xf32, #tpu.memory_space<vmem>>) attributes {dimension_semantics = [], scalar_prefetch = 0 : i64, scratch_operands = 0 : i64, tpu.core_type = #tpu.core_type<tc>} {
    %c0 = arith.constant 0 : index
    %c0_0 = arith.constant 0 : index
    %0 = vector.load %arg1[%c0, %c0_0] : memref<2x32xf32, #tpu.memory_space<vmem>>, vector<2x32xf32>
    %c0_1 = arith.constant 0 : index
    %c0_2 = arith.constant 0 : index
    %1 = vector.load %arg3[%c0_1, %c0_2] : memref<32x4xf32, #tpu.memory_space<vmem>>, vector<32x4xf32>
    %c0_3 = arith.constant 0 : index
    %c0_4 = arith.constant 0 : index
    %2 = vector.load %arg4[%c0_3, %c0_4] : memref<4x32xf32, #tpu.memory_space<vmem>>, vector<4x32xf32>
    %c0_5 = arith.constant 0 : index
    %c0_6 = arith.constant 0 : index
    %3 = vector.load %arg0[%c0_5, %c0_6] : memref<32x56xf32, #tpu.memory_space<vmem>>, vector<32x56xf32>
    %c0_7 = arith.constant 0 : index
    %c0_8 = arith.constant 0 : index
    %4 = vector.load %arg6[%c0_7, %c0_8] : memref<56x96xf32, #tpu.memory_space<vmem>>, vector<56x96xf32>
    %cst = arith.constant dense<0.000000e+00> : vector<32x96xf32>
    %5 = tpu.matmul %3, %4, %cst {dimension_numbers = #tpu.dot_dimension_numbers<[1], [0], [0], [1], [0, 0, 1, 1], [], []>} : vector<32x56xf32>, vector<56x96xf32>, vector<32x96xf32> -> vector<32x96xf32>
    %c0_9 = arith.constant 0 : index
    %c0_10 = arith.constant 0 : index
    %6 = vector.load %arg7[%c0_9, %c0_10] : memref<1x96xf32, #tpu.memory_space<vmem>>, vector<1x96xf32>
    %7 = vector.broadcast %6 : vector<1x96xf32> to vector<32x96xf32>
    %8 = arith.addf %5, %7 : vector<32x96xf32>
    %cst_11 = arith.constant dense<0.000000e+00> : vector<96xf32>
    %9 = vector.multi_reduction <add>, %8, %cst_11 [0] : vector<32x96xf32> to vector<96xf32>
    %10 = vector.shape_cast %9 : vector<96xf32> to vector<1x96xf32>
    %cst_12 = arith.constant 3.200000e+01 : f32
    %11 = vector.broadcast %cst_12 : f32 to vector<1x96xf32>
    %12 = arith.divf %10, %11 : vector<1x96xf32>
    %13 = vector.broadcast %12 : vector<1x96xf32> to vector<32x96xf32>
    %14 = arith.subf %8, %13 : vector<32x96xf32>
    %15 = arith.mulf %14, %14 : vector<32x96xf32>
    %cst_13 = arith.constant dense<0.000000e+00> : vector<96xf32>
    %16 = vector.multi_reduction <add>, %15, %cst_13 [0] : vector<32x96xf32> to vector<96xf32>
    %17 = vector.shape_cast %16 : vector<96xf32> to vector<1x96xf32>
    %cst_14 = arith.constant 3.200000e+01 : f32
    %18 = vector.broadcast %cst_14 : f32 to vector<1x96xf32>
    %19 = arith.divf %17, %18 : vector<1x96xf32>
    %20 = vector.broadcast %12 : vector<1x96xf32> to vector<32x96xf32>
    %21 = arith.subf %8, %20 : vector<32x96xf32>
    %cst_15 = arith.constant 9.99999974E-6 : f32
    %22 = vector.broadcast %cst_15 : f32 to vector<1x96xf32>
    %23 = arith.addf %19, %22 : vector<1x96xf32>
    %24 = math.rsqrt %23 : vector<1x96xf32>
    %25 = vector.broadcast %24 : vector<1x96xf32> to vector<32x96xf32>
    %26 = arith.mulf %21, %25 : vector<32x96xf32>
    %c0_16 = arith.constant 0 : index
    %c0_17 = arith.constant 0 : index
    %27 = vector.load %arg8[%c0_16, %c0_17] : memref<1x96xf32, #tpu.memory_space<vmem>>, vector<1x96xf32>
    %28 = vector.broadcast %27 : vector<1x96xf32> to vector<32x96xf32>
    %29 = arith.mulf %26, %28 : vector<32x96xf32>
    %c0_18 = arith.constant 0 : index
    %c0_19 = arith.constant 0 : index
    %30 = vector.load %arg9[%c0_18, %c0_19] : memref<1x96xf32, #tpu.memory_space<vmem>>, vector<1x96xf32>
    %31 = vector.broadcast %30 : vector<1x96xf32> to vector<32x96xf32>
    %32 = arith.addf %29, %31 : vector<32x96xf32>
    %cst_20 = arith.constant 0.000000e+00 : f32
    %33 = vector.broadcast %cst_20 : f32 to vector<32x96xf32>
    %34 = arith.maximumf %32, %33 : vector<32x96xf32>
    %35 = vector.extract_strided_slice %34 {offsets = [0, 0], sizes = [32, 32], strides = [1, 1]} : vector<32x96xf32> to vector<32x32xf32>
    %36 = vector.extract_strided_slice %34 {offsets = [0, 32], sizes = [32, 32], strides = [1, 1]} : vector<32x96xf32> to vector<32x32xf32>
    %37 = arith.addf %35, %36 : vector<32x32xf32>
    %38 = vector.extract_strided_slice %34 {offsets = [0, 64], sizes = [32, 32], strides = [1, 1]} : vector<32x96xf32> to vector<32x32xf32>
    %39 = arith.addf %37, %38 : vector<32x32xf32>
    %c0_21 = arith.constant 0 : index
    %c0_22 = arith.constant 0 : index
    %40 = vector.load %arg10[%c0_21, %c0_22] : memref<32x64xf32, #tpu.memory_space<vmem>>, vector<32x64xf32>
    %cst_23 = arith.constant dense<0.000000e+00> : vector<2x64xf32>
    %41 = tpu.matmul %0, %40, %cst_23 {dimension_numbers = #tpu.dot_dimension_numbers<[1], [0], [0], [1], [0, 0, 1, 1], [], []>} : vector<2x32xf32>, vector<32x64xf32>, vector<2x64xf32> -> vector<2x64xf32>
    %c0_24 = arith.constant 0 : index
    %c0_25 = arith.constant 0 : index
    %42 = vector.load %arg11[%c0_24, %c0_25] : memref<1x64xf32, #tpu.memory_space<vmem>>, vector<1x64xf32>
    %43 = vector.broadcast %42 : vector<1x64xf32> to vector<2x64xf32>
    %44 = arith.addf %41, %43 : vector<2x64xf32>
    %45 = vector.extract_strided_slice %44 {offsets = [0, 0], sizes = [2, 32], strides = [1, 1]} : vector<2x64xf32> to vector<2x32xf32>
    %46 = vector.shape_cast %45 : vector<2x32xf32> to vector<2x1x32xf32>
    %47 = vector.shape_cast %46 : vector<2x1x32xf32> to vector<2x1x32xf32>
    %48 = vector.broadcast %47 : vector<2x1x32xf32> to vector<2x16x32xf32>
    %49 = vector.shape_cast %48 : vector<2x16x32xf32> to vector<32x32xf32>
    %50 = vector.extract_strided_slice %44 {offsets = [0, 32], sizes = [2, 32], strides = [1, 1]} : vector<2x64xf32> to vector<2x32xf32>
    %51 = vector.shape_cast %50 : vector<2x32xf32> to vector<2x1x32xf32>
    %52 = vector.shape_cast %51 : vector<2x1x32xf32> to vector<2x1x32xf32>
    %53 = vector.broadcast %52 : vector<2x1x32xf32> to vector<2x16x32xf32>
    %54 = vector.shape_cast %53 : vector<2x16x32xf32> to vector<32x32xf32>
    %cst_26 = arith.constant 1.000000e+00 : f32
    %55 = vector.broadcast %cst_26 : f32 to vector<32x32xf32>
    %56 = arith.addf %55, %49 : vector<32x32xf32>
    %cst_27 = arith.constant dense<0.000000e+00> : vector<32xf32>
    %57 = vector.multi_reduction <add>, %39, %cst_27 [1] : vector<32x32xf32> to vector<32xf32>
    %58 = vector.shape_cast %57 : vector<32xf32> to vector<32x1xf32>
    %cst_28 = arith.constant 3.200000e+01 : f32
    %59 = vector.broadcast %cst_28 : f32 to vector<32x1xf32>
    %60 = arith.divf %58, %59 : vector<32x1xf32>
    %61 = vector.broadcast %60 : vector<32x1xf32> to vector<32x32xf32>
    %62 = arith.subf %39, %61 : vector<32x32xf32>
    %63 = arith.mulf %62, %62 : vector<32x32xf32>
    %cst_29 = arith.constant dense<0.000000e+00> : vector<32xf32>
    %64 = vector.multi_reduction <add>, %63, %cst_29 [1] : vector<32x32xf32> to vector<32xf32>
    %65 = vector.shape_cast %64 : vector<32xf32> to vector<32x1xf32>
    %cst_30 = arith.constant 3.200000e+01 : f32
    %66 = vector.broadcast %cst_30 : f32 to vector<32x1xf32>
    %67 = arith.divf %65, %66 : vector<32x1xf32>
    %68 = vector.broadcast %60 : vector<32x1xf32> to vector<32x32xf32>
    %69 = arith.subf %39, %68 : vector<32x32xf32>
    %cst_31 = arith.constant 9.99999974E-6 : f32
    %70 = vector.broadcast %cst_31 : f32 to vector<32x1xf32>
    %71 = arith.addf %67, %70 : vector<32x1xf32>
    %72 = math.rsqrt %71 : vector<32x1xf32>
    %73 = vector.broadcast %72 : vector<32x1xf32> to vector<32x32xf32>
    %74 = arith.mulf %69, %73 : vector<32x32xf32>
    %75 = arith.mulf %56, %74 : vector<32x32xf32>
    %76 = arith.addf %75, %54 : vector<32x32xf32>
    %77 = vector.shape_cast %0 : vector<2x32xf32> to vector<2x1x32xf32>
    %78 = vector.shape_cast %77 : vector<2x1x32xf32> to vector<2x1x32xf32>
    %79 = vector.broadcast %78 : vector<2x1x32xf32> to vector<2x16x32xf32>
    %80 = vector.shape_cast %79 : vector<2x16x32xf32> to vector<32x32xf32>
    %c0_32 = arith.constant 0 : index
    %c0_33 = arith.constant 0 : index
    %c0_34 = arith.constant 0 : index
    %81 = vector.load %arg2[%c0_32, %c0_33, %c0_34] : memref<3x16x33xf32, #tpu.memory_space<vmem>>, vector<1x16x33xf32>
    %82 = vector.shape_cast %81 : vector<1x16x33xf32> to vector<16x33xf32>
    %c0_35 = arith.constant 0 : index
    %c0_36 = arith.constant 0 : index
    %c0_37 = arith.constant 0 : index
    %83 = vector.load %arg12[%c0_35, %c0_36, %c0_37] : memref<3x33x32xf32, #tpu.memory_space<vmem>>, vector<1x33x32xf32>
    %84 = vector.shape_cast %83 : vector<1x33x32xf32> to vector<33x32xf32>
    %cst_38 = arith.constant dense<0.000000e+00> : vector<16x32xf32>
    %85 = tpu.matmul %82, %84, %cst_38 {dimension_numbers = #tpu.dot_dimension_numbers<[1], [0], [0], [1], [0, 0, 1, 1], [], []>} : vector<16x33xf32>, vector<33x32xf32>, vector<16x32xf32> -> vector<16x32xf32>
    %c0_39 = arith.constant 0 : index
    %c0_40 = arith.constant 0 : index
    %c0_41 = arith.constant 0 : index
    %86 = vector.load %arg13[%c0_39, %c0_40, %c0_41] : memref<3x1x32xf32, #tpu.memory_space<vmem>>, vector<1x1x32xf32>
    %87 = vector.shape_cast %86 : vector<1x1x32xf32> to vector<1x32xf32>
    %88 = vector.broadcast %87 : vector<1x32xf32> to vector<16x32xf32>
    %89 = arith.addf %85, %88 : vector<16x32xf32>
    %cst_42 = arith.constant 5.000000e-01 : f32
    %90 = vector.broadcast %cst_42 : f32 to vector<16x32xf32>
    %91 = arith.mulf %90, %89 : vector<16x32xf32>
    %cst_43 = arith.constant 0.707106769 : f32
    %92 = vector.broadcast %cst_43 : f32 to vector<16x32xf32>
    %93 = arith.mulf %89, %92 : vector<16x32xf32>
    %cst_44 = arith.constant 0.000000e+00 : f32
    %94 = vector.broadcast %cst_44 : f32 to vector<16x32xf32>
    %95 = arith.cmpf oge, %93, %94 : vector<16x32xf32>
    %cst_45 = arith.constant 1.000000e+00 : f32
    %cst_46 = arith.constant -1.000000e+00 : f32
    %96 = vector.broadcast %cst_45 : f32 to vector<16x32xf32>
    %97 = vector.broadcast %cst_46 : f32 to vector<16x32xf32>
    %98 = arith.select %95, %96, %97 : vector<16x32xi1>, vector<16x32xf32>
    %99 = math.absf %93 : vector<16x32xf32>
    %cst_47 = arith.constant 0.327591091 : f32
    %100 = vector.broadcast %cst_47 : f32 to vector<16x32xf32>
    %101 = arith.mulf %100, %99 : vector<16x32xf32>
    %cst_48 = arith.constant 1.000000e+00 : f32
    %102 = vector.broadcast %cst_48 : f32 to vector<16x32xf32>
    %103 = arith.addf %102, %101 : vector<16x32xf32>
    %cst_49 = arith.constant 1.000000e+00 : f32
    %104 = vector.broadcast %cst_49 : f32 to vector<16x32xf32>
    %105 = arith.divf %104, %103 : vector<16x32xf32>
    %cst_50 = arith.constant 1.06140542 : f32
    %106 = vector.broadcast %cst_50 : f32 to vector<16x32xf32>
    %107 = arith.mulf %106, %105 : vector<16x32xf32>
    %cst_51 = arith.constant -1.45315206 : f32
    %108 = vector.broadcast %cst_51 : f32 to vector<16x32xf32>
    %109 = arith.addf %107, %108 : vector<16x32xf32>
    %110 = arith.mulf %109, %105 : vector<16x32xf32>
    %cst_52 = arith.constant 1.42141378 : f32
    %111 = vector.broadcast %cst_52 : f32 to vector<16x32xf32>
    %112 = arith.addf %110, %111 : vector<16x32xf32>
    %113 = arith.mulf %112, %105 : vector<16x32xf32>
    %cst_53 = arith.constant -0.284496725 : f32
    %114 = vector.broadcast %cst_53 : f32 to vector<16x32xf32>
    %115 = arith.addf %113, %114 : vector<16x32xf32>
    %116 = arith.mulf %115, %105 : vector<16x32xf32>
    %cst_54 = arith.constant 0.254829586 : f32
    %117 = vector.broadcast %cst_54 : f32 to vector<16x32xf32>
    %118 = arith.addf %116, %117 : vector<16x32xf32>
    %119 = arith.mulf %118, %105 : vector<16x32xf32>
    %cst_55 = arith.constant 0.000000e+00 : f32
    %120 = vector.broadcast %cst_55 : f32 to vector<16x32xf32>
    %121 = arith.subf %120, %99 : vector<16x32xf32>
    %122 = arith.mulf %121, %99 : vector<16x32xf32>
    %123 = math.exp %122 : vector<16x32xf32>
    %124 = arith.mulf %119, %123 : vector<16x32xf32>
    %cst_56 = arith.constant 1.000000e+00 : f32
    %125 = vector.broadcast %cst_56 : f32 to vector<16x32xf32>
    %126 = arith.subf %125, %124 : vector<16x32xf32>
    %127 = arith.mulf %98, %126 : vector<16x32xf32>
    %cst_57 = arith.constant 1.000000e+00 : f32
    %128 = vector.broadcast %cst_57 : f32 to vector<16x32xf32>
    %129 = arith.addf %128, %127 : vector<16x32xf32>
    %130 = arith.mulf %91, %129 : vector<16x32xf32>
    %131 = arith.addf %76, %80 : vector<32x32xf32>
    %132 = vector.shape_cast %130 : vector<16x32xf32> to vector<1x16x32xf32>
    %133 = vector.shape_cast %132 : vector<1x16x32xf32> to vector<1x16x32xf32>
    %134 = vector.broadcast %133 : vector<1x16x32xf32> to vector<2x16x32xf32>
    %135 = vector.shape_cast %134 : vector<2x16x32xf32> to vector<32x32xf32>
    %136 = arith.addf %131, %135 : vector<32x32xf32>
    %c0_58 = arith.constant 0 : index
    %c0_59 = arith.constant 0 : index
    %c0_60 = arith.constant 0 : index
    %137 = vector.load %arg14[%c0_58, %c0_59, %c0_60] : memref<3x32x64xf32, #tpu.memory_space<vmem>>, vector<1x32x64xf32>
    %138 = vector.shape_cast %137 : vector<1x32x64xf32> to vector<32x64xf32>
    %cst_61 = arith.constant dense<0.000000e+00> : vector<2x64xf32>
    %139 = tpu.matmul %0, %138, %cst_61 {dimension_numbers = #tpu.dot_dimension_numbers<[1], [0], [0], [1], [0, 0, 1, 1], [], []>} : vector<2x32xf32>, vector<32x64xf32>, vector<2x64xf32> -> vector<2x64xf32>
    %c0_62 = arith.constant 0 : index
    %c0_63 = arith.constant 0 : index
    %c0_64 = arith.constant 0 : index
    %140 = vector.load %arg15[%c0_62, %c0_63, %c0_64] : memref<3x1x64xf32, #tpu.memory_space<vmem>>, vector<1x1x64xf32>
    %141 = vector.shape_cast %140 : vector<1x1x64xf32> to vector<1x64xf32>
    %142 = vector.broadcast %141 : vector<1x64xf32> to vector<2x64xf32>
    %143 = arith.addf %139, %142 : vector<2x64xf32>
    %144 = vector.extract_strided_slice %143 {offsets = [0, 0], sizes = [2, 32], strides = [1, 1]} : vector<2x64xf32> to vector<2x32xf32>
    %145 = vector.shape_cast %144 : vector<2x32xf32> to vector<2x1x32xf32>
    %146 = vector.shape_cast %145 : vector<2x1x32xf32> to vector<2x1x32xf32>
    %147 = vector.broadcast %146 : vector<2x1x32xf32> to vector<2x16x32xf32>
    %148 = vector.shape_cast %147 : vector<2x16x32xf32> to vector<32x32xf32>
    %149 = vector.extract_strided_slice %143 {offsets = [0, 32], sizes = [2, 32], strides = [1, 1]} : vector<2x64xf32> to vector<2x32xf32>
    %150 = vector.shape_cast %149 : vector<2x32xf32> to vector<2x1x32xf32>
    %151 = vector.shape_cast %150 : vector<2x1x32xf32> to vector<2x1x32xf32>
    %152 = vector.broadcast %151 : vector<2x1x32xf32> to vector<2x16x32xf32>
    %153 = vector.shape_cast %152 : vector<2x16x32xf32> to vector<32x32xf32>
    %cst_65 = arith.constant 1.000000e+00 : f32
    %154 = vector.broadcast %cst_65 : f32 to vector<32x32xf32>
    %155 = arith.addf %154, %148 : vector<32x32xf32>
    %cst_66 = arith.constant dense<0.000000e+00> : vector<32xf32>
    %156 = vector.multi_reduction <add>, %136, %cst_66 [1] : vector<32x32xf32> to vector<32xf32>
    %157 = vector.shape_cast %156 : vector<32xf32> to vector<32x1xf32>
    %cst_67 = arith.constant 3.200000e+01 : f32
    %158 = vector.broadcast %cst_67 : f32 to vector<32x1xf32>
    %159 = arith.divf %157, %158 : vector<32x1xf32>
    %160 = vector.broadcast %159 : vector<32x1xf32> to vector<32x32xf32>
    %161 = arith.subf %136, %160 : vector<32x32xf32>
    %162 = arith.mulf %161, %161 : vector<32x32xf32>
    %cst_68 = arith.constant dense<0.000000e+00> : vector<32xf32>
    %163 = vector.multi_reduction <add>, %162, %cst_68 [1] : vector<32x32xf32> to vector<32xf32>
    %164 = vector.shape_cast %163 : vector<32xf32> to vector<32x1xf32>
    %cst_69 = arith.constant 3.200000e+01 : f32
    %165 = vector.broadcast %cst_69 : f32 to vector<32x1xf32>
    %166 = arith.divf %164, %165 : vector<32x1xf32>
    %167 = vector.broadcast %159 : vector<32x1xf32> to vector<32x32xf32>
    %168 = arith.subf %136, %167 : vector<32x32xf32>
    %cst_70 = arith.constant 9.99999974E-6 : f32
    %169 = vector.broadcast %cst_70 : f32 to vector<32x1xf32>
    %170 = arith.addf %166, %169 : vector<32x1xf32>
    %171 = math.rsqrt %170 : vector<32x1xf32>
    %172 = vector.broadcast %171 : vector<32x1xf32> to vector<32x32xf32>
    %173 = arith.mulf %168, %172 : vector<32x32xf32>
    %174 = arith.mulf %155, %173 : vector<32x32xf32>
    %175 = arith.addf %174, %153 : vector<32x32xf32>
    %c0_71 = arith.constant 0 : index
    %c0_72 = arith.constant 0 : index
    %c0_73 = arith.constant 0 : index
    %176 = vector.load %arg16[%c0_71, %c0_72, %c0_73] : memref<3x32x96xf32, #tpu.memory_space<vmem>>, vector<1x32x96xf32>
    %177 = vector.shape_cast %176 : vector<1x32x96xf32> to vector<32x96xf32>
    %cst_74 = arith.constant dense<0.000000e+00> : vector<32x96xf32>
    %178 = tpu.matmul %175, %177, %cst_74 {dimension_numbers = #tpu.dot_dimension_numbers<[1], [0], [0], [1], [0, 0, 1, 1], [], []>} : vector<32x32xf32>, vector<32x96xf32>, vector<32x96xf32> -> vector<32x96xf32>
    %c0_75 = arith.constant 0 : index
    %c0_76 = arith.constant 0 : index
    %c0_77 = arith.constant 0 : index
    %179 = vector.load %arg17[%c0_75, %c0_76, %c0_77] : memref<3x1x96xf32, #tpu.memory_space<vmem>>, vector<1x1x96xf32>
    %180 = vector.shape_cast %179 : vector<1x1x96xf32> to vector<1x96xf32>
    %181 = vector.broadcast %180 : vector<1x96xf32> to vector<32x96xf32>
    %182 = arith.addf %178, %181 : vector<32x96xf32>
    %183 = vector.extract_strided_slice %182 {offsets = [0, 0], sizes = [32, 32], strides = [1, 1]} : vector<32x96xf32> to vector<32x32xf32>
    %184 = vector.extract_strided_slice %182 {offsets = [0, 32], sizes = [32, 32], strides = [1, 1]} : vector<32x96xf32> to vector<32x32xf32>
    %185 = vector.extract_strided_slice %182 {offsets = [0, 64], sizes = [32, 32], strides = [1, 1]} : vector<32x96xf32> to vector<32x32xf32>
    %186 = vector.extract_strided_slice %184 {offsets = [0, 0], sizes = [16, 32], strides = [1, 1]} : vector<32x32xf32> to vector<16x32xf32>
    %187 = vector.shape_cast %186 : vector<16x32xf32> to vector<1x16x32xf32>
    %188 = vector.shape_cast %187 : vector<1x16x32xf32> to vector<1x16x32xf32>
    %189 = vector.broadcast %188 : vector<1x16x32xf32> to vector<2x16x32xf32>
    %190 = vector.shape_cast %189 : vector<2x16x32xf32> to vector<32x32xf32>
    %191 = arith.mulf %183, %190 : vector<32x32xf32>
    %cst_78 = arith.constant dense<0.000000e+00> : vector<32x4xf32>
    %192 = tpu.matmul %191, %1, %cst_78 {dimension_numbers = #tpu.dot_dimension_numbers<[1], [0], [0], [1], [0, 0, 1, 1], [], []>} : vector<32x32xf32>, vector<32x4xf32>, vector<32x4xf32> -> vector<32x4xf32>
    %cst_79 = arith.constant 0.353553385 : f32
    %193 = vector.broadcast %cst_79 : f32 to vector<32x4xf32>
    %194 = arith.mulf %193, %192 : vector<32x4xf32>
    %195 = vector.extract_strided_slice %184 {offsets = [16, 0], sizes = [16, 32], strides = [1, 1]} : vector<32x32xf32> to vector<16x32xf32>
    %196 = vector.shape_cast %195 : vector<16x32xf32> to vector<1x16x32xf32>
    %197 = vector.shape_cast %196 : vector<1x16x32xf32> to vector<1x16x32xf32>
    %198 = vector.broadcast %197 : vector<1x16x32xf32> to vector<2x16x32xf32>
    %199 = vector.shape_cast %198 : vector<2x16x32xf32> to vector<32x32xf32>
    %200 = arith.mulf %183, %199 : vector<32x32xf32>
    %cst_80 = arith.constant dense<0.000000e+00> : vector<32x4xf32>
    %201 = tpu.matmul %200, %1, %cst_80 {dimension_numbers = #tpu.dot_dimension_numbers<[1], [0], [0], [1], [0, 0, 1, 1], [], []>} : vector<32x32xf32>, vector<32x4xf32>, vector<32x4xf32> -> vector<32x4xf32>
    %cst_81 = arith.constant 0.353553385 : f32
    %202 = vector.broadcast %cst_81 : f32 to vector<32x4xf32>
    %203 = arith.mulf %202, %201 : vector<32x4xf32>
    %204 = arith.maximumf %194, %203 : vector<32x4xf32>
    %205 = arith.subf %194, %204 : vector<32x4xf32>
    %206 = math.exp %205 : vector<32x4xf32>
    %207 = arith.subf %203, %204 : vector<32x4xf32>
    %208 = math.exp %207 : vector<32x4xf32>
    %209 = arith.addf %206, %208 : vector<32x4xf32>
    %210 = tpu.reciprocal %209 {approx = true} : vector<32x4xf32> -> vector<32x4xf32>
    %211 = arith.mulf %206, %210 : vector<32x4xf32>
    %cst_82 = arith.constant dense<0.000000e+00> : vector<32x32xf32>
    %212 = tpu.matmul %211, %2, %cst_82 {dimension_numbers = #tpu.dot_dimension_numbers<[1], [0], [0], [1], [0, 0, 1, 1], [], []>} : vector<32x4xf32>, vector<4x32xf32>, vector<32x32xf32> -> vector<32x32xf32>
    %213 = vector.extract_strided_slice %185 {offsets = [0, 0], sizes = [16, 32], strides = [1, 1]} : vector<32x32xf32> to vector<16x32xf32>
    %214 = vector.shape_cast %213 : vector<16x32xf32> to vector<1x16x32xf32>
    %215 = vector.shape_cast %214 : vector<1x16x32xf32> to vector<1x16x32xf32>
    %216 = vector.broadcast %215 : vector<1x16x32xf32> to vector<2x16x32xf32>
    %217 = vector.shape_cast %216 : vector<2x16x32xf32> to vector<32x32xf32>
    %218 = arith.mulf %212, %217 : vector<32x32xf32>
    %219 = arith.mulf %208, %210 : vector<32x4xf32>
    %cst_83 = arith.constant dense<0.000000e+00> : vector<32x32xf32>
    %220 = tpu.matmul %219, %2, %cst_83 {dimension_numbers = #tpu.dot_dimension_numbers<[1], [0], [0], [1], [0, 0, 1, 1], [], []>} : vector<32x4xf32>, vector<4x32xf32>, vector<32x32xf32> -> vector<32x32xf32>
    %221 = vector.extract_strided_slice %185 {offsets = [16, 0], sizes = [16, 32], strides = [1, 1]} : vector<32x32xf32> to vector<16x32xf32>
    %222 = vector.shape_cast %221 : vector<16x32xf32> to vector<1x16x32xf32>
    %223 = vector.shape_cast %222 : vector<1x16x32xf32> to vector<1x16x32xf32>
    %224 = vector.broadcast %223 : vector<1x16x32xf32> to vector<2x16x32xf32>
    %225 = vector.shape_cast %224 : vector<2x16x32xf32> to vector<32x32xf32>
    %226 = arith.mulf %220, %225 : vector<32x32xf32>
    %227 = arith.addf %218, %226 : vector<32x32xf32>
    %c0_84 = arith.constant 0 : index
    %c0_85 = arith.constant 0 : index
    %c0_86 = arith.constant 0 : index
    %228 = vector.load %arg18[%c0_84, %c0_85, %c0_86] : memref<3x32x32xf32, #tpu.memory_space<vmem>>, vector<1x32x32xf32>
    %229 = vector.shape_cast %228 : vector<1x32x32xf32> to vector<32x32xf32>
    %cst_87 = arith.constant dense<0.000000e+00> : vector<32x32xf32>
    %230 = tpu.matmul %227, %229, %cst_87 {dimension_numbers = #tpu.dot_dimension_numbers<[1], [0], [0], [1], [0, 0, 1, 1], [], []>} : vector<32x32xf32>, vector<32x32xf32>, vector<32x32xf32> -> vector<32x32xf32>
    %c0_88 = arith.constant 0 : index
    %c0_89 = arith.constant 0 : index
    %c0_90 = arith.constant 0 : index
    %231 = vector.load %arg19[%c0_88, %c0_89, %c0_90] : memref<3x1x32xf32, #tpu.memory_space<vmem>>, vector<1x1x32xf32>
    %232 = vector.shape_cast %231 : vector<1x1x32xf32> to vector<1x32xf32>
    %233 = vector.broadcast %232 : vector<1x32xf32> to vector<32x32xf32>
    %234 = arith.addf %230, %233 : vector<32x32xf32>
    %235 = arith.addf %175, %234 : vector<32x32xf32>
    %cst_91 = arith.constant dense<0.000000e+00> : vector<32xf32>
    %236 = vector.multi_reduction <add>, %235, %cst_91 [1] : vector<32x32xf32> to vector<32xf32>
    %237 = vector.shape_cast %236 : vector<32xf32> to vector<32x1xf32>
    %cst_92 = arith.constant 3.200000e+01 : f32
    %238 = vector.broadcast %cst_92 : f32 to vector<32x1xf32>
    %239 = arith.divf %237, %238 : vector<32x1xf32>
    %240 = vector.broadcast %239 : vector<32x1xf32> to vector<32x32xf32>
    %241 = arith.subf %235, %240 : vector<32x32xf32>
    %242 = arith.mulf %241, %241 : vector<32x32xf32>
    %cst_93 = arith.constant dense<0.000000e+00> : vector<32xf32>
    %243 = vector.multi_reduction <add>, %242, %cst_93 [1] : vector<32x32xf32> to vector<32xf32>
    %244 = vector.shape_cast %243 : vector<32xf32> to vector<32x1xf32>
    %cst_94 = arith.constant 3.200000e+01 : f32
    %245 = vector.broadcast %cst_94 : f32 to vector<32x1xf32>
    %246 = arith.divf %244, %245 : vector<32x1xf32>
    %247 = vector.broadcast %239 : vector<32x1xf32> to vector<32x32xf32>
    %248 = arith.subf %235, %247 : vector<32x32xf32>
    %cst_95 = arith.constant 9.99999974E-6 : f32
    %249 = vector.broadcast %cst_95 : f32 to vector<32x1xf32>
    %250 = arith.addf %246, %249 : vector<32x1xf32>
    %251 = math.rsqrt %250 : vector<32x1xf32>
    %252 = vector.broadcast %251 : vector<32x1xf32> to vector<32x32xf32>
    %253 = arith.mulf %248, %252 : vector<32x32xf32>
    %c0_96 = arith.constant 0 : index
    %c0_97 = arith.constant 0 : index
    %c0_98 = arith.constant 0 : index
    %254 = vector.load %arg20[%c0_96, %c0_97, %c0_98] : memref<3x1x32xf32, #tpu.memory_space<vmem>>, vector<1x1x32xf32>
    %255 = vector.shape_cast %254 : vector<1x1x32xf32> to vector<1x32xf32>
    %256 = vector.broadcast %255 : vector<1x32xf32> to vector<32x32xf32>
    %257 = arith.mulf %253, %256 : vector<32x32xf32>
    %c0_99 = arith.constant 0 : index
    %c0_100 = arith.constant 0 : index
    %c0_101 = arith.constant 0 : index
    %258 = vector.load %arg21[%c0_99, %c0_100, %c0_101] : memref<3x1x32xf32, #tpu.memory_space<vmem>>, vector<1x1x32xf32>
    %259 = vector.shape_cast %258 : vector<1x1x32xf32> to vector<1x32xf32>
    %260 = vector.broadcast %259 : vector<1x32xf32> to vector<32x32xf32>
    %261 = arith.addf %257, %260 : vector<32x32xf32>
    %c0_102 = arith.constant 0 : index
    %c0_103 = arith.constant 0 : index
    %c0_104 = arith.constant 0 : index
    %262 = vector.load %arg22[%c0_102, %c0_103, %c0_104] : memref<3x32x64xf32, #tpu.memory_space<vmem>>, vector<1x32x64xf32>
    %263 = vector.shape_cast %262 : vector<1x32x64xf32> to vector<32x64xf32>
    %cst_105 = arith.constant dense<0.000000e+00> : vector<32x64xf32>
    %264 = tpu.matmul %261, %263, %cst_105 {dimension_numbers = #tpu.dot_dimension_numbers<[1], [0], [0], [1], [0, 0, 1, 1], [], []>} : vector<32x32xf32>, vector<32x64xf32>, vector<32x64xf32> -> vector<32x64xf32>
    %c0_106 = arith.constant 0 : index
    %c0_107 = arith.constant 0 : index
    %c0_108 = arith.constant 0 : index
    %265 = vector.load %arg23[%c0_106, %c0_107, %c0_108] : memref<3x1x64xf32, #tpu.memory_space<vmem>>, vector<1x1x64xf32>
    %266 = vector.shape_cast %265 : vector<1x1x64xf32> to vector<1x64xf32>
    %267 = vector.broadcast %266 : vector<1x64xf32> to vector<32x64xf32>
    %268 = arith.addf %264, %267 : vector<32x64xf32>
    %cst_109 = arith.constant 5.000000e-01 : f32
    %269 = vector.broadcast %cst_109 : f32 to vector<32x64xf32>
    %270 = arith.mulf %269, %268 : vector<32x64xf32>
    %cst_110 = arith.constant 0.707106769 : f32
    %271 = vector.broadcast %cst_110 : f32 to vector<32x64xf32>
    %272 = arith.mulf %268, %271 : vector<32x64xf32>
    %cst_111 = arith.constant 0.000000e+00 : f32
    %273 = vector.broadcast %cst_111 : f32 to vector<32x64xf32>
    %274 = arith.cmpf oge, %272, %273 : vector<32x64xf32>
    %cst_112 = arith.constant 1.000000e+00 : f32
    %cst_113 = arith.constant -1.000000e+00 : f32
    %275 = vector.broadcast %cst_112 : f32 to vector<32x64xf32>
    %276 = vector.broadcast %cst_113 : f32 to vector<32x64xf32>
    %277 = arith.select %274, %275, %276 : vector<32x64xi1>, vector<32x64xf32>
    %278 = math.absf %272 : vector<32x64xf32>
    %cst_114 = arith.constant 0.327591091 : f32
    %279 = vector.broadcast %cst_114 : f32 to vector<32x64xf32>
    %280 = arith.mulf %279, %278 : vector<32x64xf32>
    %cst_115 = arith.constant 1.000000e+00 : f32
    %281 = vector.broadcast %cst_115 : f32 to vector<32x64xf32>
    %282 = arith.addf %281, %280 : vector<32x64xf32>
    %cst_116 = arith.constant 1.000000e+00 : f32
    %283 = vector.broadcast %cst_116 : f32 to vector<32x64xf32>
    %284 = arith.divf %283, %282 : vector<32x64xf32>
    %cst_117 = arith.constant 1.06140542 : f32
    %285 = vector.broadcast %cst_117 : f32 to vector<32x64xf32>
    %286 = arith.mulf %285, %284 : vector<32x64xf32>
    %cst_118 = arith.constant -1.45315206 : f32
    %287 = vector.broadcast %cst_118 : f32 to vector<32x64xf32>
    %288 = arith.addf %286, %287 : vector<32x64xf32>
    %289 = arith.mulf %288, %284 : vector<32x64xf32>
    %cst_119 = arith.constant 1.42141378 : f32
    %290 = vector.broadcast %cst_119 : f32 to vector<32x64xf32>
    %291 = arith.addf %289, %290 : vector<32x64xf32>
    %292 = arith.mulf %291, %284 : vector<32x64xf32>
    %cst_120 = arith.constant -0.284496725 : f32
    %293 = vector.broadcast %cst_120 : f32 to vector<32x64xf32>
    %294 = arith.addf %292, %293 : vector<32x64xf32>
    %295 = arith.mulf %294, %284 : vector<32x64xf32>
    %cst_121 = arith.constant 0.254829586 : f32
    %296 = vector.broadcast %cst_121 : f32 to vector<32x64xf32>
    %297 = arith.addf %295, %296 : vector<32x64xf32>
    %298 = arith.mulf %297, %284 : vector<32x64xf32>
    %cst_122 = arith.constant 0.000000e+00 : f32
    %299 = vector.broadcast %cst_122 : f32 to vector<32x64xf32>
    %300 = arith.subf %299, %278 : vector<32x64xf32>
    %301 = arith.mulf %300, %278 : vector<32x64xf32>
    %302 = math.exp %301 : vector<32x64xf32>
    %303 = arith.mulf %298, %302 : vector<32x64xf32>
    %cst_123 = arith.constant 1.000000e+00 : f32
    %304 = vector.broadcast %cst_123 : f32 to vector<32x64xf32>
    %305 = arith.subf %304, %303 : vector<32x64xf32>
    %306 = arith.mulf %277, %305 : vector<32x64xf32>
    %cst_124 = arith.constant 1.000000e+00 : f32
    %307 = vector.broadcast %cst_124 : f32 to vector<32x64xf32>
    %308 = arith.addf %307, %306 : vector<32x64xf32>
    %309 = arith.mulf %270, %308 : vector<32x64xf32>
    %c0_125 = arith.constant 0 : index
    %c0_126 = arith.constant 0 : index
    %c0_127 = arith.constant 0 : index
    %310 = vector.load %arg24[%c0_125, %c0_126, %c0_127] : memref<3x64x32xf32, #tpu.memory_space<vmem>>, vector<1x64x32xf32>
    %311 = vector.shape_cast %310 : vector<1x64x32xf32> to vector<64x32xf32>
    %cst_128 = arith.constant dense<0.000000e+00> : vector<32x32xf32>
    %312 = tpu.matmul %309, %311, %cst_128 {dimension_numbers = #tpu.dot_dimension_numbers<[1], [0], [0], [1], [0, 0, 1, 1], [], []>} : vector<32x64xf32>, vector<64x32xf32>, vector<32x32xf32> -> vector<32x32xf32>
    %313 = arith.addf %261, %312 : vector<32x32xf32>
    %c0_129 = arith.constant 0 : index
    %c0_130 = arith.constant 0 : index
    %c0_131 = arith.constant 0 : index
    %314 = vector.load %arg25[%c0_129, %c0_130, %c0_131] : memref<3x1x32xf32, #tpu.memory_space<vmem>>, vector<1x1x32xf32>
    %315 = vector.shape_cast %314 : vector<1x1x32xf32> to vector<1x32xf32>
    %316 = vector.broadcast %315 : vector<1x32xf32> to vector<32x32xf32>
    %317 = arith.addf %313, %316 : vector<32x32xf32>
    %c1 = arith.constant 1 : index
    %c0_132 = arith.constant 0 : index
    %c0_133 = arith.constant 0 : index
    %318 = vector.load %arg2[%c1, %c0_132, %c0_133] : memref<3x16x33xf32, #tpu.memory_space<vmem>>, vector<1x16x33xf32>
    %319 = vector.shape_cast %318 : vector<1x16x33xf32> to vector<16x33xf32>
    %c1_134 = arith.constant 1 : index
    %c0_135 = arith.constant 0 : index
    %c0_136 = arith.constant 0 : index
    %320 = vector.load %arg12[%c1_134, %c0_135, %c0_136] : memref<3x33x32xf32, #tpu.memory_space<vmem>>, vector<1x33x32xf32>
    %321 = vector.shape_cast %320 : vector<1x33x32xf32> to vector<33x32xf32>
    %cst_137 = arith.constant dense<0.000000e+00> : vector<16x32xf32>
    %322 = tpu.matmul %319, %321, %cst_137 {dimension_numbers = #tpu.dot_dimension_numbers<[1], [0], [0], [1], [0, 0, 1, 1], [], []>} : vector<16x33xf32>, vector<33x32xf32>, vector<16x32xf32> -> vector<16x32xf32>
    %c1_138 = arith.constant 1 : index
    %c0_139 = arith.constant 0 : index
    %c0_140 = arith.constant 0 : index
    %323 = vector.load %arg13[%c1_138, %c0_139, %c0_140] : memref<3x1x32xf32, #tpu.memory_space<vmem>>, vector<1x1x32xf32>
    %324 = vector.shape_cast %323 : vector<1x1x32xf32> to vector<1x32xf32>
    %325 = vector.broadcast %324 : vector<1x32xf32> to vector<16x32xf32>
    %326 = arith.addf %322, %325 : vector<16x32xf32>
    %cst_141 = arith.constant 5.000000e-01 : f32
    %327 = vector.broadcast %cst_141 : f32 to vector<16x32xf32>
    %328 = arith.mulf %327, %326 : vector<16x32xf32>
    %cst_142 = arith.constant 0.707106769 : f32
    %329 = vector.broadcast %cst_142 : f32 to vector<16x32xf32>
    %330 = arith.mulf %326, %329 : vector<16x32xf32>
    %cst_143 = arith.constant 0.000000e+00 : f32
    %331 = vector.broadcast %cst_143 : f32 to vector<16x32xf32>
    %332 = arith.cmpf oge, %330, %331 : vector<16x32xf32>
    %cst_144 = arith.constant 1.000000e+00 : f32
    %cst_145 = arith.constant -1.000000e+00 : f32
    %333 = vector.broadcast %cst_144 : f32 to vector<16x32xf32>
    %334 = vector.broadcast %cst_145 : f32 to vector<16x32xf32>
    %335 = arith.select %332, %333, %334 : vector<16x32xi1>, vector<16x32xf32>
    %336 = math.absf %330 : vector<16x32xf32>
    %cst_146 = arith.constant 0.327591091 : f32
    %337 = vector.broadcast %cst_146 : f32 to vector<16x32xf32>
    %338 = arith.mulf %337, %336 : vector<16x32xf32>
    %cst_147 = arith.constant 1.000000e+00 : f32
    %339 = vector.broadcast %cst_147 : f32 to vector<16x32xf32>
    %340 = arith.addf %339, %338 : vector<16x32xf32>
    %cst_148 = arith.constant 1.000000e+00 : f32
    %341 = vector.broadcast %cst_148 : f32 to vector<16x32xf32>
    %342 = arith.divf %341, %340 : vector<16x32xf32>
    %cst_149 = arith.constant 1.06140542 : f32
    %343 = vector.broadcast %cst_149 : f32 to vector<16x32xf32>
    %344 = arith.mulf %343, %342 : vector<16x32xf32>
    %cst_150 = arith.constant -1.45315206 : f32
    %345 = vector.broadcast %cst_150 : f32 to vector<16x32xf32>
    %346 = arith.addf %344, %345 : vector<16x32xf32>
    %347 = arith.mulf %346, %342 : vector<16x32xf32>
    %cst_151 = arith.constant 1.42141378 : f32
    %348 = vector.broadcast %cst_151 : f32 to vector<16x32xf32>
    %349 = arith.addf %347, %348 : vector<16x32xf32>
    %350 = arith.mulf %349, %342 : vector<16x32xf32>
    %cst_152 = arith.constant -0.284496725 : f32
    %351 = vector.broadcast %cst_152 : f32 to vector<16x32xf32>
    %352 = arith.addf %350, %351 : vector<16x32xf32>
    %353 = arith.mulf %352, %342 : vector<16x32xf32>
    %cst_153 = arith.constant 0.254829586 : f32
    %354 = vector.broadcast %cst_153 : f32 to vector<16x32xf32>
    %355 = arith.addf %353, %354 : vector<16x32xf32>
    %356 = arith.mulf %355, %342 : vector<16x32xf32>
    %cst_154 = arith.constant 0.000000e+00 : f32
    %357 = vector.broadcast %cst_154 : f32 to vector<16x32xf32>
    %358 = arith.subf %357, %336 : vector<16x32xf32>
    %359 = arith.mulf %358, %336 : vector<16x32xf32>
    %360 = math.exp %359 : vector<16x32xf32>
    %361 = arith.mulf %356, %360 : vector<16x32xf32>
    %cst_155 = arith.constant 1.000000e+00 : f32
    %362 = vector.broadcast %cst_155 : f32 to vector<16x32xf32>
    %363 = arith.subf %362, %361 : vector<16x32xf32>
    %364 = arith.mulf %335, %363 : vector<16x32xf32>
    %cst_156 = arith.constant 1.000000e+00 : f32
    %365 = vector.broadcast %cst_156 : f32 to vector<16x32xf32>
    %366 = arith.addf %365, %364 : vector<16x32xf32>
    %367 = arith.mulf %328, %366 : vector<16x32xf32>
    %368 = arith.addf %317, %80 : vector<32x32xf32>
    %369 = vector.shape_cast %367 : vector<16x32xf32> to vector<1x16x32xf32>
    %370 = vector.shape_cast %369 : vector<1x16x32xf32> to vector<1x16x32xf32>
    %371 = vector.broadcast %370 : vector<1x16x32xf32> to vector<2x16x32xf32>
    %372 = vector.shape_cast %371 : vector<2x16x32xf32> to vector<32x32xf32>
    %373 = arith.addf %368, %372 : vector<32x32xf32>
    %c1_157 = arith.constant 1 : index
    %c0_158 = arith.constant 0 : index
    %c0_159 = arith.constant 0 : index
    %374 = vector.load %arg14[%c1_157, %c0_158, %c0_159] : memref<3x32x64xf32, #tpu.memory_space<vmem>>, vector<1x32x64xf32>
    %375 = vector.shape_cast %374 : vector<1x32x64xf32> to vector<32x64xf32>
    %cst_160 = arith.constant dense<0.000000e+00> : vector<2x64xf32>
    %376 = tpu.matmul %0, %375, %cst_160 {dimension_numbers = #tpu.dot_dimension_numbers<[1], [0], [0], [1], [0, 0, 1, 1], [], []>} : vector<2x32xf32>, vector<32x64xf32>, vector<2x64xf32> -> vector<2x64xf32>
    %c1_161 = arith.constant 1 : index
    %c0_162 = arith.constant 0 : index
    %c0_163 = arith.constant 0 : index
    %377 = vector.load %arg15[%c1_161, %c0_162, %c0_163] : memref<3x1x64xf32, #tpu.memory_space<vmem>>, vector<1x1x64xf32>
    %378 = vector.shape_cast %377 : vector<1x1x64xf32> to vector<1x64xf32>
    %379 = vector.broadcast %378 : vector<1x64xf32> to vector<2x64xf32>
    %380 = arith.addf %376, %379 : vector<2x64xf32>
    %381 = vector.extract_strided_slice %380 {offsets = [0, 0], sizes = [2, 32], strides = [1, 1]} : vector<2x64xf32> to vector<2x32xf32>
    %382 = vector.shape_cast %381 : vector<2x32xf32> to vector<2x1x32xf32>
    %383 = vector.shape_cast %382 : vector<2x1x32xf32> to vector<2x1x32xf32>
    %384 = vector.broadcast %383 : vector<2x1x32xf32> to vector<2x16x32xf32>
    %385 = vector.shape_cast %384 : vector<2x16x32xf32> to vector<32x32xf32>
    %386 = vector.extract_strided_slice %380 {offsets = [0, 32], sizes = [2, 32], strides = [1, 1]} : vector<2x64xf32> to vector<2x32xf32>
    %387 = vector.shape_cast %386 : vector<2x32xf32> to vector<2x1x32xf32>
    %388 = vector.shape_cast %387 : vector<2x1x32xf32> to vector<2x1x32xf32>
    %389 = vector.broadcast %388 : vector<2x1x32xf32> to vector<2x16x32xf32>
    %390 = vector.shape_cast %389 : vector<2x16x32xf32> to vector<32x32xf32>
    %cst_164 = arith.constant 1.000000e+00 : f32
    %391 = vector.broadcast %cst_164 : f32 to vector<32x32xf32>
    %392 = arith.addf %391, %385 : vector<32x32xf32>
    %cst_165 = arith.constant dense<0.000000e+00> : vector<32xf32>
    %393 = vector.multi_reduction <add>, %373, %cst_165 [1] : vector<32x32xf32> to vector<32xf32>
    %394 = vector.shape_cast %393 : vector<32xf32> to vector<32x1xf32>
    %cst_166 = arith.constant 3.200000e+01 : f32
    %395 = vector.broadcast %cst_166 : f32 to vector<32x1xf32>
    %396 = arith.divf %394, %395 : vector<32x1xf32>
    %397 = vector.broadcast %396 : vector<32x1xf32> to vector<32x32xf32>
    %398 = arith.subf %373, %397 : vector<32x32xf32>
    %399 = arith.mulf %398, %398 : vector<32x32xf32>
    %cst_167 = arith.constant dense<0.000000e+00> : vector<32xf32>
    %400 = vector.multi_reduction <add>, %399, %cst_167 [1] : vector<32x32xf32> to vector<32xf32>
    %401 = vector.shape_cast %400 : vector<32xf32> to vector<32x1xf32>
    %cst_168 = arith.constant 3.200000e+01 : f32
    %402 = vector.broadcast %cst_168 : f32 to vector<32x1xf32>
    %403 = arith.divf %401, %402 : vector<32x1xf32>
    %404 = vector.broadcast %396 : vector<32x1xf32> to vector<32x32xf32>
    %405 = arith.subf %373, %404 : vector<32x32xf32>
    %cst_169 = arith.constant 9.99999974E-6 : f32
    %406 = vector.broadcast %cst_169 : f32 to vector<32x1xf32>
    %407 = arith.addf %403, %406 : vector<32x1xf32>
    %408 = math.rsqrt %407 : vector<32x1xf32>
    %409 = vector.broadcast %408 : vector<32x1xf32> to vector<32x32xf32>
    %410 = arith.mulf %405, %409 : vector<32x32xf32>
    %411 = arith.mulf %392, %410 : vector<32x32xf32>
    %412 = arith.addf %411, %390 : vector<32x32xf32>
    %c1_170 = arith.constant 1 : index
    %c0_171 = arith.constant 0 : index
    %c0_172 = arith.constant 0 : index
    %413 = vector.load %arg16[%c1_170, %c0_171, %c0_172] : memref<3x32x96xf32, #tpu.memory_space<vmem>>, vector<1x32x96xf32>
    %414 = vector.shape_cast %413 : vector<1x32x96xf32> to vector<32x96xf32>
    %cst_173 = arith.constant dense<0.000000e+00> : vector<32x96xf32>
    %415 = tpu.matmul %412, %414, %cst_173 {dimension_numbers = #tpu.dot_dimension_numbers<[1], [0], [0], [1], [0, 0, 1, 1], [], []>} : vector<32x32xf32>, vector<32x96xf32>, vector<32x96xf32> -> vector<32x96xf32>
    %c1_174 = arith.constant 1 : index
    %c0_175 = arith.constant 0 : index
    %c0_176 = arith.constant 0 : index
    %416 = vector.load %arg17[%c1_174, %c0_175, %c0_176] : memref<3x1x96xf32, #tpu.memory_space<vmem>>, vector<1x1x96xf32>
    %417 = vector.shape_cast %416 : vector<1x1x96xf32> to vector<1x96xf32>
    %418 = vector.broadcast %417 : vector<1x96xf32> to vector<32x96xf32>
    %419 = arith.addf %415, %418 : vector<32x96xf32>
    %420 = vector.extract_strided_slice %419 {offsets = [0, 0], sizes = [32, 32], strides = [1, 1]} : vector<32x96xf32> to vector<32x32xf32>
    %421 = vector.extract_strided_slice %419 {offsets = [0, 32], sizes = [32, 32], strides = [1, 1]} : vector<32x96xf32> to vector<32x32xf32>
    %422 = vector.extract_strided_slice %419 {offsets = [0, 64], sizes = [32, 32], strides = [1, 1]} : vector<32x96xf32> to vector<32x32xf32>
    %423 = vector.extract_strided_slice %421 {offsets = [0, 0], sizes = [16, 32], strides = [1, 1]} : vector<32x32xf32> to vector<16x32xf32>
    %424 = vector.shape_cast %423 : vector<16x32xf32> to vector<1x16x32xf32>
    %425 = vector.shape_cast %424 : vector<1x16x32xf32> to vector<1x16x32xf32>
    %426 = vector.broadcast %425 : vector<1x16x32xf32> to vector<2x16x32xf32>
    %427 = vector.shape_cast %426 : vector<2x16x32xf32> to vector<32x32xf32>
    %428 = arith.mulf %420, %427 : vector<32x32xf32>
    %cst_177 = arith.constant dense<0.000000e+00> : vector<32x4xf32>
    %429 = tpu.matmul %428, %1, %cst_177 {dimension_numbers = #tpu.dot_dimension_numbers<[1], [0], [0], [1], [0, 0, 1, 1], [], []>} : vector<32x32xf32>, vector<32x4xf32>, vector<32x4xf32> -> vector<32x4xf32>
    %cst_178 = arith.constant 0.353553385 : f32
    %430 = vector.broadcast %cst_178 : f32 to vector<32x4xf32>
    %431 = arith.mulf %430, %429 : vector<32x4xf32>
    %432 = vector.extract_strided_slice %421 {offsets = [16, 0], sizes = [16, 32], strides = [1, 1]} : vector<32x32xf32> to vector<16x32xf32>
    %433 = vector.shape_cast %432 : vector<16x32xf32> to vector<1x16x32xf32>
    %434 = vector.shape_cast %433 : vector<1x16x32xf32> to vector<1x16x32xf32>
    %435 = vector.broadcast %434 : vector<1x16x32xf32> to vector<2x16x32xf32>
    %436 = vector.shape_cast %435 : vector<2x16x32xf32> to vector<32x32xf32>
    %437 = arith.mulf %420, %436 : vector<32x32xf32>
    %cst_179 = arith.constant dense<0.000000e+00> : vector<32x4xf32>
    %438 = tpu.matmul %437, %1, %cst_179 {dimension_numbers = #tpu.dot_dimension_numbers<[1], [0], [0], [1], [0, 0, 1, 1], [], []>} : vector<32x32xf32>, vector<32x4xf32>, vector<32x4xf32> -> vector<32x4xf32>
    %cst_180 = arith.constant 0.353553385 : f32
    %439 = vector.broadcast %cst_180 : f32 to vector<32x4xf32>
    %440 = arith.mulf %439, %438 : vector<32x4xf32>
    %441 = arith.maximumf %431, %440 : vector<32x4xf32>
    %442 = arith.subf %431, %441 : vector<32x4xf32>
    %443 = math.exp %442 : vector<32x4xf32>
    %444 = arith.subf %440, %441 : vector<32x4xf32>
    %445 = math.exp %444 : vector<32x4xf32>
    %446 = arith.addf %443, %445 : vector<32x4xf32>
    %447 = tpu.reciprocal %446 {approx = true} : vector<32x4xf32> -> vector<32x4xf32>
    %448 = arith.mulf %443, %447 : vector<32x4xf32>
    %cst_181 = arith.constant dense<0.000000e+00> : vector<32x32xf32>
    %449 = tpu.matmul %448, %2, %cst_181 {dimension_numbers = #tpu.dot_dimension_numbers<[1], [0], [0], [1], [0, 0, 1, 1], [], []>} : vector<32x4xf32>, vector<4x32xf32>, vector<32x32xf32> -> vector<32x32xf32>
    %450 = vector.extract_strided_slice %422 {offsets = [0, 0], sizes = [16, 32], strides = [1, 1]} : vector<32x32xf32> to vector<16x32xf32>
    %451 = vector.shape_cast %450 : vector<16x32xf32> to vector<1x16x32xf32>
    %452 = vector.shape_cast %451 : vector<1x16x32xf32> to vector<1x16x32xf32>
    %453 = vector.broadcast %452 : vector<1x16x32xf32> to vector<2x16x32xf32>
    %454 = vector.shape_cast %453 : vector<2x16x32xf32> to vector<32x32xf32>
    %455 = arith.mulf %449, %454 : vector<32x32xf32>
    %456 = arith.mulf %445, %447 : vector<32x4xf32>
    %cst_182 = arith.constant dense<0.000000e+00> : vector<32x32xf32>
    %457 = tpu.matmul %456, %2, %cst_182 {dimension_numbers = #tpu.dot_dimension_numbers<[1], [0], [0], [1], [0, 0, 1, 1], [], []>} : vector<32x4xf32>, vector<4x32xf32>, vector<32x32xf32> -> vector<32x32xf32>
    %458 = vector.extract_strided_slice %422 {offsets = [16, 0], sizes = [16, 32], strides = [1, 1]} : vector<32x32xf32> to vector<16x32xf32>
    %459 = vector.shape_cast %458 : vector<16x32xf32> to vector<1x16x32xf32>
    %460 = vector.shape_cast %459 : vector<1x16x32xf32> to vector<1x16x32xf32>
    %461 = vector.broadcast %460 : vector<1x16x32xf32> to vector<2x16x32xf32>
    %462 = vector.shape_cast %461 : vector<2x16x32xf32> to vector<32x32xf32>
    %463 = arith.mulf %457, %462 : vector<32x32xf32>
    %464 = arith.addf %455, %463 : vector<32x32xf32>
    %c1_183 = arith.constant 1 : index
    %c0_184 = arith.constant 0 : index
    %c0_185 = arith.constant 0 : index
    %465 = vector.load %arg18[%c1_183, %c0_184, %c0_185] : memref<3x32x32xf32, #tpu.memory_space<vmem>>, vector<1x32x32xf32>
    %466 = vector.shape_cast %465 : vector<1x32x32xf32> to vector<32x32xf32>
    %cst_186 = arith.constant dense<0.000000e+00> : vector<32x32xf32>
    %467 = tpu.matmul %464, %466, %cst_186 {dimension_numbers = #tpu.dot_dimension_numbers<[1], [0], [0], [1], [0, 0, 1, 1], [], []>} : vector<32x32xf32>, vector<32x32xf32>, vector<32x32xf32> -> vector<32x32xf32>
    %c1_187 = arith.constant 1 : index
    %c0_188 = arith.constant 0 : index
    %c0_189 = arith.constant 0 : index
    %468 = vector.load %arg19[%c1_187, %c0_188, %c0_189] : memref<3x1x32xf32, #tpu.memory_space<vmem>>, vector<1x1x32xf32>
    %469 = vector.shape_cast %468 : vector<1x1x32xf32> to vector<1x32xf32>
    %470 = vector.broadcast %469 : vector<1x32xf32> to vector<32x32xf32>
    %471 = arith.addf %467, %470 : vector<32x32xf32>
    %472 = arith.addf %412, %471 : vector<32x32xf32>
    %cst_190 = arith.constant dense<0.000000e+00> : vector<32xf32>
    %473 = vector.multi_reduction <add>, %472, %cst_190 [1] : vector<32x32xf32> to vector<32xf32>
    %474 = vector.shape_cast %473 : vector<32xf32> to vector<32x1xf32>
    %cst_191 = arith.constant 3.200000e+01 : f32
    %475 = vector.broadcast %cst_191 : f32 to vector<32x1xf32>
    %476 = arith.divf %474, %475 : vector<32x1xf32>
    %477 = vector.broadcast %476 : vector<32x1xf32> to vector<32x32xf32>
    %478 = arith.subf %472, %477 : vector<32x32xf32>
    %479 = arith.mulf %478, %478 : vector<32x32xf32>
    %cst_192 = arith.constant dense<0.000000e+00> : vector<32xf32>
    %480 = vector.multi_reduction <add>, %479, %cst_192 [1] : vector<32x32xf32> to vector<32xf32>
    %481 = vector.shape_cast %480 : vector<32xf32> to vector<32x1xf32>
    %cst_193 = arith.constant 3.200000e+01 : f32
    %482 = vector.broadcast %cst_193 : f32 to vector<32x1xf32>
    %483 = arith.divf %481, %482 : vector<32x1xf32>
    %484 = vector.broadcast %476 : vector<32x1xf32> to vector<32x32xf32>
    %485 = arith.subf %472, %484 : vector<32x32xf32>
    %cst_194 = arith.constant 9.99999974E-6 : f32
    %486 = vector.broadcast %cst_194 : f32 to vector<32x1xf32>
    %487 = arith.addf %483, %486 : vector<32x1xf32>
    %488 = math.rsqrt %487 : vector<32x1xf32>
    %489 = vector.broadcast %488 : vector<32x1xf32> to vector<32x32xf32>
    %490 = arith.mulf %485, %489 : vector<32x32xf32>
    %c1_195 = arith.constant 1 : index
    %c0_196 = arith.constant 0 : index
    %c0_197 = arith.constant 0 : index
    %491 = vector.load %arg20[%c1_195, %c0_196, %c0_197] : memref<3x1x32xf32, #tpu.memory_space<vmem>>, vector<1x1x32xf32>
    %492 = vector.shape_cast %491 : vector<1x1x32xf32> to vector<1x32xf32>
    %493 = vector.broadcast %492 : vector<1x32xf32> to vector<32x32xf32>
    %494 = arith.mulf %490, %493 : vector<32x32xf32>
    %c1_198 = arith.constant 1 : index
    %c0_199 = arith.constant 0 : index
    %c0_200 = arith.constant 0 : index
    %495 = vector.load %arg21[%c1_198, %c0_199, %c0_200] : memref<3x1x32xf32, #tpu.memory_space<vmem>>, vector<1x1x32xf32>
    %496 = vector.shape_cast %495 : vector<1x1x32xf32> to vector<1x32xf32>
    %497 = vector.broadcast %496 : vector<1x32xf32> to vector<32x32xf32>
    %498 = arith.addf %494, %497 : vector<32x32xf32>
    %c1_201 = arith.constant 1 : index
    %c0_202 = arith.constant 0 : index
    %c0_203 = arith.constant 0 : index
    %499 = vector.load %arg22[%c1_201, %c0_202, %c0_203] : memref<3x32x64xf32, #tpu.memory_space<vmem>>, vector<1x32x64xf32>
    %500 = vector.shape_cast %499 : vector<1x32x64xf32> to vector<32x64xf32>
    %cst_204 = arith.constant dense<0.000000e+00> : vector<32x64xf32>
    %501 = tpu.matmul %498, %500, %cst_204 {dimension_numbers = #tpu.dot_dimension_numbers<[1], [0], [0], [1], [0, 0, 1, 1], [], []>} : vector<32x32xf32>, vector<32x64xf32>, vector<32x64xf32> -> vector<32x64xf32>
    %c1_205 = arith.constant 1 : index
    %c0_206 = arith.constant 0 : index
    %c0_207 = arith.constant 0 : index
    %502 = vector.load %arg23[%c1_205, %c0_206, %c0_207] : memref<3x1x64xf32, #tpu.memory_space<vmem>>, vector<1x1x64xf32>
    %503 = vector.shape_cast %502 : vector<1x1x64xf32> to vector<1x64xf32>
    %504 = vector.broadcast %503 : vector<1x64xf32> to vector<32x64xf32>
    %505 = arith.addf %501, %504 : vector<32x64xf32>
    %cst_208 = arith.constant 5.000000e-01 : f32
    %506 = vector.broadcast %cst_208 : f32 to vector<32x64xf32>
    %507 = arith.mulf %506, %505 : vector<32x64xf32>
    %cst_209 = arith.constant 0.707106769 : f32
    %508 = vector.broadcast %cst_209 : f32 to vector<32x64xf32>
    %509 = arith.mulf %505, %508 : vector<32x64xf32>
    %cst_210 = arith.constant 0.000000e+00 : f32
    %510 = vector.broadcast %cst_210 : f32 to vector<32x64xf32>
    %511 = arith.cmpf oge, %509, %510 : vector<32x64xf32>
    %cst_211 = arith.constant 1.000000e+00 : f32
    %cst_212 = arith.constant -1.000000e+00 : f32
    %512 = vector.broadcast %cst_211 : f32 to vector<32x64xf32>
    %513 = vector.broadcast %cst_212 : f32 to vector<32x64xf32>
    %514 = arith.select %511, %512, %513 : vector<32x64xi1>, vector<32x64xf32>
    %515 = math.absf %509 : vector<32x64xf32>
    %cst_213 = arith.constant 0.327591091 : f32
    %516 = vector.broadcast %cst_213 : f32 to vector<32x64xf32>
    %517 = arith.mulf %516, %515 : vector<32x64xf32>
    %cst_214 = arith.constant 1.000000e+00 : f32
    %518 = vector.broadcast %cst_214 : f32 to vector<32x64xf32>
    %519 = arith.addf %518, %517 : vector<32x64xf32>
    %cst_215 = arith.constant 1.000000e+00 : f32
    %520 = vector.broadcast %cst_215 : f32 to vector<32x64xf32>
    %521 = arith.divf %520, %519 : vector<32x64xf32>
    %cst_216 = arith.constant 1.06140542 : f32
    %522 = vector.broadcast %cst_216 : f32 to vector<32x64xf32>
    %523 = arith.mulf %522, %521 : vector<32x64xf32>
    %cst_217 = arith.constant -1.45315206 : f32
    %524 = vector.broadcast %cst_217 : f32 to vector<32x64xf32>
    %525 = arith.addf %523, %524 : vector<32x64xf32>
    %526 = arith.mulf %525, %521 : vector<32x64xf32>
    %cst_218 = arith.constant 1.42141378 : f32
    %527 = vector.broadcast %cst_218 : f32 to vector<32x64xf32>
    %528 = arith.addf %526, %527 : vector<32x64xf32>
    %529 = arith.mulf %528, %521 : vector<32x64xf32>
    %cst_219 = arith.constant -0.284496725 : f32
    %530 = vector.broadcast %cst_219 : f32 to vector<32x64xf32>
    %531 = arith.addf %529, %530 : vector<32x64xf32>
    %532 = arith.mulf %531, %521 : vector<32x64xf32>
    %cst_220 = arith.constant 0.254829586 : f32
    %533 = vector.broadcast %cst_220 : f32 to vector<32x64xf32>
    %534 = arith.addf %532, %533 : vector<32x64xf32>
    %535 = arith.mulf %534, %521 : vector<32x64xf32>
    %cst_221 = arith.constant 0.000000e+00 : f32
    %536 = vector.broadcast %cst_221 : f32 to vector<32x64xf32>
    %537 = arith.subf %536, %515 : vector<32x64xf32>
    %538 = arith.mulf %537, %515 : vector<32x64xf32>
    %539 = math.exp %538 : vector<32x64xf32>
    %540 = arith.mulf %535, %539 : vector<32x64xf32>
    %cst_222 = arith.constant 1.000000e+00 : f32
    %541 = vector.broadcast %cst_222 : f32 to vector<32x64xf32>
    %542 = arith.subf %541, %540 : vector<32x64xf32>
    %543 = arith.mulf %514, %542 : vector<32x64xf32>
    %cst_223 = arith.constant 1.000000e+00 : f32
    %544 = vector.broadcast %cst_223 : f32 to vector<32x64xf32>
    %545 = arith.addf %544, %543 : vector<32x64xf32>
    %546 = arith.mulf %507, %545 : vector<32x64xf32>
    %c1_224 = arith.constant 1 : index
    %c0_225 = arith.constant 0 : index
    %c0_226 = arith.constant 0 : index
    %547 = vector.load %arg24[%c1_224, %c0_225, %c0_226] : memref<3x64x32xf32, #tpu.memory_space<vmem>>, vector<1x64x32xf32>
    %548 = vector.shape_cast %547 : vector<1x64x32xf32> to vector<64x32xf32>
    %cst_227 = arith.constant dense<0.000000e+00> : vector<32x32xf32>
    %549 = tpu.matmul %546, %548, %cst_227 {dimension_numbers = #tpu.dot_dimension_numbers<[1], [0], [0], [1], [0, 0, 1, 1], [], []>} : vector<32x64xf32>, vector<64x32xf32>, vector<32x32xf32> -> vector<32x32xf32>
    %550 = arith.addf %498, %549 : vector<32x32xf32>
    %c1_228 = arith.constant 1 : index
    %c0_229 = arith.constant 0 : index
    %c0_230 = arith.constant 0 : index
    %551 = vector.load %arg25[%c1_228, %c0_229, %c0_230] : memref<3x1x32xf32, #tpu.memory_space<vmem>>, vector<1x1x32xf32>
    %552 = vector.shape_cast %551 : vector<1x1x32xf32> to vector<1x32xf32>
    %553 = vector.broadcast %552 : vector<1x32xf32> to vector<32x32xf32>
    %554 = arith.addf %550, %553 : vector<32x32xf32>
    %c2 = arith.constant 2 : index
    %c0_231 = arith.constant 0 : index
    %c0_232 = arith.constant 0 : index
    %555 = vector.load %arg2[%c2, %c0_231, %c0_232] : memref<3x16x33xf32, #tpu.memory_space<vmem>>, vector<1x16x33xf32>
    %556 = vector.shape_cast %555 : vector<1x16x33xf32> to vector<16x33xf32>
    %c2_233 = arith.constant 2 : index
    %c0_234 = arith.constant 0 : index
    %c0_235 = arith.constant 0 : index
    %557 = vector.load %arg12[%c2_233, %c0_234, %c0_235] : memref<3x33x32xf32, #tpu.memory_space<vmem>>, vector<1x33x32xf32>
    %558 = vector.shape_cast %557 : vector<1x33x32xf32> to vector<33x32xf32>
    %cst_236 = arith.constant dense<0.000000e+00> : vector<16x32xf32>
    %559 = tpu.matmul %556, %558, %cst_236 {dimension_numbers = #tpu.dot_dimension_numbers<[1], [0], [0], [1], [0, 0, 1, 1], [], []>} : vector<16x33xf32>, vector<33x32xf32>, vector<16x32xf32> -> vector<16x32xf32>
    %c2_237 = arith.constant 2 : index
    %c0_238 = arith.constant 0 : index
    %c0_239 = arith.constant 0 : index
    %560 = vector.load %arg13[%c2_237, %c0_238, %c0_239] : memref<3x1x32xf32, #tpu.memory_space<vmem>>, vector<1x1x32xf32>
    %561 = vector.shape_cast %560 : vector<1x1x32xf32> to vector<1x32xf32>
    %562 = vector.broadcast %561 : vector<1x32xf32> to vector<16x32xf32>
    %563 = arith.addf %559, %562 : vector<16x32xf32>
    %cst_240 = arith.constant 5.000000e-01 : f32
    %564 = vector.broadcast %cst_240 : f32 to vector<16x32xf32>
    %565 = arith.mulf %564, %563 : vector<16x32xf32>
    %cst_241 = arith.constant 0.707106769 : f32
    %566 = vector.broadcast %cst_241 : f32 to vector<16x32xf32>
    %567 = arith.mulf %563, %566 : vector<16x32xf32>
    %cst_242 = arith.constant 0.000000e+00 : f32
    %568 = vector.broadcast %cst_242 : f32 to vector<16x32xf32>
    %569 = arith.cmpf oge, %567, %568 : vector<16x32xf32>
    %cst_243 = arith.constant 1.000000e+00 : f32
    %cst_244 = arith.constant -1.000000e+00 : f32
    %570 = vector.broadcast %cst_243 : f32 to vector<16x32xf32>
    %571 = vector.broadcast %cst_244 : f32 to vector<16x32xf32>
    %572 = arith.select %569, %570, %571 : vector<16x32xi1>, vector<16x32xf32>
    %573 = math.absf %567 : vector<16x32xf32>
    %cst_245 = arith.constant 0.327591091 : f32
    %574 = vector.broadcast %cst_245 : f32 to vector<16x32xf32>
    %575 = arith.mulf %574, %573 : vector<16x32xf32>
    %cst_246 = arith.constant 1.000000e+00 : f32
    %576 = vector.broadcast %cst_246 : f32 to vector<16x32xf32>
    %577 = arith.addf %576, %575 : vector<16x32xf32>
    %cst_247 = arith.constant 1.000000e+00 : f32
    %578 = vector.broadcast %cst_247 : f32 to vector<16x32xf32>
    %579 = arith.divf %578, %577 : vector<16x32xf32>
    %cst_248 = arith.constant 1.06140542 : f32
    %580 = vector.broadcast %cst_248 : f32 to vector<16x32xf32>
    %581 = arith.mulf %580, %579 : vector<16x32xf32>
    %cst_249 = arith.constant -1.45315206 : f32
    %582 = vector.broadcast %cst_249 : f32 to vector<16x32xf32>
    %583 = arith.addf %581, %582 : vector<16x32xf32>
    %584 = arith.mulf %583, %579 : vector<16x32xf32>
    %cst_250 = arith.constant 1.42141378 : f32
    %585 = vector.broadcast %cst_250 : f32 to vector<16x32xf32>
    %586 = arith.addf %584, %585 : vector<16x32xf32>
    %587 = arith.mulf %586, %579 : vector<16x32xf32>
    %cst_251 = arith.constant -0.284496725 : f32
    %588 = vector.broadcast %cst_251 : f32 to vector<16x32xf32>
    %589 = arith.addf %587, %588 : vector<16x32xf32>
    %590 = arith.mulf %589, %579 : vector<16x32xf32>
    %cst_252 = arith.constant 0.254829586 : f32
    %591 = vector.broadcast %cst_252 : f32 to vector<16x32xf32>
    %592 = arith.addf %590, %591 : vector<16x32xf32>
    %593 = arith.mulf %592, %579 : vector<16x32xf32>
    %cst_253 = arith.constant 0.000000e+00 : f32
    %594 = vector.broadcast %cst_253 : f32 to vector<16x32xf32>
    %595 = arith.subf %594, %573 : vector<16x32xf32>
    %596 = arith.mulf %595, %573 : vector<16x32xf32>
    %597 = math.exp %596 : vector<16x32xf32>
    %598 = arith.mulf %593, %597 : vector<16x32xf32>
    %cst_254 = arith.constant 1.000000e+00 : f32
    %599 = vector.broadcast %cst_254 : f32 to vector<16x32xf32>
    %600 = arith.subf %599, %598 : vector<16x32xf32>
    %601 = arith.mulf %572, %600 : vector<16x32xf32>
    %cst_255 = arith.constant 1.000000e+00 : f32
    %602 = vector.broadcast %cst_255 : f32 to vector<16x32xf32>
    %603 = arith.addf %602, %601 : vector<16x32xf32>
    %604 = arith.mulf %565, %603 : vector<16x32xf32>
    %605 = arith.addf %554, %80 : vector<32x32xf32>
    %606 = vector.shape_cast %604 : vector<16x32xf32> to vector<1x16x32xf32>
    %607 = vector.shape_cast %606 : vector<1x16x32xf32> to vector<1x16x32xf32>
    %608 = vector.broadcast %607 : vector<1x16x32xf32> to vector<2x16x32xf32>
    %609 = vector.shape_cast %608 : vector<2x16x32xf32> to vector<32x32xf32>
    %610 = arith.addf %605, %609 : vector<32x32xf32>
    %c2_256 = arith.constant 2 : index
    %c0_257 = arith.constant 0 : index
    %c0_258 = arith.constant 0 : index
    %611 = vector.load %arg14[%c2_256, %c0_257, %c0_258] : memref<3x32x64xf32, #tpu.memory_space<vmem>>, vector<1x32x64xf32>
    %612 = vector.shape_cast %611 : vector<1x32x64xf32> to vector<32x64xf32>
    %cst_259 = arith.constant dense<0.000000e+00> : vector<2x64xf32>
    %613 = tpu.matmul %0, %612, %cst_259 {dimension_numbers = #tpu.dot_dimension_numbers<[1], [0], [0], [1], [0, 0, 1, 1], [], []>} : vector<2x32xf32>, vector<32x64xf32>, vector<2x64xf32> -> vector<2x64xf32>
    %c2_260 = arith.constant 2 : index
    %c0_261 = arith.constant 0 : index
    %c0_262 = arith.constant 0 : index
    %614 = vector.load %arg15[%c2_260, %c0_261, %c0_262] : memref<3x1x64xf32, #tpu.memory_space<vmem>>, vector<1x1x64xf32>
    %615 = vector.shape_cast %614 : vector<1x1x64xf32> to vector<1x64xf32>
    %616 = vector.broadcast %615 : vector<1x64xf32> to vector<2x64xf32>
    %617 = arith.addf %613, %616 : vector<2x64xf32>
    %618 = vector.extract_strided_slice %617 {offsets = [0, 0], sizes = [2, 32], strides = [1, 1]} : vector<2x64xf32> to vector<2x32xf32>
    %619 = vector.shape_cast %618 : vector<2x32xf32> to vector<2x1x32xf32>
    %620 = vector.shape_cast %619 : vector<2x1x32xf32> to vector<2x1x32xf32>
    %621 = vector.broadcast %620 : vector<2x1x32xf32> to vector<2x16x32xf32>
    %622 = vector.shape_cast %621 : vector<2x16x32xf32> to vector<32x32xf32>
    %623 = vector.extract_strided_slice %617 {offsets = [0, 32], sizes = [2, 32], strides = [1, 1]} : vector<2x64xf32> to vector<2x32xf32>
    %624 = vector.shape_cast %623 : vector<2x32xf32> to vector<2x1x32xf32>
    %625 = vector.shape_cast %624 : vector<2x1x32xf32> to vector<2x1x32xf32>
    %626 = vector.broadcast %625 : vector<2x1x32xf32> to vector<2x16x32xf32>
    %627 = vector.shape_cast %626 : vector<2x16x32xf32> to vector<32x32xf32>
    %cst_263 = arith.constant 1.000000e+00 : f32
    %628 = vector.broadcast %cst_263 : f32 to vector<32x32xf32>
    %629 = arith.addf %628, %622 : vector<32x32xf32>
    %cst_264 = arith.constant dense<0.000000e+00> : vector<32xf32>
    %630 = vector.multi_reduction <add>, %610, %cst_264 [1] : vector<32x32xf32> to vector<32xf32>
    %631 = vector.shape_cast %630 : vector<32xf32> to vector<32x1xf32>
    %cst_265 = arith.constant 3.200000e+01 : f32
    %632 = vector.broadcast %cst_265 : f32 to vector<32x1xf32>
    %633 = arith.divf %631, %632 : vector<32x1xf32>
    %634 = vector.broadcast %633 : vector<32x1xf32> to vector<32x32xf32>
    %635 = arith.subf %610, %634 : vector<32x32xf32>
    %636 = arith.mulf %635, %635 : vector<32x32xf32>
    %cst_266 = arith.constant dense<0.000000e+00> : vector<32xf32>
    %637 = vector.multi_reduction <add>, %636, %cst_266 [1] : vector<32x32xf32> to vector<32xf32>
    %638 = vector.shape_cast %637 : vector<32xf32> to vector<32x1xf32>
    %cst_267 = arith.constant 3.200000e+01 : f32
    %639 = vector.broadcast %cst_267 : f32 to vector<32x1xf32>
    %640 = arith.divf %638, %639 : vector<32x1xf32>
    %641 = vector.broadcast %633 : vector<32x1xf32> to vector<32x32xf32>
    %642 = arith.subf %610, %641 : vector<32x32xf32>
    %cst_268 = arith.constant 9.99999974E-6 : f32
    %643 = vector.broadcast %cst_268 : f32 to vector<32x1xf32>
    %644 = arith.addf %640, %643 : vector<32x1xf32>
    %645 = math.rsqrt %644 : vector<32x1xf32>
    %646 = vector.broadcast %645 : vector<32x1xf32> to vector<32x32xf32>
    %647 = arith.mulf %642, %646 : vector<32x32xf32>
    %648 = arith.mulf %629, %647 : vector<32x32xf32>
    %649 = arith.addf %648, %627 : vector<32x32xf32>
    %c2_269 = arith.constant 2 : index
    %c0_270 = arith.constant 0 : index
    %c0_271 = arith.constant 0 : index
    %650 = vector.load %arg16[%c2_269, %c0_270, %c0_271] : memref<3x32x96xf32, #tpu.memory_space<vmem>>, vector<1x32x96xf32>
    %651 = vector.shape_cast %650 : vector<1x32x96xf32> to vector<32x96xf32>
    %cst_272 = arith.constant dense<0.000000e+00> : vector<32x96xf32>
    %652 = tpu.matmul %649, %651, %cst_272 {dimension_numbers = #tpu.dot_dimension_numbers<[1], [0], [0], [1], [0, 0, 1, 1], [], []>} : vector<32x32xf32>, vector<32x96xf32>, vector<32x96xf32> -> vector<32x96xf32>
    %c2_273 = arith.constant 2 : index
    %c0_274 = arith.constant 0 : index
    %c0_275 = arith.constant 0 : index
    %653 = vector.load %arg17[%c2_273, %c0_274, %c0_275] : memref<3x1x96xf32, #tpu.memory_space<vmem>>, vector<1x1x96xf32>
    %654 = vector.shape_cast %653 : vector<1x1x96xf32> to vector<1x96xf32>
    %655 = vector.broadcast %654 : vector<1x96xf32> to vector<32x96xf32>
    %656 = arith.addf %652, %655 : vector<32x96xf32>
    %657 = vector.extract_strided_slice %656 {offsets = [0, 0], sizes = [32, 32], strides = [1, 1]} : vector<32x96xf32> to vector<32x32xf32>
    %658 = vector.extract_strided_slice %656 {offsets = [0, 32], sizes = [32, 32], strides = [1, 1]} : vector<32x96xf32> to vector<32x32xf32>
    %659 = vector.extract_strided_slice %656 {offsets = [0, 64], sizes = [32, 32], strides = [1, 1]} : vector<32x96xf32> to vector<32x32xf32>
    %660 = vector.extract_strided_slice %658 {offsets = [0, 0], sizes = [16, 32], strides = [1, 1]} : vector<32x32xf32> to vector<16x32xf32>
    %661 = vector.shape_cast %660 : vector<16x32xf32> to vector<1x16x32xf32>
    %662 = vector.shape_cast %661 : vector<1x16x32xf32> to vector<1x16x32xf32>
    %663 = vector.broadcast %662 : vector<1x16x32xf32> to vector<2x16x32xf32>
    %664 = vector.shape_cast %663 : vector<2x16x32xf32> to vector<32x32xf32>
    %665 = arith.mulf %657, %664 : vector<32x32xf32>
    %cst_276 = arith.constant dense<0.000000e+00> : vector<32x4xf32>
    %666 = tpu.matmul %665, %1, %cst_276 {dimension_numbers = #tpu.dot_dimension_numbers<[1], [0], [0], [1], [0, 0, 1, 1], [], []>} : vector<32x32xf32>, vector<32x4xf32>, vector<32x4xf32> -> vector<32x4xf32>
    %cst_277 = arith.constant 0.353553385 : f32
    %667 = vector.broadcast %cst_277 : f32 to vector<32x4xf32>
    %668 = arith.mulf %667, %666 : vector<32x4xf32>
    %669 = vector.extract_strided_slice %658 {offsets = [16, 0], sizes = [16, 32], strides = [1, 1]} : vector<32x32xf32> to vector<16x32xf32>
    %670 = vector.shape_cast %669 : vector<16x32xf32> to vector<1x16x32xf32>
    %671 = vector.shape_cast %670 : vector<1x16x32xf32> to vector<1x16x32xf32>
    %672 = vector.broadcast %671 : vector<1x16x32xf32> to vector<2x16x32xf32>
    %673 = vector.shape_cast %672 : vector<2x16x32xf32> to vector<32x32xf32>
    %674 = arith.mulf %657, %673 : vector<32x32xf32>
    %cst_278 = arith.constant dense<0.000000e+00> : vector<32x4xf32>
    %675 = tpu.matmul %674, %1, %cst_278 {dimension_numbers = #tpu.dot_dimension_numbers<[1], [0], [0], [1], [0, 0, 1, 1], [], []>} : vector<32x32xf32>, vector<32x4xf32>, vector<32x4xf32> -> vector<32x4xf32>
    %cst_279 = arith.constant 0.353553385 : f32
    %676 = vector.broadcast %cst_279 : f32 to vector<32x4xf32>
    %677 = arith.mulf %676, %675 : vector<32x4xf32>
    %678 = arith.maximumf %668, %677 : vector<32x4xf32>
    %679 = arith.subf %668, %678 : vector<32x4xf32>
    %680 = math.exp %679 : vector<32x4xf32>
    %681 = arith.subf %677, %678 : vector<32x4xf32>
    %682 = math.exp %681 : vector<32x4xf32>
    %683 = arith.addf %680, %682 : vector<32x4xf32>
    %684 = tpu.reciprocal %683 {approx = true} : vector<32x4xf32> -> vector<32x4xf32>
    %685 = arith.mulf %680, %684 : vector<32x4xf32>
    %cst_280 = arith.constant dense<0.000000e+00> : vector<32x32xf32>
    %686 = tpu.matmul %685, %2, %cst_280 {dimension_numbers = #tpu.dot_dimension_numbers<[1], [0], [0], [1], [0, 0, 1, 1], [], []>} : vector<32x4xf32>, vector<4x32xf32>, vector<32x32xf32> -> vector<32x32xf32>
    %687 = vector.extract_strided_slice %659 {offsets = [0, 0], sizes = [16, 32], strides = [1, 1]} : vector<32x32xf32> to vector<16x32xf32>
    %688 = vector.shape_cast %687 : vector<16x32xf32> to vector<1x16x32xf32>
    %689 = vector.shape_cast %688 : vector<1x16x32xf32> to vector<1x16x32xf32>
    %690 = vector.broadcast %689 : vector<1x16x32xf32> to vector<2x16x32xf32>
    %691 = vector.shape_cast %690 : vector<2x16x32xf32> to vector<32x32xf32>
    %692 = arith.mulf %686, %691 : vector<32x32xf32>
    %693 = arith.mulf %682, %684 : vector<32x4xf32>
    %cst_281 = arith.constant dense<0.000000e+00> : vector<32x32xf32>
    %694 = tpu.matmul %693, %2, %cst_281 {dimension_numbers = #tpu.dot_dimension_numbers<[1], [0], [0], [1], [0, 0, 1, 1], [], []>} : vector<32x4xf32>, vector<4x32xf32>, vector<32x32xf32> -> vector<32x32xf32>
    %695 = vector.extract_strided_slice %659 {offsets = [16, 0], sizes = [16, 32], strides = [1, 1]} : vector<32x32xf32> to vector<16x32xf32>
    %696 = vector.shape_cast %695 : vector<16x32xf32> to vector<1x16x32xf32>
    %697 = vector.shape_cast %696 : vector<1x16x32xf32> to vector<1x16x32xf32>
    %698 = vector.broadcast %697 : vector<1x16x32xf32> to vector<2x16x32xf32>
    %699 = vector.shape_cast %698 : vector<2x16x32xf32> to vector<32x32xf32>
    %700 = arith.mulf %694, %699 : vector<32x32xf32>
    %701 = arith.addf %692, %700 : vector<32x32xf32>
    %c2_282 = arith.constant 2 : index
    %c0_283 = arith.constant 0 : index
    %c0_284 = arith.constant 0 : index
    %702 = vector.load %arg18[%c2_282, %c0_283, %c0_284] : memref<3x32x32xf32, #tpu.memory_space<vmem>>, vector<1x32x32xf32>
    %703 = vector.shape_cast %702 : vector<1x32x32xf32> to vector<32x32xf32>
    %cst_285 = arith.constant dense<0.000000e+00> : vector<32x32xf32>
    %704 = tpu.matmul %701, %703, %cst_285 {dimension_numbers = #tpu.dot_dimension_numbers<[1], [0], [0], [1], [0, 0, 1, 1], [], []>} : vector<32x32xf32>, vector<32x32xf32>, vector<32x32xf32> -> vector<32x32xf32>
    %c2_286 = arith.constant 2 : index
    %c0_287 = arith.constant 0 : index
    %c0_288 = arith.constant 0 : index
    %705 = vector.load %arg19[%c2_286, %c0_287, %c0_288] : memref<3x1x32xf32, #tpu.memory_space<vmem>>, vector<1x1x32xf32>
    %706 = vector.shape_cast %705 : vector<1x1x32xf32> to vector<1x32xf32>
    %707 = vector.broadcast %706 : vector<1x32xf32> to vector<32x32xf32>
    %708 = arith.addf %704, %707 : vector<32x32xf32>
    %709 = arith.addf %649, %708 : vector<32x32xf32>
    %cst_289 = arith.constant dense<0.000000e+00> : vector<32xf32>
    %710 = vector.multi_reduction <add>, %709, %cst_289 [1] : vector<32x32xf32> to vector<32xf32>
    %711 = vector.shape_cast %710 : vector<32xf32> to vector<32x1xf32>
    %cst_290 = arith.constant 3.200000e+01 : f32
    %712 = vector.broadcast %cst_290 : f32 to vector<32x1xf32>
    %713 = arith.divf %711, %712 : vector<32x1xf32>
    %714 = vector.broadcast %713 : vector<32x1xf32> to vector<32x32xf32>
    %715 = arith.subf %709, %714 : vector<32x32xf32>
    %716 = arith.mulf %715, %715 : vector<32x32xf32>
    %cst_291 = arith.constant dense<0.000000e+00> : vector<32xf32>
    %717 = vector.multi_reduction <add>, %716, %cst_291 [1] : vector<32x32xf32> to vector<32xf32>
    %718 = vector.shape_cast %717 : vector<32xf32> to vector<32x1xf32>
    %cst_292 = arith.constant 3.200000e+01 : f32
    %719 = vector.broadcast %cst_292 : f32 to vector<32x1xf32>
    %720 = arith.divf %718, %719 : vector<32x1xf32>
    %721 = vector.broadcast %713 : vector<32x1xf32> to vector<32x32xf32>
    %722 = arith.subf %709, %721 : vector<32x32xf32>
    %cst_293 = arith.constant 9.99999974E-6 : f32
    %723 = vector.broadcast %cst_293 : f32 to vector<32x1xf32>
    %724 = arith.addf %720, %723 : vector<32x1xf32>
    %725 = math.rsqrt %724 : vector<32x1xf32>
    %726 = vector.broadcast %725 : vector<32x1xf32> to vector<32x32xf32>
    %727 = arith.mulf %722, %726 : vector<32x32xf32>
    %c2_294 = arith.constant 2 : index
    %c0_295 = arith.constant 0 : index
    %c0_296 = arith.constant 0 : index
    %728 = vector.load %arg20[%c2_294, %c0_295, %c0_296] : memref<3x1x32xf32, #tpu.memory_space<vmem>>, vector<1x1x32xf32>
    %729 = vector.shape_cast %728 : vector<1x1x32xf32> to vector<1x32xf32>
    %730 = vector.broadcast %729 : vector<1x32xf32> to vector<32x32xf32>
    %731 = arith.mulf %727, %730 : vector<32x32xf32>
    %c2_297 = arith.constant 2 : index
    %c0_298 = arith.constant 0 : index
    %c0_299 = arith.constant 0 : index
    %732 = vector.load %arg21[%c2_297, %c0_298, %c0_299] : memref<3x1x32xf32, #tpu.memory_space<vmem>>, vector<1x1x32xf32>
    %733 = vector.shape_cast %732 : vector<1x1x32xf32> to vector<1x32xf32>
    %734 = vector.broadcast %733 : vector<1x32xf32> to vector<32x32xf32>
    %735 = arith.addf %731, %734 : vector<32x32xf32>
    %c2_300 = arith.constant 2 : index
    %c0_301 = arith.constant 0 : index
    %c0_302 = arith.constant 0 : index
    %736 = vector.load %arg22[%c2_300, %c0_301, %c0_302] : memref<3x32x64xf32, #tpu.memory_space<vmem>>, vector<1x32x64xf32>
    %737 = vector.shape_cast %736 : vector<1x32x64xf32> to vector<32x64xf32>
    %cst_303 = arith.constant dense<0.000000e+00> : vector<32x64xf32>
    %738 = tpu.matmul %735, %737, %cst_303 {dimension_numbers = #tpu.dot_dimension_numbers<[1], [0], [0], [1], [0, 0, 1, 1], [], []>} : vector<32x32xf32>, vector<32x64xf32>, vector<32x64xf32> -> vector<32x64xf32>
    %c2_304 = arith.constant 2 : index
    %c0_305 = arith.constant 0 : index
    %c0_306 = arith.constant 0 : index
    %739 = vector.load %arg23[%c2_304, %c0_305, %c0_306] : memref<3x1x64xf32, #tpu.memory_space<vmem>>, vector<1x1x64xf32>
    %740 = vector.shape_cast %739 : vector<1x1x64xf32> to vector<1x64xf32>
    %741 = vector.broadcast %740 : vector<1x64xf32> to vector<32x64xf32>
    %742 = arith.addf %738, %741 : vector<32x64xf32>
    %cst_307 = arith.constant 5.000000e-01 : f32
    %743 = vector.broadcast %cst_307 : f32 to vector<32x64xf32>
    %744 = arith.mulf %743, %742 : vector<32x64xf32>
    %cst_308 = arith.constant 0.707106769 : f32
    %745 = vector.broadcast %cst_308 : f32 to vector<32x64xf32>
    %746 = arith.mulf %742, %745 : vector<32x64xf32>
    %cst_309 = arith.constant 0.000000e+00 : f32
    %747 = vector.broadcast %cst_309 : f32 to vector<32x64xf32>
    %748 = arith.cmpf oge, %746, %747 : vector<32x64xf32>
    %cst_310 = arith.constant 1.000000e+00 : f32
    %cst_311 = arith.constant -1.000000e+00 : f32
    %749 = vector.broadcast %cst_310 : f32 to vector<32x64xf32>
    %750 = vector.broadcast %cst_311 : f32 to vector<32x64xf32>
    %751 = arith.select %748, %749, %750 : vector<32x64xi1>, vector<32x64xf32>
    %752 = math.absf %746 : vector<32x64xf32>
    %cst_312 = arith.constant 0.327591091 : f32
    %753 = vector.broadcast %cst_312 : f32 to vector<32x64xf32>
    %754 = arith.mulf %753, %752 : vector<32x64xf32>
    %cst_313 = arith.constant 1.000000e+00 : f32
    %755 = vector.broadcast %cst_313 : f32 to vector<32x64xf32>
    %756 = arith.addf %755, %754 : vector<32x64xf32>
    %cst_314 = arith.constant 1.000000e+00 : f32
    %757 = vector.broadcast %cst_314 : f32 to vector<32x64xf32>
    %758 = arith.divf %757, %756 : vector<32x64xf32>
    %cst_315 = arith.constant 1.06140542 : f32
    %759 = vector.broadcast %cst_315 : f32 to vector<32x64xf32>
    %760 = arith.mulf %759, %758 : vector<32x64xf32>
    %cst_316 = arith.constant -1.45315206 : f32
    %761 = vector.broadcast %cst_316 : f32 to vector<32x64xf32>
    %762 = arith.addf %760, %761 : vector<32x64xf32>
    %763 = arith.mulf %762, %758 : vector<32x64xf32>
    %cst_317 = arith.constant 1.42141378 : f32
    %764 = vector.broadcast %cst_317 : f32 to vector<32x64xf32>
    %765 = arith.addf %763, %764 : vector<32x64xf32>
    %766 = arith.mulf %765, %758 : vector<32x64xf32>
    %cst_318 = arith.constant -0.284496725 : f32
    %767 = vector.broadcast %cst_318 : f32 to vector<32x64xf32>
    %768 = arith.addf %766, %767 : vector<32x64xf32>
    %769 = arith.mulf %768, %758 : vector<32x64xf32>
    %cst_319 = arith.constant 0.254829586 : f32
    %770 = vector.broadcast %cst_319 : f32 to vector<32x64xf32>
    %771 = arith.addf %769, %770 : vector<32x64xf32>
    %772 = arith.mulf %771, %758 : vector<32x64xf32>
    %cst_320 = arith.constant 0.000000e+00 : f32
    %773 = vector.broadcast %cst_320 : f32 to vector<32x64xf32>
    %774 = arith.subf %773, %752 : vector<32x64xf32>
    %775 = arith.mulf %774, %752 : vector<32x64xf32>
    %776 = math.exp %775 : vector<32x64xf32>
    %777 = arith.mulf %772, %776 : vector<32x64xf32>
    %cst_321 = arith.constant 1.000000e+00 : f32
    %778 = vector.broadcast %cst_321 : f32 to vector<32x64xf32>
    %779 = arith.subf %778, %777 : vector<32x64xf32>
    %780 = arith.mulf %751, %779 : vector<32x64xf32>
    %cst_322 = arith.constant 1.000000e+00 : f32
    %781 = vector.broadcast %cst_322 : f32 to vector<32x64xf32>
    %782 = arith.addf %781, %780 : vector<32x64xf32>
    %783 = arith.mulf %744, %782 : vector<32x64xf32>
    %c2_323 = arith.constant 2 : index
    %c0_324 = arith.constant 0 : index
    %c0_325 = arith.constant 0 : index
    %784 = vector.load %arg24[%c2_323, %c0_324, %c0_325] : memref<3x64x32xf32, #tpu.memory_space<vmem>>, vector<1x64x32xf32>
    %785 = vector.shape_cast %784 : vector<1x64x32xf32> to vector<64x32xf32>
    %cst_326 = arith.constant dense<0.000000e+00> : vector<32x32xf32>
    %786 = tpu.matmul %783, %785, %cst_326 {dimension_numbers = #tpu.dot_dimension_numbers<[1], [0], [0], [1], [0, 0, 1, 1], [], []>} : vector<32x64xf32>, vector<64x32xf32>, vector<32x32xf32> -> vector<32x32xf32>
    %787 = arith.addf %735, %786 : vector<32x32xf32>
    %c2_327 = arith.constant 2 : index
    %c0_328 = arith.constant 0 : index
    %c0_329 = arith.constant 0 : index
    %788 = vector.load %arg25[%c2_327, %c0_328, %c0_329] : memref<3x1x32xf32, #tpu.memory_space<vmem>>, vector<1x1x32xf32>
    %789 = vector.shape_cast %788 : vector<1x1x32xf32> to vector<1x32xf32>
    %790 = vector.broadcast %789 : vector<1x32xf32> to vector<32x32xf32>
    %791 = arith.addf %787, %790 : vector<32x32xf32>
    %c0_330 = arith.constant 0 : index
    %c0_331 = arith.constant 0 : index
    %792 = vector.load %arg26[%c0_330, %c0_331] : memref<32x32xf32, #tpu.memory_space<vmem>>, vector<32x32xf32>
    %cst_332 = arith.constant dense<0.000000e+00> : vector<32x32xf32>
    %793 = tpu.matmul %791, %792, %cst_332 {dimension_numbers = #tpu.dot_dimension_numbers<[1], [0], [0], [1], [0, 0, 1, 1], [], []>} : vector<32x32xf32>, vector<32x32xf32>, vector<32x32xf32> -> vector<32x32xf32>
    %c0_333 = arith.constant 0 : index
    %c0_334 = arith.constant 0 : index
    %794 = vector.load %arg27[%c0_333, %c0_334] : memref<1x32xf32, #tpu.memory_space<vmem>>, vector<1x32xf32>
    %795 = vector.broadcast %794 : vector<1x32xf32> to vector<32x32xf32>
    %796 = arith.addf %793, %795 : vector<32x32xf32>
    %c0_335 = arith.constant 0 : index
    %c0_336 = arith.constant 0 : index
    %797 = vector.load %arg28[%c0_335, %c0_336] : memref<32x32xf32, #tpu.memory_space<vmem>>, vector<32x32xf32>
    tpu.vector_store %arg28[%c0_335, %c0_336], %796 {strides = array<i32>} : memref<32x32xf32, #tpu.memory_space<vmem>>, vector<32x32xf32>,
    %c0_337 = arith.constant 0 : index
    %c0_338 = arith.constant 0 : index
    %798 = vector.load %arg5[%c0_337, %c0_338] : memref<2x32xf32, #tpu.memory_space<vmem>>, vector<2x32xf32>
    %cst_339 = arith.constant dense<0.000000e+00> : vector<2x32xf32>
    %799 = tpu.matmul %798, %796, %cst_339 {dimension_numbers = #tpu.dot_dimension_numbers<[1], [0], [0], [1], [0, 0, 1, 1], [], []>} : vector<2x32xf32>, vector<32x32xf32>, vector<2x32xf32> -> vector<2x32xf32>
    %c0_340 = arith.constant 0 : index
    %c0_341 = arith.constant 0 : index
    %800 = vector.load %arg29[%c0_340, %c0_341] : memref<2x32xf32, #tpu.memory_space<vmem>>, vector<2x32xf32>
    tpu.vector_store %arg29[%c0_340, %c0_341], %799 {strides = array<i32>} : memref<2x32xf32, #tpu.memory_space<vmem>>, vector<2x32xf32>,
    return
  }
}

</mosaic_0001>

<llo_original>
// kernel: _lambda_.1
$region0: #{_lambda_.1}
  #allocation0 [shape = 'u32[]', space=smem, size = 0x4, offset = 0x4, fixed_abs, tag = 'smem constant byte address 0x4 - core index']
  #allocation1 [shape = 'u32[144,128]{1,0:T(1,128)}', space=vmem, size = 0x12000, scoped, tag = 'internal scratch']
  %s0 = inlined_call_operand.smem [shape: u32[30], index: -1, kind: input, shape index: {}]
  %s1 = sld [smem:[%s0]]
  %s2 = scalar_lea.smem %s0, 1
  %s3 = sld [smem:[%s2]]
  %s4 = scalar_lea.smem %s0, 2
  %s5 = sld [smem:[%s4]]
  %s6 = scalar_lea.smem %s0, 3
  %s7 = sld [smem:[%s6]]
  %s8 = scalar_lea.smem %s0, 4
  %s9 = sld [smem:[%s8]]
  %s10 = scalar_lea.smem %s0, 5
  %s11 = sld [smem:[%s10]]
  %s12 = scalar_lea.smem %s0, 6
  %s13 = sld [smem:[%s12]]
  %s14 = scalar_lea.smem %s0, 7
  %s15 = sld [smem:[%s14]]
  %s16 = scalar_lea.smem %s0, 8
  %s17 = sld [smem:[%s16]]
  %s18 = scalar_lea.smem %s0, 9
  %s19 = sld [smem:[%s18]]
  %s20 = scalar_lea.smem %s0, 10
  %s21 = sld [smem:[%s20]]
  %s22 = scalar_lea.smem %s0, 11
  %s23 = sld [smem:[%s22]]
  %s24 = scalar_lea.smem %s0, 12
  %s25 = sld [smem:[%s24]]
  %s26 = scalar_lea.smem %s0, 13
  %s27 = sld [smem:[%s26]]
  %s28 = scalar_lea.smem %s0, 14
  %s29 = sld [smem:[%s28]]
  %s30 = scalar_lea.smem %s0, 15
  %s31 = sld [smem:[%s30]]
  %s32 = scalar_lea.smem %s0, 16
  %s33 = sld [smem:[%s32]]
  %s34 = scalar_lea.smem %s0, 17
  %s35 = sld [smem:[%s34]]
  %s36 = scalar_lea.smem %s0, 18
  %s37 = sld [smem:[%s36]]
  %s38 = scalar_lea.smem %s0, 19
  %s39 = sld [smem:[%s38]]
  %s40 = scalar_lea.smem %s0, 20
  %s41 = sld [smem:[%s40]]
  %s42 = scalar_lea.smem %s0, 21
  %s43 = sld [smem:[%s42]]
  %s44 = scalar_lea.smem %s0, 22
  %s45 = sld [smem:[%s44]]
  %s46 = scalar_lea.smem %s0, 23
  %s47 = sld [smem:[%s46]]
  %s48 = scalar_lea.smem %s0, 24
  %s49 = sld [smem:[%s48]]
  %s50 = scalar_lea.smem %s0, 25
  %s51 = sld [smem:[%s50]]
  %s52 = scalar_lea.smem %s0, 26
  %s53 = sld [smem:[%s52]]
  %s54 = scalar_lea.smem %s0, 27
  %s55 = sld [smem:[%s54]]
  %s56 = scalar_lea.smem %s0, 28
  %s57 = sld [smem:[%s56]]
  %s58 = scalar_lea.smem %s0, 29
  %s59 = sld [smem:[%s58]]
  %60 = xla_tuple %s57, %s59
  %s61 = sld [smem:[#allocation0]]
  $region198: #{_lambda_.1} parent=0
    _
  %s63 = ssub.s32 1, %s61
  %s64 = scalar_select 0, %s63, %s61
  $region1: #{_lambda_.1} parent=0
    #allocation2 [shape = 'u8[24576]{0}', space=vmem, size = 0x6000, scoped, tag = 'input window, operand 2, single buffered']
    #allocation3 [shape = 's32[1]{0}', space=sflag, size = 0x4, scoped, tag = 'scoped memory for _lambda_.1']
    #allocation4 [shape = 's32[1]{0}', space=sflag, size = 0x4, scoped, tag = 'scoped memory for _lambda_.1']
    #allocation5 [shape = 'u8[1024]{0}', space=vmem, size = 0x400, scoped, tag = 'input window, operand 5, single buffered']
    #allocation6 [shape = 's32[1]{0}', space=sflag, size = 0x4, scoped, tag = 'scoped memory for _lambda_.1']
    #allocation7 [shape = 'u8[512]{0}', space=vmem, size = 0x400, scoped, tag = 'input window, operand 8, single buffered']
    #allocation8 [shape = 'u8[512]{0}', space=vmem, size = 0x400, scoped, tag = 'input window, operand 9, single buffered']
    #allocation9 [shape = 's32[1]{0}', space=sflag, size = 0x4, scoped, tag = 'scoped memory for _lambda_.1']
    #allocation10 [shape = 'u8[16384]{0}', space=vmem, size = 0x4000, scoped, tag = 'input window, operand 10, single buffered']
    #allocation11 [shape = 'u8[512]{0}', space=vmem, size = 0x400, scoped, tag = 'input window, operand 11, single buffered']
    #allocation12 [shape = 's32[1]{0}', space=sflag, size = 0x4, scoped, tag = 'scoped memory for _lambda_.1']
    #allocation13 [shape = 'u8[1536]{0}', space=vmem, size = 0x800, scoped, tag = 'input window, operand 13, single buffered']
    #allocation14 [shape = 'u8[1536]{0}', space=vmem, size = 0x800, scoped, tag = 'input window, operand 15, single buffered']
    #allocation15 [shape = 's32[1]{0}', space=sflag, size = 0x4, scoped, tag = 'scoped memory for _lambda_.1']
    #allocation16 [shape = 'u8[1536]{0}', space=vmem, size = 0x800, scoped, tag = 'input window, operand 17, single buffered']
    #allocation17 [shape = 'u8[1536]{0}', space=vmem, size = 0x800, scoped, tag = 'input window, operand 19, single buffered']
    #allocation18 [shape = 's32[1]{0}', space=sflag, size = 0x4, scoped, tag = 'scoped memory for _lambda_.1']
    #allocation19 [shape = 'u8[1536]{0}', space=vmem, size = 0x800, scoped, tag = 'input window, operand 20, single buffered']
    #allocation20 [shape = 'u8[1536]{0}', space=vmem, size = 0x800, scoped, tag = 'input window, operand 21, single buffered']
    #allocation21 [shape = 's32[1]{0}', space=sflag, size = 0x4, scoped, tag = 'scoped memory for _lambda_.1']
    #allocation22 [shape = 'u8[49152]{0}', space=vmem, size = 0xc000, scoped, tag = 'input window, operand 22, single buffered']
    #allocation23 [shape = 'u8[1536]{0}', space=vmem, size = 0x800, scoped, tag = 'input window, operand 23, single buffered']
    #allocation24 [shape = 's32[1]{0}', space=sflag, size = 0x4, scoped, tag = 'scoped memory for _lambda_.1']
    #allocation25 [shape = 'u8[1536]{0}', space=vmem, size = 0x800, scoped, tag = 'input window, operand 25, single buffered']
    #allocation26 [shape = 'u8[16384]{0}', space=vmem, size = 0x4000, scoped, tag = 'input window, operand 26, single buffered']
    #allocation27 [shape = 's32[1]{0}', space=sflag, size = 0x4, scoped, tag = 'scoped memory for _lambda_.1']
    #allocation28 [shape = 'u8[512]{0}', space=vmem, size = 0x400, scoped, tag = 'input window, operand 27, single buffered']
    #allocation29 [shape = 'u8[16384]{0}', space=vmem, size = 0x4000, scoped, tag = 'output window, operand 0, single buffered']
    #allocation30 [shape = 'u8[1024]{0}', space=vmem, size = 0x400, scoped, tag = 'output window, operand 1, single buffered']
    #allocation31 [shape = 's32[1]{0}', space=sflag, size = 0x4, scoped, tag = 'scoped memory for _lambda_.1']
    %65 = vsyncpa [#allocation3], 0
    %66 = vsyncpa [#allocation6], 0
    %67 = vsyncpa [#allocation9], 0
    %68 = vsyncpa [#allocation12], 0
    %69 = vsyncpa [#allocation15], 0
    %70 = vsyncpa [#allocation18], 0
    %71 = vsyncpa [#allocation21], 0
    %72 = vsyncpa [#allocation24], 0
    %73 = vsyncpa [#allocation27], 0
    %74 = vsyncpa [#allocation4], 0
    %75 = vsyncpa [#allocation31], 0
    // Predicated region
    $region2: #{_lambda_.1} parent=1 // pred_check
      _
    $region3: #{_lambda_.1} parent=1 // pred_check_branch
      %77 = sbr.rel (0) target = $region5
    $region4: #{_lambda_.1} parent=1 // pred_region
      _
    $region5: #{_lambda_.1} parent=1 // pred_fallthru
      _
    // Predicated region
    $region6: #{_lambda_.1} parent=1 // pred_check
      _
    $region7: #{_lambda_.1} parent=1 // pred_check_branch
      %79 = sbr.rel (0) target = $region9
    $region8: #{_lambda_.1} parent=1 // pred_region
      _
    $region9: #{_lambda_.1} parent=1 // pred_fallthru
      _
    // Predicated region
    $region10: #{_lambda_.1} parent=1 // pred_check
      _
    $region11: #{_lambda_.1} parent=1 // pred_check_branch
      %81 = sbr.rel (0) target = $region13
    $region12: #{_lambda_.1} parent=1 // pred_region
      %s83 = ssub.s32 768, 768
      %84 = vsyncadd [#allocation3], %s83
      %s85 = sshll.u32 [#allocation2], 4
      %s86 = int_to_ptr.vmem [resolvable:$true] %s85
      %91 = dma.hbm_to_vmem [thread:$0]  %s5, 768, %s86, [#allocation3], 128, 128, 8
    $region13: #{_lambda_.1} parent=1 // pred_fallthru
      _
    // Predicated region
    $region14: #{_lambda_.1} parent=1 // pred_check
      _
    $region15: #{_lambda_.1} parent=1 // pred_check_branch
      %93 = sbr.rel (0) target = $region17
    $region16: #{_lambda_.1} parent=1 // pred_region
      _
    $region17: #{_lambda_.1} parent=1 // pred_fallthru
      _
    // Predicated region
    $region18: #{_lambda_.1} parent=1 // pred_check
      _
    $region19: #{_lambda_.1} parent=1 // pred_check_branch
      %95 = sbr.rel (0) target = $region21
    $region20: #{_lambda_.1} parent=1 // pred_region
      _
    $region21: #{_lambda_.1} parent=1 // pred_fallthru
      _
    // Predicated region
    $region22: #{_lambda_.1} parent=1 // pred_check
      _
    $region23: #{_lambda_.1} parent=1 // pred_check_branch
      %97 = sbr.rel (0) target = $region25
    $region24: #{_lambda_.1} parent=1 // pred_region
      %s99 = ssub.s32 32, 32
      %100 = vsyncadd [#allocation6], %s99
      %s102 = sshll.u32 [#allocation5], 4
      %s103 = int_to_ptr.vmem [resolvable:$true] %s102
      %105 = dma.hbm_to_vmem [thread:$0]  %s11, 32, %s103, [#allocation6]
    $region25: #{_lambda_.1} parent=1 // pred_fallthru
      _
    // Predicated region
    $region26: #{_lambda_.1} parent=1 // pred_check
      _
    $region27: #{_lambda_.1} parent=1 // pred_check_branch
      %107 = sbr.rel (0) target = $region29
    $region28: #{_lambda_.1} parent=1 // pred_region
      _
    $region29: #{_lambda_.1} parent=1 // pred_fallthru
      _
    // Predicated region
    $region30: #{_lambda_.1} parent=1 // pred_check
      _
    $region31: #{_lambda_.1} parent=1 // pred_check_branch
      %109 = sbr.rel (0) target = $region33
    $region32: #{_lambda_.1} parent=1 // pred_region
      _
    $region33: #{_lambda_.1} parent=1 // pred_fallthru
      _
    // Predicated region
    $region34: #{_lambda_.1} parent=1 // pred_check
      _
    $region35: #{_lambda_.1} parent=1 // pred_check_branch
      %111 = sbr.rel (0) target = $region37
    $region36: #{_lambda_.1} parent=1 // pred_region
      %s113 = ssub.s32 16, 16
      %114 = vsyncadd [#allocation6], %s113
      %s116 = sshll.u32 [#allocation7], 4
      %s117 = int_to_ptr.vmem [resolvable:$true] %s116
      %119 = dma.hbm_to_vmem [thread:$0]  %s17, 16, %s117, [#allocation6]
    $region37: #{_lambda_.1} parent=1 // pred_fallthru
      _
    // Predicated region
    $region38: #{_lambda_.1} parent=1 // pred_check
      _
    $region39: #{_lambda_.1} parent=1 // pred_check_branch
      %121 = sbr.rel (0) target = $region41
    $region40: #{_lambda_.1} parent=1 // pred_region
      %s123 = ssub.s32 16, 16
      %124 = vsyncadd [#allocation9], %s123
      %s126 = sshll.u32 [#allocation8], 4
      %s127 = int_to_ptr.vmem [resolvable:$true] %s126
      %129 = dma.hbm_to_vmem [thread:$0]  %s19, 16, %s127, [#allocation9]
    $region41: #{_lambda_.1} parent=1 // pred_fallthru
      _
    // Predicated region
    $region42: #{_lambda_.1} parent=1 // pred_check
      _
    $region43: #{_lambda_.1} parent=1 // pred_check_branch
      %131 = sbr.rel (0) target = $region45
    $region44: #{_lambda_.1} parent=1 // pred_region
      %s133 = ssub.s32 512, 512
      %134 = vsyncadd [#allocation9], %s133
      %s135 = sshll.u32 [#allocation10], 4
      %s136 = int_to_ptr.vmem [resolvable:$true] %s135
      %141 = dma.hbm_to_vmem [thread:$0]  %s21, 512, %s136, [#allocation9], 128, 128, 8
    $region45: #{_lambda_.1} parent=1 // pred_fallthru
      _
    // Predicated region
    $region46: #{_lambda_.1} parent=1 // pred_check
      _
    $region47: #{_lambda_.1} parent=1 // pred_check_branch
      %143 = sbr.rel (0) target = $region49
    $region48: #{_lambda_.1} parent=1 // pred_region
      %s145 = ssub.s32 16, 16
      %146 = vsyncadd [#allocation12], %s145
      %s148 = sshll.u32 [#allocation11], 4
      %s149 = int_to_ptr.vmem [resolvable:$true] %s148
      %151 = dma.hbm_to_vmem [thread:$0]  %s23, 16, %s149, [#allocation12]
    $region49: #{_lambda_.1} parent=1 // pred_fallthru
      _
    // Predicated region
    $region50: #{_lambda_.1} parent=1 // pred_check
      _
    $region51: #{_lambda_.1} parent=1 // pred_check_branch
      %153 = sbr.rel (0) target = $region53
    $region52: #{_lambda_.1} parent=1 // pred_region
      _
    $region53: #{_lambda_.1} parent=1 // pred_fallthru
      _
    // Predicated region
    $region54: #{_lambda_.1} parent=1 // pred_check
      _
    $region55: #{_lambda_.1} parent=1 // pred_check_branch
      %155 = sbr.rel (0) target = $region57
    $region56: #{_lambda_.1} parent=1 // pred_region
      %s157 = ssub.s32 48, 48
      %158 = vsyncadd [#allocation12], %s157
      %s159 = sshll.u32 [#allocation13], 4
      %s160 = int_to_ptr.vmem [resolvable:$true] %s159
      %165 = dma.hbm_to_vmem [thread:$0]  %s27, 48, %s160, [#allocation12], 16, 16, 1
    $region57: #{_lambda_.1} parent=1 // pred_fallthru
      _
    // Predicated region
    $region58: #{_lambda_.1} parent=1 // pred_check
      _
    $region59: #{_lambda_.1} parent=1 // pred_check_branch
      %167 = sbr.rel (0) target = $region61
    $region60: #{_lambda_.1} parent=1 // pred_region
      _
    $region61: #{_lambda_.1} parent=1 // pred_fallthru
      _
    // Predicated region
    $region62: #{_lambda_.1} parent=1 // pred_check
      _
    $region63: #{_lambda_.1} parent=1 // pred_check_branch
      %169 = sbr.rel (0) target = $region65
    $region64: #{_lambda_.1} parent=1 // pred_region
      %s171 = ssub.s32 48, 48
      %172 = vsyncadd [#allocation15], %s171
      %s173 = sshll.u32 [#allocation14], 4
      %s174 = int_to_ptr.vmem [resolvable:$true] %s173
      %179 = dma.hbm_to_vmem [thread:$0]  %s31, 48, %s174, [#allocation15], 16, 16, 1
    $region65: #{_lambda_.1} parent=1 // pred_fallthru
      _
    // Predicated region
    $region66: #{_lambda_.1} parent=1 // pred_check
      _
    $region67: #{_lambda_.1} parent=1 // pred_check_branch
      %181 = sbr.rel (0) target = $region69
    $region68: #{_lambda_.1} parent=1 // pred_region
      _
    $region69: #{_lambda_.1} parent=1 // pred_fallthru
      _
    // Predicated region
    $region70: #{_lambda_.1} parent=1 // pred_check
      _
    $region71: #{_lambda_.1} parent=1 // pred_check_branch
      %183 = sbr.rel (0) target = $region73
    $region72: #{_lambda_.1} parent=1 // pred_region
      %s185 = ssub.s32 48, 48
      %186 = vsyncadd [#allocation15], %s185
      %s187 = sshll.u32 [#allocation16], 4
      %s188 = int_to_ptr.vmem [resolvable:$true] %s187
      %193 = dma.hbm_to_vmem [thread:$0]  %s35, 48, %s188, [#allocation15], 16, 16, 1
    $region73: #{_lambda_.1} parent=1 // pred_fallthru
      _
    // Predicated region
    $region74: #{_lambda_.1} parent=1 // pred_check
      _
    $region75: #{_lambda_.1} parent=1 // pred_check_branch
      %195 = sbr.rel (0) target = $region77
    $region76: #{_lambda_.1} parent=1 // pred_region
      _
    $region77: #{_lambda_.1} parent=1 // pred_fallthru
      _
    // Predicated region
    $region78: #{_lambda_.1} parent=1 // pred_check
      _
    $region79: #{_lambda_.1} parent=1 // pred_check_branch
      %197 = sbr.rel (0) target = $region81
    $region80: #{_lambda_.1} parent=1 // pred_region
      %s199 = ssub.s32 48, 48
      %200 = vsyncadd [#allocation18], %s199
      %s201 = sshll.u32 [#allocation17], 4
      %s202 = int_to_ptr.vmem [resolvable:$true] %s201
      %207 = dma.hbm_to_vmem [thread:$0]  %s39, 48, %s202, [#allocation18], 16, 16, 1
    $region81: #{_lambda_.1} parent=1 // pred_fallthru
      _
    // Predicated region
    $region82: #{_lambda_.1} parent=1 // pred_check
      _
    $region83: #{_lambda_.1} parent=1 // pred_check_branch
      %209 = sbr.rel (0) target = $region85
    $region84: #{_lambda_.1} parent=1 // pred_region
      %s211 = ssub.s32 48, 48
      %212 = vsyncadd [#allocation18], %s211
      %s213 = sshll.u32 [#allocation19], 4
      %s214 = int_to_ptr.vmem [resolvable:$true] %s213
      %219 = dma.hbm_to_vmem [thread:$0]  %s41, 48, %s214, [#allocation18], 16, 16, 1
    $region85: #{_lambda_.1} parent=1 // pred_fallthru
      _
    // Predicated region
    $region86: #{_lambda_.1} parent=1 // pred_check
      _
    $region87: #{_lambda_.1} parent=1 // pred_check_branch
      %221 = sbr.rel (0) target = $region89
    $region88: #{_lambda_.1} parent=1 // pred_region
      %s223 = ssub.s32 48, 48
      %224 = vsyncadd [#allocation21], %s223
      %s225 = sshll.u32 [#allocation20], 4
      %s226 = int_to_ptr.vmem [resolvable:$true] %s225
      %231 = dma.hbm_to_vmem [thread:$0]  %s43, 48, %s226, [#allocation21], 16, 16, 1
    $region89: #{_lambda_.1} parent=1 // pred_fallthru
      _
    // Predicated region
    $region90: #{_lambda_.1} parent=1 // pred_check
      _
    $region91: #{_lambda_.1} parent=1 // pred_check_branch
      %233 = sbr.rel (0) target = $region93
    $region92: #{_lambda_.1} parent=1 // pred_region
      %s235 = ssub.s32 1536, 1536
      %236 = vsyncadd [#allocation21], %s235
      %s237 = sshll.u32 [#allocation22], 4
      %s238 = int_to_ptr.vmem [resolvable:$true] %s237
      %243 = dma.hbm_to_vmem [thread:$0]  %s45, 1536, %s238, [#allocation21], 128, 128, 8
    $region93: #{_lambda_.1} parent=1 // pred_fallthru
      _
    // Predicated region
    $region94: #{_lambda_.1} parent=1 // pred_check
      _
    $region95: #{_lambda_.1} parent=1 // pred_check_branch
      %245 = sbr.rel (0) target = $region97
    $region96: #{_lambda_.1} parent=1 // pred_region
      %s247 = ssub.s32 48, 48
      %248 = vsyncadd [#allocation24], %s247
      %s249 = sshll.u32 [#allocation23], 4
      %s250 = int_to_ptr.vmem [resolvable:$true] %s249
      %255 = dma.hbm_to_vmem [thread:$0]  %s47, 48, %s250, [#allocation24], 16, 16, 1
    $region97: #{_lambda_.1} parent=1 // pred_fallthru
      _
    // Predicated region
    $region98: #{_lambda_.1} parent=1 // pred_check
      _
    $region99: #{_lambda_.1} parent=1 // pred_check_branch
      %257 = sbr.rel (0) target = $region101
    $region100: #{_lambda_.1} parent=1 // pred_region
      _
    $region101: #{_lambda_.1} parent=1 // pred_fallthru
      _
    // Predicated region
    $region102: #{_lambda_.1} parent=1 // pred_check
      _
    $region103: #{_lambda_.1} parent=1 // pred_check_branch
      %259 = sbr.rel (0) target = $region105
    $region104: #{_lambda_.1} parent=1 // pred_region
      %s261 = ssub.s32 48, 48
      %262 = vsyncadd [#allocation24], %s261
      %s263 = sshll.u32 [#allocation25], 4
      %s264 = int_to_ptr.vmem [resolvable:$true] %s263
      %269 = dma.hbm_to_vmem [thread:$0]  %s51, 48, %s264, [#allocation24], 16, 16, 1
    $region105: #{_lambda_.1} parent=1 // pred_fallthru
      _
    // Predicated region
    $region106: #{_lambda_.1} parent=1 // pred_check
      _
    $region107: #{_lambda_.1} parent=1 // pred_check_branch
      %271 = sbr.rel (0) target = $region109
    $region108: #{_lambda_.1} parent=1 // pred_region
      %s273 = ssub.s32 512, 512
      %274 = vsyncadd [#allocation27], %s273
      %s275 = sshll.u32 [#allocation26], 4
      %s276 = int_to_ptr.vmem [resolvable:$true] %s275
      %281 = dma.hbm_to_vmem [thread:$0]  %s53, 512, %s276, [#allocation27], 128, 128, 8
    $region109: #{_lambda_.1} parent=1 // pred_fallthru
      _
    // Predicated region
    $region110: #{_lambda_.1} parent=1 // pred_check
      _
    $region111: #{_lambda_.1} parent=1 // pred_check_branch
      %283 = sbr.rel (0) target = $region113
    $region112: #{_lambda_.1} parent=1 // pred_region
      %s285 = ssub.s32 16, 16
      %286 = vsyncadd [#allocation27], %s285
      %s288 = sshll.u32 [#allocation28], 4
      %s289 = int_to_ptr.vmem [resolvable:$true] %s288
      %291 = dma.hbm_to_vmem [thread:$0]  %s55, 16, %s289, [#allocation27]
    $region113: #{_lambda_.1} parent=1 // pred_fallthru
      _
    // Predicated region
    $region114: #{_lambda_.1} parent=1 // pred_check
      _
    $region115: #{_lambda_.1} parent=1 // pred_check_branch
      %293 = sbr.rel (0) target = $region117
    $region116: #{_lambda_.1} parent=1 // pred_region
      %294 = dma.done [#allocation3], 768
    $region117: #{_lambda_.1} parent=1 // pred_fallthru
      _
    // Predicated region
    $region118: #{_lambda_.1} parent=1 // pred_check
      _
    $region119: #{_lambda_.1} parent=1 // pred_check_branch
      %296 = sbr.rel (0) target = $region121
    $region120: #{_lambda_.1} parent=1 // pred_region
      %297 = dma.done [#allocation6], 32
    $region121: #{_lambda_.1} parent=1 // pred_fallthru
      _
    // Predicated region
    $region122: #{_lambda_.1} parent=1 // pred_check
      _
    $region123: #{_lambda_.1} parent=1 // pred_check_branch
      %299 = sbr.rel (0) target = $region125
    $region124: #{_lambda_.1} parent=1 // pred_region
      %300 = dma.done [#allocation6], 16
    $region125: #{_lambda_.1} parent=1 // pred_fallthru
      _
    // Predicated region
    $region126: #{_lambda_.1} parent=1 // pred_check
      _
    $region127: #{_lambda_.1} parent=1 // pred_check_branch
      %302 = sbr.rel (0) target = $region129
    $region128: #{_lambda_.1} parent=1 // pred_region
      %303 = dma.done [#allocation9], 16
    $region129: #{_lambda_.1} parent=1 // pred_fallthru
      _
    // Predicated region
    $region130: #{_lambda_.1} parent=1 // pred_check
      _
    $region131: #{_lambda_.1} parent=1 // pred_check_branch
      %305 = sbr.rel (0) target = $region133
    $region132: #{_lambda_.1} parent=1 // pred_region
      %306 = dma.done [#allocation9], 512
    $region133: #{_lambda_.1} parent=1 // pred_fallthru
      _
    // Predicated region
    $region134: #{_lambda_.1} parent=1 // pred_check
      _
    $region135: #{_lambda_.1} parent=1 // pred_check_branch
      %308 = sbr.rel (0) target = $region137
    $region136: #{_lambda_.1} parent=1 // pred_region
      %309 = dma.done [#allocation12], 16
    $region137: #{_lambda_.1} parent=1 // pred_fallthru
      _
    // Predicated region
    $region138: #{_lambda_.1} parent=1 // pred_check
      _
    $region139: #{_lambda_.1} parent=1 // pred_check_branch
      %311 = sbr.rel (0) target = $region141
    $region140: #{_lambda_.1} parent=1 // pred_region
      %312 = dma.done [#allocation12], 48
    $region141: #{_lambda_.1} parent=1 // pred_fallthru
      _
    // Predicated region
    $region142: #{_lambda_.1} parent=1 // pred_check
      _
    $region143: #{_lambda_.1} parent=1 // pred_check_branch
      %314 = sbr.rel (0) target = $region145
    $region144: #{_lambda_.1} parent=1 // pred_region
      %315 = dma.done [#allocation15], 48
    $region145: #{_lambda_.1} parent=1 // pred_fallthru
      _
    // Predicated region
    $region146: #{_lambda_.1} parent=1 // pred_check
      _
    $region147: #{_lambda_.1} parent=1 // pred_check_branch
      %317 = sbr.rel (0) target = $region149
    $region148: #{_lambda_.1} parent=1 // pred_region
      %318 = dma.done [#allocation15], 48
    $region149: #{_lambda_.1} parent=1 // pred_fallthru
      _
    // Predicated region
    $region150: #{_lambda_.1} parent=1 // pred_check
      _
    $region151: #{_lambda_.1} parent=1 // pred_check_branch
      %320 = sbr.rel (0) target = $region153
    $region152: #{_lambda_.1} parent=1 // pred_region
      %321 = dma.done [#allocation18], 48
    $region153: #{_lambda_.1} parent=1 // pred_fallthru
      _
    // Predicated region
    $region154: #{_lambda_.1} parent=1 // pred_check
      _
    $region155: #{_lambda_.1} parent=1 // pred_check_branch
      %323 = sbr.rel (0) target = $region157
    $region156: #{_lambda_.1} parent=1 // pred_region
      %324 = dma.done [#allocation18], 48
    $region157: #{_lambda_.1} parent=1 // pred_fallthru
      _
    // Predicated region
    $region158: #{_lambda_.1} parent=1 // pred_check
      _
    $region159: #{_lambda_.1} parent=1 // pred_check_branch
      %326 = sbr.rel (0) target = $region161
    $region160: #{_lambda_.1} parent=1 // pred_region
      %327 = dma.done [#allocation21], 48
    $region161: #{_lambda_.1} parent=1 // pred_fallthru
      _
    // Predicated region
    $region162: #{_lambda_.1} parent=1 // pred_check
      _
    $region163: #{_lambda_.1} parent=1 // pred_check_branch
      %329 = sbr.rel (0) target = $region165
    $region164: #{_lambda_.1} parent=1 // pred_region
      %330 = dma.done [#allocation21], 1536
    $region165: #{_lambda_.1} parent=1 // pred_fallthru
      _
    // Predicated region
    $region166: #{_lambda_.1} parent=1 // pred_check
      _
    $region167: #{_lambda_.1} parent=1 // pred_check_branch
      %332 = sbr.rel (0) target = $region169
    $region168: #{_lambda_.1} parent=1 // pred_region
      %333 = dma.done [#allocation24], 48
    $region169: #{_lambda_.1} parent=1 // pred_fallthru
      _
    // Predicated region
    $region170: #{_lambda_.1} parent=1 // pred_check
      _
    $region171: #{_lambda_.1} parent=1 // pred_check_branch
      %335 = sbr.rel (0) target = $region173
    $region172: #{_lambda_.1} parent=1 // pred_region
      %336 = dma.done [#allocation24], 48
    $region173: #{_lambda_.1} parent=1 // pred_fallthru
      _
    // Predicated region
    $region174: #{_lambda_.1} parent=1 // pred_check
      _
    $region175: #{_lambda_.1} parent=1 // pred_check_branch
      %338 = sbr.rel (0) target = $region177
    $region176: #{_lambda_.1} parent=1 // pred_region
      %339 = dma.done [#allocation27], 512
    $region177: #{_lambda_.1} parent=1 // pred_fallthru
      _
    // Predicated region
    $region178: #{_lambda_.1} parent=1 // pred_check
      _
    $region179: #{_lambda_.1} parent=1 // pred_check_branch
      %341 = sbr.rel (0) target = $region181
    $region180: #{_lambda_.1} parent=1 // pred_region
      %342 = dma.done [#allocation27], 16
    $region181: #{_lambda_.1} parent=1 // pred_fallthru
      _
    %v343 = vld [vmem:[%s3] sm:$0x3]
    %v344 = vld [vmem:[%s7] sm:$0xff]
    %v345 = vld [vmem:[%s7 + $0x8] sm:$0xff]
    %v346 = vld [vmem:[%s7 + $0x10] sm:$0xff]
    %v347 = vld [vmem:[%s7 + $0x18] sm:$0xff]
    %v348 = vld [vmem:[%s9] sm:$0xf]
    %v349 = vld [vmem:[%s1] sm:$0xff]
    %v350 = vld [vmem:[%s1 + $0x8] sm:$0xff]
    %v351 = vld [vmem:[%s1 + $0x10] sm:$0xff]
    %v352 = vld [vmem:[%s1 + $0x18] sm:$0xff]
    %v353 = vld [vmem:[%s13] sm:$0xff]
    %v354 = vld [vmem:[%s13 + $0x8] sm:$0xff]
    %v355 = vld [vmem:[%s13 + $0x10] sm:$0xff]
    %v356 = vld [vmem:[%s13 + $0x18] sm:$0xff]
    %v357 = vld [vmem:[%s13 + $0x20] sm:$0xff]
    %v358 = vld [vmem:[%s13 + $0x28] sm:$0xff]
    %v359 = vld [vmem:[%s13 + $0x30] sm:$0xff]
    %v360 = vld [vmem:[%s15] sm:$0x1]
    %v362 = vlaneseq
    %v363 = vshrl.u32 %v362, 7
    %v364 = vsub.s32 0, %v363
    %v365 = vrot.slane %v360, %v364
    %vm367 = vcmask 457728
    %v369 = vsel %vm367, %v349, 0
    %v372 = vsel %vm367, %v350, 0
    %v375 = vsel %vm367, %v351, 0
    %v378 = vsel %vm367, %v352, 0
    %380 = vmatprep.subr.mxu0 0.0
    %381 = vmatpush1.msra.mxu0 %v353
    %382 = vmatprep.subr.mxu0 0.0
    %383 = vmatpush1.msra.mxu0 %v354
    %384 = vmatprep.subr.mxu0 0.0
    %385 = vmatpush1.msra.mxu0 %v355
    %386 = vmatprep.subr.mxu0 0.0
    %387 = vmatpush1.msra.mxu0 %v356
    %388 = vmatprep.subr.mxu0 0.0
    %389 = vmatpush1.msra.mxu0 %v357
    %390 = vmatprep.subr.mxu0 0.0
    %391 = vmatpush1.msra.mxu0 %v358
    %392 = vmatprep.subr.mxu0 0.0
    %393 = vmatpush1.msra.mxu0 %v359
    %394 = vmatprep.subr.mxu0 0.0
    %395 = vmatpush1.msra.mxu0 0.0
    %396 = vmatprep.subr.mxu0 0.0
    %397 = vmatpush1.msra.mxu0 0.0
    %398 = vmatprep.subr.mxu0 0.0
    %399 = vmatpush1.msra.mxu0 0.0
    %400 = vmatprep.subr.mxu0 0.0
    %401 = vmatpush1.msra.mxu0 0.0
    %402 = vmatprep.subr.mxu0 0.0
    %403 = vmatpush1.msra.mxu0 0.0
    %404 = vmatprep.subr.mxu0 0.0
    %405 = vmatpush1.msra.mxu0 0.0
    %406 = vmatprep.subr.mxu0 0.0
    %407 = vmatpush1.msra.mxu0 0.0
    %408 = vmatprep.subr.mxu0 0.0
    %409 = vmatpush1.msra.mxu0 0.0
    %410 = vmatprep.subr.mxu0 0.0
    %411 = vmatpush1.msra.mxu0 0.0
    %412 = vmatprep.subr.mxu0 0.0
    %413 = vmatpush1.msra.mxu0 0.0
    %414 = vmatprep.subr.mxu0 0.0
    %415 = vmatpush1.msra.mxu0 0.0
    %416 = vmatprep.subr.mxu0 0.0
    %417 = vmatpush1.msra.mxu0 0.0
    %418 = vmatprep.subr.mxu0 0.0
    %419 = vmatpush1.msra.mxu0 0.0
    %420 = vmatprep.subr.mxu0 0.0
    %421 = vmatpush1.msra.mxu0 0.0
    %422 = vmatprep.subr.mxu0 0.0
    %423 = vmatpush1.msra.mxu0 0.0
    %424 = vmatprep.subr.mxu0 0.0
    %425 = vmatpush1.msra.mxu0 0.0
    %426 = vmatprep.subr.mxu0 0.0
    %427 = vmatpush1.msra.mxu0 0.0
    %428 = vmatprep.subr.mxu0 0.0
    %429 = vmatpush1.msra.mxu0 0.0
    %430 = vmatprep.subr.mxu0 0.0
    %431 = vmatpush1.msra.mxu0 0.0
    %432 = vmatprep.subr.mxu0 0.0
    %433 = vmatpush1.msra.mxu0 0.0
    %434 = vmatprep.subr.mxu0 0.0
    %435 = vmatpush1.msra.mxu0 0.0
    %436 = vmatprep.subr.mxu0 0.0
    %437 = vmatpush1.msra.mxu0 0.0
    %438 = vmatprep.subr.mxu0 0.0
    %439 = vmatpush1.msra.mxu0 0.0
    %440 = vmatprep.subr.mxu0 0.0
    %441 = vmatpush1.msra.mxu0 0.0
    %442 = vmatprep.subr.mxu0 0.0
    %443 = vmatpush1.msra.mxu0 0.0
    %444 = vmatprep.mubr.f32.mxu0 0.0
    %445 = vmatmul.mubr.f32.gmra.mrb[0].mxu0 %v369
    %v446 = vpop.f32.mrb[0].mxu0
    %v447 = vadd.f32 %v365, %v446
    %v448 = vpop.f32.mrb[0].mxu0
    %449 = vmatprep.mubr.f32.mxu0 0.0
    %450 = vmatmul.mubr.f32.gmra.mrb[0].mxu0 %v372
    %v451 = vpop.f32.mrb[0].mxu0
    %v452 = vadd.f32 %v365, %v451
    %v453 = vpop.f32.mrb[0].mxu0
    %454 = vmatprep.mubr.f32.mxu0 0.0
    %455 = vmatmul.mubr.f32.gmra.mrb[0].mxu0 %v375
    %v456 = vpop.f32.mrb[0].mxu0
    %v457 = vadd.f32 %v365, %v456
    %v458 = vpop.f32.mrb[0].mxu0
    %459 = vmatprep.mubr.f32.mxu0 0.0
    %460 = vmatmul.mubr.f32.gmra.mrb[0].mxu0 %v378
    %v461 = vpop.f32.mrb[0].mxu0
    %v462 = vadd.f32 %v365, %v461
    %v463 = vpop.f32.mrb[0].mxu0
    %464 = vdwg.mxu0
    %vm465 = vcmask 785408
    %v466 = vsel %vm465, %v447, 0.0
    %v467 = vsel %vm465, %v452, 0.0
    %v468 = vadd.f32 %v466, %v467
    %v469 = vsel %vm465, %v457, 0.0
    %v470 = vadd.f32 %v468, %v469
    %v471 = vsel %vm465, %v462, 0.0
    %v472 = vadd.f32 %v470, %v471
    %v473 = vrot.slane %v472, 4
    %v474 = vadd.f32 %v472, %v473
    %v475 = vrot.slane %v474, 2
    %v476 = vadd.f32 %v474, %v475
    %v477 = vrot.slane %v476, 1
    %v478 = vadd.f32 %v476, %v477
    %v479 = vrcp.pop 32.0
    %v480 = vmul.f32 %v478, %v479
    %v481 = vsub.f32 %v447, %v480
    %v482 = vsub.f32 %v452, %v480
    %v483 = vsub.f32 %v457, %v480
    %v484 = vsub.f32 %v462, %v480
    %v485 = vmul.f32 %v481, %v481
    %v486 = vmul.f32 %v482, %v482
    %v487 = vmul.f32 %v483, %v483
    %v488 = vmul.f32 %v484, %v484
    %v489 = vsel %vm465, %v485, 0.0
    %v490 = vsel %vm465, %v486, 0.0
    %v491 = vadd.f32 %v489, %v490
    %v492 = vsel %vm465, %v487, 0.0
    %v493 = vadd.f32 %v491, %v492
    %v494 = vsel %vm465, %v488, 0.0
    %v495 = vadd.f32 %v493, %v494
    %v496 = vrot.slane %v495, 4
    %v497 = vadd.f32 %v495, %v496
    %v498 = vrot.slane %v497, 2
    %v499 = vadd.f32 %v497, %v498
    %v500 = vrot.slane %v499, 1
    %v501 = vadd.f32 %v499, %v500
    %v502 = vmul.f32 %v501, %v479
    %v503 = vadd.f32 %v502, 1e-05
    %v504 = vrsqrt.pop %v503
    %v505 = vmul.f32 %v481, %v504
    %v506 = vmul.f32 %v482, %v504
    %v507 = vmul.f32 %v483, %v504
    %v508 = vmul.f32 %v484, %v504
    %v509 = vld [vmem:[#allocation7] sm:$0x1]
    %v511 = vlaneseq
    %v512 = vshrl.u32 %v511, 7
    %v513 = vsub.s32 0, %v512
    %v514 = vrot.slane %v509, %v513
    %v516 = vmul.f32 %v505, %v514
    %v517 = vmul.f32 %v506, %v514
    %v518 = vmul.f32 %v507, %v514
    %v519 = vmul.f32 %v508, %v514
    %v520 = vld [vmem:[#allocation8] sm:$0x1]
    %v522 = vlaneseq
    %v523 = vshrl.u32 %v522, 7
    %v524 = vsub.s32 0, %v523
    %v525 = vrot.slane %v520, %v524
    %v527 = vadd.f32 %v516, %v525
    %v528 = vadd.f32 %v517, %v525
    %v529 = vadd.f32 %v518, %v525
    %v530 = vadd.f32 %v519, %v525
    %v531 = vmax.f32 %v527, 0.0
    %v532 = vmax.f32 %v528, 0.0
    %v533 = vmax.f32 %v529, 0.0
    %v534 = vmax.f32 %v530, 0.0
    %539 = vrot.lane.b32.xlu0 %v531, 96
    %v540 = vpop.permute.xlu0 %539
    %541 = vrot.lane.b32.xlu0 %v532, 96
    %v542 = vpop.permute.xlu0 %541
    %543 = vrot.lane.b32.xlu0 %v533, 96
    %v544 = vpop.permute.xlu0 %543
    %545 = vrot.lane.b32.xlu0 %v534, 96
    %v546 = vpop.permute.xlu0 %545
    %v551 = vadd.f32 %v531, %v540
    %v552 = vadd.f32 %v532, %v542
    %v553 = vadd.f32 %v533, %v544
    %v554 = vadd.f32 %v534, %v546
    %555 = vrot.lane.b32.xlu0 %v531, 64
    %v556 = vpop.permute.xlu0 %555
    %557 = vrot.lane.b32.xlu0 %v532, 64
    %v558 = vpop.permute.xlu0 %557
    %559 = vrot.lane.b32.xlu0 %v533, 64
    %v560 = vpop.permute.xlu0 %559
    %561 = vrot.lane.b32.xlu0 %v534, 64
    %v562 = vpop.permute.xlu0 %561
    %v567 = vadd.f32 %v551, %v556
    %v568 = vadd.f32 %v552, %v558
    %v569 = vadd.f32 %v553, %v560
    %v570 = vadd.f32 %v554, %v562
    %v571 = vld [vmem:[#allocation10] sm:$0xff]
    %v572 = vld [vmem:[#allocation10 + $0x8] sm:$0xff]
    %v573 = vld [vmem:[#allocation10 + $0x10] sm:$0xff]
    %v574 = vld [vmem:[#allocation10 + $0x18] sm:$0xff]
    %v575 = vld [vmem:[#allocation11] sm:$0x1]
    %v577 = vlaneseq
    %v578 = vshrl.u32 %v577, 7
    %v579 = vsub.s32 0, %v578
    %v580 = vrot.slane %v575, %v579
    %vm582 = vcmask 261120
    %v584 = vsel %vm582, %v343, 0
    %586 = vmatprep.subr.mxu0 0.0
    %587 = vmatpush1.msra.mxu0 %v571
    %588 = vmatprep.subr.mxu0 0.0
    %589 = vmatpush1.msra.mxu0 %v572
    %590 = vmatprep.subr.mxu0 0.0
    %591 = vmatpush1.msra.mxu0 %v573
    %592 = vmatprep.subr.mxu0 0.0
    %593 = vmatpush1.msra.mxu0 %v574
    %594 = vmatprep.subr.mxu0 0.0
    %595 = vmatpush1.msra.mxu0 0.0
    %596 = vmatprep.subr.mxu0 0.0
    %597 = vmatpush1.msra.mxu0 0.0
    %598 = vmatprep.subr.mxu0 0.0
    %599 = vmatpush1.msra.mxu0 0.0
    %600 = vmatprep.subr.mxu0 0.0
    %601 = vmatpush1.msra.mxu0 0.0
    %602 = vmatprep.subr.mxu0 0.0
    %603 = vmatpush1.msra.mxu0 0.0
    %604 = vmatprep.subr.mxu0 0.0
    %605 = vmatpush1.msra.mxu0 0.0
    %606 = vmatprep.subr.mxu0 0.0
    %607 = vmatpush1.msra.mxu0 0.0
    %608 = vmatprep.subr.mxu0 0.0
    %609 = vmatpush1.msra.mxu0 0.0
    %610 = vmatprep.subr.mxu0 0.0
    %611 = vmatpush1.msra.mxu0 0.0
    %612 = vmatprep.subr.mxu0 0.0
    %613 = vmatpush1.msra.mxu0 0.0
    %614 = vmatprep.subr.mxu0 0.0
    %615 = vmatpush1.msra.mxu0 0.0
    %616 = vmatprep.subr.mxu0 0.0
    %617 = vmatpush1.msra.mxu0 0.0
    %618 = vmatprep.subr.mxu0 0.0
    %619 = vmatpush1.msra.mxu0 0.0
    %620 = vmatprep.subr.mxu0 0.0
    %621 = vmatpush1.msra.mxu0 0.0
    %622 = vmatprep.subr.mxu0 0.0
    %623 = vmatpush1.msra.mxu0 0.0
    %624 = vmatprep.subr.mxu0 0.0
    %625 = vmatpush1.msra.mxu0 0.0
    %626 = vmatprep.subr.mxu0 0.0
    %627 = vmatpush1.msra.mxu0 0.0
    %628 = vmatprep.subr.mxu0 0.0
    %629 = vmatpush1.msra.mxu0 0.0
    %630 = vmatprep.subr.mxu0 0.0
    %631 = vmatpush1.msra.mxu0 0.0
    %632 = vmatprep.subr.mxu0 0.0
    %633 = vmatpush1.msra.mxu0 0.0
    %634 = vmatprep.subr.mxu0 0.0
    %635 = vmatpush1.msra.mxu0 0.0
    %636 = vmatprep.subr.mxu0 0.0
    %637 = vmatpush1.msra.mxu0 0.0
    %638 = vmatprep.subr.mxu0 0.0
    %639 = vmatpush1.msra.mxu0 0.0
    %640 = vmatprep.subr.mxu0 0.0
    %641 = vmatpush1.msra.mxu0 0.0
    %642 = vmatprep.subr.mxu0 0.0
    %643 = vmatpush1.msra.mxu0 0.0
    %644 = vmatprep.subr.mxu0 0.0
    %645 = vmatpush1.msra.mxu0 0.0
    %646 = vmatprep.subr.mxu0 0.0
    %647 = vmatpush1.msra.mxu0 0.0
    %648 = vmatprep.subr.mxu0 0.0
    %649 = vmatpush1.msra.mxu0 0.0
    %650 = vmatprep.mubr.f32.mxu0 0.0
    %651 = vmatmul.mubr.f32.gmra.mrb[0].mxu0 %v584
    %v652 = vpop.f32.mrb[0].mxu0
    %v653 = vadd.f32 %v580, %v652
    %v654 = vpop.f32.mrb[0].mxu0
    %655 = vdwg.mxu0
    %v658 = vunpack.c.l.s4 1966171168
    %v659 = vunpack.c.0.s8 %v658
    %v660 = vlaneseq
    %v661 = vshrl.u32 %v660, 7
    %v662 = vsub.s32 %v659, %v661
    %v663 = vrot.slane %v653, %v662
    %v664 = vcombine.high %v663, %v663
    %v666 = vunpack.c.l.s4 1966171168
    %v667 = vunpack.c.0.s8 %v666
    %v668 = vlaneseq
    %v669 = vshrl.u32 %v668, 7
    %v670 = vsub.s32 %v667, %v669
    %v671 = vrot.slane %v663, %v670
    %v673 = vunpack.c.l.s4 1966171168
    %v674 = vunpack.c.0.s8 %v673
    %v675 = vlaneseq
    %v676 = vshrl.u32 %v675, 7
    %v677 = vsub.s32 %v674, %v676
    %v678 = vrot.slane %v664, %v677
    %v679 = vlaneseq
    %v680 = vshrl.u32 %v679, 7
    %v681 = vsub.s32 0, %v680
    %v682 = vrot.slane %v671, %v681
    %v683 = vlaneseq
    %v684 = vshrl.u32 %v683, 7
    %v685 = vsub.s32 0, %v684
    %v686 = vrot.slane %v678, %v685
    %v689 = vadd.f32 %v682, 1.0
    %v690 = vadd.f32 %v686, 1.0
    %v691 = vsel %vm582, %v567, 0.0
    %692 = vadd.xlane.f32.xlu0 %v691
    %v693 = vpop.xlane.xlu0 %692
    %v694 = vsel %vm582, %v568, 0.0
    %695 = vadd.xlane.f32.xlu0 %v694
    %v696 = vpop.xlane.xlu0 %695
    %v697 = vsel %vm582, %v569, 0.0
    %698 = vadd.xlane.f32.xlu0 %v697
    %v699 = vpop.xlane.xlu0 %698
    %v700 = vsel %vm582, %v570, 0.0
    %701 = vadd.xlane.f32.xlu0 %v700
    %v702 = vpop.xlane.xlu0 %701
    %v703 = vmul.f32 %v693, %v479
    %v704 = vmul.f32 %v696, %v479
    %v705 = vmul.f32 %v699, %v479
    %v706 = vmul.f32 %v702, %v479
    %v707 = vsub.f32 %v567, %v703
    %v708 = vsub.f32 %v568, %v704
    %v709 = vsub.f32 %v569, %v705
    %v710 = vsub.f32 %v570, %v706
    %v711 = vmul.f32 %v707, %v707
    %v712 = vmul.f32 %v708, %v708
    %v713 = vmul.f32 %v709, %v709
    %v714 = vmul.f32 %v710, %v710
    %v715 = vsel %vm582, %v711, 0.0
    %716 = vadd.xlane.f32.xlu0 %v715
    %v717 = vpop.xlane.xlu0 %716
    %v718 = vsel %vm582, %v712, 0.0
    %719 = vadd.xlane.f32.xlu0 %v718
    %v720 = vpop.xlane.xlu0 %719
    %v721 = vsel %vm582, %v713, 0.0
    %722 = vadd.xlane.f32.xlu0 %v721
    %v723 = vpop.xlane.xlu0 %722
    %v724 = vsel %vm582, %v714, 0.0
    %725 = vadd.xlane.f32.xlu0 %v724
    %v726 = vpop.xlane.xlu0 %725
    %v727 = vmul.f32 %v717, %v479
    %v728 = vmul.f32 %v720, %v479
    %v729 = vmul.f32 %v723, %v479
    %v730 = vmul.f32 %v726, %v479
    %v731 = vadd.f32 %v727, 1e-05
    %v732 = vadd.f32 %v728, 1e-05
    %v733 = vadd.f32 %v729, 1e-05
    %v734 = vadd.f32 %v730, 1e-05
    %v735 = vrsqrt.pop %v731
    %v736 = vrsqrt.pop %v732
    %v737 = vrsqrt.pop %v733
    %v738 = vrsqrt.pop %v734
    %v739 = vmul.f32 %v707, %v735
    %v740 = vmul.f32 %v708, %v736
    %v741 = vmul.f32 %v709, %v737
    %v742 = vmul.f32 %v710, %v738
    %v743 = vmul.f32 %v689, %v739
    %v744 = vmul.f32 %v689, %v740
    %v745 = vmul.f32 %v690, %v741
    %v746 = vmul.f32 %v690, %v742
    %747 = vrot.lane.b32.xlu0 %v682, 96
    %v748 = vpop.permute.xlu0 %747
    %749 = vrot.lane.b32.xlu0 %v686, 96
    %v750 = vpop.permute.xlu0 %749
    %v753 = vadd.f32 %v743, %v748
    %v754 = vadd.f32 %v744, %v748
    %v755 = vadd.f32 %v745, %v750
    %v756 = vadd.f32 %v746, %v750
    %v758 = vunpack.c.l.s4 1966171168
    %v759 = vunpack.c.0.s8 %v758
    %v760 = vlaneseq
    %v761 = vshrl.u32 %v760, 7
    %v762 = vsub.s32 %v759, %v761
    %v763 = vrot.slane %v343, %v762
    %v764 = vcombine.high %v763, %v763
    %v766 = vunpack.c.l.s4 1966171168
    %v767 = vunpack.c.0.s8 %v766
    %v768 = vlaneseq
    %v769 = vshrl.u32 %v768, 7
    %v770 = vsub.s32 %v767, %v769
    %v771 = vrot.slane %v763, %v770
    %v773 = vunpack.c.l.s4 1966171168
    %v774 = vunpack.c.0.s8 %v773
    %v775 = vlaneseq
    %v776 = vshrl.u32 %v775, 7
    %v777 = vsub.s32 %v774, %v776
    %v778 = vrot.slane %v764, %v777
    %v779 = vlaneseq
    %v780 = vshrl.u32 %v779, 7
    %v781 = vsub.s32 0, %v780
    %v782 = vrot.slane %v771, %v781
    %v783 = vlaneseq
    %v784 = vshrl.u32 %v783, 7
    %v785 = vsub.s32 0, %v784
    %v786 = vrot.slane %v778, %v785
    %v789 = vld [vmem:[#allocation2] sm:$0xff]
    %v790 = vld [vmem:[#allocation2 + $0x8] sm:$0xff]
    %v791 = vld [vmem:[%s25] sm:$0xff]
    %v792 = vld [vmem:[%s25 + $0x8] sm:$0xff]
    %v793 = vld [vmem:[%s25 + $0x10] sm:$0xff]
    %v794 = vld [vmem:[%s25 + $0x18] sm:$0xff]
    %v795 = vld [vmem:[%s25 + $0x20] sm:$0x1]
    %v796 = vld [vmem:[#allocation13] sm:$0x1]
    %v798 = vlaneseq
    %v799 = vshrl.u32 %v798, 7
    %v800 = vsub.s32 0, %v799
    %v801 = vrot.slane %v796, %v800
    %vm803 = vcmask 269312
    %v805 = vsel %vm803, %v789, 0
    %v808 = vsel %vm803, %v790, 0
    %vm810 = vcmask 1040384
    %v812 = vsel %vm810, %v795, 0
    %814 = vmatprep.subr.mxu0 0.0
    %815 = vmatpush1.msra.mxu0 %v791
    %816 = vmatprep.subr.mxu0 0.0
    %817 = vmatpush1.msra.mxu0 %v792
    %818 = vmatprep.subr.mxu0 0.0
    %819 = vmatpush1.msra.mxu0 %v793
    %820 = vmatprep.subr.mxu0 0.0
    %821 = vmatpush1.msra.mxu0 %v794
    %822 = vmatprep.subr.mxu0 0.0
    %823 = vmatpush1.msra.mxu0 %v812
    %824 = vmatprep.subr.mxu0 0.0
    %825 = vmatpush1.msra.mxu0 0.0
    %826 = vmatprep.subr.mxu0 0.0
    %827 = vmatpush1.msra.mxu0 0.0
    %828 = vmatprep.subr.mxu0 0.0
    %829 = vmatpush1.msra.mxu0 0.0
    %830 = vmatprep.subr.mxu0 0.0
    %831 = vmatpush1.msra.mxu0 0.0
    %832 = vmatprep.subr.mxu0 0.0
    %833 = vmatpush1.msra.mxu0 0.0
    %834 = vmatprep.subr.mxu0 0.0
    %835 = vmatpush1.msra.mxu0 0.0
    %836 = vmatprep.subr.mxu0 0.0
    %837 = vmatpush1.msra.mxu0 0.0
    %838 = vmatprep.subr.mxu0 0.0
    %839 = vmatpush1.msra.mxu0 0.0
    %840 = vmatprep.subr.mxu0 0.0
    %841 = vmatpush1.msra.mxu0 0.0
    %842 = vmatprep.subr.mxu0 0.0
    %843 = vmatpush1.msra.mxu0 0.0
    %844 = vmatprep.subr.mxu0 0.0
    %845 = vmatpush1.msra.mxu0 0.0
    %846 = vmatprep.subr.mxu0 0.0
    %847 = vmatpush1.msra.mxu0 0.0
    %848 = vmatprep.subr.mxu0 0.0
    %849 = vmatpush1.msra.mxu0 0.0
    %850 = vmatprep.subr.mxu0 0.0
    %851 = vmatpush1.msra.mxu0 0.0
    %852 = vmatprep.subr.mxu0 0.0
    %853 = vmatpush1.msra.mxu0 0.0
    %854 = vmatprep.subr.mxu0 0.0
    %855 = vmatpush1.msra.mxu0 0.0
    %856 = vmatprep.subr.mxu0 0.0
    %857 = vmatpush1.msra.mxu0 0.0
    %858 = vmatprep.subr.mxu0 0.0
    %859 = vmatpush1.msra.mxu0 0.0
    %860 = vmatprep.subr.mxu0 0.0
    %861 = vmatpush1.msra.mxu0 0.0
    %862 = vmatprep.subr.mxu0 0.0
    %863 = vmatpush1.msra.mxu0 0.0
    %864 = vmatprep.subr.mxu0 0.0
    %865 = vmatpush1.msra.mxu0 0.0
    %866 = vmatprep.subr.mxu0 0.0
    %867 = vmatpush1.msra.mxu0 0.0
    %868 = vmatprep.subr.mxu0 0.0
    %869 = vmatpush1.msra.mxu0 0.0
    %870 = vmatprep.subr.mxu0 0.0
    %871 = vmatpush1.msra.mxu0 0.0
    %872 = vmatprep.subr.mxu0 0.0
    %873 = vmatpush1.msra.mxu0 0.0
    %874 = vmatprep.subr.mxu0 0.0
    %875 = vmatpush1.msra.mxu0 0.0
    %876 = vmatprep.subr.mxu0 0.0
    %877 = vmatpush1.msra.mxu0 0.0
    %878 = vmatprep.mubr.f32.mxu0 0.0
    %879 = vmatmul.mubr.f32.gmra.mrb[0].mxu0 %v805
    %v880 = vpop.f32.mrb[0].mxu0
    %v881 = vadd.f32 %v801, %v880
    %v882 = vpop.f32.mrb[0].mxu0
    %883 = vmatprep.mubr.f32.mxu0 0.0
    %884 = vmatmul.mubr.f32.gmra.mrb[0].mxu0 %v808
    %v885 = vpop.f32.mrb[0].mxu0
    %v886 = vadd.f32 %v801, %v885
    %v887 = vpop.f32.mrb[0].mxu0
    %888 = vdwg.mxu0
    %v889 = vmul.f32 %v881, 0.5
    %v890 = vmul.f32 %v886, 0.5
    %v891 = vmul.f32 %v881, 0.70710677
    %v892 = vmul.f32 %v886, 0.70710677
    %vm893 = vcmp.ge.f32.partialorder %v891, 0.0
    %vm894 = vcmp.ge.f32.partialorder %v892, 0.0
    %v895 = vsel %vm893, 1.0, -1.0
    %v896 = vsel %vm894, 1.0, -1.0
    %v897 = vand.u32 2147483647, %v891
    %v898 = vand.u32 2147483647, %v892
    %v899 = vmul.f32 %v897, 0.3275911
    %v900 = vmul.f32 %v898, 0.3275911
    %v901 = vadd.f32 %v899, 1.0
    %v902 = vadd.f32 %v900, 1.0
    %v903 = vrcp.pop %v901
    %v904 = vmul.f32 1.0, %v903
    %v905 = vrcp.pop %v902
    %v906 = vmul.f32 1.0, %v905
    %v907 = vmul.f32 %v904, 1.0614054
    %v908 = vmul.f32 %v906, 1.0614054
    %v909 = vadd.f32 %v907, -1.4531521
    %v910 = vadd.f32 %v908, -1.4531521
    %v911 = vmul.f32 %v909, %v904
    %v912 = vmul.f32 %v910, %v906
    %v913 = vadd.f32 %v911, 1.4214138
    %v914 = vadd.f32 %v912, 1.4214138
    %v915 = vmul.f32 %v913, %v904
    %v916 = vmul.f32 %v914, %v906
    %v917 = vadd.f32 %v915, -0.28449672
    %v918 = vadd.f32 %v916, -0.28449672
    %v919 = vmul.f32 %v917, %v904
    %v920 = vmul.f32 %v918, %v906
    %v921 = vadd.f32 %v919, 0.2548296
    %v922 = vadd.f32 %v920, 0.2548296
    %v923 = vmul.f32 %v921, %v904
    %v924 = vmul.f32 %v922, %v906
    %v925 = vsub.f32 0.0, %v897
    %v926 = vsub.f32 0.0, %v898
    %v927 = vmul.f32 %v925, %v897
    %v928 = vmul.f32 %v926, %v898
    %v929 = vmul.f32 %v927, 1.442695
    %v930 = vpow.pop %v929
    %v931 = vmul.f32 %v928, 1.442695
    %v932 = vpow.pop %v931
    %v933 = vmul.f32 %v923, %v930
    %v934 = vmul.f32 %v924, %v932
    %v935 = vsub.f32 1.0, %v933
    %v936 = vsub.f32 1.0, %v934
    %v937 = vmul.f32 %v895, %v935
    %v938 = vmul.f32 %v896, %v936
    %v939 = vadd.f32 %v937, 1.0
    %v940 = vadd.f32 %v938, 1.0
    %v941 = vmul.f32 %v889, %v939
    %v942 = vmul.f32 %v890, %v940
    %v943 = vadd.f32 %v753, %v782
    %v944 = vadd.f32 %v754, %v782
    %v945 = vadd.f32 %v755, %v786
    %v946 = vadd.f32 %v756, %v786
    %v947 = vadd.f32 %v943, %v941
    %v948 = vadd.f32 %v944, %v942
    %v949 = vadd.f32 %v945, %v941
    %v950 = vadd.f32 %v946, %v942
    %v951 = vld [vmem:[%s29] sm:$0xff]
    %v952 = vld [vmem:[%s29 + $0x8] sm:$0xff]
    %v953 = vld [vmem:[%s29 + $0x10] sm:$0xff]
    %v954 = vld [vmem:[%s29 + $0x18] sm:$0xff]
    %v955 = vld [vmem:[#allocation14] sm:$0x1]
    %v957 = vlaneseq
    %v958 = vshrl.u32 %v957, 7
    %v959 = vsub.s32 0, %v958
    %v960 = vrot.slane %v955, %v959
    %962 = vmatprep.subr.mxu0 0.0
    %963 = vmatpush1.msra.mxu0 %v951
    %964 = vmatprep.subr.mxu0 0.0
    %965 = vmatpush1.msra.mxu0 %v952
    %966 = vmatprep.subr.mxu0 0.0
    %967 = vmatpush1.msra.mxu0 %v953
    %968 = vmatprep.subr.mxu0 0.0
    %969 = vmatpush1.msra.mxu0 %v954
    %970 = vmatprep.subr.mxu0 0.0
    %971 = vmatpush1.msra.mxu0 0.0
    %972 = vmatprep.subr.mxu0 0.0
    %973 = vmatpush1.msra.mxu0 0.0
    %974 = vmatprep.subr.mxu0 0.0
    %975 = vmatpush1.msra.mxu0 0.0
    %976 = vmatprep.subr.mxu0 0.0
    %977 = vmatpush1.msra.mxu0 0.0
    %978 = vmatprep.subr.mxu0 0.0
    %979 = vmatpush1.msra.mxu0 0.0
    %980 = vmatprep.subr.mxu0 0.0
    %981 = vmatpush1.msra.mxu0 0.0
    %982 = vmatprep.subr.mxu0 0.0
    %983 = vmatpush1.msra.mxu0 0.0
    %984 = vmatprep.subr.mxu0 0.0
    %985 = vmatpush1.msra.mxu0 0.0
    %986 = vmatprep.subr.mxu0 0.0
    %987 = vmatpush1.msra.mxu0 0.0
    %988 = vmatprep.subr.mxu0 0.0
    %989 = vmatpush1.msra.mxu0 0.0
    %990 = vmatprep.subr.mxu0 0.0
    %991 = vmatpush1.msra.mxu0 0.0
    %992 = vmatprep.subr.mxu0 0.0
    %993 = vmatpush1.msra.mxu0 0.0
    %994 = vmatprep.subr.mxu0 0.0
    %995 = vmatpush1.msra.mxu0 0.0
    %996 = vmatprep.subr.mxu0 0.0
    %997 = vmatpush1.msra.mxu0 0.0
    %998 = vmatprep.subr.mxu0 0.0
    %999 = vmatpush1.msra.mxu0 0.0
    %1000 = vmatprep.subr.mxu0 0.0
    %1001 = vmatpush1.msra.mxu0 0.0
    %1002 = vmatprep.subr.mxu0 0.0
    %1003 = vmatpush1.msra.mxu0 0.0
    %1004 = vmatprep.subr.mxu0 0.0
    %1005 = vmatpush1.msra.mxu0 0.0
    %1006 = vmatprep.subr.mxu0 0.0
    %1007 = vmatpush1.msra.mxu0 0.0
    %1008 = vmatprep.subr.mxu0 0.0
    %1009 = vmatpush1.msra.mxu0 0.0
    %1010 = vmatprep.subr.mxu0 0.0
    %1011 = vmatpush1.msra.mxu0 0.0
    %1012 = vmatprep.subr.mxu0 0.0
    %1013 = vmatpush1.msra.mxu0 0.0
    %1014 = vmatprep.subr.mxu0 0.0
    %1015 = vmatpush1.msra.mxu0 0.0
    %1016 = vmatprep.subr.mxu0 0.0
    %1017 = vmatpush1.msra.mxu0 0.0
    %1018 = vmatprep.subr.mxu0 0.0
    %1019 = vmatpush1.msra.mxu0 0.0
    %1020 = vmatprep.subr.mxu0 0.0
    %1021 = vmatpush1.msra.mxu0 0.0
    %1022 = vmatprep.subr.mxu0 0.0
    %1023 = vmatpush1.msra.mxu0 0.0
    %1024 = vmatprep.subr.mxu0 0.0
    %1025 = vmatpush1.msra.mxu0 0.0
    %1026 = vmatprep.mubr.f32.mxu0 0.0
    %1027 = vmatmul.mubr.f32.gmra.mrb[0].mxu0 %v584
    %v1028 = vpop.f32.mrb[0].mxu0
    %v1029 = vadd.f32 %v960, %v1028
    %v1030 = vpop.f32.mrb[0].mxu0
    %1031 = vdwg.mxu0
    %v1034 = vunpack.c.l.s4 1966171168
    %v1035 = vunpack.c.0.s8 %v1034
    %v1036 = vlaneseq
    %v1037 = vshrl.u32 %v1036, 7
    %v1038 = vsub.s32 %v1035, %v1037
    %v1039 = vrot.slane %v1029, %v1038
    %v1040 = vcombine.high %v1039, %v1039
    %v1042 = vunpack.c.l.s4 1966171168
    %v1043 = vunpack.c.0.s8 %v1042
    %v1044 = vlaneseq
    %v1045 = vshrl.u32 %v1044, 7
    %v1046 = vsub.s32 %v1043, %v1045
    %v1047 = vrot.slane %v1039, %v1046
    %v1049 = vunpack.c.l.s4 1966171168
    %v1050 = vunpack.c.0.s8 %v1049
    %v1051 = vlaneseq
    %v1052 = vshrl.u32 %v1051, 7
    %v1053 = vsub.s32 %v1050, %v1052
    %v1054 = vrot.slane %v1040, %v1053
    %v1055 = vlaneseq
    %v1056 = vshrl.u32 %v1055, 7
    %v1057 = vsub.s32 0, %v1056
    %v1058 = vrot.slane %v1047, %v1057
    %v1059 = vlaneseq
    %v1060 = vshrl.u32 %v1059, 7
    %v1061 = vsub.s32 0, %v1060
    %v1062 = vrot.slane %v1054, %v1061
    %v1065 = vadd.f32 %v1058, 1.0
    %v1066 = vadd.f32 %v1062, 1.0
    %v1067 = vsel %vm582, %v947, 0.0
    %1068 = vadd.xlane.f32.xlu0 %v1067
    %v1069 = vpop.xlane.xlu0 %1068
    %v1070 = vsel %vm582, %v948, 0.0
    %1071 = vadd.xlane.f32.xlu0 %v1070
    %v1072 = vpop.xlane.xlu0 %1071
    %v1073 = vsel %vm582, %v949, 0.0
    %1074 = vadd.xlane.f32.xlu0 %v1073
    %v1075 = vpop.xlane.xlu0 %1074
    %v1076 = vsel %vm582, %v950, 0.0
    %1077 = vadd.xlane.f32.xlu0 %v1076
    %v1078 = vpop.xlane.xlu0 %1077
    %v1079 = vmul.f32 %v1069, %v479
    %v1080 = vmul.f32 %v1072, %v479
    %v1081 = vmul.f32 %v1075, %v479
    %v1082 = vmul.f32 %v1078, %v479
    %v1083 = vsub.f32 %v947, %v1079
    %v1084 = vsub.f32 %v948, %v1080
    %v1085 = vsub.f32 %v949, %v1081
    %v1086 = vsub.f32 %v950, %v1082
    %v1087 = vmul.f32 %v1083, %v1083
    %v1088 = vmul.f32 %v1084, %v1084
    %v1089 = vmul.f32 %v1085, %v1085
    %v1090 = vmul.f32 %v1086, %v1086
    %v1091 = vsel %vm582, %v1087, 0.0
    %1092 = vadd.xlane.f32.xlu0 %v1091
    %v1093 = vpop.xlane.xlu0 %1092
    %v1094 = vsel %vm582, %v1088, 0.0
    %1095 = vadd.xlane.f32.xlu0 %v1094
    %v1096 = vpop.xlane.xlu0 %1095
    %v1097 = vsel %vm582, %v1089, 0.0
    %1098 = vadd.xlane.f32.xlu0 %v1097
    %v1099 = vpop.xlane.xlu0 %1098
    %v1100 = vsel %vm582, %v1090, 0.0
    %1101 = vadd.xlane.f32.xlu0 %v1100
    %v1102 = vpop.xlane.xlu0 %1101
    %v1103 = vmul.f32 %v1093, %v479
    %v1104 = vmul.f32 %v1096, %v479
    %v1105 = vmul.f32 %v1099, %v479
    %v1106 = vmul.f32 %v1102, %v479
    %v1107 = vadd.f32 %v1103, 1e-05
    %v1108 = vadd.f32 %v1104, 1e-05
    %v1109 = vadd.f32 %v1105, 1e-05
    %v1110 = vadd.f32 %v1106, 1e-05
    %v1111 = vrsqrt.pop %v1107
    %v1112 = vrsqrt.pop %v1108
    %v1113 = vrsqrt.pop %v1109
    %v1114 = vrsqrt.pop %v1110
    %v1115 = vmul.f32 %v1083, %v1111
    %v1116 = vmul.f32 %v1084, %v1112
    %v1117 = vmul.f32 %v1085, %v1113
    %v1118 = vmul.f32 %v1086, %v1114
    %v1119 = vmul.f32 %v1065, %v1115
    %v1120 = vmul.f32 %v1065, %v1116
    %v1121 = vmul.f32 %v1066, %v1117
    %v1122 = vmul.f32 %v1066, %v1118
    %1123 = vrot.lane.b32.xlu0 %v1058, 96
    %v1124 = vpop.permute.xlu0 %1123
    %1125 = vrot.lane.b32.xlu0 %v1062, 96
    %v1126 = vpop.permute.xlu0 %1125
    %v1129 = vadd.f32 %v1119, %v1124
    %v1130 = vadd.f32 %v1120, %v1124
    %v1131 = vadd.f32 %v1121, %v1126
    %v1132 = vadd.f32 %v1122, %v1126
    %v1133 = vld [vmem:[%s33] sm:$0xff]
    %v1134 = vld [vmem:[%s33 + $0x8] sm:$0xff]
    %v1135 = vld [vmem:[%s33 + $0x10] sm:$0xff]
    %v1136 = vld [vmem:[%s33 + $0x18] sm:$0xff]
    %v1137 = vld [vmem:[#allocation16] sm:$0x1]
    %v1139 = vlaneseq
    %v1140 = vshrl.u32 %v1139, 7
    %v1141 = vsub.s32 0, %v1140
    %v1142 = vrot.slane %v1137, %v1141
    %v1145 = vsel %vm582, %v1129, 0
    %v1148 = vsel %vm582, %v1130, 0
    %v1151 = vsel %vm582, %v1131, 0
    %v1154 = vsel %vm582, %v1132, 0
    %1156 = vmatprep.subr.mxu0 0.0
    %1157 = vmatpush1.msra.mxu0 %v1133
    %1158 = vmatprep.subr.mxu0 0.0
    %1159 = vmatpush1.msra.mxu0 %v1134
    %1160 = vmatprep.subr.mxu0 0.0
    %1161 = vmatpush1.msra.mxu0 %v1135
    %1162 = vmatprep.subr.mxu0 0.0
    %1163 = vmatpush1.msra.mxu0 %v1136
    %1164 = vmatprep.subr.mxu0 0.0
    %1165 = vmatpush1.msra.mxu0 0.0
    %1166 = vmatprep.subr.mxu0 0.0
    %1167 = vmatpush1.msra.mxu0 0.0
    %1168 = vmatprep.subr.mxu0 0.0
    %1169 = vmatpush1.msra.mxu0 0.0
    %1170 = vmatprep.subr.mxu0 0.0
    %1171 = vmatpush1.msra.mxu0 0.0
    %1172 = vmatprep.subr.mxu0 0.0
    %1173 = vmatpush1.msra.mxu0 0.0
    %1174 = vmatprep.subr.mxu0 0.0
    %1175 = vmatpush1.msra.mxu0 0.0
    %1176 = vmatprep.subr.mxu0 0.0
    %1177 = vmatpush1.msra.mxu0 0.0
    %1178 = vmatprep.subr.mxu0 0.0
    %1179 = vmatpush1.msra.mxu0 0.0
    %1180 = vmatprep.subr.mxu0 0.0
    %1181 = vmatpush1.msra.mxu0 0.0
    %1182 = vmatprep.subr.mxu0 0.0
    %1183 = vmatpush1.msra.mxu0 0.0
    %1184 = vmatprep.subr.mxu0 0.0
    %1185 = vmatpush1.msra.mxu0 0.0
    %1186 = vmatprep.subr.mxu0 0.0
    %1187 = vmatpush1.msra.mxu0 0.0
    %1188 = vmatprep.subr.mxu0 0.0
    %1189 = vmatpush1.msra.mxu0 0.0
    %1190 = vmatprep.subr.mxu0 0.0
    %1191 = vmatpush1.msra.mxu0 0.0
    %1192 = vmatprep.subr.mxu0 0.0
    %1193 = vmatpush1.msra.mxu0 0.0
    %1194 = vmatprep.subr.mxu0 0.0
    %1195 = vmatpush1.msra.mxu0 0.0
    %1196 = vmatprep.subr.mxu0 0.0
    %1197 = vmatpush1.msra.mxu0 0.0
    %1198 = vmatprep.subr.mxu0 0.0
    %1199 = vmatpush1.msra.mxu0 0.0
    %1200 = vmatprep.subr.mxu0 0.0
    %1201 = vmatpush1.msra.mxu0 0.0
    %1202 = vmatprep.subr.mxu0 0.0
    %1203 = vmatpush1.msra.mxu0 0.0
    %1204 = vmatprep.subr.mxu0 0.0
    %1205 = vmatpush1.msra.mxu0 0.0
    %1206 = vmatprep.subr.mxu0 0.0
    %1207 = vmatpush1.msra.mxu0 0.0
    %1208 = vmatprep.subr.mxu0 0.0
    %1209 = vmatpush1.msra.mxu0 0.0
    %1210 = vmatprep.subr.mxu0 0.0
    %1211 = vmatpush1.msra.mxu0 0.0
    %1212 = vmatprep.subr.mxu0 0.0
    %1213 = vmatpush1.msra.mxu0 0.0
    %1214 = vmatprep.subr.mxu0 0.0
    %1215 = vmatpush1.msra.mxu0 0.0
    %1216 = vmatprep.subr.mxu0 0.0
    %1217 = vmatpush1.msra.mxu0 0.0
    %1218 = vmatprep.subr.mxu0 0.0
    %1219 = vmatpush1.msra.mxu0 0.0
    %1220 = vmatprep.mubr.f32.mxu0 0.0
    %1221 = vmatmul.mubr.f32.gmra.mrb[0].mxu0 %v1145
    %v1222 = vpop.f32.mrb[0].mxu0
    %v1223 = vadd.f32 %v1142, %v1222
    %v1224 = vpop.f32.mrb[0].mxu0
    %1225 = vmatprep.mubr.f32.mxu0 0.0
    %1226 = vmatmul.mubr.f32.gmra.mrb[0].mxu0 %v1148
    %v1227 = vpop.f32.mrb[0].mxu0
    %v1228 = vadd.f32 %v1142, %v1227
    %v1229 = vpop.f32.mrb[0].mxu0
    %1230 = vmatprep.mubr.f32.mxu0 0.0
    %1231 = vmatmul.mubr.f32.gmra.mrb[0].mxu0 %v1151
    %v1232 = vpop.f32.mrb[0].mxu0
    %v1233 = vadd.f32 %v1142, %v1232
    %v1234 = vpop.f32.mrb[0].mxu0
    %1235 = vmatprep.mubr.f32.mxu0 0.0
    %1236 = vmatmul.mubr.f32.gmra.mrb[0].mxu0 %v1154
    %v1237 = vpop.f32.mrb[0].mxu0
    %v1238 = vadd.f32 %v1142, %v1237
    %v1239 = vpop.f32.mrb[0].mxu0
    %1240 = vdwg.mxu0
    %1243 = vrot.lane.b32.xlu0 %v1223, 96
    %v1244 = vpop.permute.xlu0 %1243
    %1245 = vrot.lane.b32.xlu0 %v1228, 96
    %v1246 = vpop.permute.xlu0 %1245
    %v1249 = vmul.f32 %v1223, %v1244
    %v1250 = vmul.f32 %v1228, %v1246
    %v1251 = vmul.f32 %v1233, %v1244
    %v1252 = vmul.f32 %v1238, %v1246
    %v1254 = vsel %vm582, %v1249, 0
    %v1257 = vsel %vm582, %v1250, 0
    %v1260 = vsel %vm582, %v1251, 0
    %v1263 = vsel %vm582, %v1252, 0
    %1265 = vmatprep.subr.mxu0 0.0
    %1266 = vmatpush1.msra.mxu0 %v344
    %1267 = vmatprep.subr.mxu0 0.0
    %1268 = vmatpush1.msra.mxu0 %v345
    %1269 = vmatprep.subr.mxu0 0.0
    %1270 = vmatpush1.msra.mxu0 %v346
    %1271 = vmatprep.subr.mxu0 0.0
    %1272 = vmatpush1.msra.mxu0 %v347
    %1273 = vmatprep.subr.mxu0 0.0
    %1274 = vmatpush1.msra.mxu0 0.0
    %1275 = vmatprep.subr.mxu0 0.0
    %1276 = vmatpush1.msra.mxu0 0.0
    %1277 = vmatprep.subr.mxu0 0.0
    %1278 = vmatpush1.msra.mxu0 0.0
    %1279 = vmatprep.subr.mxu0 0.0
    %1280 = vmatpush1.msra.mxu0 0.0
    %1281 = vmatprep.subr.mxu0 0.0
    %1282 = vmatpush1.msra.mxu0 0.0
    %1283 = vmatprep.subr.mxu0 0.0
    %1284 = vmatpush1.msra.mxu0 0.0
    %1285 = vmatprep.subr.mxu0 0.0
    %1286 = vmatpush1.msra.mxu0 0.0
    %1287 = vmatprep.subr.mxu0 0.0
    %1288 = vmatpush1.msra.mxu0 0.0
    %1289 = vmatprep.subr.mxu0 0.0
    %1290 = vmatpush1.msra.mxu0 0.0
    %1291 = vmatprep.subr.mxu0 0.0
    %1292 = vmatpush1.msra.mxu0 0.0
    %1293 = vmatprep.subr.mxu0 0.0
    %1294 = vmatpush1.msra.mxu0 0.0
    %1295 = vmatprep.subr.mxu0 0.0
    %1296 = vmatpush1.msra.mxu0 0.0
    %1297 = vmatprep.subr.mxu0 0.0
    %1298 = vmatpush1.msra.mxu0 0.0
    %1299 = vmatprep.subr.mxu0 0.0
    %1300 = vmatpush1.msra.mxu0 0.0
    %1301 = vmatprep.subr.mxu0 0.0
    %1302 = vmatpush1.msra.mxu0 0.0
    %1303 = vmatprep.subr.mxu0 0.0
    %1304 = vmatpush1.msra.mxu0 0.0
    %1305 = vmatprep.subr.mxu0 0.0
    %1306 = vmatpush1.msra.mxu0 0.0
    %1307 = vmatprep.subr.mxu0 0.0
    %1308 = vmatpush1.msra.mxu0 0.0
    %1309 = vmatprep.subr.mxu0 0.0
    %1310 = vmatpush1.msra.mxu0 0.0
    %1311 = vmatprep.subr.mxu0 0.0
    %1312 = vmatpush1.msra.mxu0 0.0
    %1313 = vmatprep.subr.mxu0 0.0
    %1314 = vmatpush1.msra.mxu0 0.0
    %1315 = vmatprep.subr.mxu0 0.0
    %1316 = vmatpush1.msra.mxu0 0.0
    %1317 = vmatprep.subr.mxu0 0.0
    %1318 = vmatpush1.msra.mxu0 0.0
    %1319 = vmatprep.subr.mxu0 0.0
    %1320 = vmatpush1.msra.mxu0 0.0
    %1321 = vmatprep.subr.mxu0 0.0
    %1322 = vmatpush1.msra.mxu0 0.0
    %1323 = vmatprep.subr.mxu0 0.0
    %1324 = vmatpush1.msra.mxu0 0.0
    %1325 = vmatprep.subr.mxu0 0.0
    %1326 = vmatpush1.msra.mxu0 0.0
    %1327 = vmatprep.subr.mxu0 0.0
    %1328 = vmatpush1.msra.mxu0 0.0
    %1329 = vmatprep.mubr.f32.mxu0 0.0
    %1330 = vmatmul.mubr.f32.gmra.mrb[0].mxu0 %v1254
    %v1331 = vpop.f32.mrb[0].mxu0
    %v1332 = vadd.f32 0.0, %v1331
    %v1333 = vpop.f32.mrb[0].mxu0
    %1334 = vmatprep.mubr.f32.mxu0 0.0
    %1335 = vmatmul.mubr.f32.gmra.mrb[0].mxu0 %v1257
    %v1336 = vpop.f32.mrb[0].mxu0
    %v1337 = vadd.f32 0.0, %v1336
    %v1338 = vpop.f32.mrb[0].mxu0
    %1339 = vmatprep.mubr.f32.mxu0 0.0
    %1340 = vmatmul.mubr.f32.gmra.mrb[0].mxu0 %v1260
    %v1341 = vpop.f32.mrb[0].mxu0
    %v1342 = vadd.f32 0.0, %v1341
    %v1343 = vpop.f32.mrb[0].mxu0
    %1344 = vmatprep.mubr.f32.mxu0 0.0
    %1345 = vmatmul.mubr.f32.gmra.mrb[0].mxu0 %v1263
    %v1346 = vpop.f32.mrb[0].mxu0
    %v1347 = vadd.f32 0.0, %v1346
    %v1348 = vpop.f32.mrb[0].mxu0
    %1349 = vdwg.mxu0
    %v1350 = vmul.f32 %v1332, 0.35355338
    %v1351 = vmul.f32 %v1337, 0.35355338
    %v1352 = vmul.f32 %v1342, 0.35355338
    %v1353 = vmul.f32 %v1347, 0.35355338
    %1356 = vrot.lane.b32.xlu0 %v1233, 96
    %v1357 = vpop.permute.xlu0 %1356
    %1358 = vrot.lane.b32.xlu0 %v1238, 96
    %v1359 = vpop.permute.xlu0 %1358
    %v1362 = vmul.f32 %v1223, %v1357
    %v1363 = vmul.f32 %v1228, %v1359
    %v1364 = vmul.f32 %v1233, %v1357
    %v1365 = vmul.f32 %v1238, %v1359
    %v1367 = vsel %vm582, %v1362, 0
    %v1370 = vsel %vm582, %v1363, 0
    %v1373 = vsel %vm582, %v1364, 0
    %v1376 = vsel %vm582, %v1365, 0
    %1378 = vmatprep.subr.mxu0 0.0
    %1379 = vmatpush1.msra.mxu0 %v344
    %1380 = vmatprep.subr.mxu0 0.0
    %1381 = vmatpush1.msra.mxu0 %v345
    %1382 = vmatprep.subr.mxu0 0.0
    %1383 = vmatpush1.msra.mxu0 %v346
    %1384 = vmatprep.subr.mxu0 0.0
    %1385 = vmatpush1.msra.mxu0 %v347
    %1386 = vmatprep.subr.mxu0 0.0
    %1387 = vmatpush1.msra.mxu0 0.0
    %1388 = vmatprep.subr.mxu0 0.0
    %1389 = vmatpush1.msra.mxu0 0.0
    %1390 = vmatprep.subr.mxu0 0.0
    %1391 = vmatpush1.msra.mxu0 0.0
    %1392 = vmatprep.subr.mxu0 0.0
    %1393 = vmatpush1.msra.mxu0 0.0
    %1394 = vmatprep.subr.mxu0 0.0
    %1395 = vmatpush1.msra.mxu0 0.0
    %1396 = vmatprep.subr.mxu0 0.0
    %1397 = vmatpush1.msra.mxu0 0.0
    %1398 = vmatprep.subr.mxu0 0.0
    %1399 = vmatpush1.msra.mxu0 0.0
    %1400 = vmatprep.subr.mxu0 0.0
    %1401 = vmatpush1.msra.mxu0 0.0
    %1402 = vmatprep.subr.mxu0 0.0
    %1403 = vmatpush1.msra.mxu0 0.0
    %1404 = vmatprep.subr.mxu0 0.0
    %1405 = vmatpush1.msra.mxu0 0.0
    %1406 = vmatprep.subr.mxu0 0.0
    %1407 = vmatpush1.msra.mxu0 0.0
    %1408 = vmatprep.subr.mxu0 0.0
    %1409 = vmatpush1.msra.mxu0 0.0
    %1410 = vmatprep.subr.mxu0 0.0
    %1411 = vmatpush1.msra.mxu0 0.0
    %1412 = vmatprep.subr.mxu0 0.0
    %1413 = vmatpush1.msra.mxu0 0.0
    %1414 = vmatprep.subr.mxu0 0.0
    %1415 = vmatpush1.msra.mxu0 0.0
    %1416 = vmatprep.subr.mxu0 0.0
    %1417 = vmatpush1.msra.mxu0 0.0
    %1418 = vmatprep.subr.mxu0 0.0
    %1419 = vmatpush1.msra.mxu0 0.0
    %1420 = vmatprep.subr.mxu0 0.0
    %1421 = vmatpush1.msra.mxu0 0.0
    %1422 = vmatprep.subr.mxu0 0.0
    %1423 = vmatpush1.msra.mxu0 0.0
    %1424 = vmatprep.subr.mxu0 0.0
    %1425 = vmatpush1.msra.mxu0 0.0
    %1426 = vmatprep.subr.mxu0 0.0
    %1427 = vmatpush1.msra.mxu0 0.0
    %1428 = vmatprep.subr.mxu0 0.0
    %1429 = vmatpush1.msra.mxu0 0.0
    %1430 = vmatprep.subr.mxu0 0.0
    %1431 = vmatpush1.msra.mxu0 0.0
    %1432 = vmatprep.subr.mxu0 0.0
    %1433 = vmatpush1.msra.mxu0 0.0
    %1434 = vmatprep.subr.mxu0 0.0
    %1435 = vmatpush1.msra.mxu0 0.0
    %1436 = vmatprep.subr.mxu0 0.0
    %1437 = vmatpush1.msra.mxu0 0.0
    %1438 = vmatprep.subr.mxu0 0.0
    %1439 = vmatpush1.msra.mxu0 0.0
    %1440 = vmatprep.subr.mxu0 0.0
    %1441 = vmatpush1.msra.mxu0 0.0
    %1442 = vmatprep.mubr.f32.mxu0 0.0
    %1443 = vmatmul.mubr.f32.gmra.mrb[0].mxu0 %v1367
    %v1444 = vpop.f32.mrb[0].mxu0
    %v1445 = vadd.f32 0.0, %v1444
    %v1446 = vpop.f32.mrb[0].mxu0
    %1447 = vmatprep.mubr.f32.mxu0 0.0
    %1448 = vmatmul.mubr.f32.gmra.mrb[0].mxu0 %v1370
    %v1449 = vpop.f32.mrb[0].mxu0
    %v1450 = vadd.f32 0.0, %v1449
    %v1451 = vpop.f32.mrb[0].mxu0
    %1452 = vmatprep.mubr.f32.mxu0 0.0
    %1453 = vmatmul.mubr.f32.gmra.mrb[0].mxu0 %v1373
    %v1454 = vpop.f32.mrb[0].mxu0
    %v1455 = vadd.f32 0.0, %v1454
    %v1456 = vpop.f32.mrb[0].mxu0
    %1457 = vmatprep.mubr.f32.mxu0 0.0
    %1458 = vmatmul.mubr.f32.gmra.mrb[0].mxu0 %v1376
    %v1459 = vpop.f32.mrb[0].mxu0
    %v1460 = vadd.f32 0.0, %v1459
    %v1461 = vpop.f32.mrb[0].mxu0
    %1462 = vdwg.mxu0
    %v1463 = vmul.f32 %v1445, 0.35355338
    %v1464 = vmul.f32 %v1450, 0.35355338
    %v1465 = vmul.f32 %v1455, 0.35355338
    %v1466 = vmul.f32 %v1460, 0.35355338
    %v1467 = vmax.f32 %v1350, %v1463
    %v1468 = vmax.f32 %v1351, %v1464
    %v1469 = vmax.f32 %v1352, %v1465
    %v1470 = vmax.f32 %v1353, %v1466
    %v1471 = vsub.f32 %v1350, %v1467
    %v1472 = vsub.f32 %v1351, %v1468
    %v1473 = vsub.f32 %v1352, %v1469
    %v1474 = vsub.f32 %v1353, %v1470
    %v1475 = vmul.f32 %v1471, 1.442695
    %v1476 = vpow.pop %v1475
    %v1477 = vmul.f32 %v1472, 1.442695
    %v1478 = vpow.pop %v1477
    %v1479 = vmul.f32 %v1473, 1.442695
    %v1480 = vpow.pop %v1479
    %v1481 = vmul.f32 %v1474, 1.442695
    %v1482 = vpow.pop %v1481
    %v1483 = vsub.f32 %v1463, %v1467
    %v1484 = vsub.f32 %v1464, %v1468
    %v1485 = vsub.f32 %v1465, %v1469
    %v1486 = vsub.f32 %v1466, %v1470
    %v1487 = vmul.f32 %v1483, 1.442695
    %v1488 = vpow.pop %v1487
    %v1489 = vmul.f32 %v1484, 1.442695
    %v1490 = vpow.pop %v1489
    %v1491 = vmul.f32 %v1485, 1.442695
    %v1492 = vpow.pop %v1491
    %v1493 = vmul.f32 %v1486, 1.442695
    %v1494 = vpow.pop %v1493
    %v1495 = vadd.f32 %v1476, %v1488
    %v1496 = vadd.f32 %v1478, %v1490
    %v1497 = vadd.f32 %v1480, %v1492
    %v1498 = vadd.f32 %v1482, %v1494
    %v1499 = vrcp.pop %v1495
    %v1500 = vrcp.pop %v1496
    %v1501 = vrcp.pop %v1497
    %v1502 = vrcp.pop %v1498
    %v1503 = vmul.f32 %v1476, %v1499
    %v1504 = vmul.f32 %v1478, %v1500
    %v1505 = vmul.f32 %v1480, %v1501
    %v1506 = vmul.f32 %v1482, %v1502
    %vm1507 = vcmask 31744
    %v1509 = vsel %vm1507, %v1503, 0
    %v1512 = vsel %vm1507, %v1504, 0
    %v1515 = vsel %vm1507, %v1505, 0
    %v1518 = vsel %vm1507, %v1506, 0
    %vm1520 = vcmask 1043456
    %v1522 = vsel %vm1520, %v348, 0
    %1524 = vmatprep.subr.mxu0 0.0
    %1525 = vmatpush1.msra.mxu0 %v1522
    %1526 = vmatprep.subr.mxu0 0.0
    %1527 = vmatpush1.msra.mxu0 0.0
    %1528 = vmatprep.subr.mxu0 0.0
    %1529 = vmatpush1.msra.mxu0 0.0
    %1530 = vmatprep.subr.mxu0 0.0
    %1531 = vmatpush1.msra.mxu0 0.0
    %1532 = vmatprep.subr.mxu0 0.0
    %1533 = vmatpush1.msra.mxu0 0.0
    %1534 = vmatprep.subr.mxu0 0.0
    %1535 = vmatpush1.msra.mxu0 0.0
    %1536 = vmatprep.subr.mxu0 0.0
    %1537 = vmatpush1.msra.mxu0 0.0
    %1538 = vmatprep.subr.mxu0 0.0
    %1539 = vmatpush1.msra.mxu0 0.0
    %1540 = vmatprep.subr.mxu0 0.0
    %1541 = vmatpush1.msra.mxu0 0.0
    %1542 = vmatprep.subr.mxu0 0.0
    %1543 = vmatpush1.msra.mxu0 0.0
    %1544 = vmatprep.subr.mxu0 0.0
    %1545 = vmatpush1.msra.mxu0 0.0
    %1546 = vmatprep.subr.mxu0 0.0
    %1547 = vmatpush1.msra.mxu0 0.0
    %1548 = vmatprep.subr.mxu0 0.0
    %1549 = vmatpush1.msra.mxu0 0.0
    %1550 = vmatprep.subr.mxu0 0.0
    %1551 = vmatpush1.msra.mxu0 0.0
    %1552 = vmatprep.subr.mxu0 0.0
    %1553 = vmatpush1.msra.mxu0 0.0
    %1554 = vmatprep.subr.mxu0 0.0
    %1555 = vmatpush1.msra.mxu0 0.0
    %1556 = vmatprep.subr.mxu0 0.0
    %1557 = vmatpush1.msra.mxu0 0.0
    %1558 = vmatprep.subr.mxu0 0.0
    %1559 = vmatpush1.msra.mxu0 0.0
    %1560 = vmatprep.subr.mxu0 0.0
    %1561 = vmatpush1.msra.mxu0 0.0
    %1562 = vmatprep.subr.mxu0 0.0
    %1563 = vmatpush1.msra.mxu0 0.0
    %1564 = vmatprep.subr.mxu0 0.0
    %1565 = vmatpush1.msra.mxu0 0.0
    %1566 = vmatprep.subr.mxu0 0.0
    %1567 = vmatpush1.msra.mxu0 0.0
    %1568 = vmatprep.subr.mxu0 0.0
    %1569 = vmatpush1.msra.mxu0 0.0
    %1570 = vmatprep.subr.mxu0 0.0
    %1571 = vmatpush1.msra.mxu0 0.0
    %1572 = vmatprep.subr.mxu0 0.0
    %1573 = vmatpush1.msra.mxu0 0.0
    %1574 = vmatprep.subr.mxu0 0.0
    %1575 = vmatpush1.msra.mxu0 0.0
    %1576 = vmatprep.subr.mxu0 0.0
    %1577 = vmatpush1.msra.mxu0 0.0
    %1578 = vmatprep.subr.mxu0 0.0
    %1579 = vmatpush1.msra.mxu0 0.0
    %1580 = vmatprep.subr.mxu0 0.0
    %1581 = vmatpush1.msra.mxu0 0.0
    %1582 = vmatprep.subr.mxu0 0.0
    %1583 = vmatpush1.msra.mxu0 0.0
    %1584 = vmatprep.subr.mxu0 0.0
    %1585 = vmatpush1.msra.mxu0 0.0
    %1586 = vmatprep.subr.mxu0 0.0
    %1587 = vmatpush1.msra.mxu0 0.0
    %1588 = vmatprep.mubr.f32.mxu0 0.0
    %1589 = vmatmul.mubr.f32.gmra.mrb[0].mxu0 %v1509
    %v1590 = vpop.f32.mrb[0].mxu0
    %v1591 = vadd.f32 0.0, %v1590
    %v1592 = vpop.f32.mrb[0].mxu0
    %1593 = vmatprep.mubr.f32.mxu0 0.0
    %1594 = vmatmul.mubr.f32.gmra.mrb[0].mxu0 %v1512
    %v1595 = vpop.f32.mrb[0].mxu0
    %v1596 = vadd.f32 0.0, %v1595
    %v1597 = vpop.f32.mrb[0].mxu0
    %1598 = vmatprep.mubr.f32.mxu0 0.0
    %1599 = vmatmul.mubr.f32.gmra.mrb[0].mxu0 %v1515
    %v1600 = vpop.f32.mrb[0].mxu0
    %v1601 = vadd.f32 0.0, %v1600
    %v1602 = vpop.f32.mrb[0].mxu0
    %1603 = vmatprep.mubr.f32.mxu0 0.0
    %1604 = vmatmul.mubr.f32.gmra.mrb[0].mxu0 %v1518
    %v1605 = vpop.f32.mrb[0].mxu0
    %v1606 = vadd.f32 0.0, %v1605
    %v1607 = vpop.f32.mrb[0].mxu0
    %1608 = vdwg.mxu0
    %1609 = vrot.lane.b32.xlu0 %v1223, 64
    %v1610 = vpop.permute.xlu0 %1609
    %1611 = vrot.lane.b32.xlu0 %v1228, 64
    %v1612 = vpop.permute.xlu0 %1611
    %v1615 = vmul.f32 %v1591, %v1610
    %v1616 = vmul.f32 %v1596, %v1612
    %v1617 = vmul.f32 %v1601, %v1610
    %v1618 = vmul.f32 %v1606, %v1612
    %v1619 = vmul.f32 %v1488, %v1499
    %v1620 = vmul.f32 %v1490, %v1500
    %v1621 = vmul.f32 %v1492, %v1501
    %v1622 = vmul.f32 %v1494, %v1502
    %v1624 = vsel %vm1507, %v1619, 0
    %v1627 = vsel %vm1507, %v1620, 0
    %v1630 = vsel %vm1507, %v1621, 0
    %v1633 = vsel %vm1507, %v1622, 0
    %1635 = vmatprep.subr.mxu0 0.0
    %1636 = vmatpush1.msra.mxu0 %v1522
    %1637 = vmatprep.subr.mxu0 0.0
    %1638 = vmatpush1.msra.mxu0 0.0
    %1639 = vmatprep.subr.mxu0 0.0
    %1640 = vmatpush1.msra.mxu0 0.0
    %1641 = vmatprep.subr.mxu0 0.0
    %1642 = vmatpush1.msra.mxu0 0.0
    %1643 = vmatprep.subr.mxu0 0.0
    %1644 = vmatpush1.msra.mxu0 0.0
    %1645 = vmatprep.subr.mxu0 0.0
    %1646 = vmatpush1.msra.mxu0 0.0
    %1647 = vmatprep.subr.mxu0 0.0
    %1648 = vmatpush1.msra.mxu0 0.0
    %1649 = vmatprep.subr.mxu0 0.0
    %1650 = vmatpush1.msra.mxu0 0.0
    %1651 = vmatprep.subr.mxu0 0.0
    %1652 = vmatpush1.msra.mxu0 0.0
    %1653 = vmatprep.subr.mxu0 0.0
    %1654 = vmatpush1.msra.mxu0 0.0
    %1655 = vmatprep.subr.mxu0 0.0
    %1656 = vmatpush1.msra.mxu0 0.0
    %1657 = vmatprep.subr.mxu0 0.0
    %1658 = vmatpush1.msra.mxu0 0.0
    %1659 = vmatprep.subr.mxu0 0.0
    %1660 = vmatpush1.msra.mxu0 0.0
    %1661 = vmatprep.subr.mxu0 0.0
    %1662 = vmatpush1.msra.mxu0 0.0
    %1663 = vmatprep.subr.mxu0 0.0
    %1664 = vmatpush1.msra.mxu0 0.0
    %1665 = vmatprep.subr.mxu0 0.0
    %1666 = vmatpush1.msra.mxu0 0.0
    %1667 = vmatprep.subr.mxu0 0.0
    %1668 = vmatpush1.msra.mxu0 0.0
    %1669 = vmatprep.subr.mxu0 0.0
    %1670 = vmatpush1.msra.mxu0 0.0
    %1671 = vmatprep.subr.mxu0 0.0
    %1672 = vmatpush1.msra.mxu0 0.0
    %1673 = vmatprep.subr.mxu0 0.0
    %1674 = vmatpush1.msra.mxu0 0.0
    %1675 = vmatprep.subr.mxu0 0.0
    %1676 = vmatpush1.msra.mxu0 0.0
    %1677 = vmatprep.subr.mxu0 0.0
    %1678 = vmatpush1.msra.mxu0 0.0
    %1679 = vmatprep.subr.mxu0 0.0
    %1680 = vmatpush1.msra.mxu0 0.0
    %1681 = vmatprep.subr.mxu0 0.0
    %1682 = vmatpush1.msra.mxu0 0.0
    %1683 = vmatprep.subr.mxu0 0.0
    %1684 = vmatpush1.msra.mxu0 0.0
    %1685 = vmatprep.subr.mxu0 0.0
    %1686 = vmatpush1.msra.mxu0 0.0
    %1687 = vmatprep.subr.mxu0 0.0
    %1688 = vmatpush1.msra.mxu0 0.0
    %1689 = vmatprep.subr.mxu0 0.0
    %1690 = vmatpush1.msra.mxu0 0.0
    %1691 = vmatprep.subr.mxu0 0.0
    %1692 = vmatpush1.msra.mxu0 0.0
    %1693 = vmatprep.subr.mxu0 0.0
    %1694 = vmatpush1.msra.mxu0 0.0
    %1695 = vmatprep.subr.mxu0 0.0
    %1696 = vmatpush1.msra.mxu0 0.0
    %1697 = vmatprep.subr.mxu0 0.0
    %1698 = vmatpush1.msra.mxu0 0.0
    %1699 = vmatprep.mubr.f32.mxu0 0.0
    %1700 = vmatmul.mubr.f32.gmra.mrb[0].mxu0 %v1624
    %v1701 = vpop.f32.mrb[0].mxu0
    %v1702 = vadd.f32 0.0, %v1701
    %v1703 = vpop.f32.mrb[0].mxu0
    %1704 = vmatprep.mubr.f32.mxu0 0.0
    %1705 = vmatmul.mubr.f32.gmra.mrb[0].mxu0 %v1627
    %v1706 = vpop.f32.mrb[0].mxu0
    %v1707 = vadd.f32 0.0, %v1706
    %v1708 = vpop.f32.mrb[0].mxu0
    %1709 = vmatprep.mubr.f32.mxu0 0.0
    %1710 = vmatmul.mubr.f32.gmra.mrb[0].mxu0 %v1630
    %v1711 = vpop.f32.mrb[0].mxu0
    %v1712 = vadd.f32 0.0, %v1711
    %v1713 = vpop.f32.mrb[0].mxu0
    %1714 = vmatprep.mubr.f32.mxu0 0.0
    %1715 = vmatmul.mubr.f32.gmra.mrb[0].mxu0 %v1633
    %v1716 = vpop.f32.mrb[0].mxu0
    %v1717 = vadd.f32 0.0, %v1716
    %v1718 = vpop.f32.mrb[0].mxu0
    %1719 = vdwg.mxu0
    %1720 = vrot.lane.b32.xlu0 %v1233, 64
    %v1721 = vpop.permute.xlu0 %1720
    %1722 = vrot.lane.b32.xlu0 %v1238, 64
    %v1723 = vpop.permute.xlu0 %1722
    %v1726 = vmul.f32 %v1702, %v1721
    %v1727 = vmul.f32 %v1707, %v1723
    %v1728 = vmul.f32 %v1712, %v1721
    %v1729 = vmul.f32 %v1717, %v1723
    %v1730 = vadd.f32 %v1615, %v1726
    %v1731 = vadd.f32 %v1616, %v1727
    %v1732 = vadd.f32 %v1617, %v1728
    %v1733 = vadd.f32 %v1618, %v1729
    %v1734 = vld [vmem:[%s37] sm:$0xff]
    %v1735 = vld [vmem:[%s37 + $0x8] sm:$0xff]
    %v1736 = vld [vmem:[%s37 + $0x10] sm:$0xff]
    %v1737 = vld [vmem:[%s37 + $0x18] sm:$0xff]
    %v1738 = vld [vmem:[#allocation17] sm:$0x1]
    %v1740 = vlaneseq
    %v1741 = vshrl.u32 %v1740, 7
    %v1742 = vsub.s32 0, %v1741
    %v1743 = vrot.slane %v1738, %v1742
    %v1746 = vsel %vm582, %v1730, 0
    %v1749 = vsel %vm582, %v1731, 0
    %v1752 = vsel %vm582, %v1732, 0
    %v1755 = vsel %vm582, %v1733, 0
    %1757 = vmatprep.subr.mxu0 0.0
    %1758 = vmatpush1.msra.mxu0 %v1734
    %1759 = vmatprep.subr.mxu0 0.0
    %1760 = vmatpush1.msra.mxu0 %v1735
    %1761 = vmatprep.subr.mxu0 0.0
    %1762 = vmatpush1.msra.mxu0 %v1736
    %1763 = vmatprep.subr.mxu0 0.0
    %1764 = vmatpush1.msra.mxu0 %v1737
    %1765 = vmatprep.subr.mxu0 0.0
    %1766 = vmatpush1.msra.mxu0 0.0
    %1767 = vmatprep.subr.mxu0 0.0
    %1768 = vmatpush1.msra.mxu0 0.0
    %1769 = vmatprep.subr.mxu0 0.0
    %1770 = vmatpush1.msra.mxu0 0.0
    %1771 = vmatprep.subr.mxu0 0.0
    %1772 = vmatpush1.msra.mxu0 0.0
    %1773 = vmatprep.subr.mxu0 0.0
    %1774 = vmatpush1.msra.mxu0 0.0
    %1775 = vmatprep.subr.mxu0 0.0
    %1776 = vmatpush1.msra.mxu0 0.0
    %1777 = vmatprep.subr.mxu0 0.0
    %1778 = vmatpush1.msra.mxu0 0.0
    %1779 = vmatprep.subr.mxu0 0.0
    %1780 = vmatpush1.msra.mxu0 0.0
    %1781 = vmatprep.subr.mxu0 0.0
    %1782 = vmatpush1.msra.mxu0 0.0
    %1783 = vmatprep.subr.mxu0 0.0
    %1784 = vmatpush1.msra.mxu0 0.0
    %1785 = vmatprep.subr.mxu0 0.0
    %1786 = vmatpush1.msra.mxu0 0.0
    %1787 = vmatprep.subr.mxu0 0.0
    %1788 = vmatpush1.msra.mxu0 0.0
    %1789 = vmatprep.subr.mxu0 0.0
    %1790 = vmatpush1.msra.mxu0 0.0
    %1791 = vmatprep.subr.mxu0 0.0
    %1792 = vmatpush1.msra.mxu0 0.0
    %1793 = vmatprep.subr.mxu0 0.0
    %1794 = vmatpush1.msra.mxu0 0.0
    %1795 = vmatprep.subr.mxu0 0.0
    %1796 = vmatpush1.msra.mxu0 0.0
    %1797 = vmatprep.subr.mxu0 0.0
    %1798 = vmatpush1.msra.mxu0 0.0
    %1799 = vmatprep.subr.mxu0 0.0
    %1800 = vmatpush1.msra.mxu0 0.0
    %1801 = vmatprep.subr.mxu0 0.0
    %1802 = vmatpush1.msra.mxu0 0.0
    %1803 = vmatprep.subr.mxu0 0.0
    %1804 = vmatpush1.msra.mxu0 0.0
    %1805 = vmatprep.subr.mxu0 0.0
    %1806 = vmatpush1.msra.mxu0 0.0
    %1807 = vmatprep.subr.mxu0 0.0
    %1808 = vmatpush1.msra.mxu0 0.0
    %1809 = vmatprep.subr.mxu0 0.0
    %1810 = vmatpush1.msra.mxu0 0.0
    %1811 = vmatprep.subr.mxu0 0.0
    %1812 = vmatpush1.msra.mxu0 0.0
    %1813 = vmatprep.subr.mxu0 0.0
    %1814 = vmatpush1.msra.mxu0 0.0
    %1815 = vmatprep.subr.mxu0 0.0
    %1816 = vmatpush1.msra.mxu0 0.0
    %1817 = vmatprep.subr.mxu0 0.0
    %1818 = vmatpush1.msra.mxu0 0.0
    %1819 = vmatprep.subr.mxu0 0.0
    %1820 = vmatpush1.msra.mxu0 0.0
    %1821 = vmatprep.mubr.f32.mxu0 0.0
    %1822 = vmatmul.mubr.f32.gmra.mrb[0].mxu0 %v1746
    %v1823 = vpop.f32.mrb[0].mxu0
    %v1824 = vadd.f32 %v1743, %v1823
    %v1825 = vpop.f32.mrb[0].mxu0
    %1826 = vmatprep.mubr.f32.mxu0 0.0
    %1827 = vmatmul.mubr.f32.gmra.mrb[0].mxu0 %v1749
    %v1828 = vpop.f32.mrb[0].mxu0
    %v1829 = vadd.f32 %v1743, %v1828
    %v1830 = vpop.f32.mrb[0].mxu0
    %1831 = vmatprep.mubr.f32.mxu0 0.0
    %1832 = vmatmul.mubr.f32.gmra.mrb[0].mxu0 %v1752
    %v1833 = vpop.f32.mrb[0].mxu0
    %v1834 = vadd.f32 %v1743, %v1833
    %v1835 = vpop.f32.mrb[0].mxu0
    %1836 = vmatprep.mubr.f32.mxu0 0.0
    %1837 = vmatmul.mubr.f32.gmra.mrb[0].mxu0 %v1755
    %v1838 = vpop.f32.mrb[0].mxu0
    %v1839 = vadd.f32 %v1743, %v1838
    %v1840 = vpop.f32.mrb[0].mxu0
    %1841 = vdwg.mxu0
    %v1842 = vadd.f32 %v1129, %v1824
    %v1843 = vadd.f32 %v1130, %v1829
    %v1844 = vadd.f32 %v1131, %v1834
    %v1845 = vadd.f32 %v1132, %v1839
    %v1846 = vsel %vm582, %v1842, 0.0
    %1847 = vadd.xlane.f32.xlu0 %v1846
    %v1848 = vpop.xlane.xlu0 %1847
    %v1849 = vsel %vm582, %v1843, 0.0
    %1850 = vadd.xlane.f32.xlu0 %v1849
    %v1851 = vpop.xlane.xlu0 %1850
    %v1852 = vsel %vm582, %v1844, 0.0
    %1853 = vadd.xlane.f32.xlu0 %v1852
    %v1854 = vpop.xlane.xlu0 %1853
    %v1855 = vsel %vm582, %v1845, 0.0
    %1856 = vadd.xlane.f32.xlu0 %v1855
    %v1857 = vpop.xlane.xlu0 %1856
    %v1858 = vmul.f32 %v1848, %v479
    %v1859 = vmul.f32 %v1851, %v479
    %v1860 = vmul.f32 %v1854, %v479
    %v1861 = vmul.f32 %v1857, %v479
    %v1862 = vsub.f32 %v1842, %v1858
    %v1863 = vsub.f32 %v1843, %v1859
    %v1864 = vsub.f32 %v1844, %v1860
    %v1865 = vsub.f32 %v1845, %v1861
    %v1866 = vmul.f32 %v1862, %v1862
    %v1867 = vmul.f32 %v1863, %v1863
    %v1868 = vmul.f32 %v1864, %v1864
    %v1869 = vmul.f32 %v1865, %v1865
    %v1870 = vsel %vm582, %v1866, 0.0
    %1871 = vadd.xlane.f32.xlu0 %v1870
    %v1872 = vpop.xlane.xlu0 %1871
    %v1873 = vsel %vm582, %v1867, 0.0
    %1874 = vadd.xlane.f32.xlu0 %v1873
    %v1875 = vpop.xlane.xlu0 %1874
    %v1876 = vsel %vm582, %v1868, 0.0
    %1877 = vadd.xlane.f32.xlu0 %v1876
    %v1878 = vpop.xlane.xlu0 %1877
    %v1879 = vsel %vm582, %v1869, 0.0
    %1880 = vadd.xlane.f32.xlu0 %v1879
    %v1881 = vpop.xlane.xlu0 %1880
    %v1882 = vmul.f32 %v1872, %v479
    %v1883 = vmul.f32 %v1875, %v479
    %v1884 = vmul.f32 %v1878, %v479
    %v1885 = vmul.f32 %v1881, %v479
    %v1886 = vadd.f32 %v1882, 1e-05
    %v1887 = vadd.f32 %v1883, 1e-05
    %v1888 = vadd.f32 %v1884, 1e-05
    %v1889 = vadd.f32 %v1885, 1e-05
    %v1890 = vrsqrt.pop %v1886
    %v1891 = vrsqrt.pop %v1887
    %v1892 = vrsqrt.pop %v1888
    %v1893 = vrsqrt.pop %v1889
    %v1894 = vmul.f32 %v1862, %v1890
    %v1895 = vmul.f32 %v1863, %v1891
    %v1896 = vmul.f32 %v1864, %v1892
    %v1897 = vmul.f32 %v1865, %v1893
    %v1898 = vld [vmem:[#allocation19] sm:$0x1]
    %v1900 = vlaneseq
    %v1901 = vshrl.u32 %v1900, 7
    %v1902 = vsub.s32 0, %v1901
    %v1903 = vrot.slane %v1898, %v1902
    %v1905 = vmul.f32 %v1894, %v1903
    %v1906 = vmul.f32 %v1895, %v1903
    %v1907 = vmul.f32 %v1896, %v1903
    %v1908 = vmul.f32 %v1897, %v1903
    %v1909 = vld [vmem:[#allocation20] sm:$0x1]
    %v1911 = vlaneseq
    %v1912 = vshrl.u32 %v1911, 7
    %v1913 = vsub.s32 0, %v1912
    %v1914 = vrot.slane %v1909, %v1913
    %v1916 = vadd.f32 %v1905, %v1914
    %v1917 = vadd.f32 %v1906, %v1914
    %v1918 = vadd.f32 %v1907, %v1914
    %v1919 = vadd.f32 %v1908, %v1914
    %v1920 = vld [vmem:[#allocation22] sm:$0xff]
    %v1921 = vld [vmem:[#allocation22 + $0x8] sm:$0xff]
    %v1922 = vld [vmem:[#allocation22 + $0x10] sm:$0xff]
    %v1923 = vld [vmem:[#allocation22 + $0x18] sm:$0xff]
    %v1924 = vld [vmem:[#allocation23] sm:$0x1]
    %v1926 = vlaneseq
    %v1927 = vshrl.u32 %v1926, 7
    %v1928 = vsub.s32 0, %v1927
    %v1929 = vrot.slane %v1924, %v1928
    %v1932 = vsel %vm582, %v1916, 0
    %v1935 = vsel %vm582, %v1917, 0
    %v1938 = vsel %vm582, %v1918, 0
    %v1941 = vsel %vm582, %v1919, 0
    %1943 = vmatprep.subr.mxu0 0.0
    %1944 = vmatpush1.msra.mxu0 %v1920
    %1945 = vmatprep.subr.mxu0 0.0
    %1946 = vmatpush1.msra.mxu0 %v1921
    %1947 = vmatprep.subr.mxu0 0.0
    %1948 = vmatpush1.msra.mxu0 %v1922
    %1949 = vmatprep.subr.mxu0 0.0
    %1950 = vmatpush1.msra.mxu0 %v1923
    %1951 = vmatprep.subr.mxu0 0.0
    %1952 = vmatpush1.msra.mxu0 0.0
    %1953 = vmatprep.subr.mxu0 0.0
    %1954 = vmatpush1.msra.mxu0 0.0
    %1955 = vmatprep.subr.mxu0 0.0
    %1956 = vmatpush1.msra.mxu0 0.0
    %1957 = vmatprep.subr.mxu0 0.0
    %1958 = vmatpush1.msra.mxu0 0.0
    %1959 = vmatprep.subr.mxu0 0.0
    %1960 = vmatpush1.msra.mxu0 0.0
    %1961 = vmatprep.subr.mxu0 0.0
    %1962 = vmatpush1.msra.mxu0 0.0
    %1963 = vmatprep.subr.mxu0 0.0
    %1964 = vmatpush1.msra.mxu0 0.0
    %1965 = vmatprep.subr.mxu0 0.0
    %1966 = vmatpush1.msra.mxu0 0.0
    %1967 = vmatprep.subr.mxu0 0.0
    %1968 = vmatpush1.msra.mxu0 0.0
    %1969 = vmatprep.subr.mxu0 0.0
    %1970 = vmatpush1.msra.mxu0 0.0
    %1971 = vmatprep.subr.mxu0 0.0
    %1972 = vmatpush1.msra.mxu0 0.0
    %1973 = vmatprep.subr.mxu0 0.0
    %1974 = vmatpush1.msra.mxu0 0.0
    %1975 = vmatprep.subr.mxu0 0.0
    %1976 = vmatpush1.msra.mxu0 0.0
    %1977 = vmatprep.subr.mxu0 0.0
    %1978 = vmatpush1.msra.mxu0 0.0
    %1979 = vmatprep.subr.mxu0 0.0
    %1980 = vmatpush1.msra.mxu0 0.0
    %1981 = vmatprep.subr.mxu0 0.0
    %1982 = vmatpush1.msra.mxu0 0.0
    %1983 = vmatprep.subr.mxu0 0.0
    %1984 = vmatpush1.msra.mxu0 0.0
    %1985 = vmatprep.subr.mxu0 0.0
    %1986 = vmatpush1.msra.mxu0 0.0
    %1987 = vmatprep.subr.mxu0 0.0
    %1988 = vmatpush1.msra.mxu0 0.0
    %1989 = vmatprep.subr.mxu0 0.0
    %1990 = vmatpush1.msra.mxu0 0.0
    %1991 = vmatprep.subr.mxu0 0.0
    %1992 = vmatpush1.msra.mxu0 0.0
    %1993 = vmatprep.subr.mxu0 0.0
    %1994 = vmatpush1.msra.mxu0 0.0
    %1995 = vmatprep.subr.mxu0 0.0
    %1996 = vmatpush1.msra.mxu0 0.0
    %1997 = vmatprep.subr.mxu0 0.0
    %1998 = vmatpush1.msra.mxu0 0.0
    %1999 = vmatprep.subr.mxu0 0.0
    %2000 = vmatpush1.msra.mxu0 0.0
    %2001 = vmatprep.subr.mxu0 0.0
    %2002 = vmatpush1.msra.mxu0 0.0
    %2003 = vmatprep.subr.mxu0 0.0
    %2004 = vmatpush1.msra.mxu0 0.0
    %2005 = vmatprep.subr.mxu0 0.0
    %2006 = vmatpush1.msra.mxu0 0.0
    %2007 = vmatprep.mubr.f32.mxu0 0.0
    %2008 = vmatmul.mubr.f32.gmra.mrb[0].mxu0 %v1932
    %v2009 = vpop.f32.mrb[0].mxu0
    %v2010 = vadd.f32 %v1929, %v2009
    %v2011 = vpop.f32.mrb[0].mxu0
    %2012 = vmatprep.mubr.f32.mxu0 0.0
    %2013 = vmatmul.mubr.f32.gmra.mrb[0].mxu0 %v1935
    %v2014 = vpop.f32.mrb[0].mxu0
    %v2015 = vadd.f32 %v1929, %v2014
    %v2016 = vpop.f32.mrb[0].mxu0
    %2017 = vmatprep.mubr.f32.mxu0 0.0
    %2018 = vmatmul.mubr.f32.gmra.mrb[0].mxu0 %v1938
    %v2019 = vpop.f32.mrb[0].mxu0
    %v2020 = vadd.f32 %v1929, %v2019
    %v2021 = vpop.f32.mrb[0].mxu0
    %2022 = vmatprep.mubr.f32.mxu0 0.0
    %2023 = vmatmul.mubr.f32.gmra.mrb[0].mxu0 %v1941
    %v2024 = vpop.f32.mrb[0].mxu0
    %v2025 = vadd.f32 %v1929, %v2024
    %v2026 = vpop.f32.mrb[0].mxu0
    %2027 = vdwg.mxu0
    %v2028 = vmul.f32 %v2010, 0.5
    %v2029 = vmul.f32 %v2015, 0.5
    %v2030 = vmul.f32 %v2020, 0.5
    %v2031 = vmul.f32 %v2025, 0.5
    %v2032 = vmul.f32 %v2010, 0.70710677
    %v2033 = vmul.f32 %v2015, 0.70710677
    %v2034 = vmul.f32 %v2020, 0.70710677
    %v2035 = vmul.f32 %v2025, 0.70710677
    %vm2036 = vcmp.ge.f32.partialorder %v2032, 0.0
    %vm2037 = vcmp.ge.f32.partialorder %v2033, 0.0
    %vm2038 = vcmp.ge.f32.partialorder %v2034, 0.0
    %vm2039 = vcmp.ge.f32.partialorder %v2035, 0.0
    %v2040 = vsel %vm2036, 1.0, -1.0
    %v2041 = vsel %vm2037, 1.0, -1.0
    %v2042 = vsel %vm2038, 1.0, -1.0
    %v2043 = vsel %vm2039, 1.0, -1.0
    %v2044 = vand.u32 2147483647, %v2032
    %v2045 = vand.u32 2147483647, %v2033
    %v2046 = vand.u32 2147483647, %v2034
    %v2047 = vand.u32 2147483647, %v2035
    %v2048 = vmul.f32 %v2044, 0.3275911
    %v2049 = vmul.f32 %v2045, 0.3275911
    %v2050 = vmul.f32 %v2046, 0.3275911
    %v2051 = vmul.f32 %v2047, 0.3275911
    %v2052 = vadd.f32 %v2048, 1.0
    %v2053 = vadd.f32 %v2049, 1.0
    %v2054 = vadd.f32 %v2050, 1.0
    %v2055 = vadd.f32 %v2051, 1.0
    %v2056 = vrcp.pop %v2052
    %v2057 = vmul.f32 1.0, %v2056
    %v2058 = vrcp.pop %v2053
    %v2059 = vmul.f32 1.0, %v2058
    %v2060 = vrcp.pop %v2054
    %v2061 = vmul.f32 1.0, %v2060
    %v2062 = vrcp.pop %v2055
    %v2063 = vmul.f32 1.0, %v2062
    %v2064 = vmul.f32 %v2057, 1.0614054
    %v2065 = vmul.f32 %v2059, 1.0614054
    %v2066 = vmul.f32 %v2061, 1.0614054
    %v2067 = vmul.f32 %v2063, 1.0614054
    %v2068 = vadd.f32 %v2064, -1.4531521
    %v2069 = vadd.f32 %v2065, -1.4531521
    %v2070 = vadd.f32 %v2066, -1.4531521
    %v2071 = vadd.f32 %v2067, -1.4531521
    %v2072 = vmul.f32 %v2068, %v2057
    %v2073 = vmul.f32 %v2069, %v2059
    %v2074 = vmul.f32 %v2070, %v2061
    %v2075 = vmul.f32 %v2071, %v2063
    %v2076 = vadd.f32 %v2072, 1.4214138
    %v2077 = vadd.f32 %v2073, 1.4214138
    %v2078 = vadd.f32 %v2074, 1.4214138
    %v2079 = vadd.f32 %v2075, 1.4214138
    %v2080 = vmul.f32 %v2076, %v2057
    %v2081 = vmul.f32 %v2077, %v2059
    %v2082 = vmul.f32 %v2078, %v2061
    %v2083 = vmul.f32 %v2079, %v2063
    %v2084 = vadd.f32 %v2080, -0.28449672
    %v2085 = vadd.f32 %v2081, -0.28449672
    %v2086 = vadd.f32 %v2082, -0.28449672
    %v2087 = vadd.f32 %v2083, -0.28449672
    %v2088 = vmul.f32 %v2084, %v2057
    %v2089 = vmul.f32 %v2085, %v2059
    %v2090 = vmul.f32 %v2086, %v2061
    %v2091 = vmul.f32 %v2087, %v2063
    %v2092 = vadd.f32 %v2088, 0.2548296
    %v2093 = vadd.f32 %v2089, 0.2548296
    %v2094 = vadd.f32 %v2090, 0.2548296
    %v2095 = vadd.f32 %v2091, 0.2548296
    %v2096 = vmul.f32 %v2092, %v2057
    %v2097 = vmul.f32 %v2093, %v2059
    %v2098 = vmul.f32 %v2094, %v2061
    %v2099 = vmul.f32 %v2095, %v2063
    %v2100 = vsub.f32 0.0, %v2044
    %v2101 = vsub.f32 0.0, %v2045
    %v2102 = vsub.f32 0.0, %v2046
    %v2103 = vsub.f32 0.0, %v2047
    %v2104 = vmul.f32 %v2100, %v2044
    %v2105 = vmul.f32 %v2101, %v2045
    %v2106 = vmul.f32 %v2102, %v2046
    %v2107 = vmul.f32 %v2103, %v2047
    %v2108 = vmul.f32 %v2104, 1.442695
    %v2109 = vpow.pop %v2108
    %v2110 = vmul.f32 %v2105, 1.442695
    %v2111 = vpow.pop %v2110
    %v2112 = vmul.f32 %v2106, 1.442695
    %v2113 = vpow.pop %v2112
    %v2114 = vmul.f32 %v2107, 1.442695
    %v2115 = vpow.pop %v2114
    %v2116 = vmul.f32 %v2096, %v2109
    %v2117 = vmul.f32 %v2097, %v2111
    %v2118 = vmul.f32 %v2098, %v2113
    %v2119 = vmul.f32 %v2099, %v2115
    %v2120 = vsub.f32 1.0, %v2116
    %v2121 = vsub.f32 1.0, %v2117
    %v2122 = vsub.f32 1.0, %v2118
    %v2123 = vsub.f32 1.0, %v2119
    %v2124 = vmul.f32 %v2040, %v2120
    %v2125 = vmul.f32 %v2041, %v2121
    %v2126 = vmul.f32 %v2042, %v2122
    %v2127 = vmul.f32 %v2043, %v2123
    %v2128 = vadd.f32 %v2124, 1.0
    %v2129 = vadd.f32 %v2125, 1.0
    %v2130 = vadd.f32 %v2126, 1.0
    %v2131 = vadd.f32 %v2127, 1.0
    %v2132 = vmul.f32 %v2028, %v2128
    %v2133 = vmul.f32 %v2029, %v2129
    %v2134 = vmul.f32 %v2030, %v2130
    %v2135 = vmul.f32 %v2031, %v2131
    %v2136 = vld [vmem:[%s49] sm:$0xff]
    %v2137 = vld [vmem:[%s49 + $0x8] sm:$0xff]
    %v2138 = vld [vmem:[%s49 + $0x10] sm:$0xff]
    %v2139 = vld [vmem:[%s49 + $0x18] sm:$0xff]
    %v2140 = vld [vmem:[%s49 + $0x20] sm:$0xff]
    %v2141 = vld [vmem:[%s49 + $0x28] sm:$0xff]
    %v2142 = vld [vmem:[%s49 + $0x30] sm:$0xff]
    %v2143 = vld [vmem:[%s49 + $0x38] sm:$0xff]
    %vm2144 = vcmask 523264
    %v2146 = vsel %vm2144, %v2132, 0
    %v2149 = vsel %vm2144, %v2133, 0
    %v2152 = vsel %vm2144, %v2134, 0
    %v2155 = vsel %vm2144, %v2135, 0
    %2157 = vmatprep.subr.mxu0 0.0
    %2158 = vmatpush1.msra.mxu0 %v2136
    %2159 = vmatprep.subr.mxu0 0.0
    %2160 = vmatpush1.msra.mxu0 %v2137
    %2161 = vmatprep.subr.mxu0 0.0
    %2162 = vmatpush1.msra.mxu0 %v2138
    %2163 = vmatprep.subr.mxu0 0.0
    %2164 = vmatpush1.msra.mxu0 %v2139
    %2165 = vmatprep.subr.mxu0 0.0
    %2166 = vmatpush1.msra.mxu0 %v2140
    %2167 = vmatprep.subr.mxu0 0.0
    %2168 = vmatpush1.msra.mxu0 %v2141
    %2169 = vmatprep.subr.mxu0 0.0
    %2170 = vmatpush1.msra.mxu0 %v2142
    %2171 = vmatprep.subr.mxu0 0.0
    %2172 = vmatpush1.msra.mxu0 %v2143
    %2173 = vmatprep.subr.mxu0 0.0
    %2174 = vmatpush1.msra.mxu0 0.0
    %2175 = vmatprep.subr.mxu0 0.0
    %2176 = vmatpush1.msra.mxu0 0.0
    %2177 = vmatprep.subr.mxu0 0.0
    %2178 = vmatpush1.msra.mxu0 0.0
    %2179 = vmatprep.subr.mxu0 0.0
    %2180 = vmatpush1.msra.mxu0 0.0
    %2181 = vmatprep.subr.mxu0 0.0
    %2182 = vmatpush1.msra.mxu0 0.0
    %2183 = vmatprep.subr.mxu0 0.0
    %2184 = vmatpush1.msra.mxu0 0.0
    %2185 = vmatprep.subr.mxu0 0.0
    %2186 = vmatpush1.msra.mxu0 0.0
    %2187 = vmatprep.subr.mxu0 0.0
    %2188 = vmatpush1.msra.mxu0 0.0
    %2189 = vmatprep.subr.mxu0 0.0
    %2190 = vmatpush1.msra.mxu0 0.0
    %2191 = vmatprep.subr.mxu0 0.0
    %2192 = vmatpush1.msra.mxu0 0.0
    %2193 = vmatprep.subr.mxu0 0.0
    %2194 = vmatpush1.msra.mxu0 0.0
    %2195 = vmatprep.subr.mxu0 0.0
    %2196 = vmatpush1.msra.mxu0 0.0
    %2197 = vmatprep.subr.mxu0 0.0
    %2198 = vmatpush1.msra.mxu0 0.0
    %2199 = vmatprep.subr.mxu0 0.0
    %2200 = vmatpush1.msra.mxu0 0.0
    %2201 = vmatprep.subr.mxu0 0.0
    %2202 = vmatpush1.msra.mxu0 0.0
    %2203 = vmatprep.subr.mxu0 0.0
    %2204 = vmatpush1.msra.mxu0 0.0
    %2205 = vmatprep.subr.mxu0 0.0
    %2206 = vmatpush1.msra.mxu0 0.0
    %2207 = vmatprep.subr.mxu0 0.0
    %2208 = vmatpush1.msra.mxu0 0.0
    %2209 = vmatprep.subr.mxu0 0.0
    %2210 = vmatpush1.msra.mxu0 0.0
    %2211 = vmatprep.subr.mxu0 0.0
    %2212 = vmatpush1.msra.mxu0 0.0
    %2213 = vmatprep.subr.mxu0 0.0
    %2214 = vmatpush1.msra.mxu0 0.0
    %2215 = vmatprep.subr.mxu0 0.0
    %2216 = vmatpush1.msra.mxu0 0.0
    %2217 = vmatprep.subr.mxu0 0.0
    %2218 = vmatpush1.msra.mxu0 0.0
    %2219 = vmatprep.subr.mxu0 0.0
    %2220 = vmatpush1.msra.mxu0 0.0
    %2221 = vmatprep.mubr.f32.mxu0 0.0
    %2222 = vmatmul.mubr.f32.gmra.mrb[0].mxu0 %v2146
    %v2223 = vpop.f32.mrb[0].mxu0
    %v2224 = vadd.f32 0.0, %v2223
    %v2225 = vpop.f32.mrb[0].mxu0
    %2226 = vmatprep.mubr.f32.mxu0 0.0
    %2227 = vmatmul.mubr.f32.gmra.mrb[0].mxu0 %v2149
    %v2228 = vpop.f32.mrb[0].mxu0
    %v2229 = vadd.f32 0.0, %v2228
    %v2230 = vpop.f32.mrb[0].mxu0
    %2231 = vmatprep.mubr.f32.mxu0 0.0
    %2232 = vmatmul.mubr.f32.gmra.mrb[0].mxu0 %v2152
    %v2233 = vpop.f32.mrb[0].mxu0
    %v2234 = vadd.f32 0.0, %v2233
    %v2235 = vpop.f32.mrb[0].mxu0
    %2236 = vmatprep.mubr.f32.mxu0 0.0
    %2237 = vmatmul.mubr.f32.gmra.mrb[0].mxu0 %v2155
    %v2238 = vpop.f32.mrb[0].mxu0
    %v2239 = vadd.f32 0.0, %v2238
    %v2240 = vpop.f32.mrb[0].mxu0
    %2241 = vdwg.mxu0
    %v2242 = vadd.f32 %v1916, %v2224
    %v2243 = vadd.f32 %v1917, %v2229
    %v2244 = vadd.f32 %v1918, %v2234
    %v2245 = vadd.f32 %v1919, %v2239
    %v2246 = vld [vmem:[#allocation25] sm:$0x1]
    %v2248 = vlaneseq
    %v2249 = vshrl.u32 %v2248, 7
    %v2250 = vsub.s32 0, %v2249
    %v2251 = vrot.slane %v2246, %v2250
    %v2253 = vadd.f32 %v2242, %v2251
    %v2254 = vadd.f32 %v2243, %v2251
    %v2255 = vadd.f32 %v2244, %v2251
    %v2256 = vadd.f32 %v2245, %v2251
    %s2257 = scalar_lea.vmem [#allocation2], 16
    %v2258 = vld [vmem:[%s2257] sm:$0xff]
    %v2259 = vld [vmem:[%s2257 + $0x8] sm:$0xff]
    %s2260 = scalar_lea.vmem %s25, 40
    %v2261 = vld [vmem:[%s2260] sm:$0xff]
    %v2262 = vld [vmem:[%s2260 + $0x8] sm:$0xff]
    %v2263 = vld [vmem:[%s2260 + $0x10] sm:$0xff]
    %v2264 = vld [vmem:[%s2260 + $0x18] sm:$0xff]
    %v2265 = vld [vmem:[%s2260 + $0x20] sm:$0x1]
    %s2266 = scalar_lea.vmem [#allocation13], 1
    %v2267 = vld [vmem:[%s2266] sm:$0x1]
    %v2269 = vlaneseq
    %v2270 = vshrl.u32 %v2269, 7
    %v2271 = vsub.s32 0, %v2270
    %v2272 = vrot.slane %v2267, %v2271
    %v2275 = vsel %vm803, %v2258, 0
    %v2278 = vsel %vm803, %v2259, 0
    %v2281 = vsel %vm810, %v2265, 0
    %2283 = vmatprep.subr.mxu0 0.0
    %2284 = vmatpush1.msra.mxu0 %v2261
    %2285 = vmatprep.subr.mxu0 0.0
    %2286 = vmatpush1.msra.mxu0 %v2262
    %2287 = vmatprep.subr.mxu0 0.0
    %2288 = vmatpush1.msra.mxu0 %v2263
    %2289 = vmatprep.subr.mxu0 0.0
    %2290 = vmatpush1.msra.mxu0 %v2264
    %2291 = vmatprep.subr.mxu0 0.0
    %2292 = vmatpush1.msra.mxu0 %v2281
    %2293 = vmatprep.subr.mxu0 0.0
    %2294 = vmatpush1.msra.mxu0 0.0
    %2295 = vmatprep.subr.mxu0 0.0
    %2296 = vmatpush1.msra.mxu0 0.0
    %2297 = vmatprep.subr.mxu0 0.0
    %2298 = vmatpush1.msra.mxu0 0.0
    %2299 = vmatprep.subr.mxu0 0.0
    %2300 = vmatpush1.msra.mxu0 0.0
    %2301 = vmatprep.subr.mxu0 0.0
    %2302 = vmatpush1.msra.mxu0 0.0
    %2303 = vmatprep.subr.mxu0 0.0
    %2304 = vmatpush1.msra.mxu0 0.0
    %2305 = vmatprep.subr.mxu0 0.0
    %2306 = vmatpush1.msra.mxu0 0.0
    %2307 = vmatprep.subr.mxu0 0.0
    %2308 = vmatpush1.msra.mxu0 0.0
    %2309 = vmatprep.subr.mxu0 0.0
    %2310 = vmatpush1.msra.mxu0 0.0
    %2311 = vmatprep.subr.mxu0 0.0
    %2312 = vmatpush1.msra.mxu0 0.0
    %2313 = vmatprep.subr.mxu0 0.0
    %2314 = vmatpush1.msra.mxu0 0.0
    %2315 = vmatprep.subr.mxu0 0.0
    %2316 = vmatpush1.msra.mxu0 0.0
    %2317 = vmatprep.subr.mxu0 0.0
    %2318 = vmatpush1.msra.mxu0 0.0
    %2319 = vmatprep.subr.mxu0 0.0
    %2320 = vmatpush1.msra.mxu0 0.0
    %2321 = vmatprep.subr.mxu0 0.0
    %2322 = vmatpush1.msra.mxu0 0.0
    %2323 = vmatprep.subr.mxu0 0.0
    %2324 = vmatpush1.msra.mxu0 0.0
    %2325 = vmatprep.subr.mxu0 0.0
    %2326 = vmatpush1.msra.mxu0 0.0
    %2327 = vmatprep.subr.mxu0 0.0
    %2328 = vmatpush1.msra.mxu0 0.0
    %2329 = vmatprep.subr.mxu0 0.0
    %2330 = vmatpush1.msra.mxu0 0.0
    %2331 = vmatprep.subr.mxu0 0.0
    %2332 = vmatpush1.msra.mxu0 0.0
    %2333 = vmatprep.subr.mxu0 0.0
    %2334 = vmatpush1.msra.mxu0 0.0
    %2335 = vmatprep.subr.mxu0 0.0
    %2336 = vmatpush1.msra.mxu0 0.0
    %2337 = vmatprep.subr.mxu0 0.0
    %2338 = vmatpush1.msra.mxu0 0.0
    %2339 = vmatprep.subr.mxu0 0.0
    %2340 = vmatpush1.msra.mxu0 0.0
    %2341 = vmatprep.subr.mxu0 0.0
    %2342 = vmatpush1.msra.mxu0 0.0
    %2343 = vmatprep.subr.mxu0 0.0
    %2344 = vmatpush1.msra.mxu0 0.0
    %2345 = vmatprep.subr.mxu0 0.0
    %2346 = vmatpush1.msra.mxu0 0.0
    %2347 = vmatprep.mubr.f32.mxu0 0.0
    %2348 = vmatmul.mubr.f32.gmra.mrb[0].mxu0 %v2275
    %v2349 = vpop.f32.mrb[0].mxu0
    %v2350 = vadd.f32 %v2272, %v2349
    %v2351 = vpop.f32.mrb[0].mxu0
    %2352 = vmatprep.mubr.f32.mxu0 0.0
    %2353 = vmatmul.mubr.f32.gmra.mrb[0].mxu0 %v2278
    %v2354 = vpop.f32.mrb[0].mxu0
    %v2355 = vadd.f32 %v2272, %v2354
    %v2356 = vpop.f32.mrb[0].mxu0
    %2357 = vdwg.mxu0
    %v2358 = vmul.f32 %v2350, 0.5
    %v2359 = vmul.f32 %v2355, 0.5
    %v2360 = vmul.f32 %v2350, 0.70710677
    %v2361 = vmul.f32 %v2355, 0.70710677
    %vm2362 = vcmp.ge.f32.partialorder %v2360, 0.0
    %vm2363 = vcmp.ge.f32.partialorder %v2361, 0.0
    %v2364 = vsel %vm2362, 1.0, -1.0
    %v2365 = vsel %vm2363, 1.0, -1.0
    %v2366 = vand.u32 2147483647, %v2360
    %v2367 = vand.u32 2147483647, %v2361
    %v2368 = vmul.f32 %v2366, 0.3275911
    %v2369 = vmul.f32 %v2367, 0.3275911
    %v2370 = vadd.f32 %v2368, 1.0
    %v2371 = vadd.f32 %v2369, 1.0
    %v2372 = vrcp.pop %v2370
    %v2373 = vmul.f32 1.0, %v2372
    %v2374 = vrcp.pop %v2371
    %v2375 = vmul.f32 1.0, %v2374
    %v2376 = vmul.f32 %v2373, 1.0614054
    %v2377 = vmul.f32 %v2375, 1.0614054
    %v2378 = vadd.f32 %v2376, -1.4531521
    %v2379 = vadd.f32 %v2377, -1.4531521
    %v2380 = vmul.f32 %v2378, %v2373
    %v2381 = vmul.f32 %v2379, %v2375
    %v2382 = vadd.f32 %v2380, 1.4214138
    %v2383 = vadd.f32 %v2381, 1.4214138
    %v2384 = vmul.f32 %v2382, %v2373
    %v2385 = vmul.f32 %v2383, %v2375
    %v2386 = vadd.f32 %v2384, -0.28449672
    %v2387 = vadd.f32 %v2385, -0.28449672
    %v2388 = vmul.f32 %v2386, %v2373
    %v2389 = vmul.f32 %v2387, %v2375
    %v2390 = vadd.f32 %v2388, 0.2548296
    %v2391 = vadd.f32 %v2389, 0.2548296
    %v2392 = vmul.f32 %v2390, %v2373
    %v2393 = vmul.f32 %v2391, %v2375
    %v2394 = vsub.f32 0.0, %v2366
    %v2395 = vsub.f32 0.0, %v2367
    %v2396 = vmul.f32 %v2394, %v2366
    %v2397 = vmul.f32 %v2395, %v2367
    %v2398 = vmul.f32 %v2396, 1.442695
    %v2399 = vpow.pop %v2398
    %v2400 = vmul.f32 %v2397, 1.442695
    %v2401 = vpow.pop %v2400
    %v2402 = vmul.f32 %v2392, %v2399
    %v2403 = vmul.f32 %v2393, %v2401
    %v2404 = vsub.f32 1.0, %v2402
    %v2405 = vsub.f32 1.0, %v2403
    %v2406 = vmul.f32 %v2364, %v2404
    %v2407 = vmul.f32 %v2365, %v2405
    %v2408 = vadd.f32 %v2406, 1.0
    %v2409 = vadd.f32 %v2407, 1.0
    %v2410 = vmul.f32 %v2358, %v2408
    %v2411 = vmul.f32 %v2359, %v2409
    %v2412 = vadd.f32 %v2253, %v782
    %v2413 = vadd.f32 %v2254, %v782
    %v2414 = vadd.f32 %v2255, %v786
    %v2415 = vadd.f32 %v2256, %v786
    %v2416 = vadd.f32 %v2412, %v2410
    %v2417 = vadd.f32 %v2413, %v2411
    %v2418 = vadd.f32 %v2414, %v2410
    %v2419 = vadd.f32 %v2415, %v2411
    %s2420 = scalar_lea.vmem %s29, 32
    %v2421 = vld [vmem:[%s2420] sm:$0xff]
    %v2422 = vld [vmem:[%s2420 + $0x8] sm:$0xff]
    %v2423 = vld [vmem:[%s2420 + $0x10] sm:$0xff]
    %v2424 = vld [vmem:[%s2420 + $0x18] sm:$0xff]
    %s2425 = scalar_lea.vmem [#allocation14], 1
    %v2426 = vld [vmem:[%s2425] sm:$0x1]
    %v2428 = vlaneseq
    %v2429 = vshrl.u32 %v2428, 7
    %v2430 = vsub.s32 0, %v2429
    %v2431 = vrot.slane %v2426, %v2430
    %2433 = vmatprep.subr.mxu0 0.0
    %2434 = vmatpush1.msra.mxu0 %v2421
    %2435 = vmatprep.subr.mxu0 0.0
    %2436 = vmatpush1.msra.mxu0 %v2422
    %2437 = vmatprep.subr.mxu0 0.0
    %2438 = vmatpush1.msra.mxu0 %v2423
    %2439 = vmatprep.subr.mxu0 0.0
    %2440 = vmatpush1.msra.mxu0 %v2424
    %2441 = vmatprep.subr.mxu0 0.0
    %2442 = vmatpush1.msra.mxu0 0.0
    %2443 = vmatprep.subr.mxu0 0.0
    %2444 = vmatpush1.msra.mxu0 0.0
    %2445 = vmatprep.subr.mxu0 0.0
    %2446 = vmatpush1.msra.mxu0 0.0
    %2447 = vmatprep.subr.mxu0 0.0
    %2448 = vmatpush1.msra.mxu0 0.0
    %2449 = vmatprep.subr.mxu0 0.0
    %2450 = vmatpush1.msra.mxu0 0.0
    %2451 = vmatprep.subr.mxu0 0.0
    %2452 = vmatpush1.msra.mxu0 0.0
    %2453 = vmatprep.subr.mxu0 0.0
    %2454 = vmatpush1.msra.mxu0 0.0
    %2455 = vmatprep.subr.mxu0 0.0
    %2456 = vmatpush1.msra.mxu0 0.0
    %2457 = vmatprep.subr.mxu0 0.0
    %2458 = vmatpush1.msra.mxu0 0.0
    %2459 = vmatprep.subr.mxu0 0.0
    %2460 = vmatpush1.msra.mxu0 0.0
    %2461 = vmatprep.subr.mxu0 0.0
    %2462 = vmatpush1.msra.mxu0 0.0
    %2463 = vmatprep.subr.mxu0 0.0
    %2464 = vmatpush1.msra.mxu0 0.0
    %2465 = vmatprep.subr.mxu0 0.0
    %2466 = vmatpush1.msra.mxu0 0.0
    %2467 = vmatprep.subr.mxu0 0.0
    %2468 = vmatpush1.msra.mxu0 0.0
    %2469 = vmatprep.subr.mxu0 0.0
    %2470 = vmatpush1.msra.mxu0 0.0
    %2471 = vmatprep.subr.mxu0 0.0
    %2472 = vmatpush1.msra.mxu0 0.0
    %2473 = vmatprep.subr.mxu0 0.0
    %2474 = vmatpush1.msra.mxu0 0.0
    %2475 = vmatprep.subr.mxu0 0.0
    %2476 = vmatpush1.msra.mxu0 0.0
    %2477 = vmatprep.subr.mxu0 0.0
    %2478 = vmatpush1.msra.mxu0 0.0
    %2479 = vmatprep.subr.mxu0 0.0
    %2480 = vmatpush1.msra.mxu0 0.0
    %2481 = vmatprep.subr.mxu0 0.0
    %2482 = vmatpush1.msra.mxu0 0.0
    %2483 = vmatprep.subr.mxu0 0.0
    %2484 = vmatpush1.msra.mxu0 0.0
    %2485 = vmatprep.subr.mxu0 0.0
    %2486 = vmatpush1.msra.mxu0 0.0
    %2487 = vmatprep.subr.mxu0 0.0
    %2488 = vmatpush1.msra.mxu0 0.0
    %2489 = vmatprep.subr.mxu0 0.0
    %2490 = vmatpush1.msra.mxu0 0.0
    %2491 = vmatprep.subr.mxu0 0.0
    %2492 = vmatpush1.msra.mxu0 0.0
    %2493 = vmatprep.subr.mxu0 0.0
    %2494 = vmatpush1.msra.mxu0 0.0
    %2495 = vmatprep.subr.mxu0 0.0
    %2496 = vmatpush1.msra.mxu0 0.0
    %2497 = vmatprep.mubr.f32.mxu0 0.0
    %2498 = vmatmul.mubr.f32.gmra.mrb[0].mxu0 %v584
    %v2499 = vpop.f32.mrb[0].mxu0
    %v2500 = vadd.f32 %v2431, %v2499
    %v2501 = vpop.f32.mrb[0].mxu0
    %2502 = vdwg.mxu0
    %v2505 = vunpack.c.l.s4 1966171168
    %v2506 = vunpack.c.0.s8 %v2505
    %v2507 = vlaneseq
    %v2508 = vshrl.u32 %v2507, 7
    %v2509 = vsub.s32 %v2506, %v2508
    %v2510 = vrot.slane %v2500, %v2509
    %v2511 = vcombine.high %v2510, %v2510
    %v2513 = vunpack.c.l.s4 1966171168
    %v2514 = vunpack.c.0.s8 %v2513
    %v2515 = vlaneseq
    %v2516 = vshrl.u32 %v2515, 7
    %v2517 = vsub.s32 %v2514, %v2516
    %v2518 = vrot.slane %v2510, %v2517
    %v2520 = vunpack.c.l.s4 1966171168
    %v2521 = vunpack.c.0.s8 %v2520
    %v2522 = vlaneseq
    %v2523 = vshrl.u32 %v2522, 7
    %v2524 = vsub.s32 %v2521, %v2523
    %v2525 = vrot.slane %v2511, %v2524
    %v2526 = vlaneseq
    %v2527 = vshrl.u32 %v2526, 7
    %v2528 = vsub.s32 0, %v2527
    %v2529 = vrot.slane %v2518, %v2528
    %v2530 = vlaneseq
    %v2531 = vshrl.u32 %v2530, 7
    %v2532 = vsub.s32 0, %v2531
    %v2533 = vrot.slane %v2525, %v2532
    %v2536 = vadd.f32 %v2529, 1.0
    %v2537 = vadd.f32 %v2533, 1.0
    %v2538 = vsel %vm582, %v2416, 0.0
    %2539 = vadd.xlane.f32.xlu0 %v2538
    %v2540 = vpop.xlane.xlu0 %2539
    %v2541 = vsel %vm582, %v2417, 0.0
    %2542 = vadd.xlane.f32.xlu0 %v2541
    %v2543 = vpop.xlane.xlu0 %2542
    %v2544 = vsel %vm582, %v2418, 0.0
    %2545 = vadd.xlane.f32.xlu0 %v2544
    %v2546 = vpop.xlane.xlu0 %2545
    %v2547 = vsel %vm582, %v2419, 0.0
    %2548 = vadd.xlane.f32.xlu0 %v2547
    %v2549 = vpop.xlane.xlu0 %2548
    %v2550 = vmul.f32 %v2540, %v479
    %v2551 = vmul.f32 %v2543, %v479
    %v2552 = vmul.f32 %v2546, %v479
    %v2553 = vmul.f32 %v2549, %v479
    %v2554 = vsub.f32 %v2416, %v2550
    %v2555 = vsub.f32 %v2417, %v2551
    %v2556 = vsub.f32 %v2418, %v2552
    %v2557 = vsub.f32 %v2419, %v2553
    %v2558 = vmul.f32 %v2554, %v2554
    %v2559 = vmul.f32 %v2555, %v2555
    %v2560 = vmul.f32 %v2556, %v2556
    %v2561 = vmul.f32 %v2557, %v2557
    %v2562 = vsel %vm582, %v2558, 0.0
    %2563 = vadd.xlane.f32.xlu0 %v2562
    %v2564 = vpop.xlane.xlu0 %2563
    %v2565 = vsel %vm582, %v2559, 0.0
    %2566 = vadd.xlane.f32.xlu0 %v2565
    %v2567 = vpop.xlane.xlu0 %2566
    %v2568 = vsel %vm582, %v2560, 0.0
    %2569 = vadd.xlane.f32.xlu0 %v2568
    %v2570 = vpop.xlane.xlu0 %2569
    %v2571 = vsel %vm582, %v2561, 0.0
    %2572 = vadd.xlane.f32.xlu0 %v2571
    %v2573 = vpop.xlane.xlu0 %2572
    %v2574 = vmul.f32 %v2564, %v479
    %v2575 = vmul.f32 %v2567, %v479
    %v2576 = vmul.f32 %v2570, %v479
    %v2577 = vmul.f32 %v2573, %v479
    %v2578 = vadd.f32 %v2574, 1e-05
    %v2579 = vadd.f32 %v2575, 1e-05
    %v2580 = vadd.f32 %v2576, 1e-05
    %v2581 = vadd.f32 %v2577, 1e-05
    %v2582 = vrsqrt.pop %v2578
    %v2583 = vrsqrt.pop %v2579
    %v2584 = vrsqrt.pop %v2580
    %v2585 = vrsqrt.pop %v2581
    %v2586 = vmul.f32 %v2554, %v2582
    %v2587 = vmul.f32 %v2555, %v2583
    %v2588 = vmul.f32 %v2556, %v2584
    %v2589 = vmul.f32 %v2557, %v2585
    %v2590 = vmul.f32 %v2536, %v2586
    %v2591 = vmul.f32 %v2536, %v2587
    %v2592 = vmul.f32 %v2537, %v2588
    %v2593 = vmul.f32 %v2537, %v2589
    %2594 = vrot.lane.b32.xlu0 %v2529, 96
    %v2595 = vpop.permute.xlu0 %2594
    %2596 = vrot.lane.b32.xlu0 %v2533, 96
    %v2597 = vpop.permute.xlu0 %2596
    %v2600 = vadd.f32 %v2590, %v2595
    %v2601 = vadd.f32 %v2591, %v2595
    %v2602 = vadd.f32 %v2592, %v2597
    %v2603 = vadd.f32 %v2593, %v2597
    %s2604 = scalar_lea.vmem %s33, 32
    %v2605 = vld [vmem:[%s2604] sm:$0xff]
    %v2606 = vld [vmem:[%s2604 + $0x8] sm:$0xff]
    %v2607 = vld [vmem:[%s2604 + $0x10] sm:$0xff]
    %v2608 = vld [vmem:[%s2604 + $0x18] sm:$0xff]
    %s2609 = scalar_lea.vmem [#allocation16], 1
    %v2610 = vld [vmem:[%s2609] sm:$0x1]
    %v2612 = vlaneseq
    %v2613 = vshrl.u32 %v2612, 7
    %v2614 = vsub.s32 0, %v2613
    %v2615 = vrot.slane %v2610, %v2614
    %v2618 = vsel %vm582, %v2600, 0
    %v2621 = vsel %vm582, %v2601, 0
    %v2624 = vsel %vm582, %v2602, 0
    %v2627 = vsel %vm582, %v2603, 0
    %2629 = vmatprep.subr.mxu0 0.0
    %2630 = vmatpush1.msra.mxu0 %v2605
    %2631 = vmatprep.subr.mxu0 0.0
    %2632 = vmatpush1.msra.mxu0 %v2606
    %2633 = vmatprep.subr.mxu0 0.0
    %2634 = vmatpush1.msra.mxu0 %v2607
    %2635 = vmatprep.subr.mxu0 0.0
    %2636 = vmatpush1.msra.mxu0 %v2608
    %2637 = vmatprep.subr.mxu0 0.0
    %2638 = vmatpush1.msra.mxu0 0.0
    %2639 = vmatprep.subr.mxu0 0.0
    %2640 = vmatpush1.msra.mxu0 0.0
    %2641 = vmatprep.subr.mxu0 0.0
    %2642 = vmatpush1.msra.mxu0 0.0
    %2643 = vmatprep.subr.mxu0 0.0
    %2644 = vmatpush1.msra.mxu0 0.0
    %2645 = vmatprep.subr.mxu0 0.0
    %2646 = vmatpush1.msra.mxu0 0.0
    %2647 = vmatprep.subr.mxu0 0.0
    %2648 = vmatpush1.msra.mxu0 0.0
    %2649 = vmatprep.subr.mxu0 0.0
    %2650 = vmatpush1.msra.mxu0 0.0
    %2651 = vmatprep.subr.mxu0 0.0
    %2652 = vmatpush1.msra.mxu0 0.0
    %2653 = vmatprep.subr.mxu0 0.0
    %2654 = vmatpush1.msra.mxu0 0.0
    %2655 = vmatprep.subr.mxu0 0.0
    %2656 = vmatpush1.msra.mxu0 0.0
    %2657 = vmatprep.subr.mxu0 0.0
    %2658 = vmatpush1.msra.mxu0 0.0
    %2659 = vmatprep.subr.mxu0 0.0
    %2660 = vmatpush1.msra.mxu0 0.0
    %2661 = vmatprep.subr.mxu0 0.0
    %2662 = vmatpush1.msra.mxu0 0.0
    %2663 = vmatprep.subr.mxu0 0.0
    %2664 = vmatpush1.msra.mxu0 0.0
    %2665 = vmatprep.subr.mxu0 0.0
    %2666 = vmatpush1.msra.mxu0 0.0
    %2667 = vmatprep.subr.mxu0 0.0
    %2668 = vmatpush1.msra.mxu0 0.0
    %2669 = vmatprep.subr.mxu0 0.0
    %2670 = vmatpush1.msra.mxu0 0.0
    %2671 = vmatprep.subr.mxu0 0.0
    %2672 = vmatpush1.msra.mxu0 0.0
    %2673 = vmatprep.subr.mxu0 0.0
    %2674 = vmatpush1.msra.mxu0 0.0
    %2675 = vmatprep.subr.mxu0 0.0
    %2676 = vmatpush1.msra.mxu0 0.0
    %2677 = vmatprep.subr.mxu0 0.0
    %2678 = vmatpush1.msra.mxu0 0.0
    %2679 = vmatprep.subr.mxu0 0.0
    %2680 = vmatpush1.msra.mxu0 0.0
    %2681 = vmatprep.subr.mxu0 0.0
    %2682 = vmatpush1.msra.mxu0 0.0
    %2683 = vmatprep.subr.mxu0 0.0
    %2684 = vmatpush1.msra.mxu0 0.0
    %2685 = vmatprep.subr.mxu0 0.0
    %2686 = vmatpush1.msra.mxu0 0.0
    %2687 = vmatprep.subr.mxu0 0.0
    %2688 = vmatpush1.msra.mxu0 0.0
    %2689 = vmatprep.subr.mxu0 0.0
    %2690 = vmatpush1.msra.mxu0 0.0
    %2691 = vmatprep.subr.mxu0 0.0
    %2692 = vmatpush1.msra.mxu0 0.0
    %2693 = vmatprep.mubr.f32.mxu0 0.0
    %2694 = vmatmul.mubr.f32.gmra.mrb[0].mxu0 %v2618
    %v2695 = vpop.f32.mrb[0].mxu0
    %v2696 = vadd.f32 %v2615, %v2695
    %v2697 = vpop.f32.mrb[0].mxu0
    %2698 = vmatprep.mubr.f32.mxu0 0.0
    %2699 = vmatmul.mubr.f32.gmra.mrb[0].mxu0 %v2621
    %v2700 = vpop.f32.mrb[0].mxu0
    %v2701 = vadd.f32 %v2615, %v2700
    %v2702 = vpop.f32.mrb[0].mxu0
    %2703 = vmatprep.mubr.f32.mxu0 0.0
    %2704 = vmatmul.mubr.f32.gmra.mrb[0].mxu0 %v2624
    %v2705 = vpop.f32.mrb[0].mxu0
    %v2706 = vadd.f32 %v2615, %v2705
    %v2707 = vpop.f32.mrb[0].mxu0
    %2708 = vmatprep.mubr.f32.mxu0 0.0
    %2709 = vmatmul.mubr.f32.gmra.mrb[0].mxu0 %v2627
    %v2710 = vpop.f32.mrb[0].mxu0
    %v2711 = vadd.f32 %v2615, %v2710
    %v2712 = vpop.f32.mrb[0].mxu0
    %2713 = vdwg.mxu0
    %2716 = vrot.lane.b32.xlu0 %v2696, 96
    %v2717 = vpop.permute.xlu0 %2716
    %2718 = vrot.lane.b32.xlu0 %v2701, 96
    %v2719 = vpop.permute.xlu0 %2718
    %v2722 = vmul.f32 %v2696, %v2717
    %v2723 = vmul.f32 %v2701, %v2719
    %v2724 = vmul.f32 %v2706, %v2717
    %v2725 = vmul.f32 %v2711, %v2719
    %v2727 = vsel %vm582, %v2722, 0
    %v2730 = vsel %vm582, %v2723, 0
    %v2733 = vsel %vm582, %v2724, 0
    %v2736 = vsel %vm582, %v2725, 0
    %2738 = vmatprep.subr.mxu0 0.0
    %2739 = vmatpush1.msra.mxu0 %v344
    %2740 = vmatprep.subr.mxu0 0.0
    %2741 = vmatpush1.msra.mxu0 %v345
    %2742 = vmatprep.subr.mxu0 0.0
    %2743 = vmatpush1.msra.mxu0 %v346
    %2744 = vmatprep.subr.mxu0 0.0
    %2745 = vmatpush1.msra.mxu0 %v347
    %2746 = vmatprep.subr.mxu0 0.0
    %2747 = vmatpush1.msra.mxu0 0.0
    %2748 = vmatprep.subr.mxu0 0.0
    %2749 = vmatpush1.msra.mxu0 0.0
    %2750 = vmatprep.subr.mxu0 0.0
    %2751 = vmatpush1.msra.mxu0 0.0
    %2752 = vmatprep.subr.mxu0 0.0
    %2753 = vmatpush1.msra.mxu0 0.0
    %2754 = vmatprep.subr.mxu0 0.0
    %2755 = vmatpush1.msra.mxu0 0.0
    %2756 = vmatprep.subr.mxu0 0.0
    %2757 = vmatpush1.msra.mxu0 0.0
    %2758 = vmatprep.subr.mxu0 0.0
    %2759 = vmatpush1.msra.mxu0 0.0
    %2760 = vmatprep.subr.mxu0 0.0
    %2761 = vmatpush1.msra.mxu0 0.0
    %2762 = vmatprep.subr.mxu0 0.0
    %2763 = vmatpush1.msra.mxu0 0.0
    %2764 = vmatprep.subr.mxu0 0.0
    %2765 = vmatpush1.msra.mxu0 0.0
    %2766 = vmatprep.subr.mxu0 0.0
    %2767 = vmatpush1.msra.mxu0 0.0
    %2768 = vmatprep.subr.mxu0 0.0
    %2769 = vmatpush1.msra.mxu0 0.0
    %2770 = vmatprep.subr.mxu0 0.0
    %2771 = vmatpush1.msra.mxu0 0.0
    %2772 = vmatprep.subr.mxu0 0.0
    %2773 = vmatpush1.msra.mxu0 0.0
    %2774 = vmatprep.subr.mxu0 0.0
    %2775 = vmatpush1.msra.mxu0 0.0
    %2776 = vmatprep.subr.mxu0 0.0
    %2777 = vmatpush1.msra.mxu0 0.0
    %2778 = vmatprep.subr.mxu0 0.0
    %2779 = vmatpush1.msra.mxu0 0.0
    %2780 = vmatprep.subr.mxu0 0.0
    %2781 = vmatpush1.msra.mxu0 0.0
    %2782 = vmatprep.subr.mxu0 0.0
    %2783 = vmatpush1.msra.mxu0 0.0
    %2784 = vmatprep.subr.mxu0 0.0
    %2785 = vmatpush1.msra.mxu0 0.0
    %2786 = vmatprep.subr.mxu0 0.0
    %2787 = vmatpush1.msra.mxu0 0.0
    %2788 = vmatprep.subr.mxu0 0.0
    %2789 = vmatpush1.msra.mxu0 0.0
    %2790 = vmatprep.subr.mxu0 0.0
    %2791 = vmatpush1.msra.mxu0 0.0
    %2792 = vmatprep.subr.mxu0 0.0
    %2793 = vmatpush1.msra.mxu0 0.0
    %2794 = vmatprep.subr.mxu0 0.0
    %2795 = vmatpush1.msra.mxu0 0.0
    %2796 = vmatprep.subr.mxu0 0.0
    %2797 = vmatpush1.msra.mxu0 0.0
    %2798 = vmatprep.subr.mxu0 0.0
    %2799 = vmatpush1.msra.mxu0 0.0
    %2800 = vmatprep.subr.mxu0 0.0
    %2801 = vmatpush1.msra.mxu0 0.0
    %2802 = vmatprep.mubr.f32.mxu0 0.0
    %2803 = vmatmul.mubr.f32.gmra.mrb[0].mxu0 %v2727
    %v2804 = vpop.f32.mrb[0].mxu0
    %v2805 = vadd.f32 0.0, %v2804
    %v2806 = vpop.f32.mrb[0].mxu0
    %2807 = vmatprep.mubr.f32.mxu0 0.0
    %2808 = vmatmul.mubr.f32.gmra.mrb[0].mxu0 %v2730
    %v2809 = vpop.f32.mrb[0].mxu0
    %v2810 = vadd.f32 0.0, %v2809
    %v2811 = vpop.f32.mrb[0].mxu0
    %2812 = vmatprep.mubr.f32.mxu0 0.0
    %2813 = vmatmul.mubr.f32.gmra.mrb[0].mxu0 %v2733
    %v2814 = vpop.f32.mrb[0].mxu0
    %v2815 = vadd.f32 0.0, %v2814
    %v2816 = vpop.f32.mrb[0].mxu0
    %2817 = vmatprep.mubr.f32.mxu0 0.0
    %2818 = vmatmul.mubr.f32.gmra.mrb[0].mxu0 %v2736
    %v2819 = vpop.f32.mrb[0].mxu0
    %v2820 = vadd.f32 0.0, %v2819
    %v2821 = vpop.f32.mrb[0].mxu0
    %2822 = vdwg.mxu0
    %v2823 = vmul.f32 %v2805, 0.35355338
    %v2824 = vmul.f32 %v2810, 0.35355338
    %v2825 = vmul.f32 %v2815, 0.35355338
    %v2826 = vmul.f32 %v2820, 0.35355338
    %2829 = vrot.lane.b32.xlu0 %v2706, 96
    %v2830 = vpop.permute.xlu0 %2829
    %2831 = vrot.lane.b32.xlu0 %v2711, 96
    %v2832 = vpop.permute.xlu0 %2831
    %v2835 = vmul.f32 %v2696, %v2830
    %v2836 = vmul.f32 %v2701, %v2832
    %v2837 = vmul.f32 %v2706, %v2830
    %v2838 = vmul.f32 %v2711, %v2832
    %v2840 = vsel %vm582, %v2835, 0
    %v2843 = vsel %vm582, %v2836, 0
    %v2846 = vsel %vm582, %v2837, 0
    %v2849 = vsel %vm582, %v2838, 0
    %2851 = vmatprep.subr.mxu0 0.0
    %2852 = vmatpush1.msra.mxu0 %v344
    %2853 = vmatprep.subr.mxu0 0.0
    %2854 = vmatpush1.msra.mxu0 %v345
    %2855 = vmatprep.subr.mxu0 0.0
    %2856 = vmatpush1.msra.mxu0 %v346
    %2857 = vmatprep.subr.mxu0 0.0
    %2858 = vmatpush1.msra.mxu0 %v347
    %2859 = vmatprep.subr.mxu0 0.0
    %2860 = vmatpush1.msra.mxu0 0.0
    %2861 = vmatprep.subr.mxu0 0.0
    %2862 = vmatpush1.msra.mxu0 0.0
    %2863 = vmatprep.subr.mxu0 0.0
    %2864 = vmatpush1.msra.mxu0 0.0
    %2865 = vmatprep.subr.mxu0 0.0
    %2866 = vmatpush1.msra.mxu0 0.0
    %2867 = vmatprep.subr.mxu0 0.0
    %2868 = vmatpush1.msra.mxu0 0.0
    %2869 = vmatprep.subr.mxu0 0.0
    %2870 = vmatpush1.msra.mxu0 0.0
    %2871 = vmatprep.subr.mxu0 0.0
    %2872 = vmatpush1.msra.mxu0 0.0
    %2873 = vmatprep.subr.mxu0 0.0
    %2874 = vmatpush1.msra.mxu0 0.0
    %2875 = vmatprep.subr.mxu0 0.0
    %2876 = vmatpush1.msra.mxu0 0.0
    %2877 = vmatprep.subr.mxu0 0.0
    %2878 = vmatpush1.msra.mxu0 0.0
    %2879 = vmatprep.subr.mxu0 0.0
    %2880 = vmatpush1.msra.mxu0 0.0
    %2881 = vmatprep.subr.mxu0 0.0
    %2882 = vmatpush1.msra.mxu0 0.0
    %2883 = vmatprep.subr.mxu0 0.0
    %2884 = vmatpush1.msra.mxu0 0.0
    %2885 = vmatprep.subr.mxu0 0.0
    %2886 = vmatpush1.msra.mxu0 0.0
    %2887 = vmatprep.subr.mxu0 0.0
    %2888 = vmatpush1.msra.mxu0 0.0
    %2889 = vmatprep.subr.mxu0 0.0
    %2890 = vmatpush1.msra.mxu0 0.0
    %2891 = vmatprep.subr.mxu0 0.0
    %2892 = vmatpush1.msra.mxu0 0.0
    %2893 = vmatprep.subr.mxu0 0.0
    %2894 = vmatpush1.msra.mxu0 0.0
    %2895 = vmatprep.subr.mxu0 0.0
    %2896 = vmatpush1.msra.mxu0 0.0
    %2897 = vmatprep.subr.mxu0 0.0
    %2898 = vmatpush1.msra.mxu0 0.0
    %2899 = vmatprep.subr.mxu0 0.0
    %2900 = vmatpush1.msra.mxu0 0.0
    %2901 = vmatprep.subr.mxu0 0.0
    %2902 = vmatpush1.msra.mxu0 0.0
    %2903 = vmatprep.subr.mxu0 0.0
    %2904 = vmatpush1.msra.mxu0 0.0
    %2905 = vmatprep.subr.mxu0 0.0
    %2906 = vmatpush1.msra.mxu0 0.0
    %2907 = vmatprep.subr.mxu0 0.0
    %2908 = vmatpush1.msra.mxu0 0.0
    %2909 = vmatprep.subr.mxu0 0.0
    %2910 = vmatpush1.msra.mxu0 0.0
    %2911 = vmatprep.subr.mxu0 0.0
    %2912 = vmatpush1.msra.mxu0 0.0
    %2913 = vmatprep.subr.mxu0 0.0
    %2914 = vmatpush1.msra.mxu0 0.0
    %2915 = vmatprep.mubr.f32.mxu0 0.0
    %2916 = vmatmul.mubr.f32.gmra.mrb[0].mxu0 %v2840
    %v2917 = vpop.f32.mrb[0].mxu0
    %v2918 = vadd.f32 0.0, %v2917
    %v2919 = vpop.f32.mrb[0].mxu0
    %2920 = vmatprep.mubr.f32.mxu0 0.0
    %2921 = vmatmul.mubr.f32.gmra.mrb[0].mxu0 %v2843
    %v2922 = vpop.f32.mrb[0].mxu0
    %v2923 = vadd.f32 0.0, %v2922
    %v2924 = vpop.f32.mrb[0].mxu0
    %2925 = vmatprep.mubr.f32.mxu0 0.0
    %2926 = vmatmul.mubr.f32.gmra.mrb[0].mxu0 %v2846
    %v2927 = vpop.f32.mrb[0].mxu0
    %v2928 = vadd.f32 0.0, %v2927
    %v2929 = vpop.f32.mrb[0].mxu0
    %2930 = vmatprep.mubr.f32.mxu0 0.0
    %2931 = vmatmul.mubr.f32.gmra.mrb[0].mxu0 %v2849
    %v2932 = vpop.f32.mrb[0].mxu0
    %v2933 = vadd.f32 0.0, %v2932
    %v2934 = vpop.f32.mrb[0].mxu0
    %2935 = vdwg.mxu0
    %v2936 = vmul.f32 %v2918, 0.35355338
    %v2937 = vmul.f32 %v2923, 0.35355338
    %v2938 = vmul.f32 %v2928, 0.35355338
    %v2939 = vmul.f32 %v2933, 0.35355338
    %v2940 = vmax.f32 %v2823, %v2936
    %v2941 = vmax.f32 %v2824, %v2937
    %v2942 = vmax.f32 %v2825, %v2938
    %v2943 = vmax.f32 %v2826, %v2939
    %v2944 = vsub.f32 %v2823, %v2940
    %v2945 = vsub.f32 %v2824, %v2941
    %v2946 = vsub.f32 %v2825, %v2942
    %v2947 = vsub.f32 %v2826, %v2943
    %v2948 = vmul.f32 %v2944, 1.442695
    %v2949 = vpow.pop %v2948
    %v2950 = vmul.f32 %v2945, 1.442695
    %v2951 = vpow.pop %v2950
    %v2952 = vmul.f32 %v2946, 1.442695
    %v2953 = vpow.pop %v2952
    %v2954 = vmul.f32 %v2947, 1.442695
    %v2955 = vpow.pop %v2954
    %v2956 = vsub.f32 %v2936, %v2940
    %v2957 = vsub.f32 %v2937, %v2941
    %v2958 = vsub.f32 %v2938, %v2942
    %v2959 = vsub.f32 %v2939, %v2943
    %v2960 = vmul.f32 %v2956, 1.442695
    %v2961 = vpow.pop %v2960
    %v2962 = vmul.f32 %v2957, 1.442695
    %v2963 = vpow.pop %v2962
    %v2964 = vmul.f32 %v2958, 1.442695
    %v2965 = vpow.pop %v2964
    %v2966 = vmul.f32 %v2959, 1.442695
    %v2967 = vpow.pop %v2966
    %v2968 = vadd.f32 %v2949, %v2961
    %v2969 = vadd.f32 %v2951, %v2963
    %v2970 = vadd.f32 %v2953, %v2965
    %v2971 = vadd.f32 %v2955, %v2967
    %v2972 = vrcp.pop %v2968
    %v2973 = vrcp.pop %v2969
    %v2974 = vrcp.pop %v2970
    %v2975 = vrcp.pop %v2971
    %v2976 = vmul.f32 %v2949, %v2972
    %v2977 = vmul.f32 %v2951, %v2973
    %v2978 = vmul.f32 %v2953, %v2974
    %v2979 = vmul.f32 %v2955, %v2975
    %v2981 = vsel %vm1507, %v2976, 0
    %v2984 = vsel %vm1507, %v2977, 0
    %v2987 = vsel %vm1507, %v2978, 0
    %v2990 = vsel %vm1507, %v2979, 0
    %2992 = vmatprep.subr.mxu0 0.0
    %2993 = vmatpush1.msra.mxu0 %v1522
    %2994 = vmatprep.subr.mxu0 0.0
    %2995 = vmatpush1.msra.mxu0 0.0
    %2996 = vmatprep.subr.mxu0 0.0
    %2997 = vmatpush1.msra.mxu0 0.0
    %2998 = vmatprep.subr.mxu0 0.0
    %2999 = vmatpush1.msra.mxu0 0.0
    %3000 = vmatprep.subr.mxu0 0.0
    %3001 = vmatpush1.msra.mxu0 0.0
    %3002 = vmatprep.subr.mxu0 0.0
    %3003 = vmatpush1.msra.mxu0 0.0
    %3004 = vmatprep.subr.mxu0 0.0
    %3005 = vmatpush1.msra.mxu0 0.0
    %3006 = vmatprep.subr.mxu0 0.0
    %3007 = vmatpush1.msra.mxu0 0.0
    %3008 = vmatprep.subr.mxu0 0.0
    %3009 = vmatpush1.msra.mxu0 0.0
    %3010 = vmatprep.subr.mxu0 0.0
    %3011 = vmatpush1.msra.mxu0 0.0
    %3012 = vmatprep.subr.mxu0 0.0
    %3013 = vmatpush1.msra.mxu0 0.0
    %3014 = vmatprep.subr.mxu0 0.0
    %3015 = vmatpush1.msra.mxu0 0.0
    %3016 = vmatprep.subr.mxu0 0.0
    %3017 = vmatpush1.msra.mxu0 0.0
    %3018 = vmatprep.subr.mxu0 0.0
    %3019 = vmatpush1.msra.mxu0 0.0
    %3020 = vmatprep.subr.mxu0 0.0
    %3021 = vmatpush1.msra.mxu0 0.0
    %3022 = vmatprep.subr.mxu0 0.0
    %3023 = vmatpush1.msra.mxu0 0.0
    %3024 = vmatprep.subr.mxu0 0.0
    %3025 = vmatpush1.msra.mxu0 0.0
    %3026 = vmatprep.subr.mxu0 0.0
    %3027 = vmatpush1.msra.mxu0 0.0
    %3028 = vmatprep.subr.mxu0 0.0
    %3029 = vmatpush1.msra.mxu0 0.0
    %3030 = vmatprep.subr.mxu0 0.0
    %3031 = vmatpush1.msra.mxu0 0.0
    %3032 = vmatprep.subr.mxu0 0.0
    %3033 = vmatpush1.msra.mxu0 0.0
    %3034 = vmatprep.subr.mxu0 0.0
    %3035 = vmatpush1.msra.mxu0 0.0
    %3036 = vmatprep.subr.mxu0 0.0
    %3037 = vmatpush1.msra.mxu0 0.0
    %3038 = vmatprep.subr.mxu0 0.0
    %3039 = vmatpush1.msra.mxu0 0.0
    %3040 = vmatprep.subr.mxu0 0.0
    %3041 = vmatpush1.msra.mxu0 0.0
    %3042 = vmatprep.subr.mxu0 0.0
    %3043 = vmatpush1.msra.mxu0 0.0
    %3044 = vmatprep.subr.mxu0 0.0
    %3045 = vmatpush1.msra.mxu0 0.0
    %3046 = vmatprep.subr.mxu0 0.0
    %3047 = vmatpush1.msra.mxu0 0.0
    %3048 = vmatprep.subr.mxu0 0.0
    %3049 = vmatpush1.msra.mxu0 0.0
    %3050 = vmatprep.subr.mxu0 0.0
    %3051 = vmatpush1.msra.mxu0 0.0
    %3052 = vmatprep.subr.mxu0 0.0
    %3053 = vmatpush1.msra.mxu0 0.0
    %3054 = vmatprep.subr.mxu0 0.0
    %3055 = vmatpush1.msra.mxu0 0.0
    %3056 = vmatprep.mubr.f32.mxu0 0.0
    %3057 = vmatmul.mubr.f32.gmra.mrb[0].mxu0 %v2981
    %v3058 = vpop.f32.mrb[0].mxu0
    %v3059 = vadd.f32 0.0, %v3058
    %v3060 = vpop.f32.mrb[0].mxu0
    %3061 = vmatprep.mubr.f32.mxu0 0.0
    %3062 = vmatmul.mubr.f32.gmra.mrb[0].mxu0 %v2984
    %v3063 = vpop.f32.mrb[0].mxu0
    %v3064 = vadd.f32 0.0, %v3063
    %v3065 = vpop.f32.mrb[0].mxu0
    %3066 = vmatprep.mubr.f32.mxu0 0.0
    %3067 = vmatmul.mubr.f32.gmra.mrb[0].mxu0 %v2987
    %v3068 = vpop.f32.mrb[0].mxu0
    %v3069 = vadd.f32 0.0, %v3068
    %v3070 = vpop.f32.mrb[0].mxu0
    %3071 = vmatprep.mubr.f32.mxu0 0.0
    %3072 = vmatmul.mubr.f32.gmra.mrb[0].mxu0 %v2990
    %v3073 = vpop.f32.mrb[0].mxu0
    %v3074 = vadd.f32 0.0, %v3073
    %v3075 = vpop.f32.mrb[0].mxu0
    %3076 = vdwg.mxu0
    %3077 = vrot.lane.b32.xlu0 %v2696, 64
    %v3078 = vpop.permute.xlu0 %3077
    %3079 = vrot.lane.b32.xlu0 %v2701, 64
    %v3080 = vpop.permute.xlu0 %3079
    %v3083 = vmul.f32 %v3059, %v3078
    %v3084 = vmul.f32 %v3064, %v3080
    %v3085 = vmul.f32 %v3069, %v3078
    %v3086 = vmul.f32 %v3074, %v3080
    %v3087 = vmul.f32 %v2961, %v2972
    %v3088 = vmul.f32 %v2963, %v2973
    %v3089 = vmul.f32 %v2965, %v2974
    %v3090 = vmul.f32 %v2967, %v2975
    %v3092 = vsel %vm1507, %v3087, 0
    %v3095 = vsel %vm1507, %v3088, 0
    %v3098 = vsel %vm1507, %v3089, 0
    %v3101 = vsel %vm1507, %v3090, 0
    %3103 = vmatprep.subr.mxu0 0.0
    %3104 = vmatpush1.msra.mxu0 %v1522
    %3105 = vmatprep.subr.mxu0 0.0
    %3106 = vmatpush1.msra.mxu0 0.0
    %3107 = vmatprep.subr.mxu0 0.0
    %3108 = vmatpush1.msra.mxu0 0.0
    %3109 = vmatprep.subr.mxu0 0.0
    %3110 = vmatpush1.msra.mxu0 0.0
    %3111 = vmatprep.subr.mxu0 0.0
    %3112 = vmatpush1.msra.mxu0 0.0
    %3113 = vmatprep.subr.mxu0 0.0
    %3114 = vmatpush1.msra.mxu0 0.0
    %3115 = vmatprep.subr.mxu0 0.0
    %3116 = vmatpush1.msra.mxu0 0.0
    %3117 = vmatprep.subr.mxu0 0.0
    %3118 = vmatpush1.msra.mxu0 0.0
    %3119 = vmatprep.subr.mxu0 0.0
    %3120 = vmatpush1.msra.mxu0 0.0
    %3121 = vmatprep.subr.mxu0 0.0
    %3122 = vmatpush1.msra.mxu0 0.0
    %3123 = vmatprep.subr.mxu0 0.0
    %3124 = vmatpush1.msra.mxu0 0.0
    %3125 = vmatprep.subr.mxu0 0.0
    %3126 = vmatpush1.msra.mxu0 0.0
    %3127 = vmatprep.subr.mxu0 0.0
    %3128 = vmatpush1.msra.mxu0 0.0
    %3129 = vmatprep.subr.mxu0 0.0
    %3130 = vmatpush1.msra.mxu0 0.0
    %3131 = vmatprep.subr.mxu0 0.0
    %3132 = vmatpush1.msra.mxu0 0.0
    %3133 = vmatprep.subr.mxu0 0.0
    %3134 = vmatpush1.msra.mxu0 0.0
    %3135 = vmatprep.subr.mxu0 0.0
    %3136 = vmatpush1.msra.mxu0 0.0
    %3137 = vmatprep.subr.mxu0 0.0
    %3138 = vmatpush1.msra.mxu0 0.0
    %3139 = vmatprep.subr.mxu0 0.0
    %3140 = vmatpush1.msra.mxu0 0.0
    %3141 = vmatprep.subr.mxu0 0.0
    %3142 = vmatpush1.msra.mxu0 0.0
    %3143 = vmatprep.subr.mxu0 0.0
    %3144 = vmatpush1.msra.mxu0 0.0
    %3145 = vmatprep.subr.mxu0 0.0
    %3146 = vmatpush1.msra.mxu0 0.0
    %3147 = vmatprep.subr.mxu0 0.0
    %3148 = vmatpush1.msra.mxu0 0.0
    %3149 = vmatprep.subr.mxu0 0.0
    %3150 = vmatpush1.msra.mxu0 0.0
    %3151 = vmatprep.subr.mxu0 0.0
    %3152 = vmatpush1.msra.mxu0 0.0
    %3153 = vmatprep.subr.mxu0 0.0
    %3154 = vmatpush1.msra.mxu0 0.0
    %3155 = vmatprep.subr.mxu0 0.0
    %3156 = vmatpush1.msra.mxu0 0.0
    %3157 = vmatprep.subr.mxu0 0.0
    %3158 = vmatpush1.msra.mxu0 0.0
    %3159 = vmatprep.subr.mxu0 0.0
    %3160 = vmatpush1.msra.mxu0 0.0
    %3161 = vmatprep.subr.mxu0 0.0
    %3162 = vmatpush1.msra.mxu0 0.0
    %3163 = vmatprep.subr.mxu0 0.0
    %3164 = vmatpush1.msra.mxu0 0.0
    %3165 = vmatprep.subr.mxu0 0.0
    %3166 = vmatpush1.msra.mxu0 0.0
    %3167 = vmatprep.mubr.f32.mxu0 0.0
    %3168 = vmatmul.mubr.f32.gmra.mrb[0].mxu0 %v3092
    %v3169 = vpop.f32.mrb[0].mxu0
    %v3170 = vadd.f32 0.0, %v3169
    %v3171 = vpop.f32.mrb[0].mxu0
    %3172 = vmatprep.mubr.f32.mxu0 0.0
    %3173 = vmatmul.mubr.f32.gmra.mrb[0].mxu0 %v3095
    %v3174 = vpop.f32.mrb[0].mxu0
    %v3175 = vadd.f32 0.0, %v3174
    %v3176 = vpop.f32.mrb[0].mxu0
    %3177 = vmatprep.mubr.f32.mxu0 0.0
    %3178 = vmatmul.mubr.f32.gmra.mrb[0].mxu0 %v3098
    %v3179 = vpop.f32.mrb[0].mxu0
    %v3180 = vadd.f32 0.0, %v3179
    %v3181 = vpop.f32.mrb[0].mxu0
    %3182 = vmatprep.mubr.f32.mxu0 0.0
    %3183 = vmatmul.mubr.f32.gmra.mrb[0].mxu0 %v3101
    %v3184 = vpop.f32.mrb[0].mxu0
    %v3185 = vadd.f32 0.0, %v3184
    %v3186 = vpop.f32.mrb[0].mxu0
    %3187 = vdwg.mxu0
    %3188 = vrot.lane.b32.xlu0 %v2706, 64
    %v3189 = vpop.permute.xlu0 %3188
    %3190 = vrot.lane.b32.xlu0 %v2711, 64
    %v3191 = vpop.permute.xlu0 %3190
    %v3194 = vmul.f32 %v3170, %v3189
    %v3195 = vmul.f32 %v3175, %v3191
    %v3196 = vmul.f32 %v3180, %v3189
    %v3197 = vmul.f32 %v3185, %v3191
    %v3198 = vadd.f32 %v3083, %v3194
    %v3199 = vadd.f32 %v3084, %v3195
    %v3200 = vadd.f32 %v3085, %v3196
    %v3201 = vadd.f32 %v3086, %v3197
    %s3202 = scalar_lea.vmem %s37, 32
    %v3203 = vld [vmem:[%s3202] sm:$0xff]
    %v3204 = vld [vmem:[%s3202 + $0x8] sm:$0xff]
    %v3205 = vld [vmem:[%s3202 + $0x10] sm:$0xff]
    %v3206 = vld [vmem:[%s3202 + $0x18] sm:$0xff]
    %s3207 = scalar_lea.vmem [#allocation17], 1
    %v3208 = vld [vmem:[%s3207] sm:$0x1]
    %v3210 = vlaneseq
    %v3211 = vshrl.u32 %v3210, 7
    %v3212 = vsub.s32 0, %v3211
    %v3213 = vrot.slane %v3208, %v3212
    %v3216 = vsel %vm582, %v3198, 0
    %v3219 = vsel %vm582, %v3199, 0
    %v3222 = vsel %vm582, %v3200, 0
    %v3225 = vsel %vm582, %v3201, 0
    %3227 = vmatprep.subr.mxu0 0.0
    %3228 = vmatpush1.msra.mxu0 %v3203
    %3229 = vmatprep.subr.mxu0 0.0
    %3230 = vmatpush1.msra.mxu0 %v3204
    %3231 = vmatprep.subr.mxu0 0.0
    %3232 = vmatpush1.msra.mxu0 %v3205
    %3233 = vmatprep.subr.mxu0 0.0
    %3234 = vmatpush1.msra.mxu0 %v3206
    %3235 = vmatprep.subr.mxu0 0.0
    %3236 = vmatpush1.msra.mxu0 0.0
    %3237 = vmatprep.subr.mxu0 0.0
    %3238 = vmatpush1.msra.mxu0 0.0
    %3239 = vmatprep.subr.mxu0 0.0
    %3240 = vmatpush1.msra.mxu0 0.0
    %3241 = vmatprep.subr.mxu0 0.0
    %3242 = vmatpush1.msra.mxu0 0.0
    %3243 = vmatprep.subr.mxu0 0.0
    %3244 = vmatpush1.msra.mxu0 0.0
    %3245 = vmatprep.subr.mxu0 0.0
    %3246 = vmatpush1.msra.mxu0 0.0
    %3247 = vmatprep.subr.mxu0 0.0
    %3248 = vmatpush1.msra.mxu0 0.0
    %3249 = vmatprep.subr.mxu0 0.0
    %3250 = vmatpush1.msra.mxu0 0.0
    %3251 = vmatprep.subr.mxu0 0.0
    %3252 = vmatpush1.msra.mxu0 0.0
    %3253 = vmatprep.subr.mxu0 0.0
    %3254 = vmatpush1.msra.mxu0 0.0
    %3255 = vmatprep.subr.mxu0 0.0
    %3256 = vmatpush1.msra.mxu0 0.0
    %3257 = vmatprep.subr.mxu0 0.0
    %3258 = vmatpush1.msra.mxu0 0.0
    %3259 = vmatprep.subr.mxu0 0.0
    %3260 = vmatpush1.msra.mxu0 0.0
    %3261 = vmatprep.subr.mxu0 0.0
    %3262 = vmatpush1.msra.mxu0 0.0
    %3263 = vmatprep.subr.mxu0 0.0
    %3264 = vmatpush1.msra.mxu0 0.0
    %3265 = vmatprep.subr.mxu0 0.0
    %3266 = vmatpush1.msra.mxu0 0.0
    %3267 = vmatprep.subr.mxu0 0.0
    %3268 = vmatpush1.msra.mxu0 0.0
    %3269 = vmatprep.subr.mxu0 0.0
    %3270 = vmatpush1.msra.mxu0 0.0
    %3271 = vmatprep.subr.mxu0 0.0
    %3272 = vmatpush1.msra.mxu0 0.0
    %3273 = vmatprep.subr.mxu0 0.0
    %3274 = vmatpush1.msra.mxu0 0.0
    %3275 = vmatprep.subr.mxu0 0.0
    %3276 = vmatpush1.msra.mxu0 0.0
    %3277 = vmatprep.subr.mxu0 0.0
    %3278 = vmatpush1.msra.mxu0 0.0
    %3279 = vmatprep.subr.mxu0 0.0
    %3280 = vmatpush1.msra.mxu0 0.0
    %3281 = vmatprep.subr.mxu0 0.0
    %3282 = vmatpush1.msra.mxu0 0.0
    %3283 = vmatprep.subr.mxu0 0.0
    %3284 = vmatpush1.msra.mxu0 0.0
    %3285 = vmatprep.subr.mxu0 0.0
    %3286 = vmatpush1.msra.mxu0 0.0
    %3287 = vmatprep.subr.mxu0 0.0
    %3288 = vmatpush1.msra.mxu0 0.0
    %3289 = vmatprep.subr.mxu0 0.0
    %3290 = vmatpush1.msra.mxu0 0.0
    %3291 = vmatprep.mubr.f32.mxu0 0.0
    %3292 = vmatmul.mubr.f32.gmra.mrb[0].mxu0 %v3216
    %v3293 = vpop.f32.mrb[0].mxu0
    %v3294 = vadd.f32 %v3213, %v3293
    %v3295 = vpop.f32.mrb[0].mxu0
    %3296 = vmatprep.mubr.f32.mxu0 0.0
    %3297 = vmatmul.mubr.f32.gmra.mrb[0].mxu0 %v3219
    %v3298 = vpop.f32.mrb[0].mxu0
    %v3299 = vadd.f32 %v3213, %v3298
    %v3300 = vpop.f32.mrb[0].mxu0
    %3301 = vmatprep.mubr.f32.mxu0 0.0
    %3302 = vmatmul.mubr.f32.gmra.mrb[0].mxu0 %v3222
    %v3303 = vpop.f32.mrb[0].mxu0
    %v3304 = vadd.f32 %v3213, %v3303
    %v3305 = vpop.f32.mrb[0].mxu0
    %3306 = vmatprep.mubr.f32.mxu0 0.0
    %3307 = vmatmul.mubr.f32.gmra.mrb[0].mxu0 %v3225
    %v3308 = vpop.f32.mrb[0].mxu0
    %v3309 = vadd.f32 %v3213, %v3308
    %v3310 = vpop.f32.mrb[0].mxu0
    %3311 = vdwg.mxu0
    %v3312 = vadd.f32 %v2600, %v3294
    %v3313 = vadd.f32 %v2601, %v3299
    %v3314 = vadd.f32 %v2602, %v3304
    %v3315 = vadd.f32 %v2603, %v3309
    %v3316 = vsel %vm582, %v3312, 0.0
    %3317 = vadd.xlane.f32.xlu0 %v3316
    %v3318 = vpop.xlane.xlu0 %3317
    %v3319 = vsel %vm582, %v3313, 0.0
    %3320 = vadd.xlane.f32.xlu0 %v3319
    %v3321 = vpop.xlane.xlu0 %3320
    %v3322 = vsel %vm582, %v3314, 0.0
    %3323 = vadd.xlane.f32.xlu0 %v3322
    %v3324 = vpop.xlane.xlu0 %3323
    %v3325 = vsel %vm582, %v3315, 0.0
    %3326 = vadd.xlane.f32.xlu0 %v3325
    %v3327 = vpop.xlane.xlu0 %3326
    %v3328 = vmul.f32 %v3318, %v479
    %v3329 = vmul.f32 %v3321, %v479
    %v3330 = vmul.f32 %v3324, %v479
    %v3331 = vmul.f32 %v3327, %v479
    %v3332 = vsub.f32 %v3312, %v3328
    %v3333 = vsub.f32 %v3313, %v3329
    %v3334 = vsub.f32 %v3314, %v3330
    %v3335 = vsub.f32 %v3315, %v3331
    %v3336 = vmul.f32 %v3332, %v3332
    %v3337 = vmul.f32 %v3333, %v3333
    %v3338 = vmul.f32 %v3334, %v3334
    %v3339 = vmul.f32 %v3335, %v3335
    %v3340 = vsel %vm582, %v3336, 0.0
    %3341 = vadd.xlane.f32.xlu0 %v3340
    %v3342 = vpop.xlane.xlu0 %3341
    %v3343 = vsel %vm582, %v3337, 0.0
    %3344 = vadd.xlane.f32.xlu0 %v3343
    %v3345 = vpop.xlane.xlu0 %3344
    %v3346 = vsel %vm582, %v3338, 0.0
    %3347 = vadd.xlane.f32.xlu0 %v3346
    %v3348 = vpop.xlane.xlu0 %3347
    %v3349 = vsel %vm582, %v3339, 0.0
    %3350 = vadd.xlane.f32.xlu0 %v3349
    %v3351 = vpop.xlane.xlu0 %3350
    %v3352 = vmul.f32 %v3342, %v479
    %v3353 = vmul.f32 %v3345, %v479
    %v3354 = vmul.f32 %v3348, %v479
    %v3355 = vmul.f32 %v3351, %v479
    %v3356 = vadd.f32 %v3352, 1e-05
    %v3357 = vadd.f32 %v3353, 1e-05
    %v3358 = vadd.f32 %v3354, 1e-05
    %v3359 = vadd.f32 %v3355, 1e-05
    %v3360 = vrsqrt.pop %v3356
    %v3361 = vrsqrt.pop %v3357
    %v3362 = vrsqrt.pop %v3358
    %v3363 = vrsqrt.pop %v3359
    %v3364 = vmul.f32 %v3332, %v3360
    %v3365 = vmul.f32 %v3333, %v3361
    %v3366 = vmul.f32 %v3334, %v3362
    %v3367 = vmul.f32 %v3335, %v3363
    %s3368 = scalar_lea.vmem [#allocation19], 1
    %v3369 = vld [vmem:[%s3368] sm:$0x1]
    %v3371 = vlaneseq
    %v3372 = vshrl.u32 %v3371, 7
    %v3373 = vsub.s32 0, %v3372
    %v3374 = vrot.slane %v3369, %v3373
    %v3376 = vmul.f32 %v3364, %v3374
    %v3377 = vmul.f32 %v3365, %v3374
    %v3378 = vmul.f32 %v3366, %v3374
    %v3379 = vmul.f32 %v3367, %v3374
    %s3380 = scalar_lea.vmem [#allocation20], 1
    %v3381 = vld [vmem:[%s3380] sm:$0x1]
    %v3383 = vlaneseq
    %v3384 = vshrl.u32 %v3383, 7
    %v3385 = vsub.s32 0, %v3384
    %v3386 = vrot.slane %v3381, %v3385
    %v3388 = vadd.f32 %v3376, %v3386
    %v3389 = vadd.f32 %v3377, %v3386
    %v3390 = vadd.f32 %v3378, %v3386
    %v3391 = vadd.f32 %v3379, %v3386
    %s3392 = scalar_lea.vmem [#allocation22], 32
    %v3393 = vld [vmem:[%s3392] sm:$0xff]
    %v3394 = vld [vmem:[%s3392 + $0x8] sm:$0xff]
    %v3395 = vld [vmem:[%s3392 + $0x10] sm:$0xff]
    %v3396 = vld [vmem:[%s3392 + $0x18] sm:$0xff]
    %s3397 = scalar_lea.vmem [#allocation23], 1
    %v3398 = vld [vmem:[%s3397] sm:$0x1]
    %v3400 = vlaneseq
    %v3401 = vshrl.u32 %v3400, 7
    %v3402 = vsub.s32 0, %v3401
    %v3403 = vrot.slane %v3398, %v3402
    %v3406 = vsel %vm582, %v3388, 0
    %v3409 = vsel %vm582, %v3389, 0
    %v3412 = vsel %vm582, %v3390, 0
    %v3415 = vsel %vm582, %v3391, 0
    %3417 = vmatprep.subr.mxu0 0.0
    %3418 = vmatpush1.msra.mxu0 %v3393
    %3419 = vmatprep.subr.mxu0 0.0
    %3420 = vmatpush1.msra.mxu0 %v3394
    %3421 = vmatprep.subr.mxu0 0.0
    %3422 = vmatpush1.msra.mxu0 %v3395
    %3423 = vmatprep.subr.mxu0 0.0
    %3424 = vmatpush1.msra.mxu0 %v3396
    %3425 = vmatprep.subr.mxu0 0.0
    %3426 = vmatpush1.msra.mxu0 0.0
    %3427 = vmatprep.subr.mxu0 0.0
    %3428 = vmatpush1.msra.mxu0 0.0
    %3429 = vmatprep.subr.mxu0 0.0
    %3430 = vmatpush1.msra.mxu0 0.0
    %3431 = vmatprep.subr.mxu0 0.0
    %3432 = vmatpush1.msra.mxu0 0.0
    %3433 = vmatprep.subr.mxu0 0.0
    %3434 = vmatpush1.msra.mxu0 0.0
    %3435 = vmatprep.subr.mxu0 0.0
    %3436 = vmatpush1.msra.mxu0 0.0
    %3437 = vmatprep.subr.mxu0 0.0
    %3438 = vmatpush1.msra.mxu0 0.0
    %3439 = vmatprep.subr.mxu0 0.0
    %3440 = vmatpush1.msra.mxu0 0.0
    %3441 = vmatprep.subr.mxu0 0.0
    %3442 = vmatpush1.msra.mxu0 0.0
    %3443 = vmatprep.subr.mxu0 0.0
    %3444 = vmatpush1.msra.mxu0 0.0
    %3445 = vmatprep.subr.mxu0 0.0
    %3446 = vmatpush1.msra.mxu0 0.0
    %3447 = vmatprep.subr.mxu0 0.0
    %3448 = vmatpush1.msra.mxu0 0.0
    %3449 = vmatprep.subr.mxu0 0.0
    %3450 = vmatpush1.msra.mxu0 0.0
    %3451 = vmatprep.subr.mxu0 0.0
    %3452 = vmatpush1.msra.mxu0 0.0
    %3453 = vmatprep.subr.mxu0 0.0
    %3454 = vmatpush1.msra.mxu0 0.0
    %3455 = vmatprep.subr.mxu0 0.0
    %3456 = vmatpush1.msra.mxu0 0.0
    %3457 = vmatprep.subr.mxu0 0.0
    %3458 = vmatpush1.msra.mxu0 0.0
    %3459 = vmatprep.subr.mxu0 0.0
    %3460 = vmatpush1.msra.mxu0 0.0
    %3461 = vmatprep.subr.mxu0 0.0
    %3462 = vmatpush1.msra.mxu0 0.0
    %3463 = vmatprep.subr.mxu0 0.0
    %3464 = vmatpush1.msra.mxu0 0.0
    %3465 = vmatprep.subr.mxu0 0.0
    %3466 = vmatpush1.msra.mxu0 0.0
    %3467 = vmatprep.subr.mxu0 0.0
    %3468 = vmatpush1.msra.mxu0 0.0
    %3469 = vmatprep.subr.mxu0 0.0
    %3470 = vmatpush1.msra.mxu0 0.0
    %3471 = vmatprep.subr.mxu0 0.0
    %3472 = vmatpush1.msra.mxu0 0.0
    %3473 = vmatprep.subr.mxu0 0.0
    %3474 = vmatpush1.msra.mxu0 0.0
    %3475 = vmatprep.subr.mxu0 0.0
    %3476 = vmatpush1.msra.mxu0 0.0
    %3477 = vmatprep.subr.mxu0 0.0
    %3478 = vmatpush1.msra.mxu0 0.0
    %3479 = vmatprep.subr.mxu0 0.0
    %3480 = vmatpush1.msra.mxu0 0.0
    %3481 = vmatprep.mubr.f32.mxu0 0.0
    %3482 = vmatmul.mubr.f32.gmra.mrb[0].mxu0 %v3406
    %v3483 = vpop.f32.mrb[0].mxu0
    %v3484 = vadd.f32 %v3403, %v3483
    %v3485 = vpop.f32.mrb[0].mxu0
    %3486 = vmatprep.mubr.f32.mxu0 0.0
    %3487 = vmatmul.mubr.f32.gmra.mrb[0].mxu0 %v3409
    %v3488 = vpop.f32.mrb[0].mxu0
    %v3489 = vadd.f32 %v3403, %v3488
    %v3490 = vpop.f32.mrb[0].mxu0
    %3491 = vmatprep.mubr.f32.mxu0 0.0
    %3492 = vmatmul.mubr.f32.gmra.mrb[0].mxu0 %v3412
    %v3493 = vpop.f32.mrb[0].mxu0
    %v3494 = vadd.f32 %v3403, %v3493
    %v3495 = vpop.f32.mrb[0].mxu0
    %3496 = vmatprep.mubr.f32.mxu0 0.0
    %3497 = vmatmul.mubr.f32.gmra.mrb[0].mxu0 %v3415
    %v3498 = vpop.f32.mrb[0].mxu0
    %v3499 = vadd.f32 %v3403, %v3498
    %v3500 = vpop.f32.mrb[0].mxu0
    %3501 = vdwg.mxu0
    %v3502 = vmul.f32 %v3484, 0.5
    %v3503 = vmul.f32 %v3489, 0.5
    %v3504 = vmul.f32 %v3494, 0.5
    %v3505 = vmul.f32 %v3499, 0.5
    %v3506 = vmul.f32 %v3484, 0.70710677
    %v3507 = vmul.f32 %v3489, 0.70710677
    %v3508 = vmul.f32 %v3494, 0.70710677
    %v3509 = vmul.f32 %v3499, 0.70710677
    %vm3510 = vcmp.ge.f32.partialorder %v3506, 0.0
    %vm3511 = vcmp.ge.f32.partialorder %v3507, 0.0
    %vm3512 = vcmp.ge.f32.partialorder %v3508, 0.0
    %vm3513 = vcmp.ge.f32.partialorder %v3509, 0.0
    %v3514 = vsel %vm3510, 1.0, -1.0
    %v3515 = vsel %vm3511, 1.0, -1.0
    %v3516 = vsel %vm3512, 1.0, -1.0
    %v3517 = vsel %vm3513, 1.0, -1.0
    %v3518 = vand.u32 2147483647, %v3506
    %v3519 = vand.u32 2147483647, %v3507
    %v3520 = vand.u32 2147483647, %v3508
    %v3521 = vand.u32 2147483647, %v3509
    %v3522 = vmul.f32 %v3518, 0.3275911
    %v3523 = vmul.f32 %v3519, 0.3275911
    %v3524 = vmul.f32 %v3520, 0.3275911
    %v3525 = vmul.f32 %v3521, 0.3275911
    %v3526 = vadd.f32 %v3522, 1.0
    %v3527 = vadd.f32 %v3523, 1.0
    %v3528 = vadd.f32 %v3524, 1.0
    %v3529 = vadd.f32 %v3525, 1.0
    %v3530 = vrcp.pop %v3526
    %v3531 = vmul.f32 1.0, %v3530
    %v3532 = vrcp.pop %v3527
    %v3533 = vmul.f32 1.0, %v3532
    %v3534 = vrcp.pop %v3528
    %v3535 = vmul.f32 1.0, %v3534
    %v3536 = vrcp.pop %v3529
    %v3537 = vmul.f32 1.0, %v3536
    %v3538 = vmul.f32 %v3531, 1.0614054
    %v3539 = vmul.f32 %v3533, 1.0614054
    %v3540 = vmul.f32 %v3535, 1.0614054
    %v3541 = vmul.f32 %v3537, 1.0614054
    %v3542 = vadd.f32 %v3538, -1.4531521
    %v3543 = vadd.f32 %v3539, -1.4531521
    %v3544 = vadd.f32 %v3540, -1.4531521
    %v3545 = vadd.f32 %v3541, -1.4531521
    %v3546 = vmul.f32 %v3542, %v3531
    %v3547 = vmul.f32 %v3543, %v3533
    %v3548 = vmul.f32 %v3544, %v3535
    %v3549 = vmul.f32 %v3545, %v3537
    %v3550 = vadd.f32 %v3546, 1.4214138
    %v3551 = vadd.f32 %v3547, 1.4214138
    %v3552 = vadd.f32 %v3548, 1.4214138
    %v3553 = vadd.f32 %v3549, 1.4214138
    %v3554 = vmul.f32 %v3550, %v3531
    %v3555 = vmul.f32 %v3551, %v3533
    %v3556 = vmul.f32 %v3552, %v3535
    %v3557 = vmul.f32 %v3553, %v3537
    %v3558 = vadd.f32 %v3554, -0.28449672
    %v3559 = vadd.f32 %v3555, -0.28449672
    %v3560 = vadd.f32 %v3556, -0.28449672
    %v3561 = vadd.f32 %v3557, -0.28449672
    %v3562 = vmul.f32 %v3558, %v3531
    %v3563 = vmul.f32 %v3559, %v3533
    %v3564 = vmul.f32 %v3560, %v3535
    %v3565 = vmul.f32 %v3561, %v3537
    %v3566 = vadd.f32 %v3562, 0.2548296
    %v3567 = vadd.f32 %v3563, 0.2548296
    %v3568 = vadd.f32 %v3564, 0.2548296
    %v3569 = vadd.f32 %v3565, 0.2548296
    %v3570 = vmul.f32 %v3566, %v3531
    %v3571 = vmul.f32 %v3567, %v3533
    %v3572 = vmul.f32 %v3568, %v3535
    %v3573 = vmul.f32 %v3569, %v3537
    %v3574 = vsub.f32 0.0, %v3518
    %v3575 = vsub.f32 0.0, %v3519
    %v3576 = vsub.f32 0.0, %v3520
    %v3577 = vsub.f32 0.0, %v3521
    %v3578 = vmul.f32 %v3574, %v3518
    %v3579 = vmul.f32 %v3575, %v3519
    %v3580 = vmul.f32 %v3576, %v3520
    %v3581 = vmul.f32 %v3577, %v3521
    %v3582 = vmul.f32 %v3578, 1.442695
    %v3583 = vpow.pop %v3582
    %v3584 = vmul.f32 %v3579, 1.442695
    %v3585 = vpow.pop %v3584
    %v3586 = vmul.f32 %v3580, 1.442695
    %v3587 = vpow.pop %v3586
    %v3588 = vmul.f32 %v3581, 1.442695
    %v3589 = vpow.pop %v3588
    %v3590 = vmul.f32 %v3570, %v3583
    %v3591 = vmul.f32 %v3571, %v3585
    %v3592 = vmul.f32 %v3572, %v3587
    %v3593 = vmul.f32 %v3573, %v3589
    %v3594 = vsub.f32 1.0, %v3590
    %v3595 = vsub.f32 1.0, %v3591
    %v3596 = vsub.f32 1.0, %v3592
    %v3597 = vsub.f32 1.0, %v3593
    %v3598 = vmul.f32 %v3514, %v3594
    %v3599 = vmul.f32 %v3515, %v3595
    %v3600 = vmul.f32 %v3516, %v3596
    %v3601 = vmul.f32 %v3517, %v3597
    %v3602 = vadd.f32 %v3598, 1.0
    %v3603 = vadd.f32 %v3599, 1.0
    %v3604 = vadd.f32 %v3600, 1.0
    %v3605 = vadd.f32 %v3601, 1.0
    %v3606 = vmul.f32 %v3502, %v3602
    %v3607 = vmul.f32 %v3503, %v3603
    %v3608 = vmul.f32 %v3504, %v3604
    %v3609 = vmul.f32 %v3505, %v3605
    %s3610 = scalar_lea.vmem %s49, 64
    %v3611 = vld [vmem:[%s3610] sm:$0xff]
    %v3612 = vld [vmem:[%s3610 + $0x8] sm:$0xff]
    %v3613 = vld [vmem:[%s3610 + $0x10] sm:$0xff]
    %v3614 = vld [vmem:[%s3610 + $0x18] sm:$0xff]
    %v3615 = vld [vmem:[%s3610 + $0x20] sm:$0xff]
    %v3616 = vld [vmem:[%s3610 + $0x28] sm:$0xff]
    %v3617 = vld [vmem:[%s3610 + $0x30] sm:$0xff]
    %v3618 = vld [vmem:[%s3610 + $0x38] sm:$0xff]
    %v3620 = vsel %vm2144, %v3606, 0
    %v3623 = vsel %vm2144, %v3607, 0
    %v3626 = vsel %vm2144, %v3608, 0
    %v3629 = vsel %vm2144, %v3609, 0
    %3631 = vmatprep.subr.mxu0 0.0
    %3632 = vmatpush1.msra.mxu0 %v3611
    %3633 = vmatprep.subr.mxu0 0.0
    %3634 = vmatpush1.msra.mxu0 %v3612
    %3635 = vmatprep.subr.mxu0 0.0
    %3636 = vmatpush1.msra.mxu0 %v3613
    %3637 = vmatprep.subr.mxu0 0.0
    %3638 = vmatpush1.msra.mxu0 %v3614
    %3639 = vmatprep.subr.mxu0 0.0
    %3640 = vmatpush1.msra.mxu0 %v3615
    %3641 = vmatprep.subr.mxu0 0.0
    %3642 = vmatpush1.msra.mxu0 %v3616
    %3643 = vmatprep.subr.mxu0 0.0
    %3644 = vmatpush1.msra.mxu0 %v3617
    %3645 = vmatprep.subr.mxu0 0.0
    %3646 = vmatpush1.msra.mxu0 %v3618
    %3647 = vmatprep.subr.mxu0 0.0
    %3648 = vmatpush1.msra.mxu0 0.0
    %3649 = vmatprep.subr.mxu0 0.0
    %3650 = vmatpush1.msra.mxu0 0.0
    %3651 = vmatprep.subr.mxu0 0.0
    %3652 = vmatpush1.msra.mxu0 0.0
    %3653 = vmatprep.subr.mxu0 0.0
    %3654 = vmatpush1.msra.mxu0 0.0
    %3655 = vmatprep.subr.mxu0 0.0
    %3656 = vmatpush1.msra.mxu0 0.0
    %3657 = vmatprep.subr.mxu0 0.0
    %3658 = vmatpush1.msra.mxu0 0.0
    %3659 = vmatprep.subr.mxu0 0.0
    %3660 = vmatpush1.msra.mxu0 0.0
    %3661 = vmatprep.subr.mxu0 0.0
    %3662 = vmatpush1.msra.mxu0 0.0
    %3663 = vmatprep.subr.mxu0 0.0
    %3664 = vmatpush1.msra.mxu0 0.0
    %3665 = vmatprep.subr.mxu0 0.0
    %3666 = vmatpush1.msra.mxu0 0.0
    %3667 = vmatprep.subr.mxu0 0.0
    %3668 = vmatpush1.msra.mxu0 0.0
    %3669 = vmatprep.subr.mxu0 0.0
    %3670 = vmatpush1.msra.mxu0 0.0
    %3671 = vmatprep.subr.mxu0 0.0
    %3672 = vmatpush1.msra.mxu0 0.0
    %3673 = vmatprep.subr.mxu0 0.0
    %3674 = vmatpush1.msra.mxu0 0.0
    %3675 = vmatprep.subr.mxu0 0.0
    %3676 = vmatpush1.msra.mxu0 0.0
    %3677 = vmatprep.subr.mxu0 0.0
    %3678 = vmatpush1.msra.mxu0 0.0
    %3679 = vmatprep.subr.mxu0 0.0
    %3680 = vmatpush1.msra.mxu0 0.0
    %3681 = vmatprep.subr.mxu0 0.0
    %3682 = vmatpush1.msra.mxu0 0.0
    %3683 = vmatprep.subr.mxu0 0.0
    %3684 = vmatpush1.msra.mxu0 0.0
    %3685 = vmatprep.subr.mxu0 0.0
    %3686 = vmatpush1.msra.mxu0 0.0
    %3687 = vmatprep.subr.mxu0 0.0
    %3688 = vmatpush1.msra.mxu0 0.0
    %3689 = vmatprep.subr.mxu0 0.0
    %3690 = vmatpush1.msra.mxu0 0.0
    %3691 = vmatprep.subr.mxu0 0.0
    %3692 = vmatpush1.msra.mxu0 0.0
    %3693 = vmatprep.subr.mxu0 0.0
    %3694 = vmatpush1.msra.mxu0 0.0
    %3695 = vmatprep.mubr.f32.mxu0 0.0
    %3696 = vmatmul.mubr.f32.gmra.mrb[0].mxu0 %v3620
    %v3697 = vpop.f32.mrb[0].mxu0
    %v3698 = vadd.f32 0.0, %v3697
    %v3699 = vpop.f32.mrb[0].mxu0
    %3700 = vmatprep.mubr.f32.mxu0 0.0
    %3701 = vmatmul.mubr.f32.gmra.mrb[0].mxu0 %v3623
    %v3702 = vpop.f32.mrb[0].mxu0
    %v3703 = vadd.f32 0.0, %v3702
    %v3704 = vpop.f32.mrb[0].mxu0
    %3705 = vmatprep.mubr.f32.mxu0 0.0
    %3706 = vmatmul.mubr.f32.gmra.mrb[0].mxu0 %v3626
    %v3707 = vpop.f32.mrb[0].mxu0
    %v3708 = vadd.f32 0.0, %v3707
    %v3709 = vpop.f32.mrb[0].mxu0
    %3710 = vmatprep.mubr.f32.mxu0 0.0
    %3711 = vmatmul.mubr.f32.gmra.mrb[0].mxu0 %v3629
    %v3712 = vpop.f32.mrb[0].mxu0
    %v3713 = vadd.f32 0.0, %v3712
    %v3714 = vpop.f32.mrb[0].mxu0
    %3715 = vdwg.mxu0
    %v3716 = vadd.f32 %v3388, %v3698
    %v3717 = vadd.f32 %v3389, %v3703
    %v3718 = vadd.f32 %v3390, %v3708
    %v3719 = vadd.f32 %v3391, %v3713
    %s3720 = scalar_lea.vmem [#allocation25], 1
    %v3721 = vld [vmem:[%s3720] sm:$0x1]
    %v3723 = vlaneseq
    %v3724 = vshrl.u32 %v3723, 7
    %v3725 = vsub.s32 0, %v3724
    %v3726 = vrot.slane %v3721, %v3725
    %v3728 = vadd.f32 %v3716, %v3726
    %v3729 = vadd.f32 %v3717, %v3726
    %v3730 = vadd.f32 %v3718, %v3726
    %v3731 = vadd.f32 %v3719, %v3726
    %s3732 = scalar_lea.vmem [#allocation2], 32
    %v3733 = vld [vmem:[%s3732] sm:$0xff]
    %v3734 = vld [vmem:[%s3732 + $0x8] sm:$0xff]
    %s3735 = scalar_lea.vmem %s25, 80
    %v3736 = vld [vmem:[%s3735] sm:$0xff]
    %v3737 = vld [vmem:[%s3735 + $0x8] sm:$0xff]
    %v3738 = vld [vmem:[%s3735 + $0x10] sm:$0xff]
    %v3739 = vld [vmem:[%s3735 + $0x18] sm:$0xff]
    %v3740 = vld [vmem:[%s3735 + $0x20] sm:$0x1]
    %s3741 = scalar_lea.vmem [#allocation13], 2
    %v3742 = vld [vmem:[%s3741] sm:$0x1]
    %v3744 = vlaneseq
    %v3745 = vshrl.u32 %v3744, 7
    %v3746 = vsub.s32 0, %v3745
    %v3747 = vrot.slane %v3742, %v3746
    %v3750 = vsel %vm803, %v3733, 0
    %v3753 = vsel %vm803, %v3734, 0
    %v3756 = vsel %vm810, %v3740, 0
    %3758 = vmatprep.subr.mxu0 0.0
    %3759 = vmatpush1.msra.mxu0 %v3736
    %3760 = vmatprep.subr.mxu0 0.0
    %3761 = vmatpush1.msra.mxu0 %v3737
    %3762 = vmatprep.subr.mxu0 0.0
    %3763 = vmatpush1.msra.mxu0 %v3738
    %3764 = vmatprep.subr.mxu0 0.0
    %3765 = vmatpush1.msra.mxu0 %v3739
    %3766 = vmatprep.subr.mxu0 0.0
    %3767 = vmatpush1.msra.mxu0 %v3756
    %3768 = vmatprep.subr.mxu0 0.0
    %3769 = vmatpush1.msra.mxu0 0.0
    %3770 = vmatprep.subr.mxu0 0.0
    %3771 = vmatpush1.msra.mxu0 0.0
    %3772 = vmatprep.subr.mxu0 0.0
    %3773 = vmatpush1.msra.mxu0 0.0
    %3774 = vmatprep.subr.mxu0 0.0
    %3775 = vmatpush1.msra.mxu0 0.0
    %3776 = vmatprep.subr.mxu0 0.0
    %3777 = vmatpush1.msra.mxu0 0.0
    %3778 = vmatprep.subr.mxu0 0.0
    %3779 = vmatpush1.msra.mxu0 0.0
    %3780 = vmatprep.subr.mxu0 0.0
    %3781 = vmatpush1.msra.mxu0 0.0
    %3782 = vmatprep.subr.mxu0 0.0
    %3783 = vmatpush1.msra.mxu0 0.0
    %3784 = vmatprep.subr.mxu0 0.0
    %3785 = vmatpush1.msra.mxu0 0.0
    %3786 = vmatprep.subr.mxu0 0.0
    %3787 = vmatpush1.msra.mxu0 0.0
    %3788 = vmatprep.subr.mxu0 0.0
    %3789 = vmatpush1.msra.mxu0 0.0
    %3790 = vmatprep.subr.mxu0 0.0
    %3791 = vmatpush1.msra.mxu0 0.0
    %3792 = vmatprep.subr.mxu0 0.0
    %3793 = vmatpush1.msra.mxu0 0.0
    %3794 = vmatprep.subr.mxu0 0.0
    %3795 = vmatpush1.msra.mxu0 0.0
    %3796 = vmatprep.subr.mxu0 0.0
    %3797 = vmatpush1.msra.mxu0 0.0
    %3798 = vmatprep.subr.mxu0 0.0
    %3799 = vmatpush1.msra.mxu0 0.0
    %3800 = vmatprep.subr.mxu0 0.0
    %3801 = vmatpush1.msra.mxu0 0.0
    %3802 = vmatprep.subr.mxu0 0.0
    %3803 = vmatpush1.msra.mxu0 0.0
    %3804 = vmatprep.subr.mxu0 0.0
    %3805 = vmatpush1.msra.mxu0 0.0
    %3806 = vmatprep.subr.mxu0 0.0
    %3807 = vmatpush1.msra.mxu0 0.0
    %3808 = vmatprep.subr.mxu0 0.0
    %3809 = vmatpush1.msra.mxu0 0.0
    %3810 = vmatprep.subr.mxu0 0.0
    %3811 = vmatpush1.msra.mxu0 0.0
    %3812 = vmatprep.subr.mxu0 0.0
    %3813 = vmatpush1.msra.mxu0 0.0
    %3814 = vmatprep.subr.mxu0 0.0
    %3815 = vmatpush1.msra.mxu0 0.0
    %3816 = vmatprep.subr.mxu0 0.0
    %3817 = vmatpush1.msra.mxu0 0.0
    %3818 = vmatprep.subr.mxu0 0.0
    %3819 = vmatpush1.msra.mxu0 0.0
    %3820 = vmatprep.subr.mxu0 0.0
    %3821 = vmatpush1.msra.mxu0 0.0
    %3822 = vmatprep.mubr.f32.mxu0 0.0
    %3823 = vmatmul.mubr.f32.gmra.mrb[0].mxu0 %v3750
    %v3824 = vpop.f32.mrb[0].mxu0
    %v3825 = vadd.f32 %v3747, %v3824
    %v3826 = vpop.f32.mrb[0].mxu0
    %3827 = vmatprep.mubr.f32.mxu0 0.0
    %3828 = vmatmul.mubr.f32.gmra.mrb[0].mxu0 %v3753
    %v3829 = vpop.f32.mrb[0].mxu0
    %v3830 = vadd.f32 %v3747, %v3829
    %v3831 = vpop.f32.mrb[0].mxu0
    %3832 = vdwg.mxu0
    %v3833 = vmul.f32 %v3825, 0.5
    %v3834 = vmul.f32 %v3830, 0.5
    %v3835 = vmul.f32 %v3825, 0.70710677
    %v3836 = vmul.f32 %v3830, 0.70710677
    %vm3837 = vcmp.ge.f32.partialorder %v3835, 0.0
    %vm3838 = vcmp.ge.f32.partialorder %v3836, 0.0
    %v3839 = vsel %vm3837, 1.0, -1.0
    %v3840 = vsel %vm3838, 1.0, -1.0
    %v3841 = vand.u32 2147483647, %v3835
    %v3842 = vand.u32 2147483647, %v3836
    %v3843 = vmul.f32 %v3841, 0.3275911
    %v3844 = vmul.f32 %v3842, 0.3275911
    %v3845 = vadd.f32 %v3843, 1.0
    %v3846 = vadd.f32 %v3844, 1.0
    %v3847 = vrcp.pop %v3845
    %v3848 = vmul.f32 1.0, %v3847
    %v3849 = vrcp.pop %v3846
    %v3850 = vmul.f32 1.0, %v3849
    %v3851 = vmul.f32 %v3848, 1.0614054
    %v3852 = vmul.f32 %v3850, 1.0614054
    %v3853 = vadd.f32 %v3851, -1.4531521
    %v3854 = vadd.f32 %v3852, -1.4531521
    %v3855 = vmul.f32 %v3853, %v3848
    %v3856 = vmul.f32 %v3854, %v3850
    %v3857 = vadd.f32 %v3855, 1.4214138
    %v3858 = vadd.f32 %v3856, 1.4214138
    %v3859 = vmul.f32 %v3857, %v3848
    %v3860 = vmul.f32 %v3858, %v3850
    %v3861 = vadd.f32 %v3859, -0.28449672
    %v3862 = vadd.f32 %v3860, -0.28449672
    %v3863 = vmul.f32 %v3861, %v3848
    %v3864 = vmul.f32 %v3862, %v3850
    %v3865 = vadd.f32 %v3863, 0.2548296
    %v3866 = vadd.f32 %v3864, 0.2548296
    %v3867 = vmul.f32 %v3865, %v3848
    %v3868 = vmul.f32 %v3866, %v3850
    %v3869 = vsub.f32 0.0, %v3841
    %v3870 = vsub.f32 0.0, %v3842
    %v3871 = vmul.f32 %v3869, %v3841
    %v3872 = vmul.f32 %v3870, %v3842
    %v3873 = vmul.f32 %v3871, 1.442695
    %v3874 = vpow.pop %v3873
    %v3875 = vmul.f32 %v3872, 1.442695
    %v3876 = vpow.pop %v3875
    %v3877 = vmul.f32 %v3867, %v3874
    %v3878 = vmul.f32 %v3868, %v3876
    %v3879 = vsub.f32 1.0, %v3877
    %v3880 = vsub.f32 1.0, %v3878
    %v3881 = vmul.f32 %v3839, %v3879
    %v3882 = vmul.f32 %v3840, %v3880
    %v3883 = vadd.f32 %v3881, 1.0
    %v3884 = vadd.f32 %v3882, 1.0
    %v3885 = vmul.f32 %v3833, %v3883
    %v3886 = vmul.f32 %v3834, %v3884
    %v3887 = vadd.f32 %v3728, %v782
    %v3888 = vadd.f32 %v3729, %v782
    %v3889 = vadd.f32 %v3730, %v786
    %v3890 = vadd.f32 %v3731, %v786
    %v3891 = vadd.f32 %v3887, %v3885
    %v3892 = vadd.f32 %v3888, %v3886
    %v3893 = vadd.f32 %v3889, %v3885
    %v3894 = vadd.f32 %v3890, %v3886
    %s3895 = scalar_lea.vmem %s29, 64
    %v3896 = vld [vmem:[%s3895] sm:$0xff]
    %v3897 = vld [vmem:[%s3895 + $0x8] sm:$0xff]
    %v3898 = vld [vmem:[%s3895 + $0x10] sm:$0xff]
    %v3899 = vld [vmem:[%s3895 + $0x18] sm:$0xff]
    %s3900 = scalar_lea.vmem [#allocation14], 2
    %v3901 = vld [vmem:[%s3900] sm:$0x1]
    %v3903 = vlaneseq
    %v3904 = vshrl.u32 %v3903, 7
    %v3905 = vsub.s32 0, %v3904
    %v3906 = vrot.slane %v3901, %v3905
    %3908 = vmatprep.subr.mxu0 0.0
    %3909 = vmatpush1.msra.mxu0 %v3896
    %3910 = vmatprep.subr.mxu0 0.0
    %3911 = vmatpush1.msra.mxu0 %v3897
    %3912 = vmatprep.subr.mxu0 0.0
    %3913 = vmatpush1.msra.mxu0 %v3898
    %3914 = vmatprep.subr.mxu0 0.0
    %3915 = vmatpush1.msra.mxu0 %v3899
    %3916 = vmatprep.subr.mxu0 0.0
    %3917 = vmatpush1.msra.mxu0 0.0
    %3918 = vmatprep.subr.mxu0 0.0
    %3919 = vmatpush1.msra.mxu0 0.0
    %3920 = vmatprep.subr.mxu0 0.0
    %3921 = vmatpush1.msra.mxu0 0.0
    %3922 = vmatprep.subr.mxu0 0.0
    %3923 = vmatpush1.msra.mxu0 0.0
    %3924 = vmatprep.subr.mxu0 0.0
    %3925 = vmatpush1.msra.mxu0 0.0
    %3926 = vmatprep.subr.mxu0 0.0
    %3927 = vmatpush1.msra.mxu0 0.0
    %3928 = vmatprep.subr.mxu0 0.0
    %3929 = vmatpush1.msra.mxu0 0.0
    %3930 = vmatprep.subr.mxu0 0.0
    %3931 = vmatpush1.msra.mxu0 0.0
    %3932 = vmatprep.subr.mxu0 0.0
    %3933 = vmatpush1.msra.mxu0 0.0
    %3934 = vmatprep.subr.mxu0 0.0
    %3935 = vmatpush1.msra.mxu0 0.0
    %3936 = vmatprep.subr.mxu0 0.0
    %3937 = vmatpush1.msra.mxu0 0.0
    %3938 = vmatprep.subr.mxu0 0.0
    %3939 = vmatpush1.msra.mxu0 0.0
    %3940 = vmatprep.subr.mxu0 0.0
    %3941 = vmatpush1.msra.mxu0 0.0
    %3942 = vmatprep.subr.mxu0 0.0
    %3943 = vmatpush1.msra.mxu0 0.0
    %3944 = vmatprep.subr.mxu0 0.0
    %3945 = vmatpush1.msra.mxu0 0.0
    %3946 = vmatprep.subr.mxu0 0.0
    %3947 = vmatpush1.msra.mxu0 0.0
    %3948 = vmatprep.subr.mxu0 0.0
    %3949 = vmatpush1.msra.mxu0 0.0
    %3950 = vmatprep.subr.mxu0 0.0
    %3951 = vmatpush1.msra.mxu0 0.0
    %3952 = vmatprep.subr.mxu0 0.0
    %3953 = vmatpush1.msra.mxu0 0.0
    %3954 = vmatprep.subr.mxu0 0.0
    %3955 = vmatpush1.msra.mxu0 0.0
    %3956 = vmatprep.subr.mxu0 0.0
    %3957 = vmatpush1.msra.mxu0 0.0
    %3958 = vmatprep.subr.mxu0 0.0
    %3959 = vmatpush1.msra.mxu0 0.0
    %3960 = vmatprep.subr.mxu0 0.0
    %3961 = vmatpush1.msra.mxu0 0.0
    %3962 = vmatprep.subr.mxu0 0.0
    %3963 = vmatpush1.msra.mxu0 0.0
    %3964 = vmatprep.subr.mxu0 0.0
    %3965 = vmatpush1.msra.mxu0 0.0
    %3966 = vmatprep.subr.mxu0 0.0
    %3967 = vmatpush1.msra.mxu0 0.0
    %3968 = vmatprep.subr.mxu0 0.0
    %3969 = vmatpush1.msra.mxu0 0.0
    %3970 = vmatprep.subr.mxu0 0.0
    %3971 = vmatpush1.msra.mxu0 0.0
    %3972 = vmatprep.mubr.f32.mxu0 0.0
    %3973 = vmatmul.mubr.f32.gmra.mrb[0].mxu0 %v584
    %v3974 = vpop.f32.mrb[0].mxu0
    %v3975 = vadd.f32 %v3906, %v3974
    %v3976 = vpop.f32.mrb[0].mxu0
    %3977 = vdwg.mxu0
    %v3980 = vunpack.c.l.s4 1966171168
    %v3981 = vunpack.c.0.s8 %v3980
    %v3982 = vlaneseq
    %v3983 = vshrl.u32 %v3982, 7
    %v3984 = vsub.s32 %v3981, %v3983
    %v3985 = vrot.slane %v3975, %v3984
    %v3986 = vcombine.high %v3985, %v3985
    %v3988 = vunpack.c.l.s4 1966171168
    %v3989 = vunpack.c.0.s8 %v3988
    %v3990 = vlaneseq
    %v3991 = vshrl.u32 %v3990, 7
    %v3992 = vsub.s32 %v3989, %v3991
    %v3993 = vrot.slane %v3985, %v3992
    %v3995 = vunpack.c.l.s4 1966171168
    %v3996 = vunpack.c.0.s8 %v3995
    %v3997 = vlaneseq
    %v3998 = vshrl.u32 %v3997, 7
    %v3999 = vsub.s32 %v3996, %v3998
    %v4000 = vrot.slane %v3986, %v3999
    %v4001 = vlaneseq
    %v4002 = vshrl.u32 %v4001, 7
    %v4003 = vsub.s32 0, %v4002
    %v4004 = vrot.slane %v3993, %v4003
    %v4005 = vlaneseq
    %v4006 = vshrl.u32 %v4005, 7
    %v4007 = vsub.s32 0, %v4006
    %v4008 = vrot.slane %v4000, %v4007
    %v4011 = vadd.f32 %v4004, 1.0
    %v4012 = vadd.f32 %v4008, 1.0
    %v4013 = vsel %vm582, %v3891, 0.0
    %4014 = vadd.xlane.f32.xlu0 %v4013
    %v4015 = vpop.xlane.xlu0 %4014
    %v4016 = vsel %vm582, %v3892, 0.0
    %4017 = vadd.xlane.f32.xlu0 %v4016
    %v4018 = vpop.xlane.xlu0 %4017
    %v4019 = vsel %vm582, %v3893, 0.0
    %4020 = vadd.xlane.f32.xlu0 %v4019
    %v4021 = vpop.xlane.xlu0 %4020
    %v4022 = vsel %vm582, %v3894, 0.0
    %4023 = vadd.xlane.f32.xlu0 %v4022
    %v4024 = vpop.xlane.xlu0 %4023
    %v4025 = vmul.f32 %v4015, %v479
    %v4026 = vmul.f32 %v4018, %v479
    %v4027 = vmul.f32 %v4021, %v479
    %v4028 = vmul.f32 %v4024, %v479
    %v4029 = vsub.f32 %v3891, %v4025
    %v4030 = vsub.f32 %v3892, %v4026
    %v4031 = vsub.f32 %v3893, %v4027
    %v4032 = vsub.f32 %v3894, %v4028
    %v4033 = vmul.f32 %v4029, %v4029
    %v4034 = vmul.f32 %v4030, %v4030
    %v4035 = vmul.f32 %v4031, %v4031
    %v4036 = vmul.f32 %v4032, %v4032
    %v4037 = vsel %vm582, %v4033, 0.0
    %4038 = vadd.xlane.f32.xlu0 %v4037
    %v4039 = vpop.xlane.xlu0 %4038
    %v4040 = vsel %vm582, %v4034, 0.0
    %4041 = vadd.xlane.f32.xlu0 %v4040
    %v4042 = vpop.xlane.xlu0 %4041
    %v4043 = vsel %vm582, %v4035, 0.0
    %4044 = vadd.xlane.f32.xlu0 %v4043
    %v4045 = vpop.xlane.xlu0 %4044
    %v4046 = vsel %vm582, %v4036, 0.0
    %4047 = vadd.xlane.f32.xlu0 %v4046
    %v4048 = vpop.xlane.xlu0 %4047
    %v4049 = vmul.f32 %v4039, %v479
    %v4050 = vmul.f32 %v4042, %v479
    %v4051 = vmul.f32 %v4045, %v479
    %v4052 = vmul.f32 %v4048, %v479
    %v4053 = vadd.f32 %v4049, 1e-05
    %v4054 = vadd.f32 %v4050, 1e-05
    %v4055 = vadd.f32 %v4051, 1e-05
    %v4056 = vadd.f32 %v4052, 1e-05
    %v4057 = vrsqrt.pop %v4053
    %v4058 = vrsqrt.pop %v4054
    %v4059 = vrsqrt.pop %v4055
    %v4060 = vrsqrt.pop %v4056
    %v4061 = vmul.f32 %v4029, %v4057
    %v4062 = vmul.f32 %v4030, %v4058
    %v4063 = vmul.f32 %v4031, %v4059
    %v4064 = vmul.f32 %v4032, %v4060
    %v4065 = vmul.f32 %v4011, %v4061
    %v4066 = vmul.f32 %v4011, %v4062
    %v4067 = vmul.f32 %v4012, %v4063
    %v4068 = vmul.f32 %v4012, %v4064
    %4069 = vrot.lane.b32.xlu0 %v4004, 96
    %v4070 = vpop.permute.xlu0 %4069
    %4071 = vrot.lane.b32.xlu0 %v4008, 96
    %v4072 = vpop.permute.xlu0 %4071
    %v4075 = vadd.f32 %v4065, %v4070
    %v4076 = vadd.f32 %v4066, %v4070
    %v4077 = vadd.f32 %v4067, %v4072
    %v4078 = vadd.f32 %v4068, %v4072
    %s4079 = scalar_lea.vmem %s33, 64
    %v4080 = vld [vmem:[%s4079] sm:$0xff]
    %v4081 = vld [vmem:[%s4079 + $0x8] sm:$0xff]
    %v4082 = vld [vmem:[%s4079 + $0x10] sm:$0xff]
    %v4083 = vld [vmem:[%s4079 + $0x18] sm:$0xff]
    %s4084 = scalar_lea.vmem [#allocation16], 2
    %v4085 = vld [vmem:[%s4084] sm:$0x1]
    %v4087 = vlaneseq
    %v4088 = vshrl.u32 %v4087, 7
    %v4089 = vsub.s32 0, %v4088
    %v4090 = vrot.slane %v4085, %v4089
    %v4093 = vsel %vm582, %v4075, 0
    %v4096 = vsel %vm582, %v4076, 0
    %v4099 = vsel %vm582, %v4077, 0
    %v4102 = vsel %vm582, %v4078, 0
    %4104 = vmatprep.subr.mxu0 0.0
    %4105 = vmatpush1.msra.mxu0 %v4080
    %4106 = vmatprep.subr.mxu0 0.0
    %4107 = vmatpush1.msra.mxu0 %v4081
    %4108 = vmatprep.subr.mxu0 0.0
    %4109 = vmatpush1.msra.mxu0 %v4082
    %4110 = vmatprep.subr.mxu0 0.0
    %4111 = vmatpush1.msra.mxu0 %v4083
    %4112 = vmatprep.subr.mxu0 0.0
    %4113 = vmatpush1.msra.mxu0 0.0
    %4114 = vmatprep.subr.mxu0 0.0
    %4115 = vmatpush1.msra.mxu0 0.0
    %4116 = vmatprep.subr.mxu0 0.0
    %4117 = vmatpush1.msra.mxu0 0.0
    %4118 = vmatprep.subr.mxu0 0.0
    %4119 = vmatpush1.msra.mxu0 0.0
    %4120 = vmatprep.subr.mxu0 0.0
    %4121 = vmatpush1.msra.mxu0 0.0
    %4122 = vmatprep.subr.mxu0 0.0
    %4123 = vmatpush1.msra.mxu0 0.0
    %4124 = vmatprep.subr.mxu0 0.0
    %4125 = vmatpush1.msra.mxu0 0.0
    %4126 = vmatprep.subr.mxu0 0.0
    %4127 = vmatpush1.msra.mxu0 0.0
    %4128 = vmatprep.subr.mxu0 0.0
    %4129 = vmatpush1.msra.mxu0 0.0
    %4130 = vmatprep.subr.mxu0 0.0
    %4131 = vmatpush1.msra.mxu0 0.0
    %4132 = vmatprep.subr.mxu0 0.0
    %4133 = vmatpush1.msra.mxu0 0.0
    %4134 = vmatprep.subr.mxu0 0.0
    %4135 = vmatpush1.msra.mxu0 0.0
    %4136 = vmatprep.subr.mxu0 0.0
    %4137 = vmatpush1.msra.mxu0 0.0
    %4138 = vmatprep.subr.mxu0 0.0
    %4139 = vmatpush1.msra.mxu0 0.0
    %4140 = vmatprep.subr.mxu0 0.0
    %4141 = vmatpush1.msra.mxu0 0.0
    %4142 = vmatprep.subr.mxu0 0.0
    %4143 = vmatpush1.msra.mxu0 0.0
    %4144 = vmatprep.subr.mxu0 0.0
    %4145 = vmatpush1.msra.mxu0 0.0
    %4146 = vmatprep.subr.mxu0 0.0
    %4147 = vmatpush1.msra.mxu0 0.0
    %4148 = vmatprep.subr.mxu0 0.0
    %4149 = vmatpush1.msra.mxu0 0.0
    %4150 = vmatprep.subr.mxu0 0.0
    %4151 = vmatpush1.msra.mxu0 0.0
    %4152 = vmatprep.subr.mxu0 0.0
    %4153 = vmatpush1.msra.mxu0 0.0
    %4154 = vmatprep.subr.mxu0 0.0
    %4155 = vmatpush1.msra.mxu0 0.0
    %4156 = vmatprep.subr.mxu0 0.0
    %4157 = vmatpush1.msra.mxu0 0.0
    %4158 = vmatprep.subr.mxu0 0.0
    %4159 = vmatpush1.msra.mxu0 0.0
    %4160 = vmatprep.subr.mxu0 0.0
    %4161 = vmatpush1.msra.mxu0 0.0
    %4162 = vmatprep.subr.mxu0 0.0
    %4163 = vmatpush1.msra.mxu0 0.0
    %4164 = vmatprep.subr.mxu0 0.0
    %4165 = vmatpush1.msra.mxu0 0.0
    %4166 = vmatprep.subr.mxu0 0.0
    %4167 = vmatpush1.msra.mxu0 0.0
    %4168 = vmatprep.mubr.f32.mxu0 0.0
    %4169 = vmatmul.mubr.f32.gmra.mrb[0].mxu0 %v4093
    %v4170 = vpop.f32.mrb[0].mxu0
    %v4171 = vadd.f32 %v4090, %v4170
    %v4172 = vpop.f32.mrb[0].mxu0
    %4173 = vmatprep.mubr.f32.mxu0 0.0
    %4174 = vmatmul.mubr.f32.gmra.mrb[0].mxu0 %v4096
    %v4175 = vpop.f32.mrb[0].mxu0
    %v4176 = vadd.f32 %v4090, %v4175
    %v4177 = vpop.f32.mrb[0].mxu0
    %4178 = vmatprep.mubr.f32.mxu0 0.0
    %4179 = vmatmul.mubr.f32.gmra.mrb[0].mxu0 %v4099
    %v4180 = vpop.f32.mrb[0].mxu0
    %v4181 = vadd.f32 %v4090, %v4180
    %v4182 = vpop.f32.mrb[0].mxu0
    %4183 = vmatprep.mubr.f32.mxu0 0.0
    %4184 = vmatmul.mubr.f32.gmra.mrb[0].mxu0 %v4102
    %v4185 = vpop.f32.mrb[0].mxu0
    %v4186 = vadd.f32 %v4090, %v4185
    %v4187 = vpop.f32.mrb[0].mxu0
    %4188 = vdwg.mxu0
    %4191 = vrot.lane.b32.xlu0 %v4171, 96
    %v4192 = vpop.permute.xlu0 %4191
    %4193 = vrot.lane.b32.xlu0 %v4176, 96
    %v4194 = vpop.permute.xlu0 %4193
    %v4197 = vmul.f32 %v4171, %v4192
    %v4198 = vmul.f32 %v4176, %v4194
    %v4199 = vmul.f32 %v4181, %v4192
    %v4200 = vmul.f32 %v4186, %v4194
    %v4202 = vsel %vm582, %v4197, 0
    %v4205 = vsel %vm582, %v4198, 0
    %v4208 = vsel %vm582, %v4199, 0
    %v4211 = vsel %vm582, %v4200, 0
    %4213 = vmatprep.subr.mxu0 0.0
    %4214 = vmatpush1.msra.mxu0 %v344
    %4215 = vmatprep.subr.mxu0 0.0
    %4216 = vmatpush1.msra.mxu0 %v345
    %4217 = vmatprep.subr.mxu0 0.0
    %4218 = vmatpush1.msra.mxu0 %v346
    %4219 = vmatprep.subr.mxu0 0.0
    %4220 = vmatpush1.msra.mxu0 %v347
    %4221 = vmatprep.subr.mxu0 0.0
    %4222 = vmatpush1.msra.mxu0 0.0
    %4223 = vmatprep.subr.mxu0 0.0
    %4224 = vmatpush1.msra.mxu0 0.0
    %4225 = vmatprep.subr.mxu0 0.0
    %4226 = vmatpush1.msra.mxu0 0.0
    %4227 = vmatprep.subr.mxu0 0.0
    %4228 = vmatpush1.msra.mxu0 0.0
    %4229 = vmatprep.subr.mxu0 0.0
    %4230 = vmatpush1.msra.mxu0 0.0
    %4231 = vmatprep.subr.mxu0 0.0
    %4232 = vmatpush1.msra.mxu0 0.0
    %4233 = vmatprep.subr.mxu0 0.0
    %4234 = vmatpush1.msra.mxu0 0.0
    %4235 = vmatprep.subr.mxu0 0.0
    %4236 = vmatpush1.msra.mxu0 0.0
    %4237 = vmatprep.subr.mxu0 0.0
    %4238 = vmatpush1.msra.mxu0 0.0
    %4239 = vmatprep.subr.mxu0 0.0
    %4240 = vmatpush1.msra.mxu0 0.0
    %4241 = vmatprep.subr.mxu0 0.0
    %4242 = vmatpush1.msra.mxu0 0.0
    %4243 = vmatprep.subr.mxu0 0.0
    %4244 = vmatpush1.msra.mxu0 0.0
    %4245 = vmatprep.subr.mxu0 0.0
    %4246 = vmatpush1.msra.mxu0 0.0
    %4247 = vmatprep.subr.mxu0 0.0
    %4248 = vmatpush1.msra.mxu0 0.0
    %4249 = vmatprep.subr.mxu0 0.0
    %4250 = vmatpush1.msra.mxu0 0.0
    %4251 = vmatprep.subr.mxu0 0.0
    %4252 = vmatpush1.msra.mxu0 0.0
    %4253 = vmatprep.subr.mxu0 0.0
    %4254 = vmatpush1.msra.mxu0 0.0
    %4255 = vmatprep.subr.mxu0 0.0
    %4256 = vmatpush1.msra.mxu0 0.0
    %4257 = vmatprep.subr.mxu0 0.0
    %4258 = vmatpush1.msra.mxu0 0.0
    %4259 = vmatprep.subr.mxu0 0.0
    %4260 = vmatpush1.msra.mxu0 0.0
    %4261 = vmatprep.subr.mxu0 0.0
    %4262 = vmatpush1.msra.mxu0 0.0
    %4263 = vmatprep.subr.mxu0 0.0
    %4264 = vmatpush1.msra.mxu0 0.0
    %4265 = vmatprep.subr.mxu0 0.0
    %4266 = vmatpush1.msra.mxu0 0.0
    %4267 = vmatprep.subr.mxu0 0.0
    %4268 = vmatpush1.msra.mxu0 0.0
    %4269 = vmatprep.subr.mxu0 0.0
    %4270 = vmatpush1.msra.mxu0 0.0
    %4271 = vmatprep.subr.mxu0 0.0
    %4272 = vmatpush1.msra.mxu0 0.0
    %4273 = vmatprep.subr.mxu0 0.0
    %4274 = vmatpush1.msra.mxu0 0.0
    %4275 = vmatprep.subr.mxu0 0.0
    %4276 = vmatpush1.msra.mxu0 0.0
    %4277 = vmatprep.mubr.f32.mxu0 0.0
    %4278 = vmatmul.mubr.f32.gmra.mrb[0].mxu0 %v4202
    %v4279 = vpop.f32.mrb[0].mxu0
    %v4280 = vadd.f32 0.0, %v4279
    %v4281 = vpop.f32.mrb[0].mxu0
    %4282 = vmatprep.mubr.f32.mxu0 0.0
    %4283 = vmatmul.mubr.f32.gmra.mrb[0].mxu0 %v4205
    %v4284 = vpop.f32.mrb[0].mxu0
    %v4285 = vadd.f32 0.0, %v4284
    %v4286 = vpop.f32.mrb[0].mxu0
    %4287 = vmatprep.mubr.f32.mxu0 0.0
    %4288 = vmatmul.mubr.f32.gmra.mrb[0].mxu0 %v4208
    %v4289 = vpop.f32.mrb[0].mxu0
    %v4290 = vadd.f32 0.0, %v4289
    %v4291 = vpop.f32.mrb[0].mxu0
    %4292 = vmatprep.mubr.f32.mxu0 0.0
    %4293 = vmatmul.mubr.f32.gmra.mrb[0].mxu0 %v4211
    %v4294 = vpop.f32.mrb[0].mxu0
    %v4295 = vadd.f32 0.0, %v4294
    %v4296 = vpop.f32.mrb[0].mxu0
    %4297 = vdwg.mxu0
    %v4298 = vmul.f32 %v4280, 0.35355338
    %v4299 = vmul.f32 %v4285, 0.35355338
    %v4300 = vmul.f32 %v4290, 0.35355338
    %v4301 = vmul.f32 %v4295, 0.35355338
    %4304 = vrot.lane.b32.xlu0 %v4181, 96
    %v4305 = vpop.permute.xlu0 %4304
    %4306 = vrot.lane.b32.xlu0 %v4186, 96
    %v4307 = vpop.permute.xlu0 %4306
    %v4310 = vmul.f32 %v4171, %v4305
    %v4311 = vmul.f32 %v4176, %v4307
    %v4312 = vmul.f32 %v4181, %v4305
    %v4313 = vmul.f32 %v4186, %v4307
    %v4315 = vsel %vm582, %v4310, 0
    %v4318 = vsel %vm582, %v4311, 0
    %v4321 = vsel %vm582, %v4312, 0
    %v4324 = vsel %vm582, %v4313, 0
    %4326 = vmatprep.subr.mxu0 0.0
    %4327 = vmatpush1.msra.mxu0 %v344
    %4328 = vmatprep.subr.mxu0 0.0
    %4329 = vmatpush1.msra.mxu0 %v345
    %4330 = vmatprep.subr.mxu0 0.0
    %4331 = vmatpush1.msra.mxu0 %v346
    %4332 = vmatprep.subr.mxu0 0.0
    %4333 = vmatpush1.msra.mxu0 %v347
    %4334 = vmatprep.subr.mxu0 0.0
    %4335 = vmatpush1.msra.mxu0 0.0
    %4336 = vmatprep.subr.mxu0 0.0
    %4337 = vmatpush1.msra.mxu0 0.0
    %4338 = vmatprep.subr.mxu0 0.0
    %4339 = vmatpush1.msra.mxu0 0.0
    %4340 = vmatprep.subr.mxu0 0.0
    %4341 = vmatpush1.msra.mxu0 0.0
    %4342 = vmatprep.subr.mxu0 0.0
    %4343 = vmatpush1.msra.mxu0 0.0
    %4344 = vmatprep.subr.mxu0 0.0
    %4345 = vmatpush1.msra.mxu0 0.0
    %4346 = vmatprep.subr.mxu0 0.0
    %4347 = vmatpush1.msra.mxu0 0.0
    %4348 = vmatprep.subr.mxu0 0.0
    %4349 = vmatpush1.msra.mxu0 0.0
    %4350 = vmatprep.subr.mxu0 0.0
    %4351 = vmatpush1.msra.mxu0 0.0
    %4352 = vmatprep.subr.mxu0 0.0
    %4353 = vmatpush1.msra.mxu0 0.0
    %4354 = vmatprep.subr.mxu0 0.0
    %4355 = vmatpush1.msra.mxu0 0.0
    %4356 = vmatprep.subr.mxu0 0.0
    %4357 = vmatpush1.msra.mxu0 0.0
    %4358 = vmatprep.subr.mxu0 0.0
    %4359 = vmatpush1.msra.mxu0 0.0
    %4360 = vmatprep.subr.mxu0 0.0
    %4361 = vmatpush1.msra.mxu0 0.0
    %4362 = vmatprep.subr.mxu0 0.0
    %4363 = vmatpush1.msra.mxu0 0.0
    %4364 = vmatprep.subr.mxu0 0.0
    %4365 = vmatpush1.msra.mxu0 0.0
    %4366 = vmatprep.subr.mxu0 0.0
    %4367 = vmatpush1.msra.mxu0 0.0
    %4368 = vmatprep.subr.mxu0 0.0
    %4369 = vmatpush1.msra.mxu0 0.0
    %4370 = vmatprep.subr.mxu0 0.0
    %4371 = vmatpush1.msra.mxu0 0.0
    %4372 = vmatprep.subr.mxu0 0.0
    %4373 = vmatpush1.msra.mxu0 0.0
    %4374 = vmatprep.subr.mxu0 0.0
    %4375 = vmatpush1.msra.mxu0 0.0
    %4376 = vmatprep.subr.mxu0 0.0
    %4377 = vmatpush1.msra.mxu0 0.0
    %4378 = vmatprep.subr.mxu0 0.0
    %4379 = vmatpush1.msra.mxu0 0.0
    %4380 = vmatprep.subr.mxu0 0.0
    %4381 = vmatpush1.msra.mxu0 0.0
    %4382 = vmatprep.subr.mxu0 0.0
    %4383 = vmatpush1.msra.mxu0 0.0
    %4384 = vmatprep.subr.mxu0 0.0
    %4385 = vmatpush1.msra.mxu0 0.0
    %4386 = vmatprep.subr.mxu0 0.0
    %4387 = vmatpush1.msra.mxu0 0.0
    %4388 = vmatprep.subr.mxu0 0.0
    %4389 = vmatpush1.msra.mxu0 0.0
    %4390 = vmatprep.mubr.f32.mxu0 0.0
    %4391 = vmatmul.mubr.f32.gmra.mrb[0].mxu0 %v4315
    %v4392 = vpop.f32.mrb[0].mxu0
    %v4393 = vadd.f32 0.0, %v4392
    %v4394 = vpop.f32.mrb[0].mxu0
    %4395 = vmatprep.mubr.f32.mxu0 0.0
    %4396 = vmatmul.mubr.f32.gmra.mrb[0].mxu0 %v4318
    %v4397 = vpop.f32.mrb[0].mxu0
    %v4398 = vadd.f32 0.0, %v4397
    %v4399 = vpop.f32.mrb[0].mxu0
    %4400 = vmatprep.mubr.f32.mxu0 0.0
    %4401 = vmatmul.mubr.f32.gmra.mrb[0].mxu0 %v4321
    %v4402 = vpop.f32.mrb[0].mxu0
    %v4403 = vadd.f32 0.0, %v4402
    %v4404 = vpop.f32.mrb[0].mxu0
    %4405 = vmatprep.mubr.f32.mxu0 0.0
    %4406 = vmatmul.mubr.f32.gmra.mrb[0].mxu0 %v4324
    %v4407 = vpop.f32.mrb[0].mxu0
    %v4408 = vadd.f32 0.0, %v4407
    %v4409 = vpop.f32.mrb[0].mxu0
    %4410 = vdwg.mxu0
    %v4411 = vmul.f32 %v4393, 0.35355338
    %v4412 = vmul.f32 %v4398, 0.35355338
    %v4413 = vmul.f32 %v4403, 0.35355338
    %v4414 = vmul.f32 %v4408, 0.35355338
    %v4415 = vmax.f32 %v4298, %v4411
    %v4416 = vmax.f32 %v4299, %v4412
    %v4417 = vmax.f32 %v4300, %v4413
    %v4418 = vmax.f32 %v4301, %v4414
    %v4419 = vsub.f32 %v4298, %v4415
    %v4420 = vsub.f32 %v4299, %v4416
    %v4421 = vsub.f32 %v4300, %v4417
    %v4422 = vsub.f32 %v4301, %v4418
    %v4423 = vmul.f32 %v4419, 1.442695
    %v4424 = vpow.pop %v4423
    %v4425 = vmul.f32 %v4420, 1.442695
    %v4426 = vpow.pop %v4425
    %v4427 = vmul.f32 %v4421, 1.442695
    %v4428 = vpow.pop %v4427
    %v4429 = vmul.f32 %v4422, 1.442695
    %v4430 = vpow.pop %v4429
    %v4431 = vsub.f32 %v4411, %v4415
    %v4432 = vsub.f32 %v4412, %v4416
    %v4433 = vsub.f32 %v4413, %v4417
    %v4434 = vsub.f32 %v4414, %v4418
    %v4435 = vmul.f32 %v4431, 1.442695
    %v4436 = vpow.pop %v4435
    %v4437 = vmul.f32 %v4432, 1.442695
    %v4438 = vpow.pop %v4437
    %v4439 = vmul.f32 %v4433, 1.442695
    %v4440 = vpow.pop %v4439
    %v4441 = vmul.f32 %v4434, 1.442695
    %v4442 = vpow.pop %v4441
    %v4443 = vadd.f32 %v4424, %v4436
    %v4444 = vadd.f32 %v4426, %v4438
    %v4445 = vadd.f32 %v4428, %v4440
    %v4446 = vadd.f32 %v4430, %v4442
    %v4447 = vrcp.pop %v4443
    %v4448 = vrcp.pop %v4444
    %v4449 = vrcp.pop %v4445
    %v4450 = vrcp.pop %v4446
    %v4451 = vmul.f32 %v4424, %v4447
    %v4452 = vmul.f32 %v4426, %v4448
    %v4453 = vmul.f32 %v4428, %v4449
    %v4454 = vmul.f32 %v4430, %v4450
    %v4456 = vsel %vm1507, %v4451, 0
    %v4459 = vsel %vm1507, %v4452, 0
    %v4462 = vsel %vm1507, %v4453, 0
    %v4465 = vsel %vm1507, %v4454, 0
    %4467 = vmatprep.subr.mxu0 0.0
    %4468 = vmatpush1.msra.mxu0 %v1522
    %4469 = vmatprep.subr.mxu0 0.0
    %4470 = vmatpush1.msra.mxu0 0.0
    %4471 = vmatprep.subr.mxu0 0.0
    %4472 = vmatpush1.msra.mxu0 0.0
    %4473 = vmatprep.subr.mxu0 0.0
    %4474 = vmatpush1.msra.mxu0 0.0
    %4475 = vmatprep.subr.mxu0 0.0
    %4476 = vmatpush1.msra.mxu0 0.0
    %4477 = vmatprep.subr.mxu0 0.0
    %4478 = vmatpush1.msra.mxu0 0.0
    %4479 = vmatprep.subr.mxu0 0.0
    %4480 = vmatpush1.msra.mxu0 0.0
    %4481 = vmatprep.subr.mxu0 0.0
    %4482 = vmatpush1.msra.mxu0 0.0
    %4483 = vmatprep.subr.mxu0 0.0
    %4484 = vmatpush1.msra.mxu0 0.0
    %4485 = vmatprep.subr.mxu0 0.0
    %4486 = vmatpush1.msra.mxu0 0.0
    %4487 = vmatprep.subr.mxu0 0.0
    %4488 = vmatpush1.msra.mxu0 0.0
    %4489 = vmatprep.subr.mxu0 0.0
    %4490 = vmatpush1.msra.mxu0 0.0
    %4491 = vmatprep.subr.mxu0 0.0
    %4492 = vmatpush1.msra.mxu0 0.0
    %4493 = vmatprep.subr.mxu0 0.0
    %4494 = vmatpush1.msra.mxu0 0.0
    %4495 = vmatprep.subr.mxu0 0.0
    %4496 = vmatpush1.msra.mxu0 0.0
    %4497 = vmatprep.subr.mxu0 0.0
    %4498 = vmatpush1.msra.mxu0 0.0
    %4499 = vmatprep.subr.mxu0 0.0
    %4500 = vmatpush1.msra.mxu0 0.0
    %4501 = vmatprep.subr.mxu0 0.0
    %4502 = vmatpush1.msra.mxu0 0.0
    %4503 = vmatprep.subr.mxu0 0.0
    %4504 = vmatpush1.msra.mxu0 0.0
    %4505 = vmatprep.subr.mxu0 0.0
    %4506 = vmatpush1.msra.mxu0 0.0
    %4507 = vmatprep.subr.mxu0 0.0
    %4508 = vmatpush1.msra.mxu0 0.0
    %4509 = vmatprep.subr.mxu0 0.0
    %4510 = vmatpush1.msra.mxu0 0.0
    %4511 = vmatprep.subr.mxu0 0.0
    %4512 = vmatpush1.msra.mxu0 0.0
    %4513 = vmatprep.subr.mxu0 0.0
    %4514 = vmatpush1.msra.mxu0 0.0
    %4515 = vmatprep.subr.mxu0 0.0
    %4516 = vmatpush1.msra.mxu0 0.0
    %4517 = vmatprep.subr.mxu0 0.0
    %4518 = vmatpush1.msra.mxu0 0.0
    %4519 = vmatprep.subr.mxu0 0.0
    %4520 = vmatpush1.msra.mxu0 0.0
    %4521 = vmatprep.subr.mxu0 0.0
    %4522 = vmatpush1.msra.mxu0 0.0
    %4523 = vmatprep.subr.mxu0 0.0
    %4524 = vmatpush1.msra.mxu0 0.0
    %4525 = vmatprep.subr.mxu0 0.0
    %4526 = vmatpush1.msra.mxu0 0.0
    %4527 = vmatprep.subr.mxu0 0.0
    %4528 = vmatpush1.msra.mxu0 0.0
    %4529 = vmatprep.subr.mxu0 0.0
    %4530 = vmatpush1.msra.mxu0 0.0
    %4531 = vmatprep.mubr.f32.mxu0 0.0
    %4532 = vmatmul.mubr.f32.gmra.mrb[0].mxu0 %v4456
    %v4533 = vpop.f32.mrb[0].mxu0
    %v4534 = vadd.f32 0.0, %v4533
    %v4535 = vpop.f32.mrb[0].mxu0
    %4536 = vmatprep.mubr.f32.mxu0 0.0
    %4537 = vmatmul.mubr.f32.gmra.mrb[0].mxu0 %v4459
    %v4538 = vpop.f32.mrb[0].mxu0
    %v4539 = vadd.f32 0.0, %v4538
    %v4540 = vpop.f32.mrb[0].mxu0
    %4541 = vmatprep.mubr.f32.mxu0 0.0
    %4542 = vmatmul.mubr.f32.gmra.mrb[0].mxu0 %v4462
    %v4543 = vpop.f32.mrb[0].mxu0
    %v4544 = vadd.f32 0.0, %v4543
    %v4545 = vpop.f32.mrb[0].mxu0
    %4546 = vmatprep.mubr.f32.mxu0 0.0
    %4547 = vmatmul.mubr.f32.gmra.mrb[0].mxu0 %v4465
    %v4548 = vpop.f32.mrb[0].mxu0
    %v4549 = vadd.f32 0.0, %v4548
    %v4550 = vpop.f32.mrb[0].mxu0
    %4551 = vdwg.mxu0
    %4552 = vrot.lane.b32.xlu0 %v4171, 64
    %v4553 = vpop.permute.xlu0 %4552
    %4554 = vrot.lane.b32.xlu0 %v4176, 64
    %v4555 = vpop.permute.xlu0 %4554
    %v4558 = vmul.f32 %v4534, %v4553
    %v4559 = vmul.f32 %v4539, %v4555
    %v4560 = vmul.f32 %v4544, %v4553
    %v4561 = vmul.f32 %v4549, %v4555
    %v4562 = vmul.f32 %v4436, %v4447
    %v4563 = vmul.f32 %v4438, %v4448
    %v4564 = vmul.f32 %v4440, %v4449
    %v4565 = vmul.f32 %v4442, %v4450
    %v4567 = vsel %vm1507, %v4562, 0
    %v4570 = vsel %vm1507, %v4563, 0
    %v4573 = vsel %vm1507, %v4564, 0
    %v4576 = vsel %vm1507, %v4565, 0
    %4578 = vmatprep.subr.mxu0 0.0
    %4579 = vmatpush1.msra.mxu0 %v1522
    %4580 = vmatprep.subr.mxu0 0.0
    %4581 = vmatpush1.msra.mxu0 0.0
    %4582 = vmatprep.subr.mxu0 0.0
    %4583 = vmatpush1.msra.mxu0 0.0
    %4584 = vmatprep.subr.mxu0 0.0
    %4585 = vmatpush1.msra.mxu0 0.0
    %4586 = vmatprep.subr.mxu0 0.0
    %4587 = vmatpush1.msra.mxu0 0.0
    %4588 = vmatprep.subr.mxu0 0.0
    %4589 = vmatpush1.msra.mxu0 0.0
    %4590 = vmatprep.subr.mxu0 0.0
    %4591 = vmatpush1.msra.mxu0 0.0
    %4592 = vmatprep.subr.mxu0 0.0
    %4593 = vmatpush1.msra.mxu0 0.0
    %4594 = vmatprep.subr.mxu0 0.0
    %4595 = vmatpush1.msra.mxu0 0.0
    %4596 = vmatprep.subr.mxu0 0.0
    %4597 = vmatpush1.msra.mxu0 0.0
    %4598 = vmatprep.subr.mxu0 0.0
    %4599 = vmatpush1.msra.mxu0 0.0
    %4600 = vmatprep.subr.mxu0 0.0
    %4601 = vmatpush1.msra.mxu0 0.0
    %4602 = vmatprep.subr.mxu0 0.0
    %4603 = vmatpush1.msra.mxu0 0.0
    %4604 = vmatprep.subr.mxu0 0.0
    %4605 = vmatpush1.msra.mxu0 0.0
    %4606 = vmatprep.subr.mxu0 0.0
    %4607 = vmatpush1.msra.mxu0 0.0
    %4608 = vmatprep.subr.mxu0 0.0
    %4609 = vmatpush1.msra.mxu0 0.0
    %4610 = vmatprep.subr.mxu0 0.0
    %4611 = vmatpush1.msra.mxu0 0.0
    %4612 = vmatprep.subr.mxu0 0.0
    %4613 = vmatpush1.msra.mxu0 0.0
    %4614 = vmatprep.subr.mxu0 0.0
    %4615 = vmatpush1.msra.mxu0 0.0
    %4616 = vmatprep.subr.mxu0 0.0
    %4617 = vmatpush1.msra.mxu0 0.0
    %4618 = vmatprep.subr.mxu0 0.0
    %4619 = vmatpush1.msra.mxu0 0.0
    %4620 = vmatprep.subr.mxu0 0.0
    %4621 = vmatpush1.msra.mxu0 0.0
    %4622 = vmatprep.subr.mxu0 0.0
    %4623 = vmatpush1.msra.mxu0 0.0
    %4624 = vmatprep.subr.mxu0 0.0
    %4625 = vmatpush1.msra.mxu0 0.0
    %4626 = vmatprep.subr.mxu0 0.0
    %4627 = vmatpush1.msra.mxu0 0.0
    %4628 = vmatprep.subr.mxu0 0.0
    %4629 = vmatpush1.msra.mxu0 0.0
    %4630 = vmatprep.subr.mxu0 0.0
    %4631 = vmatpush1.msra.mxu0 0.0
    %4632 = vmatprep.subr.mxu0 0.0
    %4633 = vmatpush1.msra.mxu0 0.0
    %4634 = vmatprep.subr.mxu0 0.0
    %4635 = vmatpush1.msra.mxu0 0.0
    %4636 = vmatprep.subr.mxu0 0.0
    %4637 = vmatpush1.msra.mxu0 0.0
    %4638 = vmatprep.subr.mxu0 0.0
    %4639 = vmatpush1.msra.mxu0 0.0
    %4640 = vmatprep.subr.mxu0 0.0
    %4641 = vmatpush1.msra.mxu0 0.0
    %4642 = vmatprep.mubr.f32.mxu0 0.0
    %4643 = vmatmul.mubr.f32.gmra.mrb[0].mxu0 %v4567
    %v4644 = vpop.f32.mrb[0].mxu0
    %v4645 = vadd.f32 0.0, %v4644
    %v4646 = vpop.f32.mrb[0].mxu0
    %4647 = vmatprep.mubr.f32.mxu0 0.0
    %4648 = vmatmul.mubr.f32.gmra.mrb[0].mxu0 %v4570
    %v4649 = vpop.f32.mrb[0].mxu0
    %v4650 = vadd.f32 0.0, %v4649
    %v4651 = vpop.f32.mrb[0].mxu0
    %4652 = vmatprep.mubr.f32.mxu0 0.0
    %4653 = vmatmul.mubr.f32.gmra.mrb[0].mxu0 %v4573
    %v4654 = vpop.f32.mrb[0].mxu0
    %v4655 = vadd.f32 0.0, %v4654
    %v4656 = vpop.f32.mrb[0].mxu0
    %4657 = vmatprep.mubr.f32.mxu0 0.0
    %4658 = vmatmul.mubr.f32.gmra.mrb[0].mxu0 %v4576
    %v4659 = vpop.f32.mrb[0].mxu0
    %v4660 = vadd.f32 0.0, %v4659
    %v4661 = vpop.f32.mrb[0].mxu0
    %4662 = vdwg.mxu0
    %4663 = vrot.lane.b32.xlu0 %v4181, 64
    %v4664 = vpop.permute.xlu0 %4663
    %4665 = vrot.lane.b32.xlu0 %v4186, 64
    %v4666 = vpop.permute.xlu0 %4665
    %v4669 = vmul.f32 %v4645, %v4664
    %v4670 = vmul.f32 %v4650, %v4666
    %v4671 = vmul.f32 %v4655, %v4664
    %v4672 = vmul.f32 %v4660, %v4666
    %v4673 = vadd.f32 %v4558, %v4669
    %v4674 = vadd.f32 %v4559, %v4670
    %v4675 = vadd.f32 %v4560, %v4671
    %v4676 = vadd.f32 %v4561, %v4672
    %s4677 = scalar_lea.vmem %s37, 64
    %v4678 = vld [vmem:[%s4677] sm:$0xff]
    %v4679 = vld [vmem:[%s4677 + $0x8] sm:$0xff]
    %v4680 = vld [vmem:[%s4677 + $0x10] sm:$0xff]
    %v4681 = vld [vmem:[%s4677 + $0x18] sm:$0xff]
    %s4682 = scalar_lea.vmem [#allocation17], 2
    %v4683 = vld [vmem:[%s4682] sm:$0x1]
    %v4685 = vlaneseq
    %v4686 = vshrl.u32 %v4685, 7
    %v4687 = vsub.s32 0, %v4686
    %v4688 = vrot.slane %v4683, %v4687
    %v4691 = vsel %vm582, %v4673, 0
    %v4694 = vsel %vm582, %v4674, 0
    %v4697 = vsel %vm582, %v4675, 0
    %v4700 = vsel %vm582, %v4676, 0
    %4702 = vmatprep.subr.mxu0 0.0
    %4703 = vmatpush1.msra.mxu0 %v4678
    %4704 = vmatprep.subr.mxu0 0.0
    %4705 = vmatpush1.msra.mxu0 %v4679
    %4706 = vmatprep.subr.mxu0 0.0
    %4707 = vmatpush1.msra.mxu0 %v4680
    %4708 = vmatprep.subr.mxu0 0.0
    %4709 = vmatpush1.msra.mxu0 %v4681
    %4710 = vmatprep.subr.mxu0 0.0
    %4711 = vmatpush1.msra.mxu0 0.0
    %4712 = vmatprep.subr.mxu0 0.0
    %4713 = vmatpush1.msra.mxu0 0.0
    %4714 = vmatprep.subr.mxu0 0.0
    %4715 = vmatpush1.msra.mxu0 0.0
    %4716 = vmatprep.subr.mxu0 0.0
    %4717 = vmatpush1.msra.mxu0 0.0
    %4718 = vmatprep.subr.mxu0 0.0
    %4719 = vmatpush1.msra.mxu0 0.0
    %4720 = vmatprep.subr.mxu0 0.0
    %4721 = vmatpush1.msra.mxu0 0.0
    %4722 = vmatprep.subr.mxu0 0.0
    %4723 = vmatpush1.msra.mxu0 0.0
    %4724 = vmatprep.subr.mxu0 0.0
    %4725 = vmatpush1.msra.mxu0 0.0
    %4726 = vmatprep.subr.mxu0 0.0
    %4727 = vmatpush1.msra.mxu0 0.0
    %4728 = vmatprep.subr.mxu0 0.0
    %4729 = vmatpush1.msra.mxu0 0.0
    %4730 = vmatprep.subr.mxu0 0.0
    %4731 = vmatpush1.msra.mxu0 0.0
    %4732 = vmatprep.subr.mxu0 0.0
    %4733 = vmatpush1.msra.mxu0 0.0
    %4734 = vmatprep.subr.mxu0 0.0
    %4735 = vmatpush1.msra.mxu0 0.0
    %4736 = vmatprep.subr.mxu0 0.0
    %4737 = vmatpush1.msra.mxu0 0.0
    %4738 = vmatprep.subr.mxu0 0.0
    %4739 = vmatpush1.msra.mxu0 0.0
    %4740 = vmatprep.subr.mxu0 0.0
    %4741 = vmatpush1.msra.mxu0 0.0
    %4742 = vmatprep.subr.mxu0 0.0
    %4743 = vmatpush1.msra.mxu0 0.0
    %4744 = vmatprep.subr.mxu0 0.0
    %4745 = vmatpush1.msra.mxu0 0.0
    %4746 = vmatprep.subr.mxu0 0.0
    %4747 = vmatpush1.msra.mxu0 0.0
    %4748 = vmatprep.subr.mxu0 0.0
    %4749 = vmatpush1.msra.mxu0 0.0
    %4750 = vmatprep.subr.mxu0 0.0
    %4751 = vmatpush1.msra.mxu0 0.0
    %4752 = vmatprep.subr.mxu0 0.0
    %4753 = vmatpush1.msra.mxu0 0.0
    %4754 = vmatprep.subr.mxu0 0.0
    %4755 = vmatpush1.msra.mxu0 0.0
    %4756 = vmatprep.subr.mxu0 0.0
    %4757 = vmatpush1.msra.mxu0 0.0
    %4758 = vmatprep.subr.mxu0 0.0
    %4759 = vmatpush1.msra.mxu0 0.0
    %4760 = vmatprep.subr.mxu0 0.0
    %4761 = vmatpush1.msra.mxu0 0.0
    %4762 = vmatprep.subr.mxu0 0.0
    %4763 = vmatpush1.msra.mxu0 0.0
    %4764 = vmatprep.subr.mxu0 0.0
    %4765 = vmatpush1.msra.mxu0 0.0
    %4766 = vmatprep.mubr.f32.mxu0 0.0
    %4767 = vmatmul.mubr.f32.gmra.mrb[0].mxu0 %v4691
    %v4768 = vpop.f32.mrb[0].mxu0
    %v4769 = vadd.f32 %v4688, %v4768
    %v4770 = vpop.f32.mrb[0].mxu0
    %4771 = vmatprep.mubr.f32.mxu0 0.0
    %4772 = vmatmul.mubr.f32.gmra.mrb[0].mxu0 %v4694
    %v4773 = vpop.f32.mrb[0].mxu0
    %v4774 = vadd.f32 %v4688, %v4773
    %v4775 = vpop.f32.mrb[0].mxu0
    %4776 = vmatprep.mubr.f32.mxu0 0.0
    %4777 = vmatmul.mubr.f32.gmra.mrb[0].mxu0 %v4697
    %v4778 = vpop.f32.mrb[0].mxu0
    %v4779 = vadd.f32 %v4688, %v4778
    %v4780 = vpop.f32.mrb[0].mxu0
    %4781 = vmatprep.mubr.f32.mxu0 0.0
    %4782 = vmatmul.mubr.f32.gmra.mrb[0].mxu0 %v4700
    %v4783 = vpop.f32.mrb[0].mxu0
    %v4784 = vadd.f32 %v4688, %v4783
    %v4785 = vpop.f32.mrb[0].mxu0
    %4786 = vdwg.mxu0
    %v4787 = vadd.f32 %v4075, %v4769
    %v4788 = vadd.f32 %v4076, %v4774
    %v4789 = vadd.f32 %v4077, %v4779
    %v4790 = vadd.f32 %v4078, %v4784
    %v4791 = vsel %vm582, %v4787, 0.0
    %4792 = vadd.xlane.f32.xlu0 %v4791
    %v4793 = vpop.xlane.xlu0 %4792
    %v4794 = vsel %vm582, %v4788, 0.0
    %4795 = vadd.xlane.f32.xlu0 %v4794
    %v4796 = vpop.xlane.xlu0 %4795
    %v4797 = vsel %vm582, %v4789, 0.0
    %4798 = vadd.xlane.f32.xlu0 %v4797
    %v4799 = vpop.xlane.xlu0 %4798
    %v4800 = vsel %vm582, %v4790, 0.0
    %4801 = vadd.xlane.f32.xlu0 %v4800
    %v4802 = vpop.xlane.xlu0 %4801
    %v4803 = vmul.f32 %v4793, %v479
    %v4804 = vmul.f32 %v4796, %v479
    %v4805 = vmul.f32 %v4799, %v479
    %v4806 = vmul.f32 %v4802, %v479
    %v4807 = vsub.f32 %v4787, %v4803
    %v4808 = vsub.f32 %v4788, %v4804
    %v4809 = vsub.f32 %v4789, %v4805
    %v4810 = vsub.f32 %v4790, %v4806
    %v4811 = vmul.f32 %v4807, %v4807
    %v4812 = vmul.f32 %v4808, %v4808
    %v4813 = vmul.f32 %v4809, %v4809
    %v4814 = vmul.f32 %v4810, %v4810
    %v4815 = vsel %vm582, %v4811, 0.0
    %4816 = vadd.xlane.f32.xlu0 %v4815
    %v4817 = vpop.xlane.xlu0 %4816
    %v4818 = vsel %vm582, %v4812, 0.0
    %4819 = vadd.xlane.f32.xlu0 %v4818
    %v4820 = vpop.xlane.xlu0 %4819
    %v4821 = vsel %vm582, %v4813, 0.0
    %4822 = vadd.xlane.f32.xlu0 %v4821
    %v4823 = vpop.xlane.xlu0 %4822
    %v4824 = vsel %vm582, %v4814, 0.0
    %4825 = vadd.xlane.f32.xlu0 %v4824
    %v4826 = vpop.xlane.xlu0 %4825
    %v4827 = vmul.f32 %v4817, %v479
    %v4828 = vmul.f32 %v4820, %v479
    %v4829 = vmul.f32 %v4823, %v479
    %v4830 = vmul.f32 %v4826, %v479
    %v4831 = vadd.f32 %v4827, 1e-05
    %v4832 = vadd.f32 %v4828, 1e-05
    %v4833 = vadd.f32 %v4829, 1e-05
    %v4834 = vadd.f32 %v4830, 1e-05
    %v4835 = vrsqrt.pop %v4831
    %v4836 = vrsqrt.pop %v4832
    %v4837 = vrsqrt.pop %v4833
    %v4838 = vrsqrt.pop %v4834
    %v4839 = vmul.f32 %v4807, %v4835
    %v4840 = vmul.f32 %v4808, %v4836
    %v4841 = vmul.f32 %v4809, %v4837
    %v4842 = vmul.f32 %v4810, %v4838
    %s4843 = scalar_lea.vmem [#allocation19], 2
    %v4844 = vld [vmem:[%s4843] sm:$0x1]
    %v4846 = vlaneseq
    %v4847 = vshrl.u32 %v4846, 7
    %v4848 = vsub.s32 0, %v4847
    %v4849 = vrot.slane %v4844, %v4848
    %v4851 = vmul.f32 %v4839, %v4849
    %v4852 = vmul.f32 %v4840, %v4849
    %v4853 = vmul.f32 %v4841, %v4849
    %v4854 = vmul.f32 %v4842, %v4849
    %s4855 = scalar_lea.vmem [#allocation20], 2
    %v4856 = vld [vmem:[%s4855] sm:$0x1]
    %v4858 = vlaneseq
    %v4859 = vshrl.u32 %v4858, 7
    %v4860 = vsub.s32 0, %v4859
    %v4861 = vrot.slane %v4856, %v4860
    %v4863 = vadd.f32 %v4851, %v4861
    %v4864 = vadd.f32 %v4852, %v4861
    %v4865 = vadd.f32 %v4853, %v4861
    %v4866 = vadd.f32 %v4854, %v4861
    %s4867 = scalar_lea.vmem [#allocation22], 64
    %v4868 = vld [vmem:[%s4867] sm:$0xff]
    %v4869 = vld [vmem:[%s4867 + $0x8] sm:$0xff]
    %v4870 = vld [vmem:[%s4867 + $0x10] sm:$0xff]
    %v4871 = vld [vmem:[%s4867 + $0x18] sm:$0xff]
    %s4872 = scalar_lea.vmem [#allocation23], 2
    %v4873 = vld [vmem:[%s4872] sm:$0x1]
    %v4875 = vlaneseq
    %v4876 = vshrl.u32 %v4875, 7
    %v4877 = vsub.s32 0, %v4876
    %v4878 = vrot.slane %v4873, %v4877
    %v4881 = vsel %vm582, %v4863, 0
    %v4884 = vsel %vm582, %v4864, 0
    %v4887 = vsel %vm582, %v4865, 0
    %v4890 = vsel %vm582, %v4866, 0
    %4892 = vmatprep.subr.mxu0 0.0
    %4893 = vmatpush1.msra.mxu0 %v4868
    %4894 = vmatprep.subr.mxu0 0.0
    %4895 = vmatpush1.msra.mxu0 %v4869
    %4896 = vmatprep.subr.mxu0 0.0
    %4897 = vmatpush1.msra.mxu0 %v4870
    %4898 = vmatprep.subr.mxu0 0.0
    %4899 = vmatpush1.msra.mxu0 %v4871
    %4900 = vmatprep.subr.mxu0 0.0
    %4901 = vmatpush1.msra.mxu0 0.0
    %4902 = vmatprep.subr.mxu0 0.0
    %4903 = vmatpush1.msra.mxu0 0.0
    %4904 = vmatprep.subr.mxu0 0.0
    %4905 = vmatpush1.msra.mxu0 0.0
    %4906 = vmatprep.subr.mxu0 0.0
    %4907 = vmatpush1.msra.mxu0 0.0
    %4908 = vmatprep.subr.mxu0 0.0
    %4909 = vmatpush1.msra.mxu0 0.0
    %4910 = vmatprep.subr.mxu0 0.0
    %4911 = vmatpush1.msra.mxu0 0.0
    %4912 = vmatprep.subr.mxu0 0.0
    %4913 = vmatpush1.msra.mxu0 0.0
    %4914 = vmatprep.subr.mxu0 0.0
    %4915 = vmatpush1.msra.mxu0 0.0
    %4916 = vmatprep.subr.mxu0 0.0
    %4917 = vmatpush1.msra.mxu0 0.0
    %4918 = vmatprep.subr.mxu0 0.0
    %4919 = vmatpush1.msra.mxu0 0.0
    %4920 = vmatprep.subr.mxu0 0.0
    %4921 = vmatpush1.msra.mxu0 0.0
    %4922 = vmatprep.subr.mxu0 0.0
    %4923 = vmatpush1.msra.mxu0 0.0
    %4924 = vmatprep.subr.mxu0 0.0
    %4925 = vmatpush1.msra.mxu0 0.0
    %4926 = vmatprep.subr.mxu0 0.0
    %4927 = vmatpush1.msra.mxu0 0.0
    %4928 = vmatprep.subr.mxu0 0.0
    %4929 = vmatpush1.msra.mxu0 0.0
    %4930 = vmatprep.subr.mxu0 0.0
    %4931 = vmatpush1.msra.mxu0 0.0
    %4932 = vmatprep.subr.mxu0 0.0
    %4933 = vmatpush1.msra.mxu0 0.0
    %4934 = vmatprep.subr.mxu0 0.0
    %4935 = vmatpush1.msra.mxu0 0.0
    %4936 = vmatprep.subr.mxu0 0.0
    %4937 = vmatpush1.msra.mxu0 0.0
    %4938 = vmatprep.subr.mxu0 0.0
    %4939 = vmatpush1.msra.mxu0 0.0
    %4940 = vmatprep.subr.mxu0 0.0
    %4941 = vmatpush1.msra.mxu0 0.0
    %4942 = vmatprep.subr.mxu0 0.0
    %4943 = vmatpush1.msra.mxu0 0.0
    %4944 = vmatprep.subr.mxu0 0.0
    %4945 = vmatpush1.msra.mxu0 0.0
    %4946 = vmatprep.subr.mxu0 0.0
    %4947 = vmatpush1.msra.mxu0 0.0
    %4948 = vmatprep.subr.mxu0 0.0
    %4949 = vmatpush1.msra.mxu0 0.0
    %4950 = vmatprep.subr.mxu0 0.0
    %4951 = vmatpush1.msra.mxu0 0.0
    %4952 = vmatprep.subr.mxu0 0.0
    %4953 = vmatpush1.msra.mxu0 0.0
    %4954 = vmatprep.subr.mxu0 0.0
    %4955 = vmatpush1.msra.mxu0 0.0
    %4956 = vmatprep.mubr.f32.mxu0 0.0
    %4957 = vmatmul.mubr.f32.gmra.mrb[0].mxu0 %v4881
    %v4958 = vpop.f32.mrb[0].mxu0
    %v4959 = vadd.f32 %v4878, %v4958
    %v4960 = vpop.f32.mrb[0].mxu0
    %4961 = vmatprep.mubr.f32.mxu0 0.0
    %4962 = vmatmul.mubr.f32.gmra.mrb[0].mxu0 %v4884
    %v4963 = vpop.f32.mrb[0].mxu0
    %v4964 = vadd.f32 %v4878, %v4963
    %v4965 = vpop.f32.mrb[0].mxu0
    %4966 = vmatprep.mubr.f32.mxu0 0.0
    %4967 = vmatmul.mubr.f32.gmra.mrb[0].mxu0 %v4887
    %v4968 = vpop.f32.mrb[0].mxu0
    %v4969 = vadd.f32 %v4878, %v4968
    %v4970 = vpop.f32.mrb[0].mxu0
    %4971 = vmatprep.mubr.f32.mxu0 0.0
    %4972 = vmatmul.mubr.f32.gmra.mrb[0].mxu0 %v4890
    %v4973 = vpop.f32.mrb[0].mxu0
    %v4974 = vadd.f32 %v4878, %v4973
    %v4975 = vpop.f32.mrb[0].mxu0
    %4976 = vdwg.mxu0
    %v4977 = vmul.f32 %v4959, 0.5
    %v4978 = vmul.f32 %v4964, 0.5
    %v4979 = vmul.f32 %v4969, 0.5
    %v4980 = vmul.f32 %v4974, 0.5
    %v4981 = vmul.f32 %v4959, 0.70710677
    %v4982 = vmul.f32 %v4964, 0.70710677
    %v4983 = vmul.f32 %v4969, 0.70710677
    %v4984 = vmul.f32 %v4974, 0.70710677
    %vm4985 = vcmp.ge.f32.partialorder %v4981, 0.0
    %vm4986 = vcmp.ge.f32.partialorder %v4982, 0.0
    %vm4987 = vcmp.ge.f32.partialorder %v4983, 0.0
    %vm4988 = vcmp.ge.f32.partialorder %v4984, 0.0
    %v4989 = vsel %vm4985, 1.0, -1.0
    %v4990 = vsel %vm4986, 1.0, -1.0
    %v4991 = vsel %vm4987, 1.0, -1.0
    %v4992 = vsel %vm4988, 1.0, -1.0
    %v4993 = vand.u32 2147483647, %v4981
    %v4994 = vand.u32 2147483647, %v4982
    %v4995 = vand.u32 2147483647, %v4983
    %v4996 = vand.u32 2147483647, %v4984
    %v4997 = vmul.f32 %v4993, 0.3275911
    %v4998 = vmul.f32 %v4994, 0.3275911
    %v4999 = vmul.f32 %v4995, 0.3275911
    %v5000 = vmul.f32 %v4996, 0.3275911
    %v5001 = vadd.f32 %v4997, 1.0
    %v5002 = vadd.f32 %v4998, 1.0
    %v5003 = vadd.f32 %v4999, 1.0
    %v5004 = vadd.f32 %v5000, 1.0
    %v5005 = vrcp.pop %v5001
    %v5006 = vmul.f32 1.0, %v5005
    %v5007 = vrcp.pop %v5002
    %v5008 = vmul.f32 1.0, %v5007
    %v5009 = vrcp.pop %v5003
    %v5010 = vmul.f32 1.0, %v5009
    %v5011 = vrcp.pop %v5004
    %v5012 = vmul.f32 1.0, %v5011
    %v5013 = vmul.f32 %v5006, 1.0614054
    %v5014 = vmul.f32 %v5008, 1.0614054
    %v5015 = vmul.f32 %v5010, 1.0614054
    %v5016 = vmul.f32 %v5012, 1.0614054
    %v5017 = vadd.f32 %v5013, -1.4531521
    %v5018 = vadd.f32 %v5014, -1.4531521
    %v5019 = vadd.f32 %v5015, -1.4531521
    %v5020 = vadd.f32 %v5016, -1.4531521
    %v5021 = vmul.f32 %v5017, %v5006
    %v5022 = vmul.f32 %v5018, %v5008
    %v5023 = vmul.f32 %v5019, %v5010
    %v5024 = vmul.f32 %v5020, %v5012
    %v5025 = vadd.f32 %v5021, 1.4214138
    %v5026 = vadd.f32 %v5022, 1.4214138
    %v5027 = vadd.f32 %v5023, 1.4214138
    %v5028 = vadd.f32 %v5024, 1.4214138
    %v5029 = vmul.f32 %v5025, %v5006
    %v5030 = vmul.f32 %v5026, %v5008
    %v5031 = vmul.f32 %v5027, %v5010
    %v5032 = vmul.f32 %v5028, %v5012
    %v5033 = vadd.f32 %v5029, -0.28449672
    %v5034 = vadd.f32 %v5030, -0.28449672
    %v5035 = vadd.f32 %v5031, -0.28449672
    %v5036 = vadd.f32 %v5032, -0.28449672
    %v5037 = vmul.f32 %v5033, %v5006
    %v5038 = vmul.f32 %v5034, %v5008
    %v5039 = vmul.f32 %v5035, %v5010
    %v5040 = vmul.f32 %v5036, %v5012
    %v5041 = vadd.f32 %v5037, 0.2548296
    %v5042 = vadd.f32 %v5038, 0.2548296
    %v5043 = vadd.f32 %v5039, 0.2548296
    %v5044 = vadd.f32 %v5040, 0.2548296
    %v5045 = vmul.f32 %v5041, %v5006
    %v5046 = vmul.f32 %v5042, %v5008
    %v5047 = vmul.f32 %v5043, %v5010
    %v5048 = vmul.f32 %v5044, %v5012
    %v5049 = vsub.f32 0.0, %v4993
    %v5050 = vsub.f32 0.0, %v4994
    %v5051 = vsub.f32 0.0, %v4995
    %v5052 = vsub.f32 0.0, %v4996
    %v5053 = vmul.f32 %v5049, %v4993
    %v5054 = vmul.f32 %v5050, %v4994
    %v5055 = vmul.f32 %v5051, %v4995
    %v5056 = vmul.f32 %v5052, %v4996
    %v5057 = vmul.f32 %v5053, 1.442695
    %v5058 = vpow.pop %v5057
    %v5059 = vmul.f32 %v5054, 1.442695
    %v5060 = vpow.pop %v5059
    %v5061 = vmul.f32 %v5055, 1.442695
    %v5062 = vpow.pop %v5061
    %v5063 = vmul.f32 %v5056, 1.442695
    %v5064 = vpow.pop %v5063
    %v5065 = vmul.f32 %v5045, %v5058
    %v5066 = vmul.f32 %v5046, %v5060
    %v5067 = vmul.f32 %v5047, %v5062
    %v5068 = vmul.f32 %v5048, %v5064
    %v5069 = vsub.f32 1.0, %v5065
    %v5070 = vsub.f32 1.0, %v5066
    %v5071 = vsub.f32 1.0, %v5067
    %v5072 = vsub.f32 1.0, %v5068
    %v5073 = vmul.f32 %v4989, %v5069
    %v5074 = vmul.f32 %v4990, %v5070
    %v5075 = vmul.f32 %v4991, %v5071
    %v5076 = vmul.f32 %v4992, %v5072
    %v5077 = vadd.f32 %v5073, 1.0
    %v5078 = vadd.f32 %v5074, 1.0
    %v5079 = vadd.f32 %v5075, 1.0
    %v5080 = vadd.f32 %v5076, 1.0
    %v5081 = vmul.f32 %v4977, %v5077
    %v5082 = vmul.f32 %v4978, %v5078
    %v5083 = vmul.f32 %v4979, %v5079
    %v5084 = vmul.f32 %v4980, %v5080
    %s5085 = scalar_lea.vmem %s49, 128
    %v5086 = vld [vmem:[%s5085] sm:$0xff]
    %v5087 = vld [vmem:[%s5085 + $0x8] sm:$0xff]
    %v5088 = vld [vmem:[%s5085 + $0x10] sm:$0xff]
    %v5089 = vld [vmem:[%s5085 + $0x18] sm:$0xff]
    %v5090 = vld [vmem:[%s5085 + $0x20] sm:$0xff]
    %v5091 = vld [vmem:[%s5085 + $0x28] sm:$0xff]
    %v5092 = vld [vmem:[%s5085 + $0x30] sm:$0xff]
    %v5093 = vld [vmem:[%s5085 + $0x38] sm:$0xff]
    %v5095 = vsel %vm2144, %v5081, 0
    %v5098 = vsel %vm2144, %v5082, 0
    %v5101 = vsel %vm2144, %v5083, 0
    %v5104 = vsel %vm2144, %v5084, 0
    %5106 = vmatprep.subr.mxu0 0.0
    %5107 = vmatpush1.msra.mxu0 %v5086
    %5108 = vmatprep.subr.mxu0 0.0
    %5109 = vmatpush1.msra.mxu0 %v5087
    %5110 = vmatprep.subr.mxu0 0.0
    %5111 = vmatpush1.msra.mxu0 %v5088
    %5112 = vmatprep.subr.mxu0 0.0
    %5113 = vmatpush1.msra.mxu0 %v5089
    %5114 = vmatprep.subr.mxu0 0.0
    %5115 = vmatpush1.msra.mxu0 %v5090
    %5116 = vmatprep.subr.mxu0 0.0
    %5117 = vmatpush1.msra.mxu0 %v5091
    %5118 = vmatprep.subr.mxu0 0.0
    %5119 = vmatpush1.msra.mxu0 %v5092
    %5120 = vmatprep.subr.mxu0 0.0
    %5121 = vmatpush1.msra.mxu0 %v5093
    %5122 = vmatprep.subr.mxu0 0.0
    %5123 = vmatpush1.msra.mxu0 0.0
    %5124 = vmatprep.subr.mxu0 0.0
    %5125 = vmatpush1.msra.mxu0 0.0
    %5126 = vmatprep.subr.mxu0 0.0
    %5127 = vmatpush1.msra.mxu0 0.0
    %5128 = vmatprep.subr.mxu0 0.0
    %5129 = vmatpush1.msra.mxu0 0.0
    %5130 = vmatprep.subr.mxu0 0.0
    %5131 = vmatpush1.msra.mxu0 0.0
    %5132 = vmatprep.subr.mxu0 0.0
    %5133 = vmatpush1.msra.mxu0 0.0
    %5134 = vmatprep.subr.mxu0 0.0
    %5135 = vmatpush1.msra.mxu0 0.0
    %5136 = vmatprep.subr.mxu0 0.0
    %5137 = vmatpush1.msra.mxu0 0.0
    %5138 = vmatprep.subr.mxu0 0.0
    %5139 = vmatpush1.msra.mxu0 0.0
    %5140 = vmatprep.subr.mxu0 0.0
    %5141 = vmatpush1.msra.mxu0 0.0
    %5142 = vmatprep.subr.mxu0 0.0
    %5143 = vmatpush1.msra.mxu0 0.0
    %5144 = vmatprep.subr.mxu0 0.0
    %5145 = vmatpush1.msra.mxu0 0.0
    %5146 = vmatprep.subr.mxu0 0.0
    %5147 = vmatpush1.msra.mxu0 0.0
    %5148 = vmatprep.subr.mxu0 0.0
    %5149 = vmatpush1.msra.mxu0 0.0
    %5150 = vmatprep.subr.mxu0 0.0
    %5151 = vmatpush1.msra.mxu0 0.0
    %5152 = vmatprep.subr.mxu0 0.0
    %5153 = vmatpush1.msra.mxu0 0.0
    %5154 = vmatprep.subr.mxu0 0.0
    %5155 = vmatpush1.msra.mxu0 0.0
    %5156 = vmatprep.subr.mxu0 0.0
    %5157 = vmatpush1.msra.mxu0 0.0
    %5158 = vmatprep.subr.mxu0 0.0
    %5159 = vmatpush1.msra.mxu0 0.0
    %5160 = vmatprep.subr.mxu0 0.0
    %5161 = vmatpush1.msra.mxu0 0.0
    %5162 = vmatprep.subr.mxu0 0.0
    %5163 = vmatpush1.msra.mxu0 0.0
    %5164 = vmatprep.subr.mxu0 0.0
    %5165 = vmatpush1.msra.mxu0 0.0
    %5166 = vmatprep.subr.mxu0 0.0
    %5167 = vmatpush1.msra.mxu0 0.0
    %5168 = vmatprep.subr.mxu0 0.0
    %5169 = vmatpush1.msra.mxu0 0.0
    %5170 = vmatprep.mubr.f32.mxu0 0.0
    %5171 = vmatmul.mubr.f32.gmra.mrb[0].mxu0 %v5095
    %v5172 = vpop.f32.mrb[0].mxu0
    %v5173 = vadd.f32 0.0, %v5172
    %v5174 = vpop.f32.mrb[0].mxu0
    %5175 = vmatprep.mubr.f32.mxu0 0.0
    %5176 = vmatmul.mubr.f32.gmra.mrb[0].mxu0 %v5098
    %v5177 = vpop.f32.mrb[0].mxu0
    %v5178 = vadd.f32 0.0, %v5177
    %v5179 = vpop.f32.mrb[0].mxu0
    %5180 = vmatprep.mubr.f32.mxu0 0.0
    %5181 = vmatmul.mubr.f32.gmra.mrb[0].mxu0 %v5101
    %v5182 = vpop.f32.mrb[0].mxu0
    %v5183 = vadd.f32 0.0, %v5182
    %v5184 = vpop.f32.mrb[0].mxu0
    %5185 = vmatprep.mubr.f32.mxu0 0.0
    %5186 = vmatmul.mubr.f32.gmra.mrb[0].mxu0 %v5104
    %v5187 = vpop.f32.mrb[0].mxu0
    %v5188 = vadd.f32 0.0, %v5187
    %v5189 = vpop.f32.mrb[0].mxu0
    %5190 = vdwg.mxu0
    %v5191 = vadd.f32 %v4863, %v5173
    %v5192 = vadd.f32 %v4864, %v5178
    %v5193 = vadd.f32 %v4865, %v5183
    %v5194 = vadd.f32 %v4866, %v5188
    %s5195 = scalar_lea.vmem [#allocation25], 2
    %v5196 = vld [vmem:[%s5195] sm:$0x1]
    %v5198 = vlaneseq
    %v5199 = vshrl.u32 %v5198, 7
    %v5200 = vsub.s32 0, %v5199
    %v5201 = vrot.slane %v5196, %v5200
    %v5203 = vadd.f32 %v5191, %v5201
    %v5204 = vadd.f32 %v5192, %v5201
    %v5205 = vadd.f32 %v5193, %v5201
    %v5206 = vadd.f32 %v5194, %v5201
    %v5207 = vld [vmem:[#allocation26] sm:$0xff]
    %v5208 = vld [vmem:[#allocation26 + $0x8] sm:$0xff]
    %v5209 = vld [vmem:[#allocation26 + $0x10] sm:$0xff]
    %v5210 = vld [vmem:[#allocation26 + $0x18] sm:$0xff]
    %v5211 = vld [vmem:[#allocation28] sm:$0x1]
    %v5213 = vlaneseq
    %v5214 = vshrl.u32 %v5213, 7
    %v5215 = vsub.s32 0, %v5214
    %v5216 = vrot.slane %v5211, %v5215
    %v5219 = vsel %vm582, %v5203, 0
    %v5222 = vsel %vm582, %v5204, 0
    %v5225 = vsel %vm582, %v5205, 0
    %v5228 = vsel %vm582, %v5206, 0
    %5230 = vmatprep.subr.mxu0 0.0
    %5231 = vmatpush1.msra.mxu0 %v5207
    %5232 = vmatprep.subr.mxu0 0.0
    %5233 = vmatpush1.msra.mxu0 %v5208
    %5234 = vmatprep.subr.mxu0 0.0
    %5235 = vmatpush1.msra.mxu0 %v5209
    %5236 = vmatprep.subr.mxu0 0.0
    %5237 = vmatpush1.msra.mxu0 %v5210
    %5238 = vmatprep.subr.mxu0 0.0
    %5239 = vmatpush1.msra.mxu0 0.0
    %5240 = vmatprep.subr.mxu0 0.0
    %5241 = vmatpush1.msra.mxu0 0.0
    %5242 = vmatprep.subr.mxu0 0.0
    %5243 = vmatpush1.msra.mxu0 0.0
    %5244 = vmatprep.subr.mxu0 0.0
    %5245 = vmatpush1.msra.mxu0 0.0
    %5246 = vmatprep.subr.mxu0 0.0
    %5247 = vmatpush1.msra.mxu0 0.0
    %5248 = vmatprep.subr.mxu0 0.0
    %5249 = vmatpush1.msra.mxu0 0.0
    %5250 = vmatprep.subr.mxu0 0.0
    %5251 = vmatpush1.msra.mxu0 0.0
    %5252 = vmatprep.subr.mxu0 0.0
    %5253 = vmatpush1.msra.mxu0 0.0
    %5254 = vmatprep.subr.mxu0 0.0
    %5255 = vmatpush1.msra.mxu0 0.0
    %5256 = vmatprep.subr.mxu0 0.0
    %5257 = vmatpush1.msra.mxu0 0.0
    %5258 = vmatprep.subr.mxu0 0.0
    %5259 = vmatpush1.msra.mxu0 0.0
    %5260 = vmatprep.subr.mxu0 0.0
    %5261 = vmatpush1.msra.mxu0 0.0
    %5262 = vmatprep.subr.mxu0 0.0
    %5263 = vmatpush1.msra.mxu0 0.0
    %5264 = vmatprep.subr.mxu0 0.0
    %5265 = vmatpush1.msra.mxu0 0.0
    %5266 = vmatprep.subr.mxu0 0.0
    %5267 = vmatpush1.msra.mxu0 0.0
    %5268 = vmatprep.subr.mxu0 0.0
    %5269 = vmatpush1.msra.mxu0 0.0
    %5270 = vmatprep.subr.mxu0 0.0
    %5271 = vmatpush1.msra.mxu0 0.0
    %5272 = vmatprep.subr.mxu0 0.0
    %5273 = vmatpush1.msra.mxu0 0.0
    %5274 = vmatprep.subr.mxu0 0.0
    %5275 = vmatpush1.msra.mxu0 0.0
    %5276 = vmatprep.subr.mxu0 0.0
    %5277 = vmatpush1.msra.mxu0 0.0
    %5278 = vmatprep.subr.mxu0 0.0
    %5279 = vmatpush1.msra.mxu0 0.0
    %5280 = vmatprep.subr.mxu0 0.0
    %5281 = vmatpush1.msra.mxu0 0.0
    %5282 = vmatprep.subr.mxu0 0.0
    %5283 = vmatpush1.msra.mxu0 0.0
    %5284 = vmatprep.subr.mxu0 0.0
    %5285 = vmatpush1.msra.mxu0 0.0
    %5286 = vmatprep.subr.mxu0 0.0
    %5287 = vmatpush1.msra.mxu0 0.0
    %5288 = vmatprep.subr.mxu0 0.0
    %5289 = vmatpush1.msra.mxu0 0.0
    %5290 = vmatprep.subr.mxu0 0.0
    %5291 = vmatpush1.msra.mxu0 0.0
    %5292 = vmatprep.subr.mxu0 0.0
    %5293 = vmatpush1.msra.mxu0 0.0
    %5294 = vmatprep.mubr.f32.mxu0 0.0
    %5295 = vmatmul.mubr.f32.gmra.mrb[0].mxu0 %v5219
    %v5296 = vpop.f32.mrb[0].mxu0
    %v5297 = vadd.f32 %v5216, %v5296
    %v5298 = vpop.f32.mrb[0].mxu0
    %5299 = vmatprep.mubr.f32.mxu0 0.0
    %5300 = vmatmul.mubr.f32.gmra.mrb[0].mxu0 %v5222
    %v5301 = vpop.f32.mrb[0].mxu0
    %v5302 = vadd.f32 %v5216, %v5301
    %v5303 = vpop.f32.mrb[0].mxu0
    %5304 = vmatprep.mubr.f32.mxu0 0.0
    %5305 = vmatmul.mubr.f32.gmra.mrb[0].mxu0 %v5225
    %v5306 = vpop.f32.mrb[0].mxu0
    %v5307 = vadd.f32 %v5216, %v5306
    %v5308 = vpop.f32.mrb[0].mxu0
    %5309 = vmatprep.mubr.f32.mxu0 0.0
    %5310 = vmatmul.mubr.f32.gmra.mrb[0].mxu0 %v5228
    %v5311 = vpop.f32.mrb[0].mxu0
    %v5312 = vadd.f32 %v5216, %v5311
    %v5313 = vpop.f32.mrb[0].mxu0
    %5314 = vdwg.mxu0
    %5315 = vst.msk [vmem:[#allocation29] sm:$0xff] %vm582, %v5297
    %5316 = vst.msk [vmem:[#allocation29 + $0x8] sm:$0xff] %vm582, %v5302
    %5317 = vst.msk [vmem:[#allocation29 + $0x10] sm:$0xff] %vm582, %v5307
    %5318 = vst.msk [vmem:[#allocation29 + $0x18] sm:$0xff] %vm582, %v5312
    %v5319 = vld [vmem:[#allocation5] sm:$0x3]
    %v5321 = vsel %vm582, %v5319, 0
    %5323 = vmatprep.subr.mxu0 0.0
    %5324 = vmatpush1.msra.mxu0 %v5297
    %5325 = vmatprep.subr.mxu0 0.0
    %5326 = vmatpush1.msra.mxu0 %v5302
    %5327 = vmatprep.subr.mxu0 0.0
    %5328 = vmatpush1.msra.mxu0 %v5307
    %5329 = vmatprep.subr.mxu0 0.0
    %5330 = vmatpush1.msra.mxu0 %v5312
    %5331 = vmatprep.subr.mxu0 0.0
    %5332 = vmatpush1.msra.mxu0 0.0
    %5333 = vmatprep.subr.mxu0 0.0
    %5334 = vmatpush1.msra.mxu0 0.0
    %5335 = vmatprep.subr.mxu0 0.0
    %5336 = vmatpush1.msra.mxu0 0.0
    %5337 = vmatprep.subr.mxu0 0.0
    %5338 = vmatpush1.msra.mxu0 0.0
    %5339 = vmatprep.subr.mxu0 0.0
    %5340 = vmatpush1.msra.mxu0 0.0
    %5341 = vmatprep.subr.mxu0 0.0
    %5342 = vmatpush1.msra.mxu0 0.0
    %5343 = vmatprep.subr.mxu0 0.0
    %5344 = vmatpush1.msra.mxu0 0.0
    %5345 = vmatprep.subr.mxu0 0.0
    %5346 = vmatpush1.msra.mxu0 0.0
    %5347 = vmatprep.subr.mxu0 0.0
    %5348 = vmatpush1.msra.mxu0 0.0
    %5349 = vmatprep.subr.mxu0 0.0
    %5350 = vmatpush1.msra.mxu0 0.0
    %5351 = vmatprep.subr.mxu0 0.0
    %5352 = vmatpush1.msra.mxu0 0.0
    %5353 = vmatprep.subr.mxu0 0.0
    %5354 = vmatpush1.msra.mxu0 0.0
    %5355 = vmatprep.subr.mxu0 0.0
    %5356 = vmatpush1.msra.mxu0 0.0
    %5357 = vmatprep.subr.mxu0 0.0
    %5358 = vmatpush1.msra.mxu0 0.0
    %5359 = vmatprep.subr.mxu0 0.0
    %5360 = vmatpush1.msra.mxu0 0.0
    %5361 = vmatprep.subr.mxu0 0.0
    %5362 = vmatpush1.msra.mxu0 0.0
    %5363 = vmatprep.subr.mxu0 0.0
    %5364 = vmatpush1.msra.mxu0 0.0
    %5365 = vmatprep.subr.mxu0 0.0
    %5366 = vmatpush1.msra.mxu0 0.0
    %5367 = vmatprep.subr.mxu0 0.0
    %5368 = vmatpush1.msra.mxu0 0.0
    %5369 = vmatprep.subr.mxu0 0.0
    %5370 = vmatpush1.msra.mxu0 0.0
    %5371 = vmatprep.subr.mxu0 0.0
    %5372 = vmatpush1.msra.mxu0 0.0
    %5373 = vmatprep.subr.mxu0 0.0
    %5374 = vmatpush1.msra.mxu0 0.0
    %5375 = vmatprep.subr.mxu0 0.0
    %5376 = vmatpush1.msra.mxu0 0.0
    %5377 = vmatprep.subr.mxu0 0.0
    %5378 = vmatpush1.msra.mxu0 0.0
    %5379 = vmatprep.subr.mxu0 0.0
    %5380 = vmatpush1.msra.mxu0 0.0
    %5381 = vmatprep.subr.mxu0 0.0
    %5382 = vmatpush1.msra.mxu0 0.0
    %5383 = vmatprep.subr.mxu0 0.0
    %5384 = vmatpush1.msra.mxu0 0.0
    %5385 = vmatprep.subr.mxu0 0.0
    %5386 = vmatpush1.msra.mxu0 0.0
    %5387 = vmatprep.mubr.f32.mxu0 0.0
    %5388 = vmatmul.mubr.f32.gmra.mrb[0].mxu0 %v5321
    %v5389 = vpop.f32.mrb[0].mxu0
    %v5390 = vadd.f32 0.0, %v5389
    %v5391 = vpop.f32.mrb[0].mxu0
    %5392 = vdwg.mxu0
    %vm5393 = vcmask 254976
    %5394 = vst.msk [vmem:[#allocation30] sm:$0x3] %vm5393, %v5390
    // Predicated region
    $region182: #{_lambda_.1} parent=1 // pred_check
      _
    $region183: #{_lambda_.1} parent=1 // pred_check_branch
      %5396 = sbr.rel (0) target = $region185
    $region184: #{_lambda_.1} parent=1 // pred_region
      %s5398 = ssub.s32 512, 512
      %5399 = vsyncadd [#allocation4], %s5398
      %s5400 = sshll.u32 [#allocation29], 4
      %s5401 = int_to_ptr.vmem [resolvable:$true] %s5400
      %5406 = dma.vmem_to_hbm [thread:$0]  %s5401, 512, %s57, [#allocation4], 128, 128, 8
    $region185: #{_lambda_.1} parent=1 // pred_fallthru
      _
    // Predicated region
    $region186: #{_lambda_.1} parent=1 // pred_check
      _
    $region187: #{_lambda_.1} parent=1 // pred_check_branch
      %5408 = sbr.rel (0) target = $region189
    $region188: #{_lambda_.1} parent=1 // pred_region
      %s5410 = ssub.s32 32, 32
      %5411 = vsyncadd [#allocation31], %s5410
      %s5413 = sshll.u32 [#allocation30], 4
      %s5414 = int_to_ptr.vmem [resolvable:$true] %s5413
      %5416 = dma.vmem_to_hbm [thread:$0]  %s5414, 32, %s59, [#allocation31]
    $region189: #{_lambda_.1} parent=1 // pred_fallthru
      _
    // Predicated region
    $region190: #{_lambda_.1} parent=1 // pred_check
      _
    $region191: #{_lambda_.1} parent=1 // pred_check_branch
      %5418 = sbr.rel (0) target = $region193
    $region192: #{_lambda_.1} parent=1 // pred_region
      %5419 = dma.done [#allocation4], 512
    $region193: #{_lambda_.1} parent=1 // pred_fallthru
      _
    // Predicated region
    $region194: #{_lambda_.1} parent=1 // pred_check
      _
    $region195: #{_lambda_.1} parent=1 // pred_check_branch
      %5421 = sbr.rel (0) target = $region197
    $region196: #{_lambda_.1} parent=1 // pred_region
      %5422 = dma.done [#allocation31], 32
    $region197: #{_lambda_.1} parent=1 // pred_fallthru
      _
    %5423 = vsyncpa [#allocation3], 1
    %5424 = vsyncpa [#allocation6], 1
    %5425 = vsyncpa [#allocation9], 1
    %5426 = vsyncpa [#allocation12], 1
    %5427 = vsyncpa [#allocation15], 1
    %5428 = vsyncpa [#allocation18], 1
    %5429 = vsyncpa [#allocation21], 1
    %5430 = vsyncpa [#allocation24], 1
    %5431 = vsyncpa [#allocation27], 1
    %5432 = vsyncpa [#allocation4], 1
    %5433 = vsyncpa [#allocation31], 1

</llo_original>
